<compile_context>
chip_gen: v7x
topology: tpu7x:2x2x1
jax: 0.10.0
libtpu: 0.0.40
codegen_flags: <defaults>
</compile_context>

<pallas_src>
import functools
import numpy as np
import jax
import jax.numpy as jnp
from jax import lax
from jax.experimental import pallas as pl
from jax.experimental.pallas import tpu as pltpu

BN_EPS = 1e-5


def _mod_const(x, d: int):
    """x % d for traced int32 vectors, static positive d (bitwise fast path for pow2)."""
    if d & (d - 1) == 0:
        return x & (d - 1)
    return x % d


def _div_const(x, d: int):
    """x // d for traced int32 vectors, static positive d (shift fast path for pow2)."""
    if d & (d - 1) == 0:
        return x >> (d.bit_length() - 1)
    return x // d


def _convcat_kernel(x_ref, p_ref, cat_ref, o_ref, *, n, h_up, w_up, kh, kw, cin):
    """Fused 3x3 conv + residual + ReLU + BatchNorm + (implicit) nearest-2x + channel concat.

    x_ref   : (Cin, M)              conv input, channel-first, already nearest-2x upsampled;
                                    M = N * 2H * 2W, lanes ordered (n, I, J)
    p_ref   : (Cout, KH*KW*Cin + 2) packed params: [conv taps (tap-major/chan-minor) | gamma | beta]
    cat_ref : (N, Ccat, 2H*2W)      tensor to concatenate (copied through to the output)
    o_ref   : (N, Cout+Ccat, 2H*2W) final lane-dense output (reshapes for free to NCHW)
    """
    _, m = x_ref.shape
    cout = p_ref.shape[0]
    img = h_up * w_up
    nw = kh * kw * cin

    x = x_ref[...]                                   # (Cin, M) f32 — also the (upsampled) identity
    params = p_ref[...]                              # one tiny vreg, loaded once
    w_all = params[:, :nw]
    gamma = params[:, nw:nw + 1]
    beta = params[:, nw + 1:nw + 2]

    # (1, M) spatial coordinates of every lane in the UPSAMPLED grid (no extra DMA inputs).
    lane = lax.broadcasted_iota(jnp.int32, (1, m), 1)
    col = _mod_const(lane, w_up)                     # J in [0, 2W)
    row = _mod_const(_div_const(lane, w_up), h_up)   # I in [0, 2H)

    # Hoisted boundary masks (3x3 -> only 4 distinct compares), kept at (1, M).
    col_ok, row_ok = {}, {}
    for kj in range(kw):
        dj = kj - kw // 2
        col_ok[dj] = None if dj == 0 else (col >= -2 * dj if dj < 0 else col < w_up - 2 * dj)
    for ki in range(kh):
        di = ki - kh // 2
        row_ok[di] = None if di == 0 else (row >= -2 * di if di < 0 else row < h_up - 2 * di)

    # Conv as 9 per-tap MXU dots accumulated in f32 vregs (no slab scratch, no slab reload).
    # In the upsampled domain a tap offset (di, dj) is a static lane roll of 2*di*2W + 2*dj;
    # wrapped lanes are exactly the ones zeroed by the boundary masks (== zero padding).
    acc = jnp.zeros((cout, m), jnp.float32)
    for ki in range(kh):
        di = ki - kh // 2
        for kj in range(kw):
            dj = kj - kw // 2
            off = (2 * di) * w_up + 2 * dj
            xs = x if off == 0 else pltpu.roll(x, shift=(-off) % m, axis=1)
            mask = col_ok[dj]
            if row_ok[di] is not None:
                mask = row_ok[di] if mask is None else jnp.logical_and(mask, row_ok[di])
            if mask is not None:
                xs = jnp.where(mask, xs, 0.0)
            kk = ki * kw + kj
            w_tap = w_all[:, kk * cin:(kk + 1) * cin]          # (Cout, Cin)
            acc = acc + jnp.dot(w_tap, xs, preferred_element_type=jnp.float32)

    # ResNet identity skip (stride==1, Cin==Cout -> identity = input) + ReLU.
    y = jnp.maximum(acc + x, 0.0)

    # BatchNorm2d, training mode, single-pass stats.  Each original value appears exactly 4x
    # in the upsampled lanes, so mean/var over M lanes equal the original batch statistics.
    inv_m = 1.0 / m
    s1 = jnp.sum(y, axis=1, keepdims=True)
    s2 = jnp.sum(y * y, axis=1, keepdims=True)
    mean = s1 * inv_m
    var = s2 * inv_m - mean * mean
    scale = gamma * lax.rsqrt(var + BN_EPS)
    shift = beta - mean * scale
    y = y * scale + shift                                      # (Cout, M)

    # Fused channel concat: per batch, pack [BN output | to_cat] into one aligned
    # (Cout+Ccat, 2H*2W) block and store it whole; per-batch lane slices are x128 aligned.
    for b in range(n):
        y_b = y[:, b * img:(b + 1) * img]                      # (Cout, 2H*2W)
        o_ref[b] = jnp.concatenate([y_b, cat_ref[b]], axis=0).astype(o_ref.dtype)


def convcat_forward(to_conv, to_cat, weight, gamma, beta):
    """ConvCat.forward(to_conv, to_cat).

    to_conv: (N, Cin, H, W)        NCHW, like PyTorch
    to_cat : (N, Ccat, 2H, 2W)
    weight : (Cout, Cin, KH, KW)   conv weight (bias=False)
    gamma, beta: (Cout,)           BatchNorm2d affine params
    returns: (N, Cout + Ccat, 2H, 2W)
    """
    n, cin, h, w = to_conv.shape
    cout, cin_w, kh, kw = weight.shape
    n2, ccat, h_up, w_up = to_cat.shape
    assert cin == cin_w and n2 == n and h_up == 2 * h and w_up == 2 * w
    assert cin == cout, "identity residual requires Cin == Cout at stride 1"
    assert (h_up * w_up) % 128 == 0, "per-image lane block must stay 128-lane aligned"
    m_up = n * h_up * w_up

    # Tiny XLA prologue: channel-first + nearest-2x upsample of the conv input
    # (8 KiB read / 32 KiB write at these shapes).  Replaces the old multi-fusion epilogue.
    x_cf = jnp.transpose(to_conv, (1, 0, 2, 3)).astype(jnp.float32)           # (Cin, N, H, W)
    x_up = jnp.broadcast_to(x_cf[:, :, :, None, :, None], (cin, n, h, 2, w, 2))
    x_up = x_up.reshape(cin, m_up)                                            # lanes = (n, I, J)

    # Pack all small parameters into ONE input (fewer DMA descriptors / semaphore waits).
    w_mat = jnp.transpose(weight, (0, 2, 3, 1)).reshape(cout, kh * kw * cin)  # tap-major/chan-minor
    params = jnp.concatenate(
        [w_mat, gamma.reshape(cout, 1), beta.reshape(cout, 1)], axis=1).astype(jnp.float32)

    cat = to_cat.reshape(n, ccat, h_up * w_up).astype(jnp.float32)            # free reshape

    kernel = functools.partial(_convcat_kernel, n=n, h_up=h_up, w_up=w_up,
                               kh=kh, kw=kw, cin=cin)

    in_bytes = 4 * (cin * m_up + cout * (kh * kw * cin + 2) + n * ccat * h_up * w_up)
    out_bytes = 4 * n * (cout + ccat) * h_up * w_up
    # Cap at 48 MiB: never request v7x's entire 64 MiB/TC physical VMEM.
    vmem_bytes = int(min(48 * 1024 * 1024, max(4 * 1024 * 1024, 8 * (in_bytes + out_bytes))))
    cost = pl.CostEstimate(
        flops=2 * m_up * (kh * kw * cin) * cout + 12 * m_up * cout,
        transcendentals=cout,
        bytes_accessed=in_bytes + out_bytes)

    # Grid-less single block: at this size per-grid-step overhead (~0.35 us) would dominate.
    # If shapes scale, add a ("parallel",) grid over batch/spatial with two-pass BN stats.
    out = pl.pallas_call(
        kernel,
        out_shape=jax.ShapeDtypeStruct((n, cout + ccat, h_up * w_up), jnp.float32),
        in_specs=[pl.BlockSpec(memory_space=pltpu.MemorySpace.VMEM)] * 3,
        out_specs=pl.BlockSpec(memory_space=pltpu.MemorySpace.VMEM),
        compiler_params=pltpu.CompilerParams(vmem_limit_bytes=vmem_bytes),
        cost_estimate=cost,
    )(x_up, params, cat)

    # Row-major contiguous -> free metadata reshape, no XLA data movement.
    return out.reshape(n, cout + ccat, h_up, w_up)


def convcat_reference(to_conv, to_cat, weight, gamma, beta):
    """Pure-JAX reference matching the PyTorch forward (training-mode BN)."""
    kh, kw = weight.shape[2], weight.shape[3]
    conv = lax.conv_general_dilated(
        to_conv, weight, window_strides=(1, 1),
        padding=((kh // 2, kh // 2), (kw // 2, kw // 2)),
        dimension_numbers=("NCHW", "OIHW", "NCHW"),
        precision=lax.Precision.HIGHEST)
    y = jax.nn.relu(conv + to_conv)
    mean = jnp.mean(y, axis=(0, 2, 3), keepdims=True)
    var = jnp.mean((y - mean) ** 2, axis=(0, 2, 3), keepdims=True)
    y = (y - mean) / jnp.sqrt(var + BN_EPS)
    y = y * gamma[None, :, None, None] + beta[None, :, None, None]
    y = jnp.repeat(jnp.repeat(y, 2, axis=2), 2, axis=3)
    return jnp.concatenate([y, to_cat], axis=1)


if __name__ == "__main__":
    key = jax.random.PRNGKey(0)
    k1, k2, k3 = jax.random.split(key, 3)

    # channels=(4, 4), size=(3, 3), stride=(1, 1), one conv layer, dropout=False; batch=2.
    N, C, H, W = 2, 4, 16, 16
    KH = KW = 3
    to_conv = jax.random.normal(k1, (N, C, H, W), jnp.float32)
    to_cat = jax.random.normal(k2, (N, C, 2 * H, 2 * W), jnp.float32)
    weight = jax.random.normal(k3, (C, C, KH, KW), jnp.float32) * 0.1
    gamma = jnp.ones((C,), jnp.float32)    # BatchNorm2d default affine init
    beta = jnp.zeros((C,), jnp.float32)

    out = jax.jit(convcat_forward)(to_conv, to_cat, weight, gamma, beta)
    jax.block_until_ready(out)

    ref = convcat_reference(to_conv, to_cat, weight, gamma, beta)
    assert out.shape == (N, 2 * C, 2 * H, 2 * W), out.shape
    np.testing.assert_allclose(np.asarray(out), np.asarray(ref), rtol=1e-2, atol=1e-2)

    print("KERNEL_OK")
</pallas_src>

<mosaic_0001>
module attributes {stable_mosaic.version = 11 : i64} {
  func.func @_convcat_kernel(%arg0: memref<4x2048xf32, #tpu.memory_space<vmem>>, %arg1: memref<4x38xf32, #tpu.memory_space<vmem>>, %arg2: memref<2x4x1024xf32, #tpu.memory_space<vmem>>, %arg3: memref<2x8x1024xf32, #tpu.memory_space<vmem>>) attributes {dimension_semantics = [], scalar_prefetch = 0 : i64, scratch_operands = 0 : i64, tpu.core_type = #tpu.core_type<tc>} {
    %c0 = arith.constant 0 : index
    %c0_0 = arith.constant 0 : index
    %0 = vector.load %arg0[%c0, %c0_0] : memref<4x2048xf32, #tpu.memory_space<vmem>>, vector<4x2048xf32>
    %c0_1 = arith.constant 0 : index
    %c0_2 = arith.constant 0 : index
    %1 = vector.load %arg1[%c0_1, %c0_2] : memref<4x38xf32, #tpu.memory_space<vmem>>, vector<4x38xf32>
    %2 = vector.extract_strided_slice %1 {offsets = [0, 0], sizes = [4, 36], strides = [1, 1]} : vector<4x38xf32> to vector<4x36xf32>
    %3 = vector.extract_strided_slice %1 {offsets = [0, 36], sizes = [4, 1], strides = [1, 1]} : vector<4x38xf32> to vector<4x1xf32>
    %4 = vector.extract_strided_slice %1 {offsets = [0, 37], sizes = [4, 1], strides = [1, 1]} : vector<4x38xf32> to vector<4x1xf32>
    %5 = tpu.iota {dimensions = array<i32: 1>} : vector<1x2048xi32>
    %c31_i32 = arith.constant 31 : i32
    %6 = vector.broadcast %c31_i32 : i32 to vector<1x2048xi32>
    %7 = arith.andi %5, %6 : vector<1x2048xi32>
    %c5_i32 = arith.constant 5 : i32
    %8 = vector.broadcast %c5_i32 : i32 to vector<1x2048xi32>
    %9 = arith.shrsi %5, %8 : vector<1x2048xi32>
    %c31_i32_3 = arith.constant 31 : i32
    %10 = vector.broadcast %c31_i32_3 : i32 to vector<1x2048xi32>
    %11 = arith.andi %9, %10 : vector<1x2048xi32>
    %c2_i32 = arith.constant 2 : i32
    %12 = vector.broadcast %c2_i32 : i32 to vector<1x2048xi32>
    %13 = arith.cmpi sge, %7, %12 : vector<1x2048xi32>
    %c30_i32 = arith.constant 30 : i32
    %14 = vector.broadcast %c30_i32 : i32 to vector<1x2048xi32>
    %15 = arith.cmpi slt, %7, %14 : vector<1x2048xi32>
    %c2_i32_4 = arith.constant 2 : i32
    %16 = vector.broadcast %c2_i32_4 : i32 to vector<1x2048xi32>
    %17 = arith.cmpi sge, %11, %16 : vector<1x2048xi32>
    %c30_i32_5 = arith.constant 30 : i32
    %18 = vector.broadcast %c30_i32_5 : i32 to vector<1x2048xi32>
    %19 = arith.cmpi slt, %11, %18 : vector<1x2048xi32>
    %cst = arith.constant 0.000000e+00 : f32
    %20 = vector.broadcast %cst : f32 to vector<4x2048xf32>
    %c66_i32 = arith.constant 66 : i32
    %21 = tpu.dynamic_rotate %0 by %c66_i32 dim 1 : vector<4x2048xf32>, i32 -> vector<4x2048xf32>
    %22 = arith.andi %13, %17 : vector<1x2048xi1>
    %cst_6 = arith.constant 0.000000e+00 : f32
    %23 = vector.shape_cast %22 : vector<1x2048xi1> to vector<1x2048xi1>
    %24 = vector.broadcast %23 : vector<1x2048xi1> to vector<4x2048xi1>
    %25 = vector.broadcast %cst_6 : f32 to vector<4x2048xf32>
    %26 = arith.select %24, %21, %25 : vector<4x2048xi1>, vector<4x2048xf32>
    %27 = vector.extract_strided_slice %2 {offsets = [0, 0], sizes = [4, 4], strides = [1, 1]} : vector<4x36xf32> to vector<4x4xf32>
    %cst_7 = arith.constant dense<0.000000e+00> : vector<4x2048xf32>
    %28 = tpu.matmul %27, %26, %cst_7 {dimension_numbers = #tpu.dot_dimension_numbers<[1], [0], [0], [1], [0, 0, 1, 1], [], []>} : vector<4x4xf32>, vector<4x2048xf32>, vector<4x2048xf32> -> vector<4x2048xf32>
    %29 = arith.addf %20, %28 : vector<4x2048xf32>
    %c64_i32 = arith.constant 64 : i32
    %30 = tpu.dynamic_rotate %0 by %c64_i32 dim 1 : vector<4x2048xf32>, i32 -> vector<4x2048xf32>
    %cst_8 = arith.constant 0.000000e+00 : f32
    %31 = vector.shape_cast %17 : vector<1x2048xi1> to vector<1x2048xi1>
    %32 = vector.broadcast %31 : vector<1x2048xi1> to vector<4x2048xi1>
    %33 = vector.broadcast %cst_8 : f32 to vector<4x2048xf32>
    %34 = arith.select %32, %30, %33 : vector<4x2048xi1>, vector<4x2048xf32>
    %35 = vector.extract_strided_slice %2 {offsets = [0, 4], sizes = [4, 4], strides = [1, 1]} : vector<4x36xf32> to vector<4x4xf32>
    %cst_9 = arith.constant dense<0.000000e+00> : vector<4x2048xf32>
    %36 = tpu.matmul %35, %34, %cst_9 {dimension_numbers = #tpu.dot_dimension_numbers<[1], [0], [0], [1], [0, 0, 1, 1], [], []>} : vector<4x4xf32>, vector<4x2048xf32>, vector<4x2048xf32> -> vector<4x2048xf32>
    %37 = arith.addf %29, %36 : vector<4x2048xf32>
    %c62_i32 = arith.constant 62 : i32
    %38 = tpu.dynamic_rotate %0 by %c62_i32 dim 1 : vector<4x2048xf32>, i32 -> vector<4x2048xf32>
    %39 = arith.andi %15, %17 : vector<1x2048xi1>
    %cst_10 = arith.constant 0.000000e+00 : f32
    %40 = vector.shape_cast %39 : vector<1x2048xi1> to vector<1x2048xi1>
    %41 = vector.broadcast %40 : vector<1x2048xi1> to vector<4x2048xi1>
    %42 = vector.broadcast %cst_10 : f32 to vector<4x2048xf32>
    %43 = arith.select %41, %38, %42 : vector<4x2048xi1>, vector<4x2048xf32>
    %44 = vector.extract_strided_slice %2 {offsets = [0, 8], sizes = [4, 4], strides = [1, 1]} : vector<4x36xf32> to vector<4x4xf32>
    %cst_11 = arith.constant dense<0.000000e+00> : vector<4x2048xf32>
    %45 = tpu.matmul %44, %43, %cst_11 {dimension_numbers = #tpu.dot_dimension_numbers<[1], [0], [0], [1], [0, 0, 1, 1], [], []>} : vector<4x4xf32>, vector<4x2048xf32>, vector<4x2048xf32> -> vector<4x2048xf32>
    %46 = arith.addf %37, %45 : vector<4x2048xf32>
    %c2_i32_12 = arith.constant 2 : i32
    %47 = tpu.dynamic_rotate %0 by %c2_i32_12 dim 1 : vector<4x2048xf32>, i32 -> vector<4x2048xf32>
    %cst_13 = arith.constant 0.000000e+00 : f32
    %48 = vector.shape_cast %13 : vector<1x2048xi1> to vector<1x2048xi1>
    %49 = vector.broadcast %48 : vector<1x2048xi1> to vector<4x2048xi1>
    %50 = vector.broadcast %cst_13 : f32 to vector<4x2048xf32>
    %51 = arith.select %49, %47, %50 : vector<4x2048xi1>, vector<4x2048xf32>
    %52 = vector.extract_strided_slice %2 {offsets = [0, 12], sizes = [4, 4], strides = [1, 1]} : vector<4x36xf32> to vector<4x4xf32>
    %cst_14 = arith.constant dense<0.000000e+00> : vector<4x2048xf32>
    %53 = tpu.matmul %52, %51, %cst_14 {dimension_numbers = #tpu.dot_dimension_numbers<[1], [0], [0], [1], [0, 0, 1, 1], [], []>} : vector<4x4xf32>, vector<4x2048xf32>, vector<4x2048xf32> -> vector<4x2048xf32>
    %54 = arith.addf %46, %53 : vector<4x2048xf32>
    %55 = vector.extract_strided_slice %2 {offsets = [0, 16], sizes = [4, 4], strides = [1, 1]} : vector<4x36xf32> to vector<4x4xf32>
    %cst_15 = arith.constant dense<0.000000e+00> : vector<4x2048xf32>
    %56 = tpu.matmul %55, %0, %cst_15 {dimension_numbers = #tpu.dot_dimension_numbers<[1], [0], [0], [1], [0, 0, 1, 1], [], []>} : vector<4x4xf32>, vector<4x2048xf32>, vector<4x2048xf32> -> vector<4x2048xf32>
    %57 = arith.addf %54, %56 : vector<4x2048xf32>
    %c2046_i32 = arith.constant 2046 : i32
    %58 = tpu.dynamic_rotate %0 by %c2046_i32 dim 1 : vector<4x2048xf32>, i32 -> vector<4x2048xf32>
    %cst_16 = arith.constant 0.000000e+00 : f32
    %59 = vector.shape_cast %15 : vector<1x2048xi1> to vector<1x2048xi1>
    %60 = vector.broadcast %59 : vector<1x2048xi1> to vector<4x2048xi1>
    %61 = vector.broadcast %cst_16 : f32 to vector<4x2048xf32>
    %62 = arith.select %60, %58, %61 : vector<4x2048xi1>, vector<4x2048xf32>
    %63 = vector.extract_strided_slice %2 {offsets = [0, 20], sizes = [4, 4], strides = [1, 1]} : vector<4x36xf32> to vector<4x4xf32>
    %cst_17 = arith.constant dense<0.000000e+00> : vector<4x2048xf32>
    %64 = tpu.matmul %63, %62, %cst_17 {dimension_numbers = #tpu.dot_dimension_numbers<[1], [0], [0], [1], [0, 0, 1, 1], [], []>} : vector<4x4xf32>, vector<4x2048xf32>, vector<4x2048xf32> -> vector<4x2048xf32>
    %65 = arith.addf %57, %64 : vector<4x2048xf32>
    %c1986_i32 = arith.constant 1986 : i32
    %66 = tpu.dynamic_rotate %0 by %c1986_i32 dim 1 : vector<4x2048xf32>, i32 -> vector<4x2048xf32>
    %67 = arith.andi %13, %19 : vector<1x2048xi1>
    %cst_18 = arith.constant 0.000000e+00 : f32
    %68 = vector.shape_cast %67 : vector<1x2048xi1> to vector<1x2048xi1>
    %69 = vector.broadcast %68 : vector<1x2048xi1> to vector<4x2048xi1>
    %70 = vector.broadcast %cst_18 : f32 to vector<4x2048xf32>
    %71 = arith.select %69, %66, %70 : vector<4x2048xi1>, vector<4x2048xf32>
    %72 = vector.extract_strided_slice %2 {offsets = [0, 24], sizes = [4, 4], strides = [1, 1]} : vector<4x36xf32> to vector<4x4xf32>
    %cst_19 = arith.constant dense<0.000000e+00> : vector<4x2048xf32>
    %73 = tpu.matmul %72, %71, %cst_19 {dimension_numbers = #tpu.dot_dimension_numbers<[1], [0], [0], [1], [0, 0, 1, 1], [], []>} : vector<4x4xf32>, vector<4x2048xf32>, vector<4x2048xf32> -> vector<4x2048xf32>
    %74 = arith.addf %65, %73 : vector<4x2048xf32>
    %c1984_i32 = arith.constant 1984 : i32
    %75 = tpu.dynamic_rotate %0 by %c1984_i32 dim 1 : vector<4x2048xf32>, i32 -> vector<4x2048xf32>
    %cst_20 = arith.constant 0.000000e+00 : f32
    %76 = vector.shape_cast %19 : vector<1x2048xi1> to vector<1x2048xi1>
    %77 = vector.broadcast %76 : vector<1x2048xi1> to vector<4x2048xi1>
    %78 = vector.broadcast %cst_20 : f32 to vector<4x2048xf32>
    %79 = arith.select %77, %75, %78 : vector<4x2048xi1>, vector<4x2048xf32>
    %80 = vector.extract_strided_slice %2 {offsets = [0, 28], sizes = [4, 4], strides = [1, 1]} : vector<4x36xf32> to vector<4x4xf32>
    %cst_21 = arith.constant dense<0.000000e+00> : vector<4x2048xf32>
    %81 = tpu.matmul %80, %79, %cst_21 {dimension_numbers = #tpu.dot_dimension_numbers<[1], [0], [0], [1], [0, 0, 1, 1], [], []>} : vector<4x4xf32>, vector<4x2048xf32>, vector<4x2048xf32> -> vector<4x2048xf32>
    %82 = arith.addf %74, %81 : vector<4x2048xf32>
    %c1982_i32 = arith.constant 1982 : i32
    %83 = tpu.dynamic_rotate %0 by %c1982_i32 dim 1 : vector<4x2048xf32>, i32 -> vector<4x2048xf32>
    %84 = arith.andi %15, %19 : vector<1x2048xi1>
    %cst_22 = arith.constant 0.000000e+00 : f32
    %85 = vector.shape_cast %84 : vector<1x2048xi1> to vector<1x2048xi1>
    %86 = vector.broadcast %85 : vector<1x2048xi1> to vector<4x2048xi1>
    %87 = vector.broadcast %cst_22 : f32 to vector<4x2048xf32>
    %88 = arith.select %86, %83, %87 : vector<4x2048xi1>, vector<4x2048xf32>
    %89 = vector.extract_strided_slice %2 {offsets = [0, 32], sizes = [4, 4], strides = [1, 1]} : vector<4x36xf32> to vector<4x4xf32>
    %cst_23 = arith.constant dense<0.000000e+00> : vector<4x2048xf32>
    %90 = tpu.matmul %89, %88, %cst_23 {dimension_numbers = #tpu.dot_dimension_numbers<[1], [0], [0], [1], [0, 0, 1, 1], [], []>} : vector<4x4xf32>, vector<4x2048xf32>, vector<4x2048xf32> -> vector<4x2048xf32>
    %91 = arith.addf %82, %90 : vector<4x2048xf32>
    %92 = arith.addf %91, %0 : vector<4x2048xf32>
    %cst_24 = arith.constant 0.000000e+00 : f32
    %93 = vector.broadcast %cst_24 : f32 to vector<4x2048xf32>
    %94 = arith.maximumf %92, %93 : vector<4x2048xf32>
    %cst_25 = arith.constant dense<0.000000e+00> : vector<4xf32>
    %95 = vector.multi_reduction <add>, %94, %cst_25 [1] : vector<4x2048xf32> to vector<4xf32>
    %96 = vector.shape_cast %95 : vector<4xf32> to vector<4x1xf32>
    %97 = arith.mulf %94, %94 : vector<4x2048xf32>
    %cst_26 = arith.constant dense<0.000000e+00> : vector<4xf32>
    %98 = vector.multi_reduction <add>, %97, %cst_26 [1] : vector<4x2048xf32> to vector<4xf32>
    %99 = vector.shape_cast %98 : vector<4xf32> to vector<4x1xf32>
    %cst_27 = arith.constant 4.8828125E-4 : f32
    %100 = vector.broadcast %cst_27 : f32 to vector<4x1xf32>
    %101 = arith.mulf %96, %100 : vector<4x1xf32>
    %cst_28 = arith.constant 4.8828125E-4 : f32
    %102 = vector.broadcast %cst_28 : f32 to vector<4x1xf32>
    %103 = arith.mulf %99, %102 : vector<4x1xf32>
    %104 = arith.mulf %101, %101 : vector<4x1xf32>
    %105 = arith.subf %103, %104 : vector<4x1xf32>
    %cst_29 = arith.constant 9.99999974E-6 : f32
    %106 = vector.broadcast %cst_29 : f32 to vector<4x1xf32>
    %107 = arith.addf %105, %106 : vector<4x1xf32>
    %108 = math.rsqrt %107 : vector<4x1xf32>
    %109 = arith.mulf %3, %108 : vector<4x1xf32>
    %110 = arith.mulf %101, %109 : vector<4x1xf32>
    %111 = arith.subf %4, %110 : vector<4x1xf32>
    %112 = vector.broadcast %109 : vector<4x1xf32> to vector<4x2048xf32>
    %113 = arith.mulf %94, %112 : vector<4x2048xf32>
    %114 = vector.broadcast %111 : vector<4x1xf32> to vector<4x2048xf32>
    %115 = arith.addf %113, %114 : vector<4x2048xf32>
    %116 = vector.extract_strided_slice %115 {offsets = [0, 0], sizes = [4, 1024], strides = [1, 1]} : vector<4x2048xf32> to vector<4x1024xf32>
    %c0_30 = arith.constant 0 : index
    %c0_31 = arith.constant 0 : index
    %c0_32 = arith.constant 0 : index
    %117 = vector.load %arg2[%c0_30, %c0_31, %c0_32] : memref<2x4x1024xf32, #tpu.memory_space<vmem>>, vector<1x4x1024xf32>
    %118 = vector.shape_cast %117 : vector<1x4x1024xf32> to vector<4x1024xf32>
    %119 = tpu.concatenate %116, %118 in 0 : vector<4x1024xf32>, vector<4x1024xf32> -> vector<8x1024xf32>
    %c0_33 = arith.constant 0 : index
    %c0_34 = arith.constant 0 : index
    %c0_35 = arith.constant 0 : index
    %120 = vector.load %arg3[%c0_33, %c0_34, %c0_35] : memref<2x8x1024xf32, #tpu.memory_space<vmem>>, vector<1x8x1024xf32>
    %121 = vector.shape_cast %120 : vector<1x8x1024xf32> to vector<8x1024xf32>
    %122 = vector.shape_cast %119 : vector<8x1024xf32> to vector<1x8x1024xf32>
    tpu.vector_store %arg3[%c0_33, %c0_34, %c0_35], %122 {strides = array<i32>} : memref<2x8x1024xf32, #tpu.memory_space<vmem>>, vector<1x8x1024xf32>,
    %123 = vector.extract_strided_slice %115 {offsets = [0, 1024], sizes = [4, 1024], strides = [1, 1]} : vector<4x2048xf32> to vector<4x1024xf32>
    %c1 = arith.constant 1 : index
    %c0_36 = arith.constant 0 : index
    %c0_37 = arith.constant 0 : index
    %124 = vector.load %arg2[%c1, %c0_36, %c0_37] : memref<2x4x1024xf32, #tpu.memory_space<vmem>>, vector<1x4x1024xf32>
    %125 = vector.shape_cast %124 : vector<1x4x1024xf32> to vector<4x1024xf32>
    %126 = tpu.concatenate %123, %125 in 0 : vector<4x1024xf32>, vector<4x1024xf32> -> vector<8x1024xf32>
    %c1_38 = arith.constant 1 : index
    %c0_39 = arith.constant 0 : index
    %c0_40 = arith.constant 0 : index
    %127 = vector.load %arg3[%c1_38, %c0_39, %c0_40] : memref<2x8x1024xf32, #tpu.memory_space<vmem>>, vector<1x8x1024xf32>
    %128 = vector.shape_cast %127 : vector<1x8x1024xf32> to vector<8x1024xf32>
    %129 = vector.shape_cast %126 : vector<8x1024xf32> to vector<1x8x1024xf32>
    tpu.vector_store %arg3[%c1_38, %c0_39, %c0_40], %129 {strides = array<i32>} : memref<2x8x1024xf32, #tpu.memory_space<vmem>>, vector<1x8x1024xf32>,
    return
  }
}

</mosaic_0001>

<llo_original>
// kernel: convcat_forward.1
$region0: #{convcat_forward.1}
  #allocation0 [shape = 'u32[]', space=smem, size = 0x4, offset = 0x4, fixed_abs, tag = 'smem constant byte address 0x4 - core index']
  #allocation1 [shape = 'u32[144,128]{1,0:T(1,128)}', space=vmem, size = 0x12000, scoped, tag = 'internal scratch']
  %s0 = inlined_call_operand.vmem [shape: f32[4,2048], index: 0, kind: input, shape index: {}]
  %s1 = inlined_call_operand.vmem [shape: f32[4,38], index: 1, kind: input, shape index: {}]
  %s2 = inlined_call_operand.vmem [shape: f32[2,4,1024], index: 2, kind: input, shape index: {}]
  %s3 = inlined_call_operand.vmem [shape: f32[2,8,1024], index: 3, kind: output, shape index: {}]
  %s4 = sld [smem:[#allocation0]]
  $region22: #{convcat_forward.1} parent=0
    _
  %s6 = ssub.s32 1, %s4
  %s7 = scalar_select 0, %s6, %s4
  // Predicated region
  $region2: #{convcat_forward.1} parent=0 // pred_check
    _
  $region3: #{convcat_forward.1} parent=0 // pred_check_branch
    %9 = sbr.rel (0) target = $region5
  $region4: #{convcat_forward.1} parent=0 // pred_region
    _
  $region5: #{convcat_forward.1} parent=0 // pred_fallthru
    _
  // Predicated region
  $region6: #{convcat_forward.1} parent=0 // pred_check
    _
  $region7: #{convcat_forward.1} parent=0 // pred_check_branch
    %11 = sbr.rel (0) target = $region9
  $region8: #{convcat_forward.1} parent=0 // pred_region
    _
  $region9: #{convcat_forward.1} parent=0 // pred_fallthru
    _
  // Predicated region
  $region10: #{convcat_forward.1} parent=0 // pred_check
    _
  $region11: #{convcat_forward.1} parent=0 // pred_check_branch
    %13 = sbr.rel (0) target = $region13
  $region12: #{convcat_forward.1} parent=0 // pred_region
    _
  $region13: #{convcat_forward.1} parent=0 // pred_fallthru
    _
  %v14 = vld [vmem:[%s0] sm:$0xff]
  %v15 = vld [vmem:[%s0 + $0x8] sm:$0xff]
  %v16 = vld [vmem:[%s0 + $0x10] sm:$0xff]
  %v17 = vld [vmem:[%s0 + $0x18] sm:$0xff]
  %v18 = vld [vmem:[%s0 + $0x20] sm:$0xff]
  %v19 = vld [vmem:[%s0 + $0x28] sm:$0xff]
  %v20 = vld [vmem:[%s0 + $0x30] sm:$0xff]
  %v21 = vld [vmem:[%s0 + $0x38] sm:$0xff]
  %v22 = vld [vmem:[%s1] sm:$0xf]
  %v23 = vlaneseq
  %v24 = vand.u32 %v23, 127
  %v25 = vadd.s32 %v24, 128
  %v26 = vadd.s32 %v24, 256
  %v27 = vadd.s32 %v24, 384
  %v28 = vadd.s32 %v24, 512
  %v29 = vadd.s32 %v24, 640
  %v30 = vadd.s32 %v24, 768
  %v31 = vadd.s32 %v24, 896
  %v32 = vadd.s32 %v24, 1024
  %v33 = vadd.s32 %v24, 1152
  %v34 = vadd.s32 %v24, 1280
  %v35 = vadd.s32 %v24, 1408
  %v36 = vadd.s32 %v24, 1536
  %v37 = vadd.s32 %v24, 1664
  %v38 = vadd.s32 %v24, 1792
  %v39 = vadd.s32 %v24, 1920
  %v40 = vand.u32 %v24, 31
  %v41 = vand.u32 %v25, 31
  %v42 = vand.u32 %v26, 31
  %v43 = vand.u32 %v27, 31
  %v44 = vand.u32 %v28, 31
  %v45 = vand.u32 %v29, 31
  %v46 = vand.u32 %v30, 31
  %v47 = vand.u32 %v31, 31
  %v48 = vand.u32 %v32, 31
  %v49 = vand.u32 %v33, 31
  %v50 = vand.u32 %v34, 31
  %v51 = vand.u32 %v35, 31
  %v52 = vand.u32 %v36, 31
  %v53 = vand.u32 %v37, 31
  %v54 = vand.u32 %v38, 31
  %v55 = vand.u32 %v39, 31
  %v56 = vshra.s32 %v24, 5
  %v57 = vshra.s32 %v25, 5
  %v58 = vshra.s32 %v26, 5
  %v59 = vshra.s32 %v27, 5
  %v60 = vshra.s32 %v28, 5
  %v61 = vshra.s32 %v29, 5
  %v62 = vshra.s32 %v30, 5
  %v63 = vshra.s32 %v31, 5
  %v64 = vshra.s32 %v32, 5
  %v65 = vshra.s32 %v33, 5
  %v66 = vshra.s32 %v34, 5
  %v67 = vshra.s32 %v35, 5
  %v68 = vshra.s32 %v36, 5
  %v69 = vshra.s32 %v37, 5
  %v70 = vshra.s32 %v38, 5
  %v71 = vshra.s32 %v39, 5
  %v72 = vand.u32 %v56, 31
  %v73 = vand.u32 %v57, 31
  %v74 = vand.u32 %v58, 31
  %v75 = vand.u32 %v59, 31
  %v76 = vand.u32 %v60, 31
  %v77 = vand.u32 %v61, 31
  %v78 = vand.u32 %v62, 31
  %v79 = vand.u32 %v63, 31
  %v80 = vand.u32 %v64, 31
  %v81 = vand.u32 %v65, 31
  %v82 = vand.u32 %v66, 31
  %v83 = vand.u32 %v67, 31
  %v84 = vand.u32 %v68, 31
  %v85 = vand.u32 %v69, 31
  %v86 = vand.u32 %v70, 31
  %v87 = vand.u32 %v71, 31
  %vm88 = vcmp.ge.s32.totalorder %v40, 2
  %vm89 = vcmp.ge.s32.totalorder %v41, 2
  %vm90 = vcmp.ge.s32.totalorder %v42, 2
  %vm91 = vcmp.ge.s32.totalorder %v43, 2
  %vm92 = vcmp.ge.s32.totalorder %v44, 2
  %vm93 = vcmp.ge.s32.totalorder %v45, 2
  %vm94 = vcmp.ge.s32.totalorder %v46, 2
  %vm95 = vcmp.ge.s32.totalorder %v47, 2
  %vm96 = vcmp.ge.s32.totalorder %v48, 2
  %vm97 = vcmp.ge.s32.totalorder %v49, 2
  %vm98 = vcmp.ge.s32.totalorder %v50, 2
  %vm99 = vcmp.ge.s32.totalorder %v51, 2
  %vm100 = vcmp.ge.s32.totalorder %v52, 2
  %vm101 = vcmp.ge.s32.totalorder %v53, 2
  %vm102 = vcmp.ge.s32.totalorder %v54, 2
  %vm103 = vcmp.ge.s32.totalorder %v55, 2
  %vm104 = vcmp.lt.s32.totalorder %v40, 30
  %vm105 = vcmp.lt.s32.totalorder %v41, 30
  %vm106 = vcmp.lt.s32.totalorder %v42, 30
  %vm107 = vcmp.lt.s32.totalorder %v43, 30
  %vm108 = vcmp.lt.s32.totalorder %v44, 30
  %vm109 = vcmp.lt.s32.totalorder %v45, 30
  %vm110 = vcmp.lt.s32.totalorder %v46, 30
  %vm111 = vcmp.lt.s32.totalorder %v47, 30
  %vm112 = vcmp.lt.s32.totalorder %v48, 30
  %vm113 = vcmp.lt.s32.totalorder %v49, 30
  %vm114 = vcmp.lt.s32.totalorder %v50, 30
  %vm115 = vcmp.lt.s32.totalorder %v51, 30
  %vm116 = vcmp.lt.s32.totalorder %v52, 30
  %vm117 = vcmp.lt.s32.totalorder %v53, 30
  %vm118 = vcmp.lt.s32.totalorder %v54, 30
  %vm119 = vcmp.lt.s32.totalorder %v55, 30
  %vm120 = vcmp.ge.s32.totalorder %v72, 2
  %vm121 = vcmp.ge.s32.totalorder %v73, 2
  %vm122 = vcmp.ge.s32.totalorder %v74, 2
  %vm123 = vcmp.ge.s32.totalorder %v75, 2
  %vm124 = vcmp.ge.s32.totalorder %v76, 2
  %vm125 = vcmp.ge.s32.totalorder %v77, 2
  %vm126 = vcmp.ge.s32.totalorder %v78, 2
  %vm127 = vcmp.ge.s32.totalorder %v79, 2
  %vm128 = vcmp.ge.s32.totalorder %v80, 2
  %vm129 = vcmp.ge.s32.totalorder %v81, 2
  %vm130 = vcmp.ge.s32.totalorder %v82, 2
  %vm131 = vcmp.ge.s32.totalorder %v83, 2
  %vm132 = vcmp.ge.s32.totalorder %v84, 2
  %vm133 = vcmp.ge.s32.totalorder %v85, 2
  %vm134 = vcmp.ge.s32.totalorder %v86, 2
  %vm135 = vcmp.ge.s32.totalorder %v87, 2
  %vm136 = vcmp.lt.s32.totalorder %v72, 30
  %vm137 = vcmp.lt.s32.totalorder %v73, 30
  %vm138 = vcmp.lt.s32.totalorder %v74, 30
  %vm139 = vcmp.lt.s32.totalorder %v75, 30
  %vm140 = vcmp.lt.s32.totalorder %v76, 30
  %vm141 = vcmp.lt.s32.totalorder %v77, 30
  %vm142 = vcmp.lt.s32.totalorder %v78, 30
  %vm143 = vcmp.lt.s32.totalorder %v79, 30
  %vm144 = vcmp.lt.s32.totalorder %v80, 30
  %vm145 = vcmp.lt.s32.totalorder %v81, 30
  %vm146 = vcmp.lt.s32.totalorder %v82, 30
  %vm147 = vcmp.lt.s32.totalorder %v83, 30
  %vm148 = vcmp.lt.s32.totalorder %v84, 30
  %vm149 = vcmp.lt.s32.totalorder %v85, 30
  %vm150 = vcmp.lt.s32.totalorder %v86, 30
  %vm151 = vcmp.lt.s32.totalorder %v87, 30
  %v160 = vcombine.high %v14, %v14
  %v161 = vcombine.high %v15, %v15
  %v162 = vcombine.high %v16, %v16
  %v163 = vcombine.high %v17, %v17
  %v164 = vcombine.high %v18, %v18
  %v165 = vcombine.high %v19, %v19
  %v166 = vcombine.high %v20, %v20
  %v167 = vcombine.high %v21, %v21
  %176 = vrot.lane.b32.xlu0 %v14, 66
  %v177 = vpop.permute.xlu0 %176
  %178 = vrot.lane.b32.xlu0 %v160, 66
  %v179 = vpop.permute.xlu0 %178
  %180 = vrot.lane.b32.xlu0 %v15, 66
  %v181 = vpop.permute.xlu0 %180
  %182 = vrot.lane.b32.xlu0 %v161, 66
  %v183 = vpop.permute.xlu0 %182
  %184 = vrot.lane.b32.xlu0 %v16, 66
  %v185 = vpop.permute.xlu0 %184
  %186 = vrot.lane.b32.xlu0 %v162, 66
  %v187 = vpop.permute.xlu0 %186
  %188 = vrot.lane.b32.xlu0 %v17, 66
  %v189 = vpop.permute.xlu0 %188
  %190 = vrot.lane.b32.xlu0 %v163, 66
  %v191 = vpop.permute.xlu0 %190
  %192 = vrot.lane.b32.xlu0 %v18, 66
  %v193 = vpop.permute.xlu0 %192
  %194 = vrot.lane.b32.xlu0 %v164, 66
  %v195 = vpop.permute.xlu0 %194
  %196 = vrot.lane.b32.xlu0 %v19, 66
  %v197 = vpop.permute.xlu0 %196
  %198 = vrot.lane.b32.xlu0 %v165, 66
  %v199 = vpop.permute.xlu0 %198
  %200 = vrot.lane.b32.xlu0 %v20, 66
  %v201 = vpop.permute.xlu0 %200
  %202 = vrot.lane.b32.xlu0 %v166, 66
  %v203 = vpop.permute.xlu0 %202
  %204 = vrot.lane.b32.xlu0 %v21, 66
  %v205 = vpop.permute.xlu0 %204
  %206 = vrot.lane.b32.xlu0 %v167, 66
  %v207 = vpop.permute.xlu0 %206
  %vm208 = vcmp.lt.s32.totalorder %v24, 66
  %v209 = vsel %vm208, %v205, %v207
  %v210 = vsel %vm208, %v203, %v205
  %v211 = vsel %vm208, %v201, %v203
  %v212 = vsel %vm208, %v199, %v201
  %v213 = vsel %vm208, %v197, %v199
  %v214 = vsel %vm208, %v195, %v197
  %v215 = vsel %vm208, %v193, %v195
  %v216 = vsel %vm208, %v191, %v193
  %v217 = vsel %vm208, %v189, %v191
  %v218 = vsel %vm208, %v187, %v189
  %v219 = vsel %vm208, %v185, %v187
  %v220 = vsel %vm208, %v183, %v185
  %v221 = vsel %vm208, %v181, %v183
  %v222 = vsel %vm208, %v179, %v181
  %v223 = vsel %vm208, %v177, %v179
  %v224 = vsel %vm208, %v207, %v177
  %vm225 = vmand %vm88, %vm120
  %vm226 = vmand %vm89, %vm121
  %vm227 = vmand %vm90, %vm122
  %vm228 = vmand %vm91, %vm123
  %vm229 = vmand %vm92, %vm124
  %vm230 = vmand %vm93, %vm125
  %vm231 = vmand %vm94, %vm126
  %vm232 = vmand %vm95, %vm127
  %vm233 = vmand %vm96, %vm128
  %vm234 = vmand %vm97, %vm129
  %vm235 = vmand %vm98, %vm130
  %vm236 = vmand %vm99, %vm131
  %vm237 = vmand %vm100, %vm132
  %vm238 = vmand %vm101, %vm133
  %vm239 = vmand %vm102, %vm134
  %vm240 = vmand %vm103, %vm135
  %v241 = vsel %vm225, 1, 0
  %v242 = vsel %vm226, 1, 0
  %v243 = vsel %vm227, 1, 0
  %v244 = vsel %vm228, 1, 0
  %v245 = vsel %vm229, 1, 0
  %v246 = vsel %vm230, 1, 0
  %v247 = vsel %vm231, 1, 0
  %v248 = vsel %vm232, 1, 0
  %v249 = vsel %vm233, 1, 0
  %v250 = vsel %vm234, 1, 0
  %v251 = vsel %vm235, 1, 0
  %v252 = vsel %vm236, 1, 0
  %v253 = vsel %vm237, 1, 0
  %v254 = vsel %vm238, 1, 0
  %v255 = vsel %vm239, 1, 0
  %v256 = vsel %vm240, 1, 0
  %vm257 = vcmp.eq.s32.totalorder %v241, 1
  %vm258 = vcmp.eq.s32.totalorder %v242, 1
  %vm259 = vcmp.eq.s32.totalorder %v243, 1
  %vm260 = vcmp.eq.s32.totalorder %v244, 1
  %vm261 = vcmp.eq.s32.totalorder %v245, 1
  %vm262 = vcmp.eq.s32.totalorder %v246, 1
  %vm263 = vcmp.eq.s32.totalorder %v247, 1
  %vm264 = vcmp.eq.s32.totalorder %v248, 1
  %vm265 = vcmp.eq.s32.totalorder %v249, 1
  %vm266 = vcmp.eq.s32.totalorder %v250, 1
  %vm267 = vcmp.eq.s32.totalorder %v251, 1
  %vm268 = vcmp.eq.s32.totalorder %v252, 1
  %vm269 = vcmp.eq.s32.totalorder %v253, 1
  %vm270 = vcmp.eq.s32.totalorder %v254, 1
  %vm271 = vcmp.eq.s32.totalorder %v255, 1
  %vm272 = vcmp.eq.s32.totalorder %v256, 1
  %v273 = vsel %vm257, %v224, 0.0
  %v274 = vsel %vm258, %v223, 0.0
  %v275 = vsel %vm259, %v222, 0.0
  %v276 = vsel %vm260, %v221, 0.0
  %v277 = vsel %vm261, %v220, 0.0
  %v278 = vsel %vm262, %v219, 0.0
  %v279 = vsel %vm263, %v218, 0.0
  %v280 = vsel %vm264, %v217, 0.0
  %v281 = vsel %vm265, %v216, 0.0
  %v282 = vsel %vm266, %v215, 0.0
  %v283 = vsel %vm267, %v214, 0.0
  %v284 = vsel %vm268, %v213, 0.0
  %v285 = vsel %vm269, %v212, 0.0
  %v286 = vsel %vm270, %v211, 0.0
  %v287 = vsel %vm271, %v210, 0.0
  %v288 = vsel %vm272, %v209, 0.0
  %289 = vrot.lane.b32.xlu0 %v14, 64
  %v290 = vpop.permute.xlu0 %289
  %291 = vrot.lane.b32.xlu0 %v160, 64
  %v292 = vpop.permute.xlu0 %291
  %293 = vrot.lane.b32.xlu0 %v15, 64
  %v294 = vpop.permute.xlu0 %293
  %295 = vrot.lane.b32.xlu0 %v161, 64
  %v296 = vpop.permute.xlu0 %295
  %297 = vrot.lane.b32.xlu0 %v16, 64
  %v298 = vpop.permute.xlu0 %297
  %299 = vrot.lane.b32.xlu0 %v162, 64
  %v300 = vpop.permute.xlu0 %299
  %301 = vrot.lane.b32.xlu0 %v17, 64
  %v302 = vpop.permute.xlu0 %301
  %303 = vrot.lane.b32.xlu0 %v163, 64
  %v304 = vpop.permute.xlu0 %303
  %305 = vrot.lane.b32.xlu0 %v18, 64
  %v306 = vpop.permute.xlu0 %305
  %307 = vrot.lane.b32.xlu0 %v164, 64
  %v308 = vpop.permute.xlu0 %307
  %309 = vrot.lane.b32.xlu0 %v19, 64
  %v310 = vpop.permute.xlu0 %309
  %311 = vrot.lane.b32.xlu0 %v165, 64
  %v312 = vpop.permute.xlu0 %311
  %313 = vrot.lane.b32.xlu0 %v20, 64
  %v314 = vpop.permute.xlu0 %313
  %315 = vrot.lane.b32.xlu0 %v166, 64
  %v316 = vpop.permute.xlu0 %315
  %317 = vrot.lane.b32.xlu0 %v21, 64
  %v318 = vpop.permute.xlu0 %317
  %319 = vrot.lane.b32.xlu0 %v167, 64
  %v320 = vpop.permute.xlu0 %319
  %vm321 = vcmp.lt.s32.totalorder %v24, 64
  %v322 = vsel %vm321, %v318, %v320
  %v323 = vsel %vm321, %v316, %v318
  %v324 = vsel %vm321, %v314, %v316
  %v325 = vsel %vm321, %v312, %v314
  %v326 = vsel %vm321, %v310, %v312
  %v327 = vsel %vm321, %v308, %v310
  %v328 = vsel %vm321, %v306, %v308
  %v329 = vsel %vm321, %v304, %v306
  %v330 = vsel %vm321, %v302, %v304
  %v331 = vsel %vm321, %v300, %v302
  %v332 = vsel %vm321, %v298, %v300
  %v333 = vsel %vm321, %v296, %v298
  %v334 = vsel %vm321, %v294, %v296
  %v335 = vsel %vm321, %v292, %v294
  %v336 = vsel %vm321, %v290, %v292
  %v337 = vsel %vm321, %v320, %v290
  %v338 = vsel %vm120, 1, 0
  %v339 = vsel %vm121, 1, 0
  %v340 = vsel %vm122, 1, 0
  %v341 = vsel %vm123, 1, 0
  %v342 = vsel %vm124, 1, 0
  %v343 = vsel %vm125, 1, 0
  %v344 = vsel %vm126, 1, 0
  %v345 = vsel %vm127, 1, 0
  %v346 = vsel %vm128, 1, 0
  %v347 = vsel %vm129, 1, 0
  %v348 = vsel %vm130, 1, 0
  %v349 = vsel %vm131, 1, 0
  %v350 = vsel %vm132, 1, 0
  %v351 = vsel %vm133, 1, 0
  %v352 = vsel %vm134, 1, 0
  %v353 = vsel %vm135, 1, 0
  %vm354 = vcmp.eq.s32.totalorder %v338, 1
  %vm355 = vcmp.eq.s32.totalorder %v339, 1
  %vm356 = vcmp.eq.s32.totalorder %v340, 1
  %vm357 = vcmp.eq.s32.totalorder %v341, 1
  %vm358 = vcmp.eq.s32.totalorder %v342, 1
  %vm359 = vcmp.eq.s32.totalorder %v343, 1
  %vm360 = vcmp.eq.s32.totalorder %v344, 1
  %vm361 = vcmp.eq.s32.totalorder %v345, 1
  %vm362 = vcmp.eq.s32.totalorder %v346, 1
  %vm363 = vcmp.eq.s32.totalorder %v347, 1
  %vm364 = vcmp.eq.s32.totalorder %v348, 1
  %vm365 = vcmp.eq.s32.totalorder %v349, 1
  %vm366 = vcmp.eq.s32.totalorder %v350, 1
  %vm367 = vcmp.eq.s32.totalorder %v351, 1
  %vm368 = vcmp.eq.s32.totalorder %v352, 1
  %vm369 = vcmp.eq.s32.totalorder %v353, 1
  %v370 = vsel %vm354, %v337, 0.0
  %v371 = vsel %vm355, %v336, 0.0
  %v372 = vsel %vm356, %v335, 0.0
  %v373 = vsel %vm357, %v334, 0.0
  %v374 = vsel %vm358, %v333, 0.0
  %v375 = vsel %vm359, %v332, 0.0
  %v376 = vsel %vm360, %v331, 0.0
  %v377 = vsel %vm361, %v330, 0.0
  %v378 = vsel %vm362, %v329, 0.0
  %v379 = vsel %vm363, %v328, 0.0
  %v380 = vsel %vm364, %v327, 0.0
  %v381 = vsel %vm365, %v326, 0.0
  %v382 = vsel %vm366, %v325, 0.0
  %v383 = vsel %vm367, %v324, 0.0
  %v384 = vsel %vm368, %v323, 0.0
  %v385 = vsel %vm369, %v322, 0.0
  %387 = vrot.lane.b32.xlu0 %v22, 124
  %v388 = vpop.permute.xlu0 %387
  %vm389 = vcmask 31744
  %v390 = vsel %vm389, %v388, 0
  %vm392 = vcmask 1043456
  %v394 = vsel %vm392, %v370, 0
  %v397 = vsel %vm392, %v371, 0
  %v400 = vsel %vm392, %v372, 0
  %v403 = vsel %vm392, %v373, 0
  %v406 = vsel %vm392, %v374, 0
  %v409 = vsel %vm392, %v375, 0
  %v412 = vsel %vm392, %v376, 0
  %v415 = vsel %vm392, %v377, 0
  %v418 = vsel %vm392, %v378, 0
  %v421 = vsel %vm392, %v379, 0
  %v424 = vsel %vm392, %v380, 0
  %v427 = vsel %vm392, %v381, 0
  %v430 = vsel %vm392, %v382, 0
  %v433 = vsel %vm392, %v383, 0
  %v436 = vsel %vm392, %v384, 0
  %v439 = vsel %vm392, %v385, 0
  %441 = vmatprep.subr.mxu0 %v397
  %442 = vmatpush1.msra.mxu0 %v394
  %443 = vmatprep.subr.mxu0 0.0
  %444 = vmatpush1.msra.mxu0 0.0
  %445 = vmatprep.subr.mxu0 0.0
  %446 = vmatpush1.msra.mxu0 0.0
  %447 = vmatprep.subr.mxu0 0.0
  %448 = vmatpush1.msra.mxu0 0.0
  %449 = vmatprep.subr.mxu0 0.0
  %450 = vmatpush1.msra.mxu0 0.0
  %451 = vmatprep.subr.mxu0 0.0
  %452 = vmatpush1.msra.mxu0 0.0
  %453 = vmatprep.subr.mxu0 0.0
  %454 = vmatpush1.msra.mxu0 0.0
  %455 = vmatprep.subr.mxu0 0.0
  %456 = vmatpush1.msra.mxu0 0.0
  %457 = vmatprep.subr.mxu0 0.0
  %458 = vmatpush1.msra.mxu0 0.0
  %459 = vmatprep.subr.mxu0 0.0
  %460 = vmatpush1.msra.mxu0 0.0
  %461 = vmatprep.subr.mxu0 0.0
  %462 = vmatpush1.msra.mxu0 0.0
  %463 = vmatprep.subr.mxu0 0.0
  %464 = vmatpush1.msra.mxu0 0.0
  %465 = vmatprep.subr.mxu0 0.0
  %466 = vmatpush1.msra.mxu0 0.0
  %467 = vmatprep.subr.mxu0 0.0
  %468 = vmatpush1.msra.mxu0 0.0
  %469 = vmatprep.subr.mxu0 0.0
  %470 = vmatpush1.msra.mxu0 0.0
  %471 = vmatprep.subr.mxu0 0.0
  %472 = vmatpush1.msra.mxu0 0.0
  %473 = vmatprep.subr.mxu0 0.0
  %474 = vmatpush1.msra.mxu0 0.0
  %475 = vmatprep.subr.mxu0 0.0
  %476 = vmatpush1.msra.mxu0 0.0
  %477 = vmatprep.subr.mxu0 0.0
  %478 = vmatpush1.msra.mxu0 0.0
  %479 = vmatprep.subr.mxu0 0.0
  %480 = vmatpush1.msra.mxu0 0.0
  %481 = vmatprep.subr.mxu0 0.0
  %482 = vmatpush1.msra.mxu0 0.0
  %483 = vmatprep.subr.mxu0 0.0
  %484 = vmatpush1.msra.mxu0 0.0
  %485 = vmatprep.subr.mxu0 0.0
  %486 = vmatpush1.msra.mxu0 0.0
  %487 = vmatprep.subr.mxu0 0.0
  %488 = vmatpush1.msra.mxu0 0.0
  %489 = vmatprep.subr.mxu0 0.0
  %490 = vmatpush1.msra.mxu0 0.0
  %491 = vmatprep.subr.mxu0 0.0
  %492 = vmatpush1.msra.mxu0 0.0
  %493 = vmatprep.subr.mxu0 0.0
  %494 = vmatpush1.msra.mxu0 0.0
  %495 = vmatprep.subr.mxu0 0.0
  %496 = vmatpush1.msra.mxu0 0.0
  %497 = vmatprep.subr.mxu0 0.0
  %498 = vmatpush1.msra.mxu0 0.0
  %499 = vmatprep.subr.mxu0 0.0
  %500 = vmatpush1.msra.mxu0 0.0
  %501 = vmatprep.subr.mxu0 0.0
  %502 = vmatpush1.msra.mxu0 0.0
  %503 = vmatprep.subr.mxu0 0.0
  %504 = vmatpush1.msra.mxu0 0.0
  %505 = vmatprep.mubr.f32.mxu0 0.0
  %506 = vmatmul.mubr.f32.gmra.mrb[0].mxu0 %v390
  %v507 = vpop.f32.mrb[0].mxu0
  %v508 = vadd.f32 0.0, %v507
  %v509 = vpop.f32.mrb[0].mxu0
  %v510 = vadd.f32 0.0, %v509
  %511 = vdwg.mxu0
  %512 = vmatprep.subr.mxu0 %v403
  %513 = vmatpush1.msra.mxu0 %v400
  %514 = vmatprep.subr.mxu0 0.0
  %515 = vmatpush1.msra.mxu0 0.0
  %516 = vmatprep.subr.mxu0 0.0
  %517 = vmatpush1.msra.mxu0 0.0
  %518 = vmatprep.subr.mxu0 0.0
  %519 = vmatpush1.msra.mxu0 0.0
  %520 = vmatprep.subr.mxu0 0.0
  %521 = vmatpush1.msra.mxu0 0.0
  %522 = vmatprep.subr.mxu0 0.0
  %523 = vmatpush1.msra.mxu0 0.0
  %524 = vmatprep.subr.mxu0 0.0
  %525 = vmatpush1.msra.mxu0 0.0
  %526 = vmatprep.subr.mxu0 0.0
  %527 = vmatpush1.msra.mxu0 0.0
  %528 = vmatprep.subr.mxu0 0.0
  %529 = vmatpush1.msra.mxu0 0.0
  %530 = vmatprep.subr.mxu0 0.0
  %531 = vmatpush1.msra.mxu0 0.0
  %532 = vmatprep.subr.mxu0 0.0
  %533 = vmatpush1.msra.mxu0 0.0
  %534 = vmatprep.subr.mxu0 0.0
  %535 = vmatpush1.msra.mxu0 0.0
  %536 = vmatprep.subr.mxu0 0.0
  %537 = vmatpush1.msra.mxu0 0.0
  %538 = vmatprep.subr.mxu0 0.0
  %539 = vmatpush1.msra.mxu0 0.0
  %540 = vmatprep.subr.mxu0 0.0
  %541 = vmatpush1.msra.mxu0 0.0
  %542 = vmatprep.subr.mxu0 0.0
  %543 = vmatpush1.msra.mxu0 0.0
  %544 = vmatprep.subr.mxu0 0.0
  %545 = vmatpush1.msra.mxu0 0.0
  %546 = vmatprep.subr.mxu0 0.0
  %547 = vmatpush1.msra.mxu0 0.0
  %548 = vmatprep.subr.mxu0 0.0
  %549 = vmatpush1.msra.mxu0 0.0
  %550 = vmatprep.subr.mxu0 0.0
  %551 = vmatpush1.msra.mxu0 0.0
  %552 = vmatprep.subr.mxu0 0.0
  %553 = vmatpush1.msra.mxu0 0.0
  %554 = vmatprep.subr.mxu0 0.0
  %555 = vmatpush1.msra.mxu0 0.0
  %556 = vmatprep.subr.mxu0 0.0
  %557 = vmatpush1.msra.mxu0 0.0
  %558 = vmatprep.subr.mxu0 0.0
  %559 = vmatpush1.msra.mxu0 0.0
  %560 = vmatprep.subr.mxu0 0.0
  %561 = vmatpush1.msra.mxu0 0.0
  %562 = vmatprep.subr.mxu0 0.0
  %563 = vmatpush1.msra.mxu0 0.0
  %564 = vmatprep.subr.mxu0 0.0
  %565 = vmatpush1.msra.mxu0 0.0
  %566 = vmatprep.subr.mxu0 0.0
  %567 = vmatpush1.msra.mxu0 0.0
  %568 = vmatprep.subr.mxu0 0.0
  %569 = vmatpush1.msra.mxu0 0.0
  %570 = vmatprep.subr.mxu0 0.0
  %571 = vmatpush1.msra.mxu0 0.0
  %572 = vmatprep.subr.mxu0 0.0
  %573 = vmatpush1.msra.mxu0 0.0
  %574 = vmatprep.subr.mxu0 0.0
  %575 = vmatpush1.msra.mxu0 0.0
  %576 = vmatprep.mubr.f32.mxu0 0.0
  %577 = vmatmul.mubr.f32.gmra.mrb[0].mxu0 %v390
  %v578 = vpop.f32.mrb[0].mxu0
  %v579 = vadd.f32 0.0, %v578
  %v580 = vpop.f32.mrb[0].mxu0
  %v581 = vadd.f32 0.0, %v580
  %582 = vdwg.mxu0
  %583 = vmatprep.subr.mxu0 %v409
  %584 = vmatpush1.msra.mxu0 %v406
  %585 = vmatprep.subr.mxu0 0.0
  %586 = vmatpush1.msra.mxu0 0.0
  %587 = vmatprep.subr.mxu0 0.0
  %588 = vmatpush1.msra.mxu0 0.0
  %589 = vmatprep.subr.mxu0 0.0
  %590 = vmatpush1.msra.mxu0 0.0
  %591 = vmatprep.subr.mxu0 0.0
  %592 = vmatpush1.msra.mxu0 0.0
  %593 = vmatprep.subr.mxu0 0.0
  %594 = vmatpush1.msra.mxu0 0.0
  %595 = vmatprep.subr.mxu0 0.0
  %596 = vmatpush1.msra.mxu0 0.0
  %597 = vmatprep.subr.mxu0 0.0
  %598 = vmatpush1.msra.mxu0 0.0
  %599 = vmatprep.subr.mxu0 0.0
  %600 = vmatpush1.msra.mxu0 0.0
  %601 = vmatprep.subr.mxu0 0.0
  %602 = vmatpush1.msra.mxu0 0.0
  %603 = vmatprep.subr.mxu0 0.0
  %604 = vmatpush1.msra.mxu0 0.0
  %605 = vmatprep.subr.mxu0 0.0
  %606 = vmatpush1.msra.mxu0 0.0
  %607 = vmatprep.subr.mxu0 0.0
  %608 = vmatpush1.msra.mxu0 0.0
  %609 = vmatprep.subr.mxu0 0.0
  %610 = vmatpush1.msra.mxu0 0.0
  %611 = vmatprep.subr.mxu0 0.0
  %612 = vmatpush1.msra.mxu0 0.0
  %613 = vmatprep.subr.mxu0 0.0
  %614 = vmatpush1.msra.mxu0 0.0
  %615 = vmatprep.subr.mxu0 0.0
  %616 = vmatpush1.msra.mxu0 0.0
  %617 = vmatprep.subr.mxu0 0.0
  %618 = vmatpush1.msra.mxu0 0.0
  %619 = vmatprep.subr.mxu0 0.0
  %620 = vmatpush1.msra.mxu0 0.0
  %621 = vmatprep.subr.mxu0 0.0
  %622 = vmatpush1.msra.mxu0 0.0
  %623 = vmatprep.subr.mxu0 0.0
  %624 = vmatpush1.msra.mxu0 0.0
  %625 = vmatprep.subr.mxu0 0.0
  %626 = vmatpush1.msra.mxu0 0.0
  %627 = vmatprep.subr.mxu0 0.0
  %628 = vmatpush1.msra.mxu0 0.0
  %629 = vmatprep.subr.mxu0 0.0
  %630 = vmatpush1.msra.mxu0 0.0
  %631 = vmatprep.subr.mxu0 0.0
  %632 = vmatpush1.msra.mxu0 0.0
  %633 = vmatprep.subr.mxu0 0.0
  %634 = vmatpush1.msra.mxu0 0.0
  %635 = vmatprep.subr.mxu0 0.0
  %636 = vmatpush1.msra.mxu0 0.0
  %637 = vmatprep.subr.mxu0 0.0
  %638 = vmatpush1.msra.mxu0 0.0
  %639 = vmatprep.subr.mxu0 0.0
  %640 = vmatpush1.msra.mxu0 0.0
  %641 = vmatprep.subr.mxu0 0.0
  %642 = vmatpush1.msra.mxu0 0.0
  %643 = vmatprep.subr.mxu0 0.0
  %644 = vmatpush1.msra.mxu0 0.0
  %645 = vmatprep.subr.mxu0 0.0
  %646 = vmatpush1.msra.mxu0 0.0
  %647 = vmatprep.mubr.f32.mxu0 0.0
  %648 = vmatmul.mubr.f32.gmra.mrb[0].mxu0 %v390
  %v649 = vpop.f32.mrb[0].mxu0
  %v650 = vadd.f32 0.0, %v649
  %v651 = vpop.f32.mrb[0].mxu0
  %v652 = vadd.f32 0.0, %v651
  %653 = vdwg.mxu0
  %654 = vmatprep.subr.mxu0 %v415
  %655 = vmatpush1.msra.mxu0 %v412
  %656 = vmatprep.subr.mxu0 0.0
  %657 = vmatpush1.msra.mxu0 0.0
  %658 = vmatprep.subr.mxu0 0.0
  %659 = vmatpush1.msra.mxu0 0.0
  %660 = vmatprep.subr.mxu0 0.0
  %661 = vmatpush1.msra.mxu0 0.0
  %662 = vmatprep.subr.mxu0 0.0
  %663 = vmatpush1.msra.mxu0 0.0
  %664 = vmatprep.subr.mxu0 0.0
  %665 = vmatpush1.msra.mxu0 0.0
  %666 = vmatprep.subr.mxu0 0.0
  %667 = vmatpush1.msra.mxu0 0.0
  %668 = vmatprep.subr.mxu0 0.0
  %669 = vmatpush1.msra.mxu0 0.0
  %670 = vmatprep.subr.mxu0 0.0
  %671 = vmatpush1.msra.mxu0 0.0
  %672 = vmatprep.subr.mxu0 0.0
  %673 = vmatpush1.msra.mxu0 0.0
  %674 = vmatprep.subr.mxu0 0.0
  %675 = vmatpush1.msra.mxu0 0.0
  %676 = vmatprep.subr.mxu0 0.0
  %677 = vmatpush1.msra.mxu0 0.0
  %678 = vmatprep.subr.mxu0 0.0
  %679 = vmatpush1.msra.mxu0 0.0
  %680 = vmatprep.subr.mxu0 0.0
  %681 = vmatpush1.msra.mxu0 0.0
  %682 = vmatprep.subr.mxu0 0.0
  %683 = vmatpush1.msra.mxu0 0.0
  %684 = vmatprep.subr.mxu0 0.0
  %685 = vmatpush1.msra.mxu0 0.0
  %686 = vmatprep.subr.mxu0 0.0
  %687 = vmatpush1.msra.mxu0 0.0
  %688 = vmatprep.subr.mxu0 0.0
  %689 = vmatpush1.msra.mxu0 0.0
  %690 = vmatprep.subr.mxu0 0.0
  %691 = vmatpush1.msra.mxu0 0.0
  %692 = vmatprep.subr.mxu0 0.0
  %693 = vmatpush1.msra.mxu0 0.0
  %694 = vmatprep.subr.mxu0 0.0
  %695 = vmatpush1.msra.mxu0 0.0
  %696 = vmatprep.subr.mxu0 0.0
  %697 = vmatpush1.msra.mxu0 0.0
  %698 = vmatprep.subr.mxu0 0.0
  %699 = vmatpush1.msra.mxu0 0.0
  %700 = vmatprep.subr.mxu0 0.0
  %701 = vmatpush1.msra.mxu0 0.0
  %702 = vmatprep.subr.mxu0 0.0
  %703 = vmatpush1.msra.mxu0 0.0
  %704 = vmatprep.subr.mxu0 0.0
  %705 = vmatpush1.msra.mxu0 0.0
  %706 = vmatprep.subr.mxu0 0.0
  %707 = vmatpush1.msra.mxu0 0.0
  %708 = vmatprep.subr.mxu0 0.0
  %709 = vmatpush1.msra.mxu0 0.0
  %710 = vmatprep.subr.mxu0 0.0
  %711 = vmatpush1.msra.mxu0 0.0
  %712 = vmatprep.subr.mxu0 0.0
  %713 = vmatpush1.msra.mxu0 0.0
  %714 = vmatprep.subr.mxu0 0.0
  %715 = vmatpush1.msra.mxu0 0.0
  %716 = vmatprep.subr.mxu0 0.0
  %717 = vmatpush1.msra.mxu0 0.0
  %718 = vmatprep.mubr.f32.mxu0 0.0
  %719 = vmatmul.mubr.f32.gmra.mrb[0].mxu0 %v390
  %v720 = vpop.f32.mrb[0].mxu0
  %v721 = vadd.f32 0.0, %v720
  %v722 = vpop.f32.mrb[0].mxu0
  %v723 = vadd.f32 0.0, %v722
  %724 = vdwg.mxu0
  %725 = vmatprep.subr.mxu0 %v421
  %726 = vmatpush1.msra.mxu0 %v418
  %727 = vmatprep.subr.mxu0 0.0
  %728 = vmatpush1.msra.mxu0 0.0
  %729 = vmatprep.subr.mxu0 0.0
  %730 = vmatpush1.msra.mxu0 0.0
  %731 = vmatprep.subr.mxu0 0.0
  %732 = vmatpush1.msra.mxu0 0.0
  %733 = vmatprep.subr.mxu0 0.0
  %734 = vmatpush1.msra.mxu0 0.0
  %735 = vmatprep.subr.mxu0 0.0
  %736 = vmatpush1.msra.mxu0 0.0
  %737 = vmatprep.subr.mxu0 0.0
  %738 = vmatpush1.msra.mxu0 0.0
  %739 = vmatprep.subr.mxu0 0.0
  %740 = vmatpush1.msra.mxu0 0.0
  %741 = vmatprep.subr.mxu0 0.0
  %742 = vmatpush1.msra.mxu0 0.0
  %743 = vmatprep.subr.mxu0 0.0
  %744 = vmatpush1.msra.mxu0 0.0
  %745 = vmatprep.subr.mxu0 0.0
  %746 = vmatpush1.msra.mxu0 0.0
  %747 = vmatprep.subr.mxu0 0.0
  %748 = vmatpush1.msra.mxu0 0.0
  %749 = vmatprep.subr.mxu0 0.0
  %750 = vmatpush1.msra.mxu0 0.0
  %751 = vmatprep.subr.mxu0 0.0
  %752 = vmatpush1.msra.mxu0 0.0
  %753 = vmatprep.subr.mxu0 0.0
  %754 = vmatpush1.msra.mxu0 0.0
  %755 = vmatprep.subr.mxu0 0.0
  %756 = vmatpush1.msra.mxu0 0.0
  %757 = vmatprep.subr.mxu0 0.0
  %758 = vmatpush1.msra.mxu0 0.0
  %759 = vmatprep.subr.mxu0 0.0
  %760 = vmatpush1.msra.mxu0 0.0
  %761 = vmatprep.subr.mxu0 0.0
  %762 = vmatpush1.msra.mxu0 0.0
  %763 = vmatprep.subr.mxu0 0.0
  %764 = vmatpush1.msra.mxu0 0.0
  %765 = vmatprep.subr.mxu0 0.0
  %766 = vmatpush1.msra.mxu0 0.0
  %767 = vmatprep.subr.mxu0 0.0
  %768 = vmatpush1.msra.mxu0 0.0
  %769 = vmatprep.subr.mxu0 0.0
  %770 = vmatpush1.msra.mxu0 0.0
  %771 = vmatprep.subr.mxu0 0.0
  %772 = vmatpush1.msra.mxu0 0.0
  %773 = vmatprep.subr.mxu0 0.0
  %774 = vmatpush1.msra.mxu0 0.0
  %775 = vmatprep.subr.mxu0 0.0
  %776 = vmatpush1.msra.mxu0 0.0
  %777 = vmatprep.subr.mxu0 0.0
  %778 = vmatpush1.msra.mxu0 0.0
  %779 = vmatprep.subr.mxu0 0.0
  %780 = vmatpush1.msra.mxu0 0.0
  %781 = vmatprep.subr.mxu0 0.0
  %782 = vmatpush1.msra.mxu0 0.0
  %783 = vmatprep.subr.mxu0 0.0
  %784 = vmatpush1.msra.mxu0 0.0
  %785 = vmatprep.subr.mxu0 0.0
  %786 = vmatpush1.msra.mxu0 0.0
  %787 = vmatprep.subr.mxu0 0.0
  %788 = vmatpush1.msra.mxu0 0.0
  %789 = vmatprep.mubr.f32.mxu0 0.0
  %790 = vmatmul.mubr.f32.gmra.mrb[0].mxu0 %v390
  %v791 = vpop.f32.mrb[0].mxu0
  %v792 = vadd.f32 0.0, %v791
  %v793 = vpop.f32.mrb[0].mxu0
  %v794 = vadd.f32 0.0, %v793
  %795 = vdwg.mxu0
  %796 = vmatprep.subr.mxu0 %v427
  %797 = vmatpush1.msra.mxu0 %v424
  %798 = vmatprep.subr.mxu0 0.0
  %799 = vmatpush1.msra.mxu0 0.0
  %800 = vmatprep.subr.mxu0 0.0
  %801 = vmatpush1.msra.mxu0 0.0
  %802 = vmatprep.subr.mxu0 0.0
  %803 = vmatpush1.msra.mxu0 0.0
  %804 = vmatprep.subr.mxu0 0.0
  %805 = vmatpush1.msra.mxu0 0.0
  %806 = vmatprep.subr.mxu0 0.0
  %807 = vmatpush1.msra.mxu0 0.0
  %808 = vmatprep.subr.mxu0 0.0
  %809 = vmatpush1.msra.mxu0 0.0
  %810 = vmatprep.subr.mxu0 0.0
  %811 = vmatpush1.msra.mxu0 0.0
  %812 = vmatprep.subr.mxu0 0.0
  %813 = vmatpush1.msra.mxu0 0.0
  %814 = vmatprep.subr.mxu0 0.0
  %815 = vmatpush1.msra.mxu0 0.0
  %816 = vmatprep.subr.mxu0 0.0
  %817 = vmatpush1.msra.mxu0 0.0
  %818 = vmatprep.subr.mxu0 0.0
  %819 = vmatpush1.msra.mxu0 0.0
  %820 = vmatprep.subr.mxu0 0.0
  %821 = vmatpush1.msra.mxu0 0.0
  %822 = vmatprep.subr.mxu0 0.0
  %823 = vmatpush1.msra.mxu0 0.0
  %824 = vmatprep.subr.mxu0 0.0
  %825 = vmatpush1.msra.mxu0 0.0
  %826 = vmatprep.subr.mxu0 0.0
  %827 = vmatpush1.msra.mxu0 0.0
  %828 = vmatprep.subr.mxu0 0.0
  %829 = vmatpush1.msra.mxu0 0.0
  %830 = vmatprep.subr.mxu0 0.0
  %831 = vmatpush1.msra.mxu0 0.0
  %832 = vmatprep.subr.mxu0 0.0
  %833 = vmatpush1.msra.mxu0 0.0
  %834 = vmatprep.subr.mxu0 0.0
  %835 = vmatpush1.msra.mxu0 0.0
  %836 = vmatprep.subr.mxu0 0.0
  %837 = vmatpush1.msra.mxu0 0.0
  %838 = vmatprep.subr.mxu0 0.0
  %839 = vmatpush1.msra.mxu0 0.0
  %840 = vmatprep.subr.mxu0 0.0
  %841 = vmatpush1.msra.mxu0 0.0
  %842 = vmatprep.subr.mxu0 0.0
  %843 = vmatpush1.msra.mxu0 0.0
  %844 = vmatprep.subr.mxu0 0.0
  %845 = vmatpush1.msra.mxu0 0.0
  %846 = vmatprep.subr.mxu0 0.0
  %847 = vmatpush1.msra.mxu0 0.0
  %848 = vmatprep.subr.mxu0 0.0
  %849 = vmatpush1.msra.mxu0 0.0
  %850 = vmatprep.subr.mxu0 0.0
  %851 = vmatpush1.msra.mxu0 0.0
  %852 = vmatprep.subr.mxu0 0.0
  %853 = vmatpush1.msra.mxu0 0.0
  %854 = vmatprep.subr.mxu0 0.0
  %855 = vmatpush1.msra.mxu0 0.0
  %856 = vmatprep.subr.mxu0 0.0
  %857 = vmatpush1.msra.mxu0 0.0
  %858 = vmatprep.subr.mxu0 0.0
  %859 = vmatpush1.msra.mxu0 0.0
  %860 = vmatprep.mubr.f32.mxu0 0.0
  %861 = vmatmul.mubr.f32.gmra.mrb[0].mxu0 %v390
  %v862 = vpop.f32.mrb[0].mxu0
  %v863 = vadd.f32 0.0, %v862
  %v864 = vpop.f32.mrb[0].mxu0
  %v865 = vadd.f32 0.0, %v864
  %866 = vdwg.mxu0
  %867 = vmatprep.subr.mxu0 %v433
  %868 = vmatpush1.msra.mxu0 %v430
  %869 = vmatprep.subr.mxu0 0.0
  %870 = vmatpush1.msra.mxu0 0.0
  %871 = vmatprep.subr.mxu0 0.0
  %872 = vmatpush1.msra.mxu0 0.0
  %873 = vmatprep.subr.mxu0 0.0
  %874 = vmatpush1.msra.mxu0 0.0
  %875 = vmatprep.subr.mxu0 0.0
  %876 = vmatpush1.msra.mxu0 0.0
  %877 = vmatprep.subr.mxu0 0.0
  %878 = vmatpush1.msra.mxu0 0.0
  %879 = vmatprep.subr.mxu0 0.0
  %880 = vmatpush1.msra.mxu0 0.0
  %881 = vmatprep.subr.mxu0 0.0
  %882 = vmatpush1.msra.mxu0 0.0
  %883 = vmatprep.subr.mxu0 0.0
  %884 = vmatpush1.msra.mxu0 0.0
  %885 = vmatprep.subr.mxu0 0.0
  %886 = vmatpush1.msra.mxu0 0.0
  %887 = vmatprep.subr.mxu0 0.0
  %888 = vmatpush1.msra.mxu0 0.0
  %889 = vmatprep.subr.mxu0 0.0
  %890 = vmatpush1.msra.mxu0 0.0
  %891 = vmatprep.subr.mxu0 0.0
  %892 = vmatpush1.msra.mxu0 0.0
  %893 = vmatprep.subr.mxu0 0.0
  %894 = vmatpush1.msra.mxu0 0.0
  %895 = vmatprep.subr.mxu0 0.0
  %896 = vmatpush1.msra.mxu0 0.0
  %897 = vmatprep.subr.mxu0 0.0
  %898 = vmatpush1.msra.mxu0 0.0
  %899 = vmatprep.subr.mxu0 0.0
  %900 = vmatpush1.msra.mxu0 0.0
  %901 = vmatprep.subr.mxu0 0.0
  %902 = vmatpush1.msra.mxu0 0.0
  %903 = vmatprep.subr.mxu0 0.0
  %904 = vmatpush1.msra.mxu0 0.0
  %905 = vmatprep.subr.mxu0 0.0
  %906 = vmatpush1.msra.mxu0 0.0
  %907 = vmatprep.subr.mxu0 0.0
  %908 = vmatpush1.msra.mxu0 0.0
  %909 = vmatprep.subr.mxu0 0.0
  %910 = vmatpush1.msra.mxu0 0.0
  %911 = vmatprep.subr.mxu0 0.0
  %912 = vmatpush1.msra.mxu0 0.0
  %913 = vmatprep.subr.mxu0 0.0
  %914 = vmatpush1.msra.mxu0 0.0
  %915 = vmatprep.subr.mxu0 0.0
  %916 = vmatpush1.msra.mxu0 0.0
  %917 = vmatprep.subr.mxu0 0.0
  %918 = vmatpush1.msra.mxu0 0.0
  %919 = vmatprep.subr.mxu0 0.0
  %920 = vmatpush1.msra.mxu0 0.0
  %921 = vmatprep.subr.mxu0 0.0
  %922 = vmatpush1.msra.mxu0 0.0
  %923 = vmatprep.subr.mxu0 0.0
  %924 = vmatpush1.msra.mxu0 0.0
  %925 = vmatprep.subr.mxu0 0.0
  %926 = vmatpush1.msra.mxu0 0.0
  %927 = vmatprep.subr.mxu0 0.0
  %928 = vmatpush1.msra.mxu0 0.0
  %929 = vmatprep.subr.mxu0 0.0
  %930 = vmatpush1.msra.mxu0 0.0
  %931 = vmatprep.mubr.f32.mxu0 0.0
  %932 = vmatmul.mubr.f32.gmra.mrb[0].mxu0 %v390
  %v933 = vpop.f32.mrb[0].mxu0
  %v934 = vadd.f32 0.0, %v933
  %v935 = vpop.f32.mrb[0].mxu0
  %v936 = vadd.f32 0.0, %v935
  %937 = vdwg.mxu0
  %938 = vmatprep.subr.mxu0 %v439
  %939 = vmatpush1.msra.mxu0 %v436
  %940 = vmatprep.subr.mxu0 0.0
  %941 = vmatpush1.msra.mxu0 0.0
  %942 = vmatprep.subr.mxu0 0.0
  %943 = vmatpush1.msra.mxu0 0.0
  %944 = vmatprep.subr.mxu0 0.0
  %945 = vmatpush1.msra.mxu0 0.0
  %946 = vmatprep.subr.mxu0 0.0
  %947 = vmatpush1.msra.mxu0 0.0
  %948 = vmatprep.subr.mxu0 0.0
  %949 = vmatpush1.msra.mxu0 0.0
  %950 = vmatprep.subr.mxu0 0.0
  %951 = vmatpush1.msra.mxu0 0.0
  %952 = vmatprep.subr.mxu0 0.0
  %953 = vmatpush1.msra.mxu0 0.0
  %954 = vmatprep.subr.mxu0 0.0
  %955 = vmatpush1.msra.mxu0 0.0
  %956 = vmatprep.subr.mxu0 0.0
  %957 = vmatpush1.msra.mxu0 0.0
  %958 = vmatprep.subr.mxu0 0.0
  %959 = vmatpush1.msra.mxu0 0.0
  %960 = vmatprep.subr.mxu0 0.0
  %961 = vmatpush1.msra.mxu0 0.0
  %962 = vmatprep.subr.mxu0 0.0
  %963 = vmatpush1.msra.mxu0 0.0
  %964 = vmatprep.subr.mxu0 0.0
  %965 = vmatpush1.msra.mxu0 0.0
  %966 = vmatprep.subr.mxu0 0.0
  %967 = vmatpush1.msra.mxu0 0.0
  %968 = vmatprep.subr.mxu0 0.0
  %969 = vmatpush1.msra.mxu0 0.0
  %970 = vmatprep.subr.mxu0 0.0
  %971 = vmatpush1.msra.mxu0 0.0
  %972 = vmatprep.subr.mxu0 0.0
  %973 = vmatpush1.msra.mxu0 0.0
  %974 = vmatprep.subr.mxu0 0.0
  %975 = vmatpush1.msra.mxu0 0.0
  %976 = vmatprep.subr.mxu0 0.0
  %977 = vmatpush1.msra.mxu0 0.0
  %978 = vmatprep.subr.mxu0 0.0
  %979 = vmatpush1.msra.mxu0 0.0
  %980 = vmatprep.subr.mxu0 0.0
  %981 = vmatpush1.msra.mxu0 0.0
  %982 = vmatprep.subr.mxu0 0.0
  %983 = vmatpush1.msra.mxu0 0.0
  %984 = vmatprep.subr.mxu0 0.0
  %985 = vmatpush1.msra.mxu0 0.0
  %986 = vmatprep.subr.mxu0 0.0
  %987 = vmatpush1.msra.mxu0 0.0
  %988 = vmatprep.subr.mxu0 0.0
  %989 = vmatpush1.msra.mxu0 0.0
  %990 = vmatprep.subr.mxu0 0.0
  %991 = vmatpush1.msra.mxu0 0.0
  %992 = vmatprep.subr.mxu0 0.0
  %993 = vmatpush1.msra.mxu0 0.0
  %994 = vmatprep.subr.mxu0 0.0
  %995 = vmatpush1.msra.mxu0 0.0
  %996 = vmatprep.subr.mxu0 0.0
  %997 = vmatpush1.msra.mxu0 0.0
  %998 = vmatprep.subr.mxu0 0.0
  %999 = vmatpush1.msra.mxu0 0.0
  %1000 = vmatprep.subr.mxu0 0.0
  %1001 = vmatpush1.msra.mxu0 0.0
  %1002 = vmatprep.mubr.f32.mxu0 0.0
  %1003 = vmatmul.mubr.f32.gmra.mrb[0].mxu0 %v390
  %v1004 = vpop.f32.mrb[0].mxu0
  %v1005 = vadd.f32 0.0, %v1004
  %v1006 = vpop.f32.mrb[0].mxu0
  %v1007 = vadd.f32 0.0, %v1006
  %1008 = vdwg.mxu0
  %v1009 = vsel %vm389, %v22, 0
  %v1012 = vsel %vm392, %v273, 0
  %v1015 = vsel %vm392, %v274, 0
  %v1018 = vsel %vm392, %v275, 0
  %v1021 = vsel %vm392, %v276, 0
  %v1024 = vsel %vm392, %v277, 0
  %v1027 = vsel %vm392, %v278, 0
  %v1030 = vsel %vm392, %v279, 0
  %v1033 = vsel %vm392, %v280, 0
  %v1036 = vsel %vm392, %v281, 0
  %v1039 = vsel %vm392, %v282, 0
  %v1042 = vsel %vm392, %v283, 0
  %v1045 = vsel %vm392, %v284, 0
  %v1048 = vsel %vm392, %v285, 0
  %v1051 = vsel %vm392, %v286, 0
  %v1054 = vsel %vm392, %v287, 0
  %v1057 = vsel %vm392, %v288, 0
  %1059 = vmatprep.subr.mxu0 %v1015
  %1060 = vmatpush1.msra.mxu0 %v1012
  %1061 = vmatprep.subr.mxu0 0.0
  %1062 = vmatpush1.msra.mxu0 0.0
  %1063 = vmatprep.subr.mxu0 0.0
  %1064 = vmatpush1.msra.mxu0 0.0
  %1065 = vmatprep.subr.mxu0 0.0
  %1066 = vmatpush1.msra.mxu0 0.0
  %1067 = vmatprep.subr.mxu0 0.0
  %1068 = vmatpush1.msra.mxu0 0.0
  %1069 = vmatprep.subr.mxu0 0.0
  %1070 = vmatpush1.msra.mxu0 0.0
  %1071 = vmatprep.subr.mxu0 0.0
  %1072 = vmatpush1.msra.mxu0 0.0
  %1073 = vmatprep.subr.mxu0 0.0
  %1074 = vmatpush1.msra.mxu0 0.0
  %1075 = vmatprep.subr.mxu0 0.0
  %1076 = vmatpush1.msra.mxu0 0.0
  %1077 = vmatprep.subr.mxu0 0.0
  %1078 = vmatpush1.msra.mxu0 0.0
  %1079 = vmatprep.subr.mxu0 0.0
  %1080 = vmatpush1.msra.mxu0 0.0
  %1081 = vmatprep.subr.mxu0 0.0
  %1082 = vmatpush1.msra.mxu0 0.0
  %1083 = vmatprep.subr.mxu0 0.0
  %1084 = vmatpush1.msra.mxu0 0.0
  %1085 = vmatprep.subr.mxu0 0.0
  %1086 = vmatpush1.msra.mxu0 0.0
  %1087 = vmatprep.subr.mxu0 0.0
  %1088 = vmatpush1.msra.mxu0 0.0
  %1089 = vmatprep.subr.mxu0 0.0
  %1090 = vmatpush1.msra.mxu0 0.0
  %1091 = vmatprep.subr.mxu0 0.0
  %1092 = vmatpush1.msra.mxu0 0.0
  %1093 = vmatprep.subr.mxu0 0.0
  %1094 = vmatpush1.msra.mxu0 0.0
  %1095 = vmatprep.subr.mxu0 0.0
  %1096 = vmatpush1.msra.mxu0 0.0
  %1097 = vmatprep.subr.mxu0 0.0
  %1098 = vmatpush1.msra.mxu0 0.0
  %1099 = vmatprep.subr.mxu0 0.0
  %1100 = vmatpush1.msra.mxu0 0.0
  %1101 = vmatprep.subr.mxu0 0.0
  %1102 = vmatpush1.msra.mxu0 0.0
  %1103 = vmatprep.subr.mxu0 0.0
  %1104 = vmatpush1.msra.mxu0 0.0
  %1105 = vmatprep.subr.mxu0 0.0
  %1106 = vmatpush1.msra.mxu0 0.0
  %1107 = vmatprep.subr.mxu0 0.0
  %1108 = vmatpush1.msra.mxu0 0.0
  %1109 = vmatprep.subr.mxu0 0.0
  %1110 = vmatpush1.msra.mxu0 0.0
  %1111 = vmatprep.subr.mxu0 0.0
  %1112 = vmatpush1.msra.mxu0 0.0
  %1113 = vmatprep.subr.mxu0 0.0
  %1114 = vmatpush1.msra.mxu0 0.0
  %1115 = vmatprep.subr.mxu0 0.0
  %1116 = vmatpush1.msra.mxu0 0.0
  %1117 = vmatprep.subr.mxu0 0.0
  %1118 = vmatpush1.msra.mxu0 0.0
  %1119 = vmatprep.subr.mxu0 0.0
  %1120 = vmatpush1.msra.mxu0 0.0
  %1121 = vmatprep.subr.mxu0 0.0
  %1122 = vmatpush1.msra.mxu0 0.0
  %1123 = vmatprep.mubr.f32.mxu0 0.0
  %1124 = vmatmul.mubr.f32.gmra.mrb[0].mxu0 %v1009
  %v1125 = vpop.f32.mrb[0].mxu0
  %v1126 = vadd.f32 %v508, %v1125
  %v1127 = vpop.f32.mrb[0].mxu0
  %v1128 = vadd.f32 %v510, %v1127
  %1129 = vdwg.mxu0
  %1130 = vmatprep.subr.mxu0 %v1021
  %1131 = vmatpush1.msra.mxu0 %v1018
  %1132 = vmatprep.subr.mxu0 0.0
  %1133 = vmatpush1.msra.mxu0 0.0
  %1134 = vmatprep.subr.mxu0 0.0
  %1135 = vmatpush1.msra.mxu0 0.0
  %1136 = vmatprep.subr.mxu0 0.0
  %1137 = vmatpush1.msra.mxu0 0.0
  %1138 = vmatprep.subr.mxu0 0.0
  %1139 = vmatpush1.msra.mxu0 0.0
  %1140 = vmatprep.subr.mxu0 0.0
  %1141 = vmatpush1.msra.mxu0 0.0
  %1142 = vmatprep.subr.mxu0 0.0
  %1143 = vmatpush1.msra.mxu0 0.0
  %1144 = vmatprep.subr.mxu0 0.0
  %1145 = vmatpush1.msra.mxu0 0.0
  %1146 = vmatprep.subr.mxu0 0.0
  %1147 = vmatpush1.msra.mxu0 0.0
  %1148 = vmatprep.subr.mxu0 0.0
  %1149 = vmatpush1.msra.mxu0 0.0
  %1150 = vmatprep.subr.mxu0 0.0
  %1151 = vmatpush1.msra.mxu0 0.0
  %1152 = vmatprep.subr.mxu0 0.0
  %1153 = vmatpush1.msra.mxu0 0.0
  %1154 = vmatprep.subr.mxu0 0.0
  %1155 = vmatpush1.msra.mxu0 0.0
  %1156 = vmatprep.subr.mxu0 0.0
  %1157 = vmatpush1.msra.mxu0 0.0
  %1158 = vmatprep.subr.mxu0 0.0
  %1159 = vmatpush1.msra.mxu0 0.0
  %1160 = vmatprep.subr.mxu0 0.0
  %1161 = vmatpush1.msra.mxu0 0.0
  %1162 = vmatprep.subr.mxu0 0.0
  %1163 = vmatpush1.msra.mxu0 0.0
  %1164 = vmatprep.subr.mxu0 0.0
  %1165 = vmatpush1.msra.mxu0 0.0
  %1166 = vmatprep.subr.mxu0 0.0
  %1167 = vmatpush1.msra.mxu0 0.0
  %1168 = vmatprep.subr.mxu0 0.0
  %1169 = vmatpush1.msra.mxu0 0.0
  %1170 = vmatprep.subr.mxu0 0.0
  %1171 = vmatpush1.msra.mxu0 0.0
  %1172 = vmatprep.subr.mxu0 0.0
  %1173 = vmatpush1.msra.mxu0 0.0
  %1174 = vmatprep.subr.mxu0 0.0
  %1175 = vmatpush1.msra.mxu0 0.0
  %1176 = vmatprep.subr.mxu0 0.0
  %1177 = vmatpush1.msra.mxu0 0.0
  %1178 = vmatprep.subr.mxu0 0.0
  %1179 = vmatpush1.msra.mxu0 0.0
  %1180 = vmatprep.subr.mxu0 0.0
  %1181 = vmatpush1.msra.mxu0 0.0
  %1182 = vmatprep.subr.mxu0 0.0
  %1183 = vmatpush1.msra.mxu0 0.0
  %1184 = vmatprep.subr.mxu0 0.0
  %1185 = vmatpush1.msra.mxu0 0.0
  %1186 = vmatprep.subr.mxu0 0.0
  %1187 = vmatpush1.msra.mxu0 0.0
  %1188 = vmatprep.subr.mxu0 0.0
  %1189 = vmatpush1.msra.mxu0 0.0
  %1190 = vmatprep.subr.mxu0 0.0
  %1191 = vmatpush1.msra.mxu0 0.0
  %1192 = vmatprep.subr.mxu0 0.0
  %1193 = vmatpush1.msra.mxu0 0.0
  %1194 = vmatprep.mubr.f32.mxu0 0.0
  %1195 = vmatmul.mubr.f32.gmra.mrb[0].mxu0 %v1009
  %v1196 = vpop.f32.mrb[0].mxu0
  %v1197 = vadd.f32 %v579, %v1196
  %v1198 = vpop.f32.mrb[0].mxu0
  %v1199 = vadd.f32 %v581, %v1198
  %1200 = vdwg.mxu0
  %1201 = vmatprep.subr.mxu0 %v1027
  %1202 = vmatpush1.msra.mxu0 %v1024
  %1203 = vmatprep.subr.mxu0 0.0
  %1204 = vmatpush1.msra.mxu0 0.0
  %1205 = vmatprep.subr.mxu0 0.0
  %1206 = vmatpush1.msra.mxu0 0.0
  %1207 = vmatprep.subr.mxu0 0.0
  %1208 = vmatpush1.msra.mxu0 0.0
  %1209 = vmatprep.subr.mxu0 0.0
  %1210 = vmatpush1.msra.mxu0 0.0
  %1211 = vmatprep.subr.mxu0 0.0
  %1212 = vmatpush1.msra.mxu0 0.0
  %1213 = vmatprep.subr.mxu0 0.0
  %1214 = vmatpush1.msra.mxu0 0.0
  %1215 = vmatprep.subr.mxu0 0.0
  %1216 = vmatpush1.msra.mxu0 0.0
  %1217 = vmatprep.subr.mxu0 0.0
  %1218 = vmatpush1.msra.mxu0 0.0
  %1219 = vmatprep.subr.mxu0 0.0
  %1220 = vmatpush1.msra.mxu0 0.0
  %1221 = vmatprep.subr.mxu0 0.0
  %1222 = vmatpush1.msra.mxu0 0.0
  %1223 = vmatprep.subr.mxu0 0.0
  %1224 = vmatpush1.msra.mxu0 0.0
  %1225 = vmatprep.subr.mxu0 0.0
  %1226 = vmatpush1.msra.mxu0 0.0
  %1227 = vmatprep.subr.mxu0 0.0
  %1228 = vmatpush1.msra.mxu0 0.0
  %1229 = vmatprep.subr.mxu0 0.0
  %1230 = vmatpush1.msra.mxu0 0.0
  %1231 = vmatprep.subr.mxu0 0.0
  %1232 = vmatpush1.msra.mxu0 0.0
  %1233 = vmatprep.subr.mxu0 0.0
  %1234 = vmatpush1.msra.mxu0 0.0
  %1235 = vmatprep.subr.mxu0 0.0
  %1236 = vmatpush1.msra.mxu0 0.0
  %1237 = vmatprep.subr.mxu0 0.0
  %1238 = vmatpush1.msra.mxu0 0.0
  %1239 = vmatprep.subr.mxu0 0.0
  %1240 = vmatpush1.msra.mxu0 0.0
  %1241 = vmatprep.subr.mxu0 0.0
  %1242 = vmatpush1.msra.mxu0 0.0
  %1243 = vmatprep.subr.mxu0 0.0
  %1244 = vmatpush1.msra.mxu0 0.0
  %1245 = vmatprep.subr.mxu0 0.0
  %1246 = vmatpush1.msra.mxu0 0.0
  %1247 = vmatprep.subr.mxu0 0.0
  %1248 = vmatpush1.msra.mxu0 0.0
  %1249 = vmatprep.subr.mxu0 0.0
  %1250 = vmatpush1.msra.mxu0 0.0
  %1251 = vmatprep.subr.mxu0 0.0
  %1252 = vmatpush1.msra.mxu0 0.0
  %1253 = vmatprep.subr.mxu0 0.0
  %1254 = vmatpush1.msra.mxu0 0.0
  %1255 = vmatprep.subr.mxu0 0.0
  %1256 = vmatpush1.msra.mxu0 0.0
  %1257 = vmatprep.subr.mxu0 0.0
  %1258 = vmatpush1.msra.mxu0 0.0
  %1259 = vmatprep.subr.mxu0 0.0
  %1260 = vmatpush1.msra.mxu0 0.0
  %1261 = vmatprep.subr.mxu0 0.0
  %1262 = vmatpush1.msra.mxu0 0.0
  %1263 = vmatprep.subr.mxu0 0.0
  %1264 = vmatpush1.msra.mxu0 0.0
  %1265 = vmatprep.mubr.f32.mxu0 0.0
  %1266 = vmatmul.mubr.f32.gmra.mrb[0].mxu0 %v1009
  %v1267 = vpop.f32.mrb[0].mxu0
  %v1268 = vadd.f32 %v650, %v1267
  %v1269 = vpop.f32.mrb[0].mxu0
  %v1270 = vadd.f32 %v652, %v1269
  %1271 = vdwg.mxu0
  %1272 = vmatprep.subr.mxu0 %v1033
  %1273 = vmatpush1.msra.mxu0 %v1030
  %1274 = vmatprep.subr.mxu0 0.0
  %1275 = vmatpush1.msra.mxu0 0.0
  %1276 = vmatprep.subr.mxu0 0.0
  %1277 = vmatpush1.msra.mxu0 0.0
  %1278 = vmatprep.subr.mxu0 0.0
  %1279 = vmatpush1.msra.mxu0 0.0
  %1280 = vmatprep.subr.mxu0 0.0
  %1281 = vmatpush1.msra.mxu0 0.0
  %1282 = vmatprep.subr.mxu0 0.0
  %1283 = vmatpush1.msra.mxu0 0.0
  %1284 = vmatprep.subr.mxu0 0.0
  %1285 = vmatpush1.msra.mxu0 0.0
  %1286 = vmatprep.subr.mxu0 0.0
  %1287 = vmatpush1.msra.mxu0 0.0
  %1288 = vmatprep.subr.mxu0 0.0
  %1289 = vmatpush1.msra.mxu0 0.0
  %1290 = vmatprep.subr.mxu0 0.0
  %1291 = vmatpush1.msra.mxu0 0.0
  %1292 = vmatprep.subr.mxu0 0.0
  %1293 = vmatpush1.msra.mxu0 0.0
  %1294 = vmatprep.subr.mxu0 0.0
  %1295 = vmatpush1.msra.mxu0 0.0
  %1296 = vmatprep.subr.mxu0 0.0
  %1297 = vmatpush1.msra.mxu0 0.0
  %1298 = vmatprep.subr.mxu0 0.0
  %1299 = vmatpush1.msra.mxu0 0.0
  %1300 = vmatprep.subr.mxu0 0.0
  %1301 = vmatpush1.msra.mxu0 0.0
  %1302 = vmatprep.subr.mxu0 0.0
  %1303 = vmatpush1.msra.mxu0 0.0
  %1304 = vmatprep.subr.mxu0 0.0
  %1305 = vmatpush1.msra.mxu0 0.0
  %1306 = vmatprep.subr.mxu0 0.0
  %1307 = vmatpush1.msra.mxu0 0.0
  %1308 = vmatprep.subr.mxu0 0.0
  %1309 = vmatpush1.msra.mxu0 0.0
  %1310 = vmatprep.subr.mxu0 0.0
  %1311 = vmatpush1.msra.mxu0 0.0
  %1312 = vmatprep.subr.mxu0 0.0
  %1313 = vmatpush1.msra.mxu0 0.0
  %1314 = vmatprep.subr.mxu0 0.0
  %1315 = vmatpush1.msra.mxu0 0.0
  %1316 = vmatprep.subr.mxu0 0.0
  %1317 = vmatpush1.msra.mxu0 0.0
  %1318 = vmatprep.subr.mxu0 0.0
  %1319 = vmatpush1.msra.mxu0 0.0
  %1320 = vmatprep.subr.mxu0 0.0
  %1321 = vmatpush1.msra.mxu0 0.0
  %1322 = vmatprep.subr.mxu0 0.0
  %1323 = vmatpush1.msra.mxu0 0.0
  %1324 = vmatprep.subr.mxu0 0.0
  %1325 = vmatpush1.msra.mxu0 0.0
  %1326 = vmatprep.subr.mxu0 0.0
  %1327 = vmatpush1.msra.mxu0 0.0
  %1328 = vmatprep.subr.mxu0 0.0
  %1329 = vmatpush1.msra.mxu0 0.0
  %1330 = vmatprep.subr.mxu0 0.0
  %1331 = vmatpush1.msra.mxu0 0.0
  %1332 = vmatprep.subr.mxu0 0.0
  %1333 = vmatpush1.msra.mxu0 0.0
  %1334 = vmatprep.subr.mxu0 0.0
  %1335 = vmatpush1.msra.mxu0 0.0
  %1336 = vmatprep.mubr.f32.mxu0 0.0
  %1337 = vmatmul.mubr.f32.gmra.mrb[0].mxu0 %v1009
  %v1338 = vpop.f32.mrb[0].mxu0
  %v1339 = vadd.f32 %v721, %v1338
  %v1340 = vpop.f32.mrb[0].mxu0
  %v1341 = vadd.f32 %v723, %v1340
  %1342 = vdwg.mxu0
  %1343 = vmatprep.subr.mxu0 %v1039
  %1344 = vmatpush1.msra.mxu0 %v1036
  %1345 = vmatprep.subr.mxu0 0.0
  %1346 = vmatpush1.msra.mxu0 0.0
  %1347 = vmatprep.subr.mxu0 0.0
  %1348 = vmatpush1.msra.mxu0 0.0
  %1349 = vmatprep.subr.mxu0 0.0
  %1350 = vmatpush1.msra.mxu0 0.0
  %1351 = vmatprep.subr.mxu0 0.0
  %1352 = vmatpush1.msra.mxu0 0.0
  %1353 = vmatprep.subr.mxu0 0.0
  %1354 = vmatpush1.msra.mxu0 0.0
  %1355 = vmatprep.subr.mxu0 0.0
  %1356 = vmatpush1.msra.mxu0 0.0
  %1357 = vmatprep.subr.mxu0 0.0
  %1358 = vmatpush1.msra.mxu0 0.0
  %1359 = vmatprep.subr.mxu0 0.0
  %1360 = vmatpush1.msra.mxu0 0.0
  %1361 = vmatprep.subr.mxu0 0.0
  %1362 = vmatpush1.msra.mxu0 0.0
  %1363 = vmatprep.subr.mxu0 0.0
  %1364 = vmatpush1.msra.mxu0 0.0
  %1365 = vmatprep.subr.mxu0 0.0
  %1366 = vmatpush1.msra.mxu0 0.0
  %1367 = vmatprep.subr.mxu0 0.0
  %1368 = vmatpush1.msra.mxu0 0.0
  %1369 = vmatprep.subr.mxu0 0.0
  %1370 = vmatpush1.msra.mxu0 0.0
  %1371 = vmatprep.subr.mxu0 0.0
  %1372 = vmatpush1.msra.mxu0 0.0
  %1373 = vmatprep.subr.mxu0 0.0
  %1374 = vmatpush1.msra.mxu0 0.0
  %1375 = vmatprep.subr.mxu0 0.0
  %1376 = vmatpush1.msra.mxu0 0.0
  %1377 = vmatprep.subr.mxu0 0.0
  %1378 = vmatpush1.msra.mxu0 0.0
  %1379 = vmatprep.subr.mxu0 0.0
  %1380 = vmatpush1.msra.mxu0 0.0
  %1381 = vmatprep.subr.mxu0 0.0
  %1382 = vmatpush1.msra.mxu0 0.0
  %1383 = vmatprep.subr.mxu0 0.0
  %1384 = vmatpush1.msra.mxu0 0.0
  %1385 = vmatprep.subr.mxu0 0.0
  %1386 = vmatpush1.msra.mxu0 0.0
  %1387 = vmatprep.subr.mxu0 0.0
  %1388 = vmatpush1.msra.mxu0 0.0
  %1389 = vmatprep.subr.mxu0 0.0
  %1390 = vmatpush1.msra.mxu0 0.0
  %1391 = vmatprep.subr.mxu0 0.0
  %1392 = vmatpush1.msra.mxu0 0.0
  %1393 = vmatprep.subr.mxu0 0.0
  %1394 = vmatpush1.msra.mxu0 0.0
  %1395 = vmatprep.subr.mxu0 0.0
  %1396 = vmatpush1.msra.mxu0 0.0
  %1397 = vmatprep.subr.mxu0 0.0
  %1398 = vmatpush1.msra.mxu0 0.0
  %1399 = vmatprep.subr.mxu0 0.0
  %1400 = vmatpush1.msra.mxu0 0.0
  %1401 = vmatprep.subr.mxu0 0.0
  %1402 = vmatpush1.msra.mxu0 0.0
  %1403 = vmatprep.subr.mxu0 0.0
  %1404 = vmatpush1.msra.mxu0 0.0
  %1405 = vmatprep.subr.mxu0 0.0
  %1406 = vmatpush1.msra.mxu0 0.0
  %1407 = vmatprep.mubr.f32.mxu0 0.0
  %1408 = vmatmul.mubr.f32.gmra.mrb[0].mxu0 %v1009
  %v1409 = vpop.f32.mrb[0].mxu0
  %v1410 = vadd.f32 %v792, %v1409
  %v1411 = vpop.f32.mrb[0].mxu0
  %v1412 = vadd.f32 %v794, %v1411
  %1413 = vdwg.mxu0
  %1414 = vmatprep.subr.mxu0 %v1045
  %1415 = vmatpush1.msra.mxu0 %v1042
  %1416 = vmatprep.subr.mxu0 0.0
  %1417 = vmatpush1.msra.mxu0 0.0
  %1418 = vmatprep.subr.mxu0 0.0
  %1419 = vmatpush1.msra.mxu0 0.0
  %1420 = vmatprep.subr.mxu0 0.0
  %1421 = vmatpush1.msra.mxu0 0.0
  %1422 = vmatprep.subr.mxu0 0.0
  %1423 = vmatpush1.msra.mxu0 0.0
  %1424 = vmatprep.subr.mxu0 0.0
  %1425 = vmatpush1.msra.mxu0 0.0
  %1426 = vmatprep.subr.mxu0 0.0
  %1427 = vmatpush1.msra.mxu0 0.0
  %1428 = vmatprep.subr.mxu0 0.0
  %1429 = vmatpush1.msra.mxu0 0.0
  %1430 = vmatprep.subr.mxu0 0.0
  %1431 = vmatpush1.msra.mxu0 0.0
  %1432 = vmatprep.subr.mxu0 0.0
  %1433 = vmatpush1.msra.mxu0 0.0
  %1434 = vmatprep.subr.mxu0 0.0
  %1435 = vmatpush1.msra.mxu0 0.0
  %1436 = vmatprep.subr.mxu0 0.0
  %1437 = vmatpush1.msra.mxu0 0.0
  %1438 = vmatprep.subr.mxu0 0.0
  %1439 = vmatpush1.msra.mxu0 0.0
  %1440 = vmatprep.subr.mxu0 0.0
  %1441 = vmatpush1.msra.mxu0 0.0
  %1442 = vmatprep.subr.mxu0 0.0
  %1443 = vmatpush1.msra.mxu0 0.0
  %1444 = vmatprep.subr.mxu0 0.0
  %1445 = vmatpush1.msra.mxu0 0.0
  %1446 = vmatprep.subr.mxu0 0.0
  %1447 = vmatpush1.msra.mxu0 0.0
  %1448 = vmatprep.subr.mxu0 0.0
  %1449 = vmatpush1.msra.mxu0 0.0
  %1450 = vmatprep.subr.mxu0 0.0
  %1451 = vmatpush1.msra.mxu0 0.0
  %1452 = vmatprep.subr.mxu0 0.0
  %1453 = vmatpush1.msra.mxu0 0.0
  %1454 = vmatprep.subr.mxu0 0.0
  %1455 = vmatpush1.msra.mxu0 0.0
  %1456 = vmatprep.subr.mxu0 0.0
  %1457 = vmatpush1.msra.mxu0 0.0
  %1458 = vmatprep.subr.mxu0 0.0
  %1459 = vmatpush1.msra.mxu0 0.0
  %1460 = vmatprep.subr.mxu0 0.0
  %1461 = vmatpush1.msra.mxu0 0.0
  %1462 = vmatprep.subr.mxu0 0.0
  %1463 = vmatpush1.msra.mxu0 0.0
  %1464 = vmatprep.subr.mxu0 0.0
  %1465 = vmatpush1.msra.mxu0 0.0
  %1466 = vmatprep.subr.mxu0 0.0
  %1467 = vmatpush1.msra.mxu0 0.0
  %1468 = vmatprep.subr.mxu0 0.0
  %1469 = vmatpush1.msra.mxu0 0.0
  %1470 = vmatprep.subr.mxu0 0.0
  %1471 = vmatpush1.msra.mxu0 0.0
  %1472 = vmatprep.subr.mxu0 0.0
  %1473 = vmatpush1.msra.mxu0 0.0
  %1474 = vmatprep.subr.mxu0 0.0
  %1475 = vmatpush1.msra.mxu0 0.0
  %1476 = vmatprep.subr.mxu0 0.0
  %1477 = vmatpush1.msra.mxu0 0.0
  %1478 = vmatprep.mubr.f32.mxu0 0.0
  %1479 = vmatmul.mubr.f32.gmra.mrb[0].mxu0 %v1009
  %v1480 = vpop.f32.mrb[0].mxu0
  %v1481 = vadd.f32 %v863, %v1480
  %v1482 = vpop.f32.mrb[0].mxu0
  %v1483 = vadd.f32 %v865, %v1482
  %1484 = vdwg.mxu0
  %1485 = vmatprep.subr.mxu0 %v1051
  %1486 = vmatpush1.msra.mxu0 %v1048
  %1487 = vmatprep.subr.mxu0 0.0
  %1488 = vmatpush1.msra.mxu0 0.0
  %1489 = vmatprep.subr.mxu0 0.0
  %1490 = vmatpush1.msra.mxu0 0.0
  %1491 = vmatprep.subr.mxu0 0.0
  %1492 = vmatpush1.msra.mxu0 0.0
  %1493 = vmatprep.subr.mxu0 0.0
  %1494 = vmatpush1.msra.mxu0 0.0
  %1495 = vmatprep.subr.mxu0 0.0
  %1496 = vmatpush1.msra.mxu0 0.0
  %1497 = vmatprep.subr.mxu0 0.0
  %1498 = vmatpush1.msra.mxu0 0.0
  %1499 = vmatprep.subr.mxu0 0.0
  %1500 = vmatpush1.msra.mxu0 0.0
  %1501 = vmatprep.subr.mxu0 0.0
  %1502 = vmatpush1.msra.mxu0 0.0
  %1503 = vmatprep.subr.mxu0 0.0
  %1504 = vmatpush1.msra.mxu0 0.0
  %1505 = vmatprep.subr.mxu0 0.0
  %1506 = vmatpush1.msra.mxu0 0.0
  %1507 = vmatprep.subr.mxu0 0.0
  %1508 = vmatpush1.msra.mxu0 0.0
  %1509 = vmatprep.subr.mxu0 0.0
  %1510 = vmatpush1.msra.mxu0 0.0
  %1511 = vmatprep.subr.mxu0 0.0
  %1512 = vmatpush1.msra.mxu0 0.0
  %1513 = vmatprep.subr.mxu0 0.0
  %1514 = vmatpush1.msra.mxu0 0.0
  %1515 = vmatprep.subr.mxu0 0.0
  %1516 = vmatpush1.msra.mxu0 0.0
  %1517 = vmatprep.subr.mxu0 0.0
  %1518 = vmatpush1.msra.mxu0 0.0
  %1519 = vmatprep.subr.mxu0 0.0
  %1520 = vmatpush1.msra.mxu0 0.0
  %1521 = vmatprep.subr.mxu0 0.0
  %1522 = vmatpush1.msra.mxu0 0.0
  %1523 = vmatprep.subr.mxu0 0.0
  %1524 = vmatpush1.msra.mxu0 0.0
  %1525 = vmatprep.subr.mxu0 0.0
  %1526 = vmatpush1.msra.mxu0 0.0
  %1527 = vmatprep.subr.mxu0 0.0
  %1528 = vmatpush1.msra.mxu0 0.0
  %1529 = vmatprep.subr.mxu0 0.0
  %1530 = vmatpush1.msra.mxu0 0.0
  %1531 = vmatprep.subr.mxu0 0.0
  %1532 = vmatpush1.msra.mxu0 0.0
  %1533 = vmatprep.subr.mxu0 0.0
  %1534 = vmatpush1.msra.mxu0 0.0
  %1535 = vmatprep.subr.mxu0 0.0
  %1536 = vmatpush1.msra.mxu0 0.0
  %1537 = vmatprep.subr.mxu0 0.0
  %1538 = vmatpush1.msra.mxu0 0.0
  %1539 = vmatprep.subr.mxu0 0.0
  %1540 = vmatpush1.msra.mxu0 0.0
  %1541 = vmatprep.subr.mxu0 0.0
  %1542 = vmatpush1.msra.mxu0 0.0
  %1543 = vmatprep.subr.mxu0 0.0
  %1544 = vmatpush1.msra.mxu0 0.0
  %1545 = vmatprep.subr.mxu0 0.0
  %1546 = vmatpush1.msra.mxu0 0.0
  %1547 = vmatprep.subr.mxu0 0.0
  %1548 = vmatpush1.msra.mxu0 0.0
  %1549 = vmatprep.mubr.f32.mxu0 0.0
  %1550 = vmatmul.mubr.f32.gmra.mrb[0].mxu0 %v1009
  %v1551 = vpop.f32.mrb[0].mxu0
  %v1552 = vadd.f32 %v934, %v1551
  %v1553 = vpop.f32.mrb[0].mxu0
  %v1554 = vadd.f32 %v936, %v1553
  %1555 = vdwg.mxu0
  %1556 = vmatprep.subr.mxu0 %v1057
  %1557 = vmatpush1.msra.mxu0 %v1054
  %1558 = vmatprep.subr.mxu0 0.0
  %1559 = vmatpush1.msra.mxu0 0.0
  %1560 = vmatprep.subr.mxu0 0.0
  %1561 = vmatpush1.msra.mxu0 0.0
  %1562 = vmatprep.subr.mxu0 0.0
  %1563 = vmatpush1.msra.mxu0 0.0
  %1564 = vmatprep.subr.mxu0 0.0
  %1565 = vmatpush1.msra.mxu0 0.0
  %1566 = vmatprep.subr.mxu0 0.0
  %1567 = vmatpush1.msra.mxu0 0.0
  %1568 = vmatprep.subr.mxu0 0.0
  %1569 = vmatpush1.msra.mxu0 0.0
  %1570 = vmatprep.subr.mxu0 0.0
  %1571 = vmatpush1.msra.mxu0 0.0
  %1572 = vmatprep.subr.mxu0 0.0
  %1573 = vmatpush1.msra.mxu0 0.0
  %1574 = vmatprep.subr.mxu0 0.0
  %1575 = vmatpush1.msra.mxu0 0.0
  %1576 = vmatprep.subr.mxu0 0.0
  %1577 = vmatpush1.msra.mxu0 0.0
  %1578 = vmatprep.subr.mxu0 0.0
  %1579 = vmatpush1.msra.mxu0 0.0
  %1580 = vmatprep.subr.mxu0 0.0
  %1581 = vmatpush1.msra.mxu0 0.0
  %1582 = vmatprep.subr.mxu0 0.0
  %1583 = vmatpush1.msra.mxu0 0.0
  %1584 = vmatprep.subr.mxu0 0.0
  %1585 = vmatpush1.msra.mxu0 0.0
  %1586 = vmatprep.subr.mxu0 0.0
  %1587 = vmatpush1.msra.mxu0 0.0
  %1588 = vmatprep.subr.mxu0 0.0
  %1589 = vmatpush1.msra.mxu0 0.0
  %1590 = vmatprep.subr.mxu0 0.0
  %1591 = vmatpush1.msra.mxu0 0.0
  %1592 = vmatprep.subr.mxu0 0.0
  %1593 = vmatpush1.msra.mxu0 0.0
  %1594 = vmatprep.subr.mxu0 0.0
  %1595 = vmatpush1.msra.mxu0 0.0
  %1596 = vmatprep.subr.mxu0 0.0
  %1597 = vmatpush1.msra.mxu0 0.0
  %1598 = vmatprep.subr.mxu0 0.0
  %1599 = vmatpush1.msra.mxu0 0.0
  %1600 = vmatprep.subr.mxu0 0.0
  %1601 = vmatpush1.msra.mxu0 0.0
  %1602 = vmatprep.subr.mxu0 0.0
  %1603 = vmatpush1.msra.mxu0 0.0
  %1604 = vmatprep.subr.mxu0 0.0
  %1605 = vmatpush1.msra.mxu0 0.0
  %1606 = vmatprep.subr.mxu0 0.0
  %1607 = vmatpush1.msra.mxu0 0.0
  %1608 = vmatprep.subr.mxu0 0.0
  %1609 = vmatpush1.msra.mxu0 0.0
  %1610 = vmatprep.subr.mxu0 0.0
  %1611 = vmatpush1.msra.mxu0 0.0
  %1612 = vmatprep.subr.mxu0 0.0
  %1613 = vmatpush1.msra.mxu0 0.0
  %1614 = vmatprep.subr.mxu0 0.0
  %1615 = vmatpush1.msra.mxu0 0.0
  %1616 = vmatprep.subr.mxu0 0.0
  %1617 = vmatpush1.msra.mxu0 0.0
  %1618 = vmatprep.subr.mxu0 0.0
  %1619 = vmatpush1.msra.mxu0 0.0
  %1620 = vmatprep.mubr.f32.mxu0 0.0
  %1621 = vmatmul.mubr.f32.gmra.mrb[0].mxu0 %v1009
  %v1622 = vpop.f32.mrb[0].mxu0
  %v1623 = vadd.f32 %v1005, %v1622
  %v1624 = vpop.f32.mrb[0].mxu0
  %v1625 = vadd.f32 %v1007, %v1624
  %1626 = vdwg.mxu0
  %1627 = vrot.lane.b32.xlu0 %v14, 62
  %v1628 = vpop.permute.xlu0 %1627
  %1629 = vrot.lane.b32.xlu0 %v160, 62
  %v1630 = vpop.permute.xlu0 %1629
  %1631 = vrot.lane.b32.xlu0 %v15, 62
  %v1632 = vpop.permute.xlu0 %1631
  %1633 = vrot.lane.b32.xlu0 %v161, 62
  %v1634 = vpop.permute.xlu0 %1633
  %1635 = vrot.lane.b32.xlu0 %v16, 62
  %v1636 = vpop.permute.xlu0 %1635
  %1637 = vrot.lane.b32.xlu0 %v162, 62
  %v1638 = vpop.permute.xlu0 %1637
  %1639 = vrot.lane.b32.xlu0 %v17, 62
  %v1640 = vpop.permute.xlu0 %1639
  %1641 = vrot.lane.b32.xlu0 %v163, 62
  %v1642 = vpop.permute.xlu0 %1641
  %1643 = vrot.lane.b32.xlu0 %v18, 62
  %v1644 = vpop.permute.xlu0 %1643
  %1645 = vrot.lane.b32.xlu0 %v164, 62
  %v1646 = vpop.permute.xlu0 %1645
  %1647 = vrot.lane.b32.xlu0 %v19, 62
  %v1648 = vpop.permute.xlu0 %1647
  %1649 = vrot.lane.b32.xlu0 %v165, 62
  %v1650 = vpop.permute.xlu0 %1649
  %1651 = vrot.lane.b32.xlu0 %v20, 62
  %v1652 = vpop.permute.xlu0 %1651
  %1653 = vrot.lane.b32.xlu0 %v166, 62
  %v1654 = vpop.permute.xlu0 %1653
  %1655 = vrot.lane.b32.xlu0 %v21, 62
  %v1656 = vpop.permute.xlu0 %1655
  %1657 = vrot.lane.b32.xlu0 %v167, 62
  %v1658 = vpop.permute.xlu0 %1657
  %vm1659 = vcmp.lt.s32.totalorder %v24, 62
  %v1660 = vsel %vm1659, %v1656, %v1658
  %v1661 = vsel %vm1659, %v1654, %v1656
  %v1662 = vsel %vm1659, %v1652, %v1654
  %v1663 = vsel %vm1659, %v1650, %v1652
  %v1664 = vsel %vm1659, %v1648, %v1650
  %v1665 = vsel %vm1659, %v1646, %v1648
  %v1666 = vsel %vm1659, %v1644, %v1646
  %v1667 = vsel %vm1659, %v1642, %v1644
  %v1668 = vsel %vm1659, %v1640, %v1642
  %v1669 = vsel %vm1659, %v1638, %v1640
  %v1670 = vsel %vm1659, %v1636, %v1638
  %v1671 = vsel %vm1659, %v1634, %v1636
  %v1672 = vsel %vm1659, %v1632, %v1634
  %v1673 = vsel %vm1659, %v1630, %v1632
  %v1674 = vsel %vm1659, %v1628, %v1630
  %v1675 = vsel %vm1659, %v1658, %v1628
  %vm1676 = vmand %vm104, %vm120
  %vm1677 = vmand %vm105, %vm121
  %vm1678 = vmand %vm106, %vm122
  %vm1679 = vmand %vm107, %vm123
  %vm1680 = vmand %vm108, %vm124
  %vm1681 = vmand %vm109, %vm125
  %vm1682 = vmand %vm110, %vm126
  %vm1683 = vmand %vm111, %vm127
  %vm1684 = vmand %vm112, %vm128
  %vm1685 = vmand %vm113, %vm129
  %vm1686 = vmand %vm114, %vm130
  %vm1687 = vmand %vm115, %vm131
  %vm1688 = vmand %vm116, %vm132
  %vm1689 = vmand %vm117, %vm133
  %vm1690 = vmand %vm118, %vm134
  %vm1691 = vmand %vm119, %vm135
  %v1692 = vsel %vm1676, 1, 0
  %v1693 = vsel %vm1677, 1, 0
  %v1694 = vsel %vm1678, 1, 0
  %v1695 = vsel %vm1679, 1, 0
  %v1696 = vsel %vm1680, 1, 0
  %v1697 = vsel %vm1681, 1, 0
  %v1698 = vsel %vm1682, 1, 0
  %v1699 = vsel %vm1683, 1, 0
  %v1700 = vsel %vm1684, 1, 0
  %v1701 = vsel %vm1685, 1, 0
  %v1702 = vsel %vm1686, 1, 0
  %v1703 = vsel %vm1687, 1, 0
  %v1704 = vsel %vm1688, 1, 0
  %v1705 = vsel %vm1689, 1, 0
  %v1706 = vsel %vm1690, 1, 0
  %v1707 = vsel %vm1691, 1, 0
  %vm1708 = vcmp.eq.s32.totalorder %v1692, 1
  %vm1709 = vcmp.eq.s32.totalorder %v1693, 1
  %vm1710 = vcmp.eq.s32.totalorder %v1694, 1
  %vm1711 = vcmp.eq.s32.totalorder %v1695, 1
  %vm1712 = vcmp.eq.s32.totalorder %v1696, 1
  %vm1713 = vcmp.eq.s32.totalorder %v1697, 1
  %vm1714 = vcmp.eq.s32.totalorder %v1698, 1
  %vm1715 = vcmp.eq.s32.totalorder %v1699, 1
  %vm1716 = vcmp.eq.s32.totalorder %v1700, 1
  %vm1717 = vcmp.eq.s32.totalorder %v1701, 1
  %vm1718 = vcmp.eq.s32.totalorder %v1702, 1
  %vm1719 = vcmp.eq.s32.totalorder %v1703, 1
  %vm1720 = vcmp.eq.s32.totalorder %v1704, 1
  %vm1721 = vcmp.eq.s32.totalorder %v1705, 1
  %vm1722 = vcmp.eq.s32.totalorder %v1706, 1
  %vm1723 = vcmp.eq.s32.totalorder %v1707, 1
  %v1724 = vsel %vm1708, %v1675, 0.0
  %v1725 = vsel %vm1709, %v1674, 0.0
  %v1726 = vsel %vm1710, %v1673, 0.0
  %v1727 = vsel %vm1711, %v1672, 0.0
  %v1728 = vsel %vm1712, %v1671, 0.0
  %v1729 = vsel %vm1713, %v1670, 0.0
  %v1730 = vsel %vm1714, %v1669, 0.0
  %v1731 = vsel %vm1715, %v1668, 0.0
  %v1732 = vsel %vm1716, %v1667, 0.0
  %v1733 = vsel %vm1717, %v1666, 0.0
  %v1734 = vsel %vm1718, %v1665, 0.0
  %v1735 = vsel %vm1719, %v1664, 0.0
  %v1736 = vsel %vm1720, %v1663, 0.0
  %v1737 = vsel %vm1721, %v1662, 0.0
  %v1738 = vsel %vm1722, %v1661, 0.0
  %v1739 = vsel %vm1723, %v1660, 0.0
  %1740 = vrot.lane.b32.xlu0 %v22, 120
  %v1741 = vpop.permute.xlu0 %1740
  %v1742 = vsel %vm389, %v1741, 0
  %v1745 = vsel %vm392, %v1724, 0
  %v1748 = vsel %vm392, %v1725, 0
  %v1751 = vsel %vm392, %v1726, 0
  %v1754 = vsel %vm392, %v1727, 0
  %v1757 = vsel %vm392, %v1728, 0
  %v1760 = vsel %vm392, %v1729, 0
  %v1763 = vsel %vm392, %v1730, 0
  %v1766 = vsel %vm392, %v1731, 0
  %v1769 = vsel %vm392, %v1732, 0
  %v1772 = vsel %vm392, %v1733, 0
  %v1775 = vsel %vm392, %v1734, 0
  %v1778 = vsel %vm392, %v1735, 0
  %v1781 = vsel %vm392, %v1736, 0
  %v1784 = vsel %vm392, %v1737, 0
  %v1787 = vsel %vm392, %v1738, 0
  %v1790 = vsel %vm392, %v1739, 0
  %1792 = vmatprep.subr.mxu0 %v1748
  %1793 = vmatpush1.msra.mxu0 %v1745
  %1794 = vmatprep.subr.mxu0 0.0
  %1795 = vmatpush1.msra.mxu0 0.0
  %1796 = vmatprep.subr.mxu0 0.0
  %1797 = vmatpush1.msra.mxu0 0.0
  %1798 = vmatprep.subr.mxu0 0.0
  %1799 = vmatpush1.msra.mxu0 0.0
  %1800 = vmatprep.subr.mxu0 0.0
  %1801 = vmatpush1.msra.mxu0 0.0
  %1802 = vmatprep.subr.mxu0 0.0
  %1803 = vmatpush1.msra.mxu0 0.0
  %1804 = vmatprep.subr.mxu0 0.0
  %1805 = vmatpush1.msra.mxu0 0.0
  %1806 = vmatprep.subr.mxu0 0.0
  %1807 = vmatpush1.msra.mxu0 0.0
  %1808 = vmatprep.subr.mxu0 0.0
  %1809 = vmatpush1.msra.mxu0 0.0
  %1810 = vmatprep.subr.mxu0 0.0
  %1811 = vmatpush1.msra.mxu0 0.0
  %1812 = vmatprep.subr.mxu0 0.0
  %1813 = vmatpush1.msra.mxu0 0.0
  %1814 = vmatprep.subr.mxu0 0.0
  %1815 = vmatpush1.msra.mxu0 0.0
  %1816 = vmatprep.subr.mxu0 0.0
  %1817 = vmatpush1.msra.mxu0 0.0
  %1818 = vmatprep.subr.mxu0 0.0
  %1819 = vmatpush1.msra.mxu0 0.0
  %1820 = vmatprep.subr.mxu0 0.0
  %1821 = vmatpush1.msra.mxu0 0.0
  %1822 = vmatprep.subr.mxu0 0.0
  %1823 = vmatpush1.msra.mxu0 0.0
  %1824 = vmatprep.subr.mxu0 0.0
  %1825 = vmatpush1.msra.mxu0 0.0
  %1826 = vmatprep.subr.mxu0 0.0
  %1827 = vmatpush1.msra.mxu0 0.0
  %1828 = vmatprep.subr.mxu0 0.0
  %1829 = vmatpush1.msra.mxu0 0.0
  %1830 = vmatprep.subr.mxu0 0.0
  %1831 = vmatpush1.msra.mxu0 0.0
  %1832 = vmatprep.subr.mxu0 0.0
  %1833 = vmatpush1.msra.mxu0 0.0
  %1834 = vmatprep.subr.mxu0 0.0
  %1835 = vmatpush1.msra.mxu0 0.0
  %1836 = vmatprep.subr.mxu0 0.0
  %1837 = vmatpush1.msra.mxu0 0.0
  %1838 = vmatprep.subr.mxu0 0.0
  %1839 = vmatpush1.msra.mxu0 0.0
  %1840 = vmatprep.subr.mxu0 0.0
  %1841 = vmatpush1.msra.mxu0 0.0
  %1842 = vmatprep.subr.mxu0 0.0
  %1843 = vmatpush1.msra.mxu0 0.0
  %1844 = vmatprep.subr.mxu0 0.0
  %1845 = vmatpush1.msra.mxu0 0.0
  %1846 = vmatprep.subr.mxu0 0.0
  %1847 = vmatpush1.msra.mxu0 0.0
  %1848 = vmatprep.subr.mxu0 0.0
  %1849 = vmatpush1.msra.mxu0 0.0
  %1850 = vmatprep.subr.mxu0 0.0
  %1851 = vmatpush1.msra.mxu0 0.0
  %1852 = vmatprep.subr.mxu0 0.0
  %1853 = vmatpush1.msra.mxu0 0.0
  %1854 = vmatprep.subr.mxu0 0.0
  %1855 = vmatpush1.msra.mxu0 0.0
  %1856 = vmatprep.mubr.f32.mxu0 0.0
  %1857 = vmatmul.mubr.f32.gmra.mrb[0].mxu0 %v1742
  %v1858 = vpop.f32.mrb[0].mxu0
  %v1859 = vadd.f32 0.0, %v1858
  %v1860 = vpop.f32.mrb[0].mxu0
  %v1861 = vadd.f32 0.0, %v1860
  %1862 = vdwg.mxu0
  %1863 = vmatprep.subr.mxu0 %v1754
  %1864 = vmatpush1.msra.mxu0 %v1751
  %1865 = vmatprep.subr.mxu0 0.0
  %1866 = vmatpush1.msra.mxu0 0.0
  %1867 = vmatprep.subr.mxu0 0.0
  %1868 = vmatpush1.msra.mxu0 0.0
  %1869 = vmatprep.subr.mxu0 0.0
  %1870 = vmatpush1.msra.mxu0 0.0
  %1871 = vmatprep.subr.mxu0 0.0
  %1872 = vmatpush1.msra.mxu0 0.0
  %1873 = vmatprep.subr.mxu0 0.0
  %1874 = vmatpush1.msra.mxu0 0.0
  %1875 = vmatprep.subr.mxu0 0.0
  %1876 = vmatpush1.msra.mxu0 0.0
  %1877 = vmatprep.subr.mxu0 0.0
  %1878 = vmatpush1.msra.mxu0 0.0
  %1879 = vmatprep.subr.mxu0 0.0
  %1880 = vmatpush1.msra.mxu0 0.0
  %1881 = vmatprep.subr.mxu0 0.0
  %1882 = vmatpush1.msra.mxu0 0.0
  %1883 = vmatprep.subr.mxu0 0.0
  %1884 = vmatpush1.msra.mxu0 0.0
  %1885 = vmatprep.subr.mxu0 0.0
  %1886 = vmatpush1.msra.mxu0 0.0
  %1887 = vmatprep.subr.mxu0 0.0
  %1888 = vmatpush1.msra.mxu0 0.0
  %1889 = vmatprep.subr.mxu0 0.0
  %1890 = vmatpush1.msra.mxu0 0.0
  %1891 = vmatprep.subr.mxu0 0.0
  %1892 = vmatpush1.msra.mxu0 0.0
  %1893 = vmatprep.subr.mxu0 0.0
  %1894 = vmatpush1.msra.mxu0 0.0
  %1895 = vmatprep.subr.mxu0 0.0
  %1896 = vmatpush1.msra.mxu0 0.0
  %1897 = vmatprep.subr.mxu0 0.0
  %1898 = vmatpush1.msra.mxu0 0.0
  %1899 = vmatprep.subr.mxu0 0.0
  %1900 = vmatpush1.msra.mxu0 0.0
  %1901 = vmatprep.subr.mxu0 0.0
  %1902 = vmatpush1.msra.mxu0 0.0
  %1903 = vmatprep.subr.mxu0 0.0
  %1904 = vmatpush1.msra.mxu0 0.0
  %1905 = vmatprep.subr.mxu0 0.0
  %1906 = vmatpush1.msra.mxu0 0.0
  %1907 = vmatprep.subr.mxu0 0.0
  %1908 = vmatpush1.msra.mxu0 0.0
  %1909 = vmatprep.subr.mxu0 0.0
  %1910 = vmatpush1.msra.mxu0 0.0
  %1911 = vmatprep.subr.mxu0 0.0
  %1912 = vmatpush1.msra.mxu0 0.0
  %1913 = vmatprep.subr.mxu0 0.0
  %1914 = vmatpush1.msra.mxu0 0.0
  %1915 = vmatprep.subr.mxu0 0.0
  %1916 = vmatpush1.msra.mxu0 0.0
  %1917 = vmatprep.subr.mxu0 0.0
  %1918 = vmatpush1.msra.mxu0 0.0
  %1919 = vmatprep.subr.mxu0 0.0
  %1920 = vmatpush1.msra.mxu0 0.0
  %1921 = vmatprep.subr.mxu0 0.0
  %1922 = vmatpush1.msra.mxu0 0.0
  %1923 = vmatprep.subr.mxu0 0.0
  %1924 = vmatpush1.msra.mxu0 0.0
  %1925 = vmatprep.subr.mxu0 0.0
  %1926 = vmatpush1.msra.mxu0 0.0
  %1927 = vmatprep.mubr.f32.mxu0 0.0
  %1928 = vmatmul.mubr.f32.gmra.mrb[0].mxu0 %v1742
  %v1929 = vpop.f32.mrb[0].mxu0
  %v1930 = vadd.f32 0.0, %v1929
  %v1931 = vpop.f32.mrb[0].mxu0
  %v1932 = vadd.f32 0.0, %v1931
  %1933 = vdwg.mxu0
  %1934 = vmatprep.subr.mxu0 %v1760
  %1935 = vmatpush1.msra.mxu0 %v1757
  %1936 = vmatprep.subr.mxu0 0.0
  %1937 = vmatpush1.msra.mxu0 0.0
  %1938 = vmatprep.subr.mxu0 0.0
  %1939 = vmatpush1.msra.mxu0 0.0
  %1940 = vmatprep.subr.mxu0 0.0
  %1941 = vmatpush1.msra.mxu0 0.0
  %1942 = vmatprep.subr.mxu0 0.0
  %1943 = vmatpush1.msra.mxu0 0.0
  %1944 = vmatprep.subr.mxu0 0.0
  %1945 = vmatpush1.msra.mxu0 0.0
  %1946 = vmatprep.subr.mxu0 0.0
  %1947 = vmatpush1.msra.mxu0 0.0
  %1948 = vmatprep.subr.mxu0 0.0
  %1949 = vmatpush1.msra.mxu0 0.0
  %1950 = vmatprep.subr.mxu0 0.0
  %1951 = vmatpush1.msra.mxu0 0.0
  %1952 = vmatprep.subr.mxu0 0.0
  %1953 = vmatpush1.msra.mxu0 0.0
  %1954 = vmatprep.subr.mxu0 0.0
  %1955 = vmatpush1.msra.mxu0 0.0
  %1956 = vmatprep.subr.mxu0 0.0
  %1957 = vmatpush1.msra.mxu0 0.0
  %1958 = vmatprep.subr.mxu0 0.0
  %1959 = vmatpush1.msra.mxu0 0.0
  %1960 = vmatprep.subr.mxu0 0.0
  %1961 = vmatpush1.msra.mxu0 0.0
  %1962 = vmatprep.subr.mxu0 0.0
  %1963 = vmatpush1.msra.mxu0 0.0
  %1964 = vmatprep.subr.mxu0 0.0
  %1965 = vmatpush1.msra.mxu0 0.0
  %1966 = vmatprep.subr.mxu0 0.0
  %1967 = vmatpush1.msra.mxu0 0.0
  %1968 = vmatprep.subr.mxu0 0.0
  %1969 = vmatpush1.msra.mxu0 0.0
  %1970 = vmatprep.subr.mxu0 0.0
  %1971 = vmatpush1.msra.mxu0 0.0
  %1972 = vmatprep.subr.mxu0 0.0
  %1973 = vmatpush1.msra.mxu0 0.0
  %1974 = vmatprep.subr.mxu0 0.0
  %1975 = vmatpush1.msra.mxu0 0.0
  %1976 = vmatprep.subr.mxu0 0.0
  %1977 = vmatpush1.msra.mxu0 0.0
  %1978 = vmatprep.subr.mxu0 0.0
  %1979 = vmatpush1.msra.mxu0 0.0
  %1980 = vmatprep.subr.mxu0 0.0
  %1981 = vmatpush1.msra.mxu0 0.0
  %1982 = vmatprep.subr.mxu0 0.0
  %1983 = vmatpush1.msra.mxu0 0.0
  %1984 = vmatprep.subr.mxu0 0.0
  %1985 = vmatpush1.msra.mxu0 0.0
  %1986 = vmatprep.subr.mxu0 0.0
  %1987 = vmatpush1.msra.mxu0 0.0
  %1988 = vmatprep.subr.mxu0 0.0
  %1989 = vmatpush1.msra.mxu0 0.0
  %1990 = vmatprep.subr.mxu0 0.0
  %1991 = vmatpush1.msra.mxu0 0.0
  %1992 = vmatprep.subr.mxu0 0.0
  %1993 = vmatpush1.msra.mxu0 0.0
  %1994 = vmatprep.subr.mxu0 0.0
  %1995 = vmatpush1.msra.mxu0 0.0
  %1996 = vmatprep.subr.mxu0 0.0
  %1997 = vmatpush1.msra.mxu0 0.0
  %1998 = vmatprep.mubr.f32.mxu0 0.0
  %1999 = vmatmul.mubr.f32.gmra.mrb[0].mxu0 %v1742
  %v2000 = vpop.f32.mrb[0].mxu0
  %v2001 = vadd.f32 0.0, %v2000
  %v2002 = vpop.f32.mrb[0].mxu0
  %v2003 = vadd.f32 0.0, %v2002
  %2004 = vdwg.mxu0
  %2005 = vmatprep.subr.mxu0 %v1766
  %2006 = vmatpush1.msra.mxu0 %v1763
  %2007 = vmatprep.subr.mxu0 0.0
  %2008 = vmatpush1.msra.mxu0 0.0
  %2009 = vmatprep.subr.mxu0 0.0
  %2010 = vmatpush1.msra.mxu0 0.0
  %2011 = vmatprep.subr.mxu0 0.0
  %2012 = vmatpush1.msra.mxu0 0.0
  %2013 = vmatprep.subr.mxu0 0.0
  %2014 = vmatpush1.msra.mxu0 0.0
  %2015 = vmatprep.subr.mxu0 0.0
  %2016 = vmatpush1.msra.mxu0 0.0
  %2017 = vmatprep.subr.mxu0 0.0
  %2018 = vmatpush1.msra.mxu0 0.0
  %2019 = vmatprep.subr.mxu0 0.0
  %2020 = vmatpush1.msra.mxu0 0.0
  %2021 = vmatprep.subr.mxu0 0.0
  %2022 = vmatpush1.msra.mxu0 0.0
  %2023 = vmatprep.subr.mxu0 0.0
  %2024 = vmatpush1.msra.mxu0 0.0
  %2025 = vmatprep.subr.mxu0 0.0
  %2026 = vmatpush1.msra.mxu0 0.0
  %2027 = vmatprep.subr.mxu0 0.0
  %2028 = vmatpush1.msra.mxu0 0.0
  %2029 = vmatprep.subr.mxu0 0.0
  %2030 = vmatpush1.msra.mxu0 0.0
  %2031 = vmatprep.subr.mxu0 0.0
  %2032 = vmatpush1.msra.mxu0 0.0
  %2033 = vmatprep.subr.mxu0 0.0
  %2034 = vmatpush1.msra.mxu0 0.0
  %2035 = vmatprep.subr.mxu0 0.0
  %2036 = vmatpush1.msra.mxu0 0.0
  %2037 = vmatprep.subr.mxu0 0.0
  %2038 = vmatpush1.msra.mxu0 0.0
  %2039 = vmatprep.subr.mxu0 0.0
  %2040 = vmatpush1.msra.mxu0 0.0
  %2041 = vmatprep.subr.mxu0 0.0
  %2042 = vmatpush1.msra.mxu0 0.0
  %2043 = vmatprep.subr.mxu0 0.0
  %2044 = vmatpush1.msra.mxu0 0.0
  %2045 = vmatprep.subr.mxu0 0.0
  %2046 = vmatpush1.msra.mxu0 0.0
  %2047 = vmatprep.subr.mxu0 0.0
  %2048 = vmatpush1.msra.mxu0 0.0
  %2049 = vmatprep.subr.mxu0 0.0
  %2050 = vmatpush1.msra.mxu0 0.0
  %2051 = vmatprep.subr.mxu0 0.0
  %2052 = vmatpush1.msra.mxu0 0.0
  %2053 = vmatprep.subr.mxu0 0.0
  %2054 = vmatpush1.msra.mxu0 0.0
  %2055 = vmatprep.subr.mxu0 0.0
  %2056 = vmatpush1.msra.mxu0 0.0
  %2057 = vmatprep.subr.mxu0 0.0
  %2058 = vmatpush1.msra.mxu0 0.0
  %2059 = vmatprep.subr.mxu0 0.0
  %2060 = vmatpush1.msra.mxu0 0.0
  %2061 = vmatprep.subr.mxu0 0.0
  %2062 = vmatpush1.msra.mxu0 0.0
  %2063 = vmatprep.subr.mxu0 0.0
  %2064 = vmatpush1.msra.mxu0 0.0
  %2065 = vmatprep.subr.mxu0 0.0
  %2066 = vmatpush1.msra.mxu0 0.0
  %2067 = vmatprep.subr.mxu0 0.0
  %2068 = vmatpush1.msra.mxu0 0.0
  %2069 = vmatprep.mubr.f32.mxu0 0.0
  %2070 = vmatmul.mubr.f32.gmra.mrb[0].mxu0 %v1742
  %v2071 = vpop.f32.mrb[0].mxu0
  %v2072 = vadd.f32 0.0, %v2071
  %v2073 = vpop.f32.mrb[0].mxu0
  %v2074 = vadd.f32 0.0, %v2073
  %2075 = vdwg.mxu0
  %2076 = vmatprep.subr.mxu0 %v1772
  %2077 = vmatpush1.msra.mxu0 %v1769
  %2078 = vmatprep.subr.mxu0 0.0
  %2079 = vmatpush1.msra.mxu0 0.0
  %2080 = vmatprep.subr.mxu0 0.0
  %2081 = vmatpush1.msra.mxu0 0.0
  %2082 = vmatprep.subr.mxu0 0.0
  %2083 = vmatpush1.msra.mxu0 0.0
  %2084 = vmatprep.subr.mxu0 0.0
  %2085 = vmatpush1.msra.mxu0 0.0
  %2086 = vmatprep.subr.mxu0 0.0
  %2087 = vmatpush1.msra.mxu0 0.0
  %2088 = vmatprep.subr.mxu0 0.0
  %2089 = vmatpush1.msra.mxu0 0.0
  %2090 = vmatprep.subr.mxu0 0.0
  %2091 = vmatpush1.msra.mxu0 0.0
  %2092 = vmatprep.subr.mxu0 0.0
  %2093 = vmatpush1.msra.mxu0 0.0
  %2094 = vmatprep.subr.mxu0 0.0
  %2095 = vmatpush1.msra.mxu0 0.0
  %2096 = vmatprep.subr.mxu0 0.0
  %2097 = vmatpush1.msra.mxu0 0.0
  %2098 = vmatprep.subr.mxu0 0.0
  %2099 = vmatpush1.msra.mxu0 0.0
  %2100 = vmatprep.subr.mxu0 0.0
  %2101 = vmatpush1.msra.mxu0 0.0
  %2102 = vmatprep.subr.mxu0 0.0
  %2103 = vmatpush1.msra.mxu0 0.0
  %2104 = vmatprep.subr.mxu0 0.0
  %2105 = vmatpush1.msra.mxu0 0.0
  %2106 = vmatprep.subr.mxu0 0.0
  %2107 = vmatpush1.msra.mxu0 0.0
  %2108 = vmatprep.subr.mxu0 0.0
  %2109 = vmatpush1.msra.mxu0 0.0
  %2110 = vmatprep.subr.mxu0 0.0
  %2111 = vmatpush1.msra.mxu0 0.0
  %2112 = vmatprep.subr.mxu0 0.0
  %2113 = vmatpush1.msra.mxu0 0.0
  %2114 = vmatprep.subr.mxu0 0.0
  %2115 = vmatpush1.msra.mxu0 0.0
  %2116 = vmatprep.subr.mxu0 0.0
  %2117 = vmatpush1.msra.mxu0 0.0
  %2118 = vmatprep.subr.mxu0 0.0
  %2119 = vmatpush1.msra.mxu0 0.0
  %2120 = vmatprep.subr.mxu0 0.0
  %2121 = vmatpush1.msra.mxu0 0.0
  %2122 = vmatprep.subr.mxu0 0.0
  %2123 = vmatpush1.msra.mxu0 0.0
  %2124 = vmatprep.subr.mxu0 0.0
  %2125 = vmatpush1.msra.mxu0 0.0
  %2126 = vmatprep.subr.mxu0 0.0
  %2127 = vmatpush1.msra.mxu0 0.0
  %2128 = vmatprep.subr.mxu0 0.0
  %2129 = vmatpush1.msra.mxu0 0.0
  %2130 = vmatprep.subr.mxu0 0.0
  %2131 = vmatpush1.msra.mxu0 0.0
  %2132 = vmatprep.subr.mxu0 0.0
  %2133 = vmatpush1.msra.mxu0 0.0
  %2134 = vmatprep.subr.mxu0 0.0
  %2135 = vmatpush1.msra.mxu0 0.0
  %2136 = vmatprep.subr.mxu0 0.0
  %2137 = vmatpush1.msra.mxu0 0.0
  %2138 = vmatprep.subr.mxu0 0.0
  %2139 = vmatpush1.msra.mxu0 0.0
  %2140 = vmatprep.mubr.f32.mxu0 0.0
  %2141 = vmatmul.mubr.f32.gmra.mrb[0].mxu0 %v1742
  %v2142 = vpop.f32.mrb[0].mxu0
  %v2143 = vadd.f32 0.0, %v2142
  %v2144 = vpop.f32.mrb[0].mxu0
  %v2145 = vadd.f32 0.0, %v2144
  %2146 = vdwg.mxu0
  %2147 = vmatprep.subr.mxu0 %v1778
  %2148 = vmatpush1.msra.mxu0 %v1775
  %2149 = vmatprep.subr.mxu0 0.0
  %2150 = vmatpush1.msra.mxu0 0.0
  %2151 = vmatprep.subr.mxu0 0.0
  %2152 = vmatpush1.msra.mxu0 0.0
  %2153 = vmatprep.subr.mxu0 0.0
  %2154 = vmatpush1.msra.mxu0 0.0
  %2155 = vmatprep.subr.mxu0 0.0
  %2156 = vmatpush1.msra.mxu0 0.0
  %2157 = vmatprep.subr.mxu0 0.0
  %2158 = vmatpush1.msra.mxu0 0.0
  %2159 = vmatprep.subr.mxu0 0.0
  %2160 = vmatpush1.msra.mxu0 0.0
  %2161 = vmatprep.subr.mxu0 0.0
  %2162 = vmatpush1.msra.mxu0 0.0
  %2163 = vmatprep.subr.mxu0 0.0
  %2164 = vmatpush1.msra.mxu0 0.0
  %2165 = vmatprep.subr.mxu0 0.0
  %2166 = vmatpush1.msra.mxu0 0.0
  %2167 = vmatprep.subr.mxu0 0.0
  %2168 = vmatpush1.msra.mxu0 0.0
  %2169 = vmatprep.subr.mxu0 0.0
  %2170 = vmatpush1.msra.mxu0 0.0
  %2171 = vmatprep.subr.mxu0 0.0
  %2172 = vmatpush1.msra.mxu0 0.0
  %2173 = vmatprep.subr.mxu0 0.0
  %2174 = vmatpush1.msra.mxu0 0.0
  %2175 = vmatprep.subr.mxu0 0.0
  %2176 = vmatpush1.msra.mxu0 0.0
  %2177 = vmatprep.subr.mxu0 0.0
  %2178 = vmatpush1.msra.mxu0 0.0
  %2179 = vmatprep.subr.mxu0 0.0
  %2180 = vmatpush1.msra.mxu0 0.0
  %2181 = vmatprep.subr.mxu0 0.0
  %2182 = vmatpush1.msra.mxu0 0.0
  %2183 = vmatprep.subr.mxu0 0.0
  %2184 = vmatpush1.msra.mxu0 0.0
  %2185 = vmatprep.subr.mxu0 0.0
  %2186 = vmatpush1.msra.mxu0 0.0
  %2187 = vmatprep.subr.mxu0 0.0
  %2188 = vmatpush1.msra.mxu0 0.0
  %2189 = vmatprep.subr.mxu0 0.0
  %2190 = vmatpush1.msra.mxu0 0.0
  %2191 = vmatprep.subr.mxu0 0.0
  %2192 = vmatpush1.msra.mxu0 0.0
  %2193 = vmatprep.subr.mxu0 0.0
  %2194 = vmatpush1.msra.mxu0 0.0
  %2195 = vmatprep.subr.mxu0 0.0
  %2196 = vmatpush1.msra.mxu0 0.0
  %2197 = vmatprep.subr.mxu0 0.0
  %2198 = vmatpush1.msra.mxu0 0.0
  %2199 = vmatprep.subr.mxu0 0.0
  %2200 = vmatpush1.msra.mxu0 0.0
  %2201 = vmatprep.subr.mxu0 0.0
  %2202 = vmatpush1.msra.mxu0 0.0
  %2203 = vmatprep.subr.mxu0 0.0
  %2204 = vmatpush1.msra.mxu0 0.0
  %2205 = vmatprep.subr.mxu0 0.0
  %2206 = vmatpush1.msra.mxu0 0.0
  %2207 = vmatprep.subr.mxu0 0.0
  %2208 = vmatpush1.msra.mxu0 0.0
  %2209 = vmatprep.subr.mxu0 0.0
  %2210 = vmatpush1.msra.mxu0 0.0
  %2211 = vmatprep.mubr.f32.mxu0 0.0
  %2212 = vmatmul.mubr.f32.gmra.mrb[0].mxu0 %v1742
  %v2213 = vpop.f32.mrb[0].mxu0
  %v2214 = vadd.f32 0.0, %v2213
  %v2215 = vpop.f32.mrb[0].mxu0
  %v2216 = vadd.f32 0.0, %v2215
  %2217 = vdwg.mxu0
  %2218 = vmatprep.subr.mxu0 %v1784
  %2219 = vmatpush1.msra.mxu0 %v1781
  %2220 = vmatprep.subr.mxu0 0.0
  %2221 = vmatpush1.msra.mxu0 0.0
  %2222 = vmatprep.subr.mxu0 0.0
  %2223 = vmatpush1.msra.mxu0 0.0
  %2224 = vmatprep.subr.mxu0 0.0
  %2225 = vmatpush1.msra.mxu0 0.0
  %2226 = vmatprep.subr.mxu0 0.0
  %2227 = vmatpush1.msra.mxu0 0.0
  %2228 = vmatprep.subr.mxu0 0.0
  %2229 = vmatpush1.msra.mxu0 0.0
  %2230 = vmatprep.subr.mxu0 0.0
  %2231 = vmatpush1.msra.mxu0 0.0
  %2232 = vmatprep.subr.mxu0 0.0
  %2233 = vmatpush1.msra.mxu0 0.0
  %2234 = vmatprep.subr.mxu0 0.0
  %2235 = vmatpush1.msra.mxu0 0.0
  %2236 = vmatprep.subr.mxu0 0.0
  %2237 = vmatpush1.msra.mxu0 0.0
  %2238 = vmatprep.subr.mxu0 0.0
  %2239 = vmatpush1.msra.mxu0 0.0
  %2240 = vmatprep.subr.mxu0 0.0
  %2241 = vmatpush1.msra.mxu0 0.0
  %2242 = vmatprep.subr.mxu0 0.0
  %2243 = vmatpush1.msra.mxu0 0.0
  %2244 = vmatprep.subr.mxu0 0.0
  %2245 = vmatpush1.msra.mxu0 0.0
  %2246 = vmatprep.subr.mxu0 0.0
  %2247 = vmatpush1.msra.mxu0 0.0
  %2248 = vmatprep.subr.mxu0 0.0
  %2249 = vmatpush1.msra.mxu0 0.0
  %2250 = vmatprep.subr.mxu0 0.0
  %2251 = vmatpush1.msra.mxu0 0.0
  %2252 = vmatprep.subr.mxu0 0.0
  %2253 = vmatpush1.msra.mxu0 0.0
  %2254 = vmatprep.subr.mxu0 0.0
  %2255 = vmatpush1.msra.mxu0 0.0
  %2256 = vmatprep.subr.mxu0 0.0
  %2257 = vmatpush1.msra.mxu0 0.0
  %2258 = vmatprep.subr.mxu0 0.0
  %2259 = vmatpush1.msra.mxu0 0.0
  %2260 = vmatprep.subr.mxu0 0.0
  %2261 = vmatpush1.msra.mxu0 0.0
  %2262 = vmatprep.subr.mxu0 0.0
  %2263 = vmatpush1.msra.mxu0 0.0
  %2264 = vmatprep.subr.mxu0 0.0
  %2265 = vmatpush1.msra.mxu0 0.0
  %2266 = vmatprep.subr.mxu0 0.0
  %2267 = vmatpush1.msra.mxu0 0.0
  %2268 = vmatprep.subr.mxu0 0.0
  %2269 = vmatpush1.msra.mxu0 0.0
  %2270 = vmatprep.subr.mxu0 0.0
  %2271 = vmatpush1.msra.mxu0 0.0
  %2272 = vmatprep.subr.mxu0 0.0
  %2273 = vmatpush1.msra.mxu0 0.0
  %2274 = vmatprep.subr.mxu0 0.0
  %2275 = vmatpush1.msra.mxu0 0.0
  %2276 = vmatprep.subr.mxu0 0.0
  %2277 = vmatpush1.msra.mxu0 0.0
  %2278 = vmatprep.subr.mxu0 0.0
  %2279 = vmatpush1.msra.mxu0 0.0
  %2280 = vmatprep.subr.mxu0 0.0
  %2281 = vmatpush1.msra.mxu0 0.0
  %2282 = vmatprep.mubr.f32.mxu0 0.0
  %2283 = vmatmul.mubr.f32.gmra.mrb[0].mxu0 %v1742
  %v2284 = vpop.f32.mrb[0].mxu0
  %v2285 = vadd.f32 0.0, %v2284
  %v2286 = vpop.f32.mrb[0].mxu0
  %v2287 = vadd.f32 0.0, %v2286
  %2288 = vdwg.mxu0
  %2289 = vmatprep.subr.mxu0 %v1790
  %2290 = vmatpush1.msra.mxu0 %v1787
  %2291 = vmatprep.subr.mxu0 0.0
  %2292 = vmatpush1.msra.mxu0 0.0
  %2293 = vmatprep.subr.mxu0 0.0
  %2294 = vmatpush1.msra.mxu0 0.0
  %2295 = vmatprep.subr.mxu0 0.0
  %2296 = vmatpush1.msra.mxu0 0.0
  %2297 = vmatprep.subr.mxu0 0.0
  %2298 = vmatpush1.msra.mxu0 0.0
  %2299 = vmatprep.subr.mxu0 0.0
  %2300 = vmatpush1.msra.mxu0 0.0
  %2301 = vmatprep.subr.mxu0 0.0
  %2302 = vmatpush1.msra.mxu0 0.0
  %2303 = vmatprep.subr.mxu0 0.0
  %2304 = vmatpush1.msra.mxu0 0.0
  %2305 = vmatprep.subr.mxu0 0.0
  %2306 = vmatpush1.msra.mxu0 0.0
  %2307 = vmatprep.subr.mxu0 0.0
  %2308 = vmatpush1.msra.mxu0 0.0
  %2309 = vmatprep.subr.mxu0 0.0
  %2310 = vmatpush1.msra.mxu0 0.0
  %2311 = vmatprep.subr.mxu0 0.0
  %2312 = vmatpush1.msra.mxu0 0.0
  %2313 = vmatprep.subr.mxu0 0.0
  %2314 = vmatpush1.msra.mxu0 0.0
  %2315 = vmatprep.subr.mxu0 0.0
  %2316 = vmatpush1.msra.mxu0 0.0
  %2317 = vmatprep.subr.mxu0 0.0
  %2318 = vmatpush1.msra.mxu0 0.0
  %2319 = vmatprep.subr.mxu0 0.0
  %2320 = vmatpush1.msra.mxu0 0.0
  %2321 = vmatprep.subr.mxu0 0.0
  %2322 = vmatpush1.msra.mxu0 0.0
  %2323 = vmatprep.subr.mxu0 0.0
  %2324 = vmatpush1.msra.mxu0 0.0
  %2325 = vmatprep.subr.mxu0 0.0
  %2326 = vmatpush1.msra.mxu0 0.0
  %2327 = vmatprep.subr.mxu0 0.0
  %2328 = vmatpush1.msra.mxu0 0.0
  %2329 = vmatprep.subr.mxu0 0.0
  %2330 = vmatpush1.msra.mxu0 0.0
  %2331 = vmatprep.subr.mxu0 0.0
  %2332 = vmatpush1.msra.mxu0 0.0
  %2333 = vmatprep.subr.mxu0 0.0
  %2334 = vmatpush1.msra.mxu0 0.0
  %2335 = vmatprep.subr.mxu0 0.0
  %2336 = vmatpush1.msra.mxu0 0.0
  %2337 = vmatprep.subr.mxu0 0.0
  %2338 = vmatpush1.msra.mxu0 0.0
  %2339 = vmatprep.subr.mxu0 0.0
  %2340 = vmatpush1.msra.mxu0 0.0
  %2341 = vmatprep.subr.mxu0 0.0
  %2342 = vmatpush1.msra.mxu0 0.0
  %2343 = vmatprep.subr.mxu0 0.0
  %2344 = vmatpush1.msra.mxu0 0.0
  %2345 = vmatprep.subr.mxu0 0.0
  %2346 = vmatpush1.msra.mxu0 0.0
  %2347 = vmatprep.subr.mxu0 0.0
  %2348 = vmatpush1.msra.mxu0 0.0
  %2349 = vmatprep.subr.mxu0 0.0
  %2350 = vmatpush1.msra.mxu0 0.0
  %2351 = vmatprep.subr.mxu0 0.0
  %2352 = vmatpush1.msra.mxu0 0.0
  %2353 = vmatprep.mubr.f32.mxu0 0.0
  %2354 = vmatmul.mubr.f32.gmra.mrb[0].mxu0 %v1742
  %v2355 = vpop.f32.mrb[0].mxu0
  %v2356 = vadd.f32 0.0, %v2355
  %v2357 = vpop.f32.mrb[0].mxu0
  %v2358 = vadd.f32 0.0, %v2357
  %2359 = vdwg.mxu0
  %v2360 = vadd.f32 %v1126, %v1859
  %v2361 = vadd.f32 %v1128, %v1861
  %v2362 = vadd.f32 %v1197, %v1930
  %v2363 = vadd.f32 %v1199, %v1932
  %v2364 = vadd.f32 %v1268, %v2001
  %v2365 = vadd.f32 %v1270, %v2003
  %v2366 = vadd.f32 %v1339, %v2072
  %v2367 = vadd.f32 %v1341, %v2074
  %v2368 = vadd.f32 %v1410, %v2143
  %v2369 = vadd.f32 %v1412, %v2145
  %v2370 = vadd.f32 %v1481, %v2214
  %v2371 = vadd.f32 %v1483, %v2216
  %v2372 = vadd.f32 %v1552, %v2285
  %v2373 = vadd.f32 %v1554, %v2287
  %v2374 = vadd.f32 %v1623, %v2356
  %v2375 = vadd.f32 %v1625, %v2358
  %2376 = vrot.lane.b32.xlu0 %v14, 2
  %v2377 = vpop.permute.xlu0 %2376
  %2378 = vrot.lane.b32.xlu0 %v160, 2
  %v2379 = vpop.permute.xlu0 %2378
  %2380 = vrot.lane.b32.xlu0 %v15, 2
  %v2381 = vpop.permute.xlu0 %2380
  %2382 = vrot.lane.b32.xlu0 %v161, 2
  %v2383 = vpop.permute.xlu0 %2382
  %2384 = vrot.lane.b32.xlu0 %v16, 2
  %v2385 = vpop.permute.xlu0 %2384
  %2386 = vrot.lane.b32.xlu0 %v162, 2
  %v2387 = vpop.permute.xlu0 %2386
  %2388 = vrot.lane.b32.xlu0 %v17, 2
  %v2389 = vpop.permute.xlu0 %2388
  %2390 = vrot.lane.b32.xlu0 %v163, 2
  %v2391 = vpop.permute.xlu0 %2390
  %2392 = vrot.lane.b32.xlu0 %v18, 2
  %v2393 = vpop.permute.xlu0 %2392
  %2394 = vrot.lane.b32.xlu0 %v164, 2
  %v2395 = vpop.permute.xlu0 %2394
  %2396 = vrot.lane.b32.xlu0 %v19, 2
  %v2397 = vpop.permute.xlu0 %2396
  %2398 = vrot.lane.b32.xlu0 %v165, 2
  %v2399 = vpop.permute.xlu0 %2398
  %2400 = vrot.lane.b32.xlu0 %v20, 2
  %v2401 = vpop.permute.xlu0 %2400
  %2402 = vrot.lane.b32.xlu0 %v166, 2
  %v2403 = vpop.permute.xlu0 %2402
  %2404 = vrot.lane.b32.xlu0 %v21, 2
  %v2405 = vpop.permute.xlu0 %2404
  %2406 = vrot.lane.b32.xlu0 %v167, 2
  %v2407 = vpop.permute.xlu0 %2406
  %vm2408 = vcmp.lt.s32.totalorder %v24, 2
  %v2409 = vsel %vm2408, %v2405, %v2407
  %v2410 = vsel %vm2408, %v2403, %v2405
  %v2411 = vsel %vm2408, %v2401, %v2403
  %v2412 = vsel %vm2408, %v2399, %v2401
  %v2413 = vsel %vm2408, %v2397, %v2399
  %v2414 = vsel %vm2408, %v2395, %v2397
  %v2415 = vsel %vm2408, %v2393, %v2395
  %v2416 = vsel %vm2408, %v2391, %v2393
  %v2417 = vsel %vm2408, %v2389, %v2391
  %v2418 = vsel %vm2408, %v2387, %v2389
  %v2419 = vsel %vm2408, %v2385, %v2387
  %v2420 = vsel %vm2408, %v2383, %v2385
  %v2421 = vsel %vm2408, %v2381, %v2383
  %v2422 = vsel %vm2408, %v2379, %v2381
  %v2423 = vsel %vm2408, %v2377, %v2379
  %v2424 = vsel %vm2408, %v2407, %v2377
  %v2425 = vsel %vm88, 1, 0
  %v2426 = vsel %vm89, 1, 0
  %v2427 = vsel %vm90, 1, 0
  %v2428 = vsel %vm91, 1, 0
  %v2429 = vsel %vm92, 1, 0
  %v2430 = vsel %vm93, 1, 0
  %v2431 = vsel %vm94, 1, 0
  %v2432 = vsel %vm95, 1, 0
  %v2433 = vsel %vm96, 1, 0
  %v2434 = vsel %vm97, 1, 0
  %v2435 = vsel %vm98, 1, 0
  %v2436 = vsel %vm99, 1, 0
  %v2437 = vsel %vm100, 1, 0
  %v2438 = vsel %vm101, 1, 0
  %v2439 = vsel %vm102, 1, 0
  %v2440 = vsel %vm103, 1, 0
  %vm2441 = vcmp.eq.s32.totalorder %v2425, 1
  %vm2442 = vcmp.eq.s32.totalorder %v2426, 1
  %vm2443 = vcmp.eq.s32.totalorder %v2427, 1
  %vm2444 = vcmp.eq.s32.totalorder %v2428, 1
  %vm2445 = vcmp.eq.s32.totalorder %v2429, 1
  %vm2446 = vcmp.eq.s32.totalorder %v2430, 1
  %vm2447 = vcmp.eq.s32.totalorder %v2431, 1
  %vm2448 = vcmp.eq.s32.totalorder %v2432, 1
  %vm2449 = vcmp.eq.s32.totalorder %v2433, 1
  %vm2450 = vcmp.eq.s32.totalorder %v2434, 1
  %vm2451 = vcmp.eq.s32.totalorder %v2435, 1
  %vm2452 = vcmp.eq.s32.totalorder %v2436, 1
  %vm2453 = vcmp.eq.s32.totalorder %v2437, 1
  %vm2454 = vcmp.eq.s32.totalorder %v2438, 1
  %vm2455 = vcmp.eq.s32.totalorder %v2439, 1
  %vm2456 = vcmp.eq.s32.totalorder %v2440, 1
  %v2457 = vsel %vm2441, %v2424, 0.0
  %v2458 = vsel %vm2442, %v2423, 0.0
  %v2459 = vsel %vm2443, %v2422, 0.0
  %v2460 = vsel %vm2444, %v2421, 0.0
  %v2461 = vsel %vm2445, %v2420, 0.0
  %v2462 = vsel %vm2446, %v2419, 0.0
  %v2463 = vsel %vm2447, %v2418, 0.0
  %v2464 = vsel %vm2448, %v2417, 0.0
  %v2465 = vsel %vm2449, %v2416, 0.0
  %v2466 = vsel %vm2450, %v2415, 0.0
  %v2467 = vsel %vm2451, %v2414, 0.0
  %v2468 = vsel %vm2452, %v2413, 0.0
  %v2469 = vsel %vm2453, %v2412, 0.0
  %v2470 = vsel %vm2454, %v2411, 0.0
  %v2471 = vsel %vm2455, %v2410, 0.0
  %v2472 = vsel %vm2456, %v2409, 0.0
  %2473 = vrot.lane.b32.xlu0 %v22, 116
  %v2474 = vpop.permute.xlu0 %2473
  %v2475 = vsel %vm389, %v2474, 0
  %v2478 = vsel %vm392, %v2457, 0
  %v2481 = vsel %vm392, %v2458, 0
  %v2484 = vsel %vm392, %v2459, 0
  %v2487 = vsel %vm392, %v2460, 0
  %v2490 = vsel %vm392, %v2461, 0
  %v2493 = vsel %vm392, %v2462, 0
  %v2496 = vsel %vm392, %v2463, 0
  %v2499 = vsel %vm392, %v2464, 0
  %v2502 = vsel %vm392, %v2465, 0
  %v2505 = vsel %vm392, %v2466, 0
  %v2508 = vsel %vm392, %v2467, 0
  %v2511 = vsel %vm392, %v2468, 0
  %v2514 = vsel %vm392, %v2469, 0
  %v2517 = vsel %vm392, %v2470, 0
  %v2520 = vsel %vm392, %v2471, 0
  %v2523 = vsel %vm392, %v2472, 0
  %2525 = vmatprep.subr.mxu0 %v2481
  %2526 = vmatpush1.msra.mxu0 %v2478
  %2527 = vmatprep.subr.mxu0 0.0
  %2528 = vmatpush1.msra.mxu0 0.0
  %2529 = vmatprep.subr.mxu0 0.0
  %2530 = vmatpush1.msra.mxu0 0.0
  %2531 = vmatprep.subr.mxu0 0.0
  %2532 = vmatpush1.msra.mxu0 0.0
  %2533 = vmatprep.subr.mxu0 0.0
  %2534 = vmatpush1.msra.mxu0 0.0
  %2535 = vmatprep.subr.mxu0 0.0
  %2536 = vmatpush1.msra.mxu0 0.0
  %2537 = vmatprep.subr.mxu0 0.0
  %2538 = vmatpush1.msra.mxu0 0.0
  %2539 = vmatprep.subr.mxu0 0.0
  %2540 = vmatpush1.msra.mxu0 0.0
  %2541 = vmatprep.subr.mxu0 0.0
  %2542 = vmatpush1.msra.mxu0 0.0
  %2543 = vmatprep.subr.mxu0 0.0
  %2544 = vmatpush1.msra.mxu0 0.0
  %2545 = vmatprep.subr.mxu0 0.0
  %2546 = vmatpush1.msra.mxu0 0.0
  %2547 = vmatprep.subr.mxu0 0.0
  %2548 = vmatpush1.msra.mxu0 0.0
  %2549 = vmatprep.subr.mxu0 0.0
  %2550 = vmatpush1.msra.mxu0 0.0
  %2551 = vmatprep.subr.mxu0 0.0
  %2552 = vmatpush1.msra.mxu0 0.0
  %2553 = vmatprep.subr.mxu0 0.0
  %2554 = vmatpush1.msra.mxu0 0.0
  %2555 = vmatprep.subr.mxu0 0.0
  %2556 = vmatpush1.msra.mxu0 0.0
  %2557 = vmatprep.subr.mxu0 0.0
  %2558 = vmatpush1.msra.mxu0 0.0
  %2559 = vmatprep.subr.mxu0 0.0
  %2560 = vmatpush1.msra.mxu0 0.0
  %2561 = vmatprep.subr.mxu0 0.0
  %2562 = vmatpush1.msra.mxu0 0.0
  %2563 = vmatprep.subr.mxu0 0.0
  %2564 = vmatpush1.msra.mxu0 0.0
  %2565 = vmatprep.subr.mxu0 0.0
  %2566 = vmatpush1.msra.mxu0 0.0
  %2567 = vmatprep.subr.mxu0 0.0
  %2568 = vmatpush1.msra.mxu0 0.0
  %2569 = vmatprep.subr.mxu0 0.0
  %2570 = vmatpush1.msra.mxu0 0.0
  %2571 = vmatprep.subr.mxu0 0.0
  %2572 = vmatpush1.msra.mxu0 0.0
  %2573 = vmatprep.subr.mxu0 0.0
  %2574 = vmatpush1.msra.mxu0 0.0
  %2575 = vmatprep.subr.mxu0 0.0
  %2576 = vmatpush1.msra.mxu0 0.0
  %2577 = vmatprep.subr.mxu0 0.0
  %2578 = vmatpush1.msra.mxu0 0.0
  %2579 = vmatprep.subr.mxu0 0.0
  %2580 = vmatpush1.msra.mxu0 0.0
  %2581 = vmatprep.subr.mxu0 0.0
  %2582 = vmatpush1.msra.mxu0 0.0
  %2583 = vmatprep.subr.mxu0 0.0
  %2584 = vmatpush1.msra.mxu0 0.0
  %2585 = vmatprep.subr.mxu0 0.0
  %2586 = vmatpush1.msra.mxu0 0.0
  %2587 = vmatprep.subr.mxu0 0.0
  %2588 = vmatpush1.msra.mxu0 0.0
  %2589 = vmatprep.mubr.f32.mxu0 0.0
  %2590 = vmatmul.mubr.f32.gmra.mrb[0].mxu0 %v2475
  %v2591 = vpop.f32.mrb[0].mxu0
  %v2592 = vadd.f32 0.0, %v2591
  %v2593 = vpop.f32.mrb[0].mxu0
  %v2594 = vadd.f32 0.0, %v2593
  %2595 = vdwg.mxu0
  %2596 = vmatprep.subr.mxu0 %v2487
  %2597 = vmatpush1.msra.mxu0 %v2484
  %2598 = vmatprep.subr.mxu0 0.0
  %2599 = vmatpush1.msra.mxu0 0.0
  %2600 = vmatprep.subr.mxu0 0.0
  %2601 = vmatpush1.msra.mxu0 0.0
  %2602 = vmatprep.subr.mxu0 0.0
  %2603 = vmatpush1.msra.mxu0 0.0
  %2604 = vmatprep.subr.mxu0 0.0
  %2605 = vmatpush1.msra.mxu0 0.0
  %2606 = vmatprep.subr.mxu0 0.0
  %2607 = vmatpush1.msra.mxu0 0.0
  %2608 = vmatprep.subr.mxu0 0.0
  %2609 = vmatpush1.msra.mxu0 0.0
  %2610 = vmatprep.subr.mxu0 0.0
  %2611 = vmatpush1.msra.mxu0 0.0
  %2612 = vmatprep.subr.mxu0 0.0
  %2613 = vmatpush1.msra.mxu0 0.0
  %2614 = vmatprep.subr.mxu0 0.0
  %2615 = vmatpush1.msra.mxu0 0.0
  %2616 = vmatprep.subr.mxu0 0.0
  %2617 = vmatpush1.msra.mxu0 0.0
  %2618 = vmatprep.subr.mxu0 0.0
  %2619 = vmatpush1.msra.mxu0 0.0
  %2620 = vmatprep.subr.mxu0 0.0
  %2621 = vmatpush1.msra.mxu0 0.0
  %2622 = vmatprep.subr.mxu0 0.0
  %2623 = vmatpush1.msra.mxu0 0.0
  %2624 = vmatprep.subr.mxu0 0.0
  %2625 = vmatpush1.msra.mxu0 0.0
  %2626 = vmatprep.subr.mxu0 0.0
  %2627 = vmatpush1.msra.mxu0 0.0
  %2628 = vmatprep.subr.mxu0 0.0
  %2629 = vmatpush1.msra.mxu0 0.0
  %2630 = vmatprep.subr.mxu0 0.0
  %2631 = vmatpush1.msra.mxu0 0.0
  %2632 = vmatprep.subr.mxu0 0.0
  %2633 = vmatpush1.msra.mxu0 0.0
  %2634 = vmatprep.subr.mxu0 0.0
  %2635 = vmatpush1.msra.mxu0 0.0
  %2636 = vmatprep.subr.mxu0 0.0
  %2637 = vmatpush1.msra.mxu0 0.0
  %2638 = vmatprep.subr.mxu0 0.0
  %2639 = vmatpush1.msra.mxu0 0.0
  %2640 = vmatprep.subr.mxu0 0.0
  %2641 = vmatpush1.msra.mxu0 0.0
  %2642 = vmatprep.subr.mxu0 0.0
  %2643 = vmatpush1.msra.mxu0 0.0
  %2644 = vmatprep.subr.mxu0 0.0
  %2645 = vmatpush1.msra.mxu0 0.0
  %2646 = vmatprep.subr.mxu0 0.0
  %2647 = vmatpush1.msra.mxu0 0.0
  %2648 = vmatprep.subr.mxu0 0.0
  %2649 = vmatpush1.msra.mxu0 0.0
  %2650 = vmatprep.subr.mxu0 0.0
  %2651 = vmatpush1.msra.mxu0 0.0
  %2652 = vmatprep.subr.mxu0 0.0
  %2653 = vmatpush1.msra.mxu0 0.0
  %2654 = vmatprep.subr.mxu0 0.0
  %2655 = vmatpush1.msra.mxu0 0.0
  %2656 = vmatprep.subr.mxu0 0.0
  %2657 = vmatpush1.msra.mxu0 0.0
  %2658 = vmatprep.subr.mxu0 0.0
  %2659 = vmatpush1.msra.mxu0 0.0
  %2660 = vmatprep.mubr.f32.mxu0 0.0
  %2661 = vmatmul.mubr.f32.gmra.mrb[0].mxu0 %v2475
  %v2662 = vpop.f32.mrb[0].mxu0
  %v2663 = vadd.f32 0.0, %v2662
  %v2664 = vpop.f32.mrb[0].mxu0
  %v2665 = vadd.f32 0.0, %v2664
  %2666 = vdwg.mxu0
  %2667 = vmatprep.subr.mxu0 %v2493
  %2668 = vmatpush1.msra.mxu0 %v2490
  %2669 = vmatprep.subr.mxu0 0.0
  %2670 = vmatpush1.msra.mxu0 0.0
  %2671 = vmatprep.subr.mxu0 0.0
  %2672 = vmatpush1.msra.mxu0 0.0
  %2673 = vmatprep.subr.mxu0 0.0
  %2674 = vmatpush1.msra.mxu0 0.0
  %2675 = vmatprep.subr.mxu0 0.0
  %2676 = vmatpush1.msra.mxu0 0.0
  %2677 = vmatprep.subr.mxu0 0.0
  %2678 = vmatpush1.msra.mxu0 0.0
  %2679 = vmatprep.subr.mxu0 0.0
  %2680 = vmatpush1.msra.mxu0 0.0
  %2681 = vmatprep.subr.mxu0 0.0
  %2682 = vmatpush1.msra.mxu0 0.0
  %2683 = vmatprep.subr.mxu0 0.0
  %2684 = vmatpush1.msra.mxu0 0.0
  %2685 = vmatprep.subr.mxu0 0.0
  %2686 = vmatpush1.msra.mxu0 0.0
  %2687 = vmatprep.subr.mxu0 0.0
  %2688 = vmatpush1.msra.mxu0 0.0
  %2689 = vmatprep.subr.mxu0 0.0
  %2690 = vmatpush1.msra.mxu0 0.0
  %2691 = vmatprep.subr.mxu0 0.0
  %2692 = vmatpush1.msra.mxu0 0.0
  %2693 = vmatprep.subr.mxu0 0.0
  %2694 = vmatpush1.msra.mxu0 0.0
  %2695 = vmatprep.subr.mxu0 0.0
  %2696 = vmatpush1.msra.mxu0 0.0
  %2697 = vmatprep.subr.mxu0 0.0
  %2698 = vmatpush1.msra.mxu0 0.0
  %2699 = vmatprep.subr.mxu0 0.0
  %2700 = vmatpush1.msra.mxu0 0.0
  %2701 = vmatprep.subr.mxu0 0.0
  %2702 = vmatpush1.msra.mxu0 0.0
  %2703 = vmatprep.subr.mxu0 0.0
  %2704 = vmatpush1.msra.mxu0 0.0
  %2705 = vmatprep.subr.mxu0 0.0
  %2706 = vmatpush1.msra.mxu0 0.0
  %2707 = vmatprep.subr.mxu0 0.0
  %2708 = vmatpush1.msra.mxu0 0.0
  %2709 = vmatprep.subr.mxu0 0.0
  %2710 = vmatpush1.msra.mxu0 0.0
  %2711 = vmatprep.subr.mxu0 0.0
  %2712 = vmatpush1.msra.mxu0 0.0
  %2713 = vmatprep.subr.mxu0 0.0
  %2714 = vmatpush1.msra.mxu0 0.0
  %2715 = vmatprep.subr.mxu0 0.0
  %2716 = vmatpush1.msra.mxu0 0.0
  %2717 = vmatprep.subr.mxu0 0.0
  %2718 = vmatpush1.msra.mxu0 0.0
  %2719 = vmatprep.subr.mxu0 0.0
  %2720 = vmatpush1.msra.mxu0 0.0
  %2721 = vmatprep.subr.mxu0 0.0
  %2722 = vmatpush1.msra.mxu0 0.0
  %2723 = vmatprep.subr.mxu0 0.0
  %2724 = vmatpush1.msra.mxu0 0.0
  %2725 = vmatprep.subr.mxu0 0.0
  %2726 = vmatpush1.msra.mxu0 0.0
  %2727 = vmatprep.subr.mxu0 0.0
  %2728 = vmatpush1.msra.mxu0 0.0
  %2729 = vmatprep.subr.mxu0 0.0
  %2730 = vmatpush1.msra.mxu0 0.0
  %2731 = vmatprep.mubr.f32.mxu0 0.0
  %2732 = vmatmul.mubr.f32.gmra.mrb[0].mxu0 %v2475
  %v2733 = vpop.f32.mrb[0].mxu0
  %v2734 = vadd.f32 0.0, %v2733
  %v2735 = vpop.f32.mrb[0].mxu0
  %v2736 = vadd.f32 0.0, %v2735
  %2737 = vdwg.mxu0
  %2738 = vmatprep.subr.mxu0 %v2499
  %2739 = vmatpush1.msra.mxu0 %v2496
  %2740 = vmatprep.subr.mxu0 0.0
  %2741 = vmatpush1.msra.mxu0 0.0
  %2742 = vmatprep.subr.mxu0 0.0
  %2743 = vmatpush1.msra.mxu0 0.0
  %2744 = vmatprep.subr.mxu0 0.0
  %2745 = vmatpush1.msra.mxu0 0.0
  %2746 = vmatprep.subr.mxu0 0.0
  %2747 = vmatpush1.msra.mxu0 0.0
  %2748 = vmatprep.subr.mxu0 0.0
  %2749 = vmatpush1.msra.mxu0 0.0
  %2750 = vmatprep.subr.mxu0 0.0
  %2751 = vmatpush1.msra.mxu0 0.0
  %2752 = vmatprep.subr.mxu0 0.0
  %2753 = vmatpush1.msra.mxu0 0.0
  %2754 = vmatprep.subr.mxu0 0.0
  %2755 = vmatpush1.msra.mxu0 0.0
  %2756 = vmatprep.subr.mxu0 0.0
  %2757 = vmatpush1.msra.mxu0 0.0
  %2758 = vmatprep.subr.mxu0 0.0
  %2759 = vmatpush1.msra.mxu0 0.0
  %2760 = vmatprep.subr.mxu0 0.0
  %2761 = vmatpush1.msra.mxu0 0.0
  %2762 = vmatprep.subr.mxu0 0.0
  %2763 = vmatpush1.msra.mxu0 0.0
  %2764 = vmatprep.subr.mxu0 0.0
  %2765 = vmatpush1.msra.mxu0 0.0
  %2766 = vmatprep.subr.mxu0 0.0
  %2767 = vmatpush1.msra.mxu0 0.0
  %2768 = vmatprep.subr.mxu0 0.0
  %2769 = vmatpush1.msra.mxu0 0.0
  %2770 = vmatprep.subr.mxu0 0.0
  %2771 = vmatpush1.msra.mxu0 0.0
  %2772 = vmatprep.subr.mxu0 0.0
  %2773 = vmatpush1.msra.mxu0 0.0
  %2774 = vmatprep.subr.mxu0 0.0
  %2775 = vmatpush1.msra.mxu0 0.0
  %2776 = vmatprep.subr.mxu0 0.0
  %2777 = vmatpush1.msra.mxu0 0.0
  %2778 = vmatprep.subr.mxu0 0.0
  %2779 = vmatpush1.msra.mxu0 0.0
  %2780 = vmatprep.subr.mxu0 0.0
  %2781 = vmatpush1.msra.mxu0 0.0
  %2782 = vmatprep.subr.mxu0 0.0
  %2783 = vmatpush1.msra.mxu0 0.0
  %2784 = vmatprep.subr.mxu0 0.0
  %2785 = vmatpush1.msra.mxu0 0.0
  %2786 = vmatprep.subr.mxu0 0.0
  %2787 = vmatpush1.msra.mxu0 0.0
  %2788 = vmatprep.subr.mxu0 0.0
  %2789 = vmatpush1.msra.mxu0 0.0
  %2790 = vmatprep.subr.mxu0 0.0
  %2791 = vmatpush1.msra.mxu0 0.0
  %2792 = vmatprep.subr.mxu0 0.0
  %2793 = vmatpush1.msra.mxu0 0.0
  %2794 = vmatprep.subr.mxu0 0.0
  %2795 = vmatpush1.msra.mxu0 0.0
  %2796 = vmatprep.subr.mxu0 0.0
  %2797 = vmatpush1.msra.mxu0 0.0
  %2798 = vmatprep.subr.mxu0 0.0
  %2799 = vmatpush1.msra.mxu0 0.0
  %2800 = vmatprep.subr.mxu0 0.0
  %2801 = vmatpush1.msra.mxu0 0.0
  %2802 = vmatprep.mubr.f32.mxu0 0.0
  %2803 = vmatmul.mubr.f32.gmra.mrb[0].mxu0 %v2475
  %v2804 = vpop.f32.mrb[0].mxu0
  %v2805 = vadd.f32 0.0, %v2804
  %v2806 = vpop.f32.mrb[0].mxu0
  %v2807 = vadd.f32 0.0, %v2806
  %2808 = vdwg.mxu0
  %2809 = vmatprep.subr.mxu0 %v2505
  %2810 = vmatpush1.msra.mxu0 %v2502
  %2811 = vmatprep.subr.mxu0 0.0
  %2812 = vmatpush1.msra.mxu0 0.0
  %2813 = vmatprep.subr.mxu0 0.0
  %2814 = vmatpush1.msra.mxu0 0.0
  %2815 = vmatprep.subr.mxu0 0.0
  %2816 = vmatpush1.msra.mxu0 0.0
  %2817 = vmatprep.subr.mxu0 0.0
  %2818 = vmatpush1.msra.mxu0 0.0
  %2819 = vmatprep.subr.mxu0 0.0
  %2820 = vmatpush1.msra.mxu0 0.0
  %2821 = vmatprep.subr.mxu0 0.0
  %2822 = vmatpush1.msra.mxu0 0.0
  %2823 = vmatprep.subr.mxu0 0.0
  %2824 = vmatpush1.msra.mxu0 0.0
  %2825 = vmatprep.subr.mxu0 0.0
  %2826 = vmatpush1.msra.mxu0 0.0
  %2827 = vmatprep.subr.mxu0 0.0
  %2828 = vmatpush1.msra.mxu0 0.0
  %2829 = vmatprep.subr.mxu0 0.0
  %2830 = vmatpush1.msra.mxu0 0.0
  %2831 = vmatprep.subr.mxu0 0.0
  %2832 = vmatpush1.msra.mxu0 0.0
  %2833 = vmatprep.subr.mxu0 0.0
  %2834 = vmatpush1.msra.mxu0 0.0
  %2835 = vmatprep.subr.mxu0 0.0
  %2836 = vmatpush1.msra.mxu0 0.0
  %2837 = vmatprep.subr.mxu0 0.0
  %2838 = vmatpush1.msra.mxu0 0.0
  %2839 = vmatprep.subr.mxu0 0.0
  %2840 = vmatpush1.msra.mxu0 0.0
  %2841 = vmatprep.subr.mxu0 0.0
  %2842 = vmatpush1.msra.mxu0 0.0
  %2843 = vmatprep.subr.mxu0 0.0
  %2844 = vmatpush1.msra.mxu0 0.0
  %2845 = vmatprep.subr.mxu0 0.0
  %2846 = vmatpush1.msra.mxu0 0.0
  %2847 = vmatprep.subr.mxu0 0.0
  %2848 = vmatpush1.msra.mxu0 0.0
  %2849 = vmatprep.subr.mxu0 0.0
  %2850 = vmatpush1.msra.mxu0 0.0
  %2851 = vmatprep.subr.mxu0 0.0
  %2852 = vmatpush1.msra.mxu0 0.0
  %2853 = vmatprep.subr.mxu0 0.0
  %2854 = vmatpush1.msra.mxu0 0.0
  %2855 = vmatprep.subr.mxu0 0.0
  %2856 = vmatpush1.msra.mxu0 0.0
  %2857 = vmatprep.subr.mxu0 0.0
  %2858 = vmatpush1.msra.mxu0 0.0
  %2859 = vmatprep.subr.mxu0 0.0
  %2860 = vmatpush1.msra.mxu0 0.0
  %2861 = vmatprep.subr.mxu0 0.0
  %2862 = vmatpush1.msra.mxu0 0.0
  %2863 = vmatprep.subr.mxu0 0.0
  %2864 = vmatpush1.msra.mxu0 0.0
  %2865 = vmatprep.subr.mxu0 0.0
  %2866 = vmatpush1.msra.mxu0 0.0
  %2867 = vmatprep.subr.mxu0 0.0
  %2868 = vmatpush1.msra.mxu0 0.0
  %2869 = vmatprep.subr.mxu0 0.0
  %2870 = vmatpush1.msra.mxu0 0.0
  %2871 = vmatprep.subr.mxu0 0.0
  %2872 = vmatpush1.msra.mxu0 0.0
  %2873 = vmatprep.mubr.f32.mxu0 0.0
  %2874 = vmatmul.mubr.f32.gmra.mrb[0].mxu0 %v2475
  %v2875 = vpop.f32.mrb[0].mxu0
  %v2876 = vadd.f32 0.0, %v2875
  %v2877 = vpop.f32.mrb[0].mxu0
  %v2878 = vadd.f32 0.0, %v2877
  %2879 = vdwg.mxu0
  %2880 = vmatprep.subr.mxu0 %v2511
  %2881 = vmatpush1.msra.mxu0 %v2508
  %2882 = vmatprep.subr.mxu0 0.0
  %2883 = vmatpush1.msra.mxu0 0.0
  %2884 = vmatprep.subr.mxu0 0.0
  %2885 = vmatpush1.msra.mxu0 0.0
  %2886 = vmatprep.subr.mxu0 0.0
  %2887 = vmatpush1.msra.mxu0 0.0
  %2888 = vmatprep.subr.mxu0 0.0
  %2889 = vmatpush1.msra.mxu0 0.0
  %2890 = vmatprep.subr.mxu0 0.0
  %2891 = vmatpush1.msra.mxu0 0.0
  %2892 = vmatprep.subr.mxu0 0.0
  %2893 = vmatpush1.msra.mxu0 0.0
  %2894 = vmatprep.subr.mxu0 0.0
  %2895 = vmatpush1.msra.mxu0 0.0
  %2896 = vmatprep.subr.mxu0 0.0
  %2897 = vmatpush1.msra.mxu0 0.0
  %2898 = vmatprep.subr.mxu0 0.0
  %2899 = vmatpush1.msra.mxu0 0.0
  %2900 = vmatprep.subr.mxu0 0.0
  %2901 = vmatpush1.msra.mxu0 0.0
  %2902 = vmatprep.subr.mxu0 0.0
  %2903 = vmatpush1.msra.mxu0 0.0
  %2904 = vmatprep.subr.mxu0 0.0
  %2905 = vmatpush1.msra.mxu0 0.0
  %2906 = vmatprep.subr.mxu0 0.0
  %2907 = vmatpush1.msra.mxu0 0.0
  %2908 = vmatprep.subr.mxu0 0.0
  %2909 = vmatpush1.msra.mxu0 0.0
  %2910 = vmatprep.subr.mxu0 0.0
  %2911 = vmatpush1.msra.mxu0 0.0
  %2912 = vmatprep.subr.mxu0 0.0
  %2913 = vmatpush1.msra.mxu0 0.0
  %2914 = vmatprep.subr.mxu0 0.0
  %2915 = vmatpush1.msra.mxu0 0.0
  %2916 = vmatprep.subr.mxu0 0.0
  %2917 = vmatpush1.msra.mxu0 0.0
  %2918 = vmatprep.subr.mxu0 0.0
  %2919 = vmatpush1.msra.mxu0 0.0
  %2920 = vmatprep.subr.mxu0 0.0
  %2921 = vmatpush1.msra.mxu0 0.0
  %2922 = vmatprep.subr.mxu0 0.0
  %2923 = vmatpush1.msra.mxu0 0.0
  %2924 = vmatprep.subr.mxu0 0.0
  %2925 = vmatpush1.msra.mxu0 0.0
  %2926 = vmatprep.subr.mxu0 0.0
  %2927 = vmatpush1.msra.mxu0 0.0
  %2928 = vmatprep.subr.mxu0 0.0
  %2929 = vmatpush1.msra.mxu0 0.0
  %2930 = vmatprep.subr.mxu0 0.0
  %2931 = vmatpush1.msra.mxu0 0.0
  %2932 = vmatprep.subr.mxu0 0.0
  %2933 = vmatpush1.msra.mxu0 0.0
  %2934 = vmatprep.subr.mxu0 0.0
  %2935 = vmatpush1.msra.mxu0 0.0
  %2936 = vmatprep.subr.mxu0 0.0
  %2937 = vmatpush1.msra.mxu0 0.0
  %2938 = vmatprep.subr.mxu0 0.0
  %2939 = vmatpush1.msra.mxu0 0.0
  %2940 = vmatprep.subr.mxu0 0.0
  %2941 = vmatpush1.msra.mxu0 0.0
  %2942 = vmatprep.subr.mxu0 0.0
  %2943 = vmatpush1.msra.mxu0 0.0
  %2944 = vmatprep.mubr.f32.mxu0 0.0
  %2945 = vmatmul.mubr.f32.gmra.mrb[0].mxu0 %v2475
  %v2946 = vpop.f32.mrb[0].mxu0
  %v2947 = vadd.f32 0.0, %v2946
  %v2948 = vpop.f32.mrb[0].mxu0
  %v2949 = vadd.f32 0.0, %v2948
  %2950 = vdwg.mxu0
  %2951 = vmatprep.subr.mxu0 %v2517
  %2952 = vmatpush1.msra.mxu0 %v2514
  %2953 = vmatprep.subr.mxu0 0.0
  %2954 = vmatpush1.msra.mxu0 0.0
  %2955 = vmatprep.subr.mxu0 0.0
  %2956 = vmatpush1.msra.mxu0 0.0
  %2957 = vmatprep.subr.mxu0 0.0
  %2958 = vmatpush1.msra.mxu0 0.0
  %2959 = vmatprep.subr.mxu0 0.0
  %2960 = vmatpush1.msra.mxu0 0.0
  %2961 = vmatprep.subr.mxu0 0.0
  %2962 = vmatpush1.msra.mxu0 0.0
  %2963 = vmatprep.subr.mxu0 0.0
  %2964 = vmatpush1.msra.mxu0 0.0
  %2965 = vmatprep.subr.mxu0 0.0
  %2966 = vmatpush1.msra.mxu0 0.0
  %2967 = vmatprep.subr.mxu0 0.0
  %2968 = vmatpush1.msra.mxu0 0.0
  %2969 = vmatprep.subr.mxu0 0.0
  %2970 = vmatpush1.msra.mxu0 0.0
  %2971 = vmatprep.subr.mxu0 0.0
  %2972 = vmatpush1.msra.mxu0 0.0
  %2973 = vmatprep.subr.mxu0 0.0
  %2974 = vmatpush1.msra.mxu0 0.0
  %2975 = vmatprep.subr.mxu0 0.0
  %2976 = vmatpush1.msra.mxu0 0.0
  %2977 = vmatprep.subr.mxu0 0.0
  %2978 = vmatpush1.msra.mxu0 0.0
  %2979 = vmatprep.subr.mxu0 0.0
  %2980 = vmatpush1.msra.mxu0 0.0
  %2981 = vmatprep.subr.mxu0 0.0
  %2982 = vmatpush1.msra.mxu0 0.0
  %2983 = vmatprep.subr.mxu0 0.0
  %2984 = vmatpush1.msra.mxu0 0.0
  %2985 = vmatprep.subr.mxu0 0.0
  %2986 = vmatpush1.msra.mxu0 0.0
  %2987 = vmatprep.subr.mxu0 0.0
  %2988 = vmatpush1.msra.mxu0 0.0
  %2989 = vmatprep.subr.mxu0 0.0
  %2990 = vmatpush1.msra.mxu0 0.0
  %2991 = vmatprep.subr.mxu0 0.0
  %2992 = vmatpush1.msra.mxu0 0.0
  %2993 = vmatprep.subr.mxu0 0.0
  %2994 = vmatpush1.msra.mxu0 0.0
  %2995 = vmatprep.subr.mxu0 0.0
  %2996 = vmatpush1.msra.mxu0 0.0
  %2997 = vmatprep.subr.mxu0 0.0
  %2998 = vmatpush1.msra.mxu0 0.0
  %2999 = vmatprep.subr.mxu0 0.0
  %3000 = vmatpush1.msra.mxu0 0.0
  %3001 = vmatprep.subr.mxu0 0.0
  %3002 = vmatpush1.msra.mxu0 0.0
  %3003 = vmatprep.subr.mxu0 0.0
  %3004 = vmatpush1.msra.mxu0 0.0
  %3005 = vmatprep.subr.mxu0 0.0
  %3006 = vmatpush1.msra.mxu0 0.0
  %3007 = vmatprep.subr.mxu0 0.0
  %3008 = vmatpush1.msra.mxu0 0.0
  %3009 = vmatprep.subr.mxu0 0.0
  %3010 = vmatpush1.msra.mxu0 0.0
  %3011 = vmatprep.subr.mxu0 0.0
  %3012 = vmatpush1.msra.mxu0 0.0
  %3013 = vmatprep.subr.mxu0 0.0
  %3014 = vmatpush1.msra.mxu0 0.0
  %3015 = vmatprep.mubr.f32.mxu0 0.0
  %3016 = vmatmul.mubr.f32.gmra.mrb[0].mxu0 %v2475
  %v3017 = vpop.f32.mrb[0].mxu0
  %v3018 = vadd.f32 0.0, %v3017
  %v3019 = vpop.f32.mrb[0].mxu0
  %v3020 = vadd.f32 0.0, %v3019
  %3021 = vdwg.mxu0
  %3022 = vmatprep.subr.mxu0 %v2523
  %3023 = vmatpush1.msra.mxu0 %v2520
  %3024 = vmatprep.subr.mxu0 0.0
  %3025 = vmatpush1.msra.mxu0 0.0
  %3026 = vmatprep.subr.mxu0 0.0
  %3027 = vmatpush1.msra.mxu0 0.0
  %3028 = vmatprep.subr.mxu0 0.0
  %3029 = vmatpush1.msra.mxu0 0.0
  %3030 = vmatprep.subr.mxu0 0.0
  %3031 = vmatpush1.msra.mxu0 0.0
  %3032 = vmatprep.subr.mxu0 0.0
  %3033 = vmatpush1.msra.mxu0 0.0
  %3034 = vmatprep.subr.mxu0 0.0
  %3035 = vmatpush1.msra.mxu0 0.0
  %3036 = vmatprep.subr.mxu0 0.0
  %3037 = vmatpush1.msra.mxu0 0.0
  %3038 = vmatprep.subr.mxu0 0.0
  %3039 = vmatpush1.msra.mxu0 0.0
  %3040 = vmatprep.subr.mxu0 0.0
  %3041 = vmatpush1.msra.mxu0 0.0
  %3042 = vmatprep.subr.mxu0 0.0
  %3043 = vmatpush1.msra.mxu0 0.0
  %3044 = vmatprep.subr.mxu0 0.0
  %3045 = vmatpush1.msra.mxu0 0.0
  %3046 = vmatprep.subr.mxu0 0.0
  %3047 = vmatpush1.msra.mxu0 0.0
  %3048 = vmatprep.subr.mxu0 0.0
  %3049 = vmatpush1.msra.mxu0 0.0
  %3050 = vmatprep.subr.mxu0 0.0
  %3051 = vmatpush1.msra.mxu0 0.0
  %3052 = vmatprep.subr.mxu0 0.0
  %3053 = vmatpush1.msra.mxu0 0.0
  %3054 = vmatprep.subr.mxu0 0.0
  %3055 = vmatpush1.msra.mxu0 0.0
  %3056 = vmatprep.subr.mxu0 0.0
  %3057 = vmatpush1.msra.mxu0 0.0
  %3058 = vmatprep.subr.mxu0 0.0
  %3059 = vmatpush1.msra.mxu0 0.0
  %3060 = vmatprep.subr.mxu0 0.0
  %3061 = vmatpush1.msra.mxu0 0.0
  %3062 = vmatprep.subr.mxu0 0.0
  %3063 = vmatpush1.msra.mxu0 0.0
  %3064 = vmatprep.subr.mxu0 0.0
  %3065 = vmatpush1.msra.mxu0 0.0
  %3066 = vmatprep.subr.mxu0 0.0
  %3067 = vmatpush1.msra.mxu0 0.0
  %3068 = vmatprep.subr.mxu0 0.0
  %3069 = vmatpush1.msra.mxu0 0.0
  %3070 = vmatprep.subr.mxu0 0.0
  %3071 = vmatpush1.msra.mxu0 0.0
  %3072 = vmatprep.subr.mxu0 0.0
  %3073 = vmatpush1.msra.mxu0 0.0
  %3074 = vmatprep.subr.mxu0 0.0
  %3075 = vmatpush1.msra.mxu0 0.0
  %3076 = vmatprep.subr.mxu0 0.0
  %3077 = vmatpush1.msra.mxu0 0.0
  %3078 = vmatprep.subr.mxu0 0.0
  %3079 = vmatpush1.msra.mxu0 0.0
  %3080 = vmatprep.subr.mxu0 0.0
  %3081 = vmatpush1.msra.mxu0 0.0
  %3082 = vmatprep.subr.mxu0 0.0
  %3083 = vmatpush1.msra.mxu0 0.0
  %3084 = vmatprep.subr.mxu0 0.0
  %3085 = vmatpush1.msra.mxu0 0.0
  %3086 = vmatprep.mubr.f32.mxu0 0.0
  %3087 = vmatmul.mubr.f32.gmra.mrb[0].mxu0 %v2475
  %v3088 = vpop.f32.mrb[0].mxu0
  %v3089 = vadd.f32 0.0, %v3088
  %v3090 = vpop.f32.mrb[0].mxu0
  %v3091 = vadd.f32 0.0, %v3090
  %3092 = vdwg.mxu0
  %v3093 = vadd.f32 %v2360, %v2592
  %v3094 = vadd.f32 %v2361, %v2594
  %v3095 = vadd.f32 %v2362, %v2663
  %v3096 = vadd.f32 %v2363, %v2665
  %v3097 = vadd.f32 %v2364, %v2734
  %v3098 = vadd.f32 %v2365, %v2736
  %v3099 = vadd.f32 %v2366, %v2805
  %v3100 = vadd.f32 %v2367, %v2807
  %v3101 = vadd.f32 %v2368, %v2876
  %v3102 = vadd.f32 %v2369, %v2878
  %v3103 = vadd.f32 %v2370, %v2947
  %v3104 = vadd.f32 %v2371, %v2949
  %v3105 = vadd.f32 %v2372, %v3018
  %v3106 = vadd.f32 %v2373, %v3020
  %v3107 = vadd.f32 %v2374, %v3089
  %v3108 = vadd.f32 %v2375, %v3091
  %3109 = vrot.lane.b32.xlu0 %v22, 112
  %v3110 = vpop.permute.xlu0 %3109
  %v3111 = vsel %vm389, %v3110, 0
  %v3113 = vsel %vm392, %v14, 0
  %v3115 = vsel %vm392, %v160, 0
  %v3117 = vsel %vm392, %v15, 0
  %v3119 = vsel %vm392, %v161, 0
  %v3121 = vsel %vm392, %v16, 0
  %v3123 = vsel %vm392, %v162, 0
  %v3125 = vsel %vm392, %v17, 0
  %v3127 = vsel %vm392, %v163, 0
  %v3129 = vsel %vm392, %v18, 0
  %v3131 = vsel %vm392, %v164, 0
  %v3133 = vsel %vm392, %v19, 0
  %v3135 = vsel %vm392, %v165, 0
  %v3137 = vsel %vm392, %v20, 0
  %v3139 = vsel %vm392, %v166, 0
  %v3141 = vsel %vm392, %v21, 0
  %v3143 = vsel %vm392, %v167, 0
  %3145 = vmatprep.subr.mxu0 %v3115
  %3146 = vmatpush1.msra.mxu0 %v3113
  %3147 = vmatprep.subr.mxu0 0.0
  %3148 = vmatpush1.msra.mxu0 0.0
  %3149 = vmatprep.subr.mxu0 0.0
  %3150 = vmatpush1.msra.mxu0 0.0
  %3151 = vmatprep.subr.mxu0 0.0
  %3152 = vmatpush1.msra.mxu0 0.0
  %3153 = vmatprep.subr.mxu0 0.0
  %3154 = vmatpush1.msra.mxu0 0.0
  %3155 = vmatprep.subr.mxu0 0.0
  %3156 = vmatpush1.msra.mxu0 0.0
  %3157 = vmatprep.subr.mxu0 0.0
  %3158 = vmatpush1.msra.mxu0 0.0
  %3159 = vmatprep.subr.mxu0 0.0
  %3160 = vmatpush1.msra.mxu0 0.0
  %3161 = vmatprep.subr.mxu0 0.0
  %3162 = vmatpush1.msra.mxu0 0.0
  %3163 = vmatprep.subr.mxu0 0.0
  %3164 = vmatpush1.msra.mxu0 0.0
  %3165 = vmatprep.subr.mxu0 0.0
  %3166 = vmatpush1.msra.mxu0 0.0
  %3167 = vmatprep.subr.mxu0 0.0
  %3168 = vmatpush1.msra.mxu0 0.0
  %3169 = vmatprep.subr.mxu0 0.0
  %3170 = vmatpush1.msra.mxu0 0.0
  %3171 = vmatprep.subr.mxu0 0.0
  %3172 = vmatpush1.msra.mxu0 0.0
  %3173 = vmatprep.subr.mxu0 0.0
  %3174 = vmatpush1.msra.mxu0 0.0
  %3175 = vmatprep.subr.mxu0 0.0
  %3176 = vmatpush1.msra.mxu0 0.0
  %3177 = vmatprep.subr.mxu0 0.0
  %3178 = vmatpush1.msra.mxu0 0.0
  %3179 = vmatprep.subr.mxu0 0.0
  %3180 = vmatpush1.msra.mxu0 0.0
  %3181 = vmatprep.subr.mxu0 0.0
  %3182 = vmatpush1.msra.mxu0 0.0
  %3183 = vmatprep.subr.mxu0 0.0
  %3184 = vmatpush1.msra.mxu0 0.0
  %3185 = vmatprep.subr.mxu0 0.0
  %3186 = vmatpush1.msra.mxu0 0.0
  %3187 = vmatprep.subr.mxu0 0.0
  %3188 = vmatpush1.msra.mxu0 0.0
  %3189 = vmatprep.subr.mxu0 0.0
  %3190 = vmatpush1.msra.mxu0 0.0
  %3191 = vmatprep.subr.mxu0 0.0
  %3192 = vmatpush1.msra.mxu0 0.0
  %3193 = vmatprep.subr.mxu0 0.0
  %3194 = vmatpush1.msra.mxu0 0.0
  %3195 = vmatprep.subr.mxu0 0.0
  %3196 = vmatpush1.msra.mxu0 0.0
  %3197 = vmatprep.subr.mxu0 0.0
  %3198 = vmatpush1.msra.mxu0 0.0
  %3199 = vmatprep.subr.mxu0 0.0
  %3200 = vmatpush1.msra.mxu0 0.0
  %3201 = vmatprep.subr.mxu0 0.0
  %3202 = vmatpush1.msra.mxu0 0.0
  %3203 = vmatprep.subr.mxu0 0.0
  %3204 = vmatpush1.msra.mxu0 0.0
  %3205 = vmatprep.subr.mxu0 0.0
  %3206 = vmatpush1.msra.mxu0 0.0
  %3207 = vmatprep.subr.mxu0 0.0
  %3208 = vmatpush1.msra.mxu0 0.0
  %3209 = vmatprep.mubr.f32.mxu0 0.0
  %3210 = vmatmul.mubr.f32.gmra.mrb[0].mxu0 %v3111
  %v3211 = vpop.f32.mrb[0].mxu0
  %v3212 = vadd.f32 0.0, %v3211
  %v3213 = vpop.f32.mrb[0].mxu0
  %v3214 = vadd.f32 0.0, %v3213
  %3215 = vdwg.mxu0
  %3216 = vmatprep.subr.mxu0 %v3119
  %3217 = vmatpush1.msra.mxu0 %v3117
  %3218 = vmatprep.subr.mxu0 0.0
  %3219 = vmatpush1.msra.mxu0 0.0
  %3220 = vmatprep.subr.mxu0 0.0
  %3221 = vmatpush1.msra.mxu0 0.0
  %3222 = vmatprep.subr.mxu0 0.0
  %3223 = vmatpush1.msra.mxu0 0.0
  %3224 = vmatprep.subr.mxu0 0.0
  %3225 = vmatpush1.msra.mxu0 0.0
  %3226 = vmatprep.subr.mxu0 0.0
  %3227 = vmatpush1.msra.mxu0 0.0
  %3228 = vmatprep.subr.mxu0 0.0
  %3229 = vmatpush1.msra.mxu0 0.0
  %3230 = vmatprep.subr.mxu0 0.0
  %3231 = vmatpush1.msra.mxu0 0.0
  %3232 = vmatprep.subr.mxu0 0.0
  %3233 = vmatpush1.msra.mxu0 0.0
  %3234 = vmatprep.subr.mxu0 0.0
  %3235 = vmatpush1.msra.mxu0 0.0
  %3236 = vmatprep.subr.mxu0 0.0
  %3237 = vmatpush1.msra.mxu0 0.0
  %3238 = vmatprep.subr.mxu0 0.0
  %3239 = vmatpush1.msra.mxu0 0.0
  %3240 = vmatprep.subr.mxu0 0.0
  %3241 = vmatpush1.msra.mxu0 0.0
  %3242 = vmatprep.subr.mxu0 0.0
  %3243 = vmatpush1.msra.mxu0 0.0
  %3244 = vmatprep.subr.mxu0 0.0
  %3245 = vmatpush1.msra.mxu0 0.0
  %3246 = vmatprep.subr.mxu0 0.0
  %3247 = vmatpush1.msra.mxu0 0.0
  %3248 = vmatprep.subr.mxu0 0.0
  %3249 = vmatpush1.msra.mxu0 0.0
  %3250 = vmatprep.subr.mxu0 0.0
  %3251 = vmatpush1.msra.mxu0 0.0
  %3252 = vmatprep.subr.mxu0 0.0
  %3253 = vmatpush1.msra.mxu0 0.0
  %3254 = vmatprep.subr.mxu0 0.0
  %3255 = vmatpush1.msra.mxu0 0.0
  %3256 = vmatprep.subr.mxu0 0.0
  %3257 = vmatpush1.msra.mxu0 0.0
  %3258 = vmatprep.subr.mxu0 0.0
  %3259 = vmatpush1.msra.mxu0 0.0
  %3260 = vmatprep.subr.mxu0 0.0
  %3261 = vmatpush1.msra.mxu0 0.0
  %3262 = vmatprep.subr.mxu0 0.0
  %3263 = vmatpush1.msra.mxu0 0.0
  %3264 = vmatprep.subr.mxu0 0.0
  %3265 = vmatpush1.msra.mxu0 0.0
  %3266 = vmatprep.subr.mxu0 0.0
  %3267 = vmatpush1.msra.mxu0 0.0
  %3268 = vmatprep.subr.mxu0 0.0
  %3269 = vmatpush1.msra.mxu0 0.0
  %3270 = vmatprep.subr.mxu0 0.0
  %3271 = vmatpush1.msra.mxu0 0.0
  %3272 = vmatprep.subr.mxu0 0.0
  %3273 = vmatpush1.msra.mxu0 0.0
  %3274 = vmatprep.subr.mxu0 0.0
  %3275 = vmatpush1.msra.mxu0 0.0
  %3276 = vmatprep.subr.mxu0 0.0
  %3277 = vmatpush1.msra.mxu0 0.0
  %3278 = vmatprep.subr.mxu0 0.0
  %3279 = vmatpush1.msra.mxu0 0.0
  %3280 = vmatprep.mubr.f32.mxu0 0.0
  %3281 = vmatmul.mubr.f32.gmra.mrb[0].mxu0 %v3111
  %v3282 = vpop.f32.mrb[0].mxu0
  %v3283 = vadd.f32 0.0, %v3282
  %v3284 = vpop.f32.mrb[0].mxu0
  %v3285 = vadd.f32 0.0, %v3284
  %3286 = vdwg.mxu0
  %3287 = vmatprep.subr.mxu0 %v3123
  %3288 = vmatpush1.msra.mxu0 %v3121
  %3289 = vmatprep.subr.mxu0 0.0
  %3290 = vmatpush1.msra.mxu0 0.0
  %3291 = vmatprep.subr.mxu0 0.0
  %3292 = vmatpush1.msra.mxu0 0.0
  %3293 = vmatprep.subr.mxu0 0.0
  %3294 = vmatpush1.msra.mxu0 0.0
  %3295 = vmatprep.subr.mxu0 0.0
  %3296 = vmatpush1.msra.mxu0 0.0
  %3297 = vmatprep.subr.mxu0 0.0
  %3298 = vmatpush1.msra.mxu0 0.0
  %3299 = vmatprep.subr.mxu0 0.0
  %3300 = vmatpush1.msra.mxu0 0.0
  %3301 = vmatprep.subr.mxu0 0.0
  %3302 = vmatpush1.msra.mxu0 0.0
  %3303 = vmatprep.subr.mxu0 0.0
  %3304 = vmatpush1.msra.mxu0 0.0
  %3305 = vmatprep.subr.mxu0 0.0
  %3306 = vmatpush1.msra.mxu0 0.0
  %3307 = vmatprep.subr.mxu0 0.0
  %3308 = vmatpush1.msra.mxu0 0.0
  %3309 = vmatprep.subr.mxu0 0.0
  %3310 = vmatpush1.msra.mxu0 0.0
  %3311 = vmatprep.subr.mxu0 0.0
  %3312 = vmatpush1.msra.mxu0 0.0
  %3313 = vmatprep.subr.mxu0 0.0
  %3314 = vmatpush1.msra.mxu0 0.0
  %3315 = vmatprep.subr.mxu0 0.0
  %3316 = vmatpush1.msra.mxu0 0.0
  %3317 = vmatprep.subr.mxu0 0.0
  %3318 = vmatpush1.msra.mxu0 0.0
  %3319 = vmatprep.subr.mxu0 0.0
  %3320 = vmatpush1.msra.mxu0 0.0
  %3321 = vmatprep.subr.mxu0 0.0
  %3322 = vmatpush1.msra.mxu0 0.0
  %3323 = vmatprep.subr.mxu0 0.0
  %3324 = vmatpush1.msra.mxu0 0.0
  %3325 = vmatprep.subr.mxu0 0.0
  %3326 = vmatpush1.msra.mxu0 0.0
  %3327 = vmatprep.subr.mxu0 0.0
  %3328 = vmatpush1.msra.mxu0 0.0
  %3329 = vmatprep.subr.mxu0 0.0
  %3330 = vmatpush1.msra.mxu0 0.0
  %3331 = vmatprep.subr.mxu0 0.0
  %3332 = vmatpush1.msra.mxu0 0.0
  %3333 = vmatprep.subr.mxu0 0.0
  %3334 = vmatpush1.msra.mxu0 0.0
  %3335 = vmatprep.subr.mxu0 0.0
  %3336 = vmatpush1.msra.mxu0 0.0
  %3337 = vmatprep.subr.mxu0 0.0
  %3338 = vmatpush1.msra.mxu0 0.0
  %3339 = vmatprep.subr.mxu0 0.0
  %3340 = vmatpush1.msra.mxu0 0.0
  %3341 = vmatprep.subr.mxu0 0.0
  %3342 = vmatpush1.msra.mxu0 0.0
  %3343 = vmatprep.subr.mxu0 0.0
  %3344 = vmatpush1.msra.mxu0 0.0
  %3345 = vmatprep.subr.mxu0 0.0
  %3346 = vmatpush1.msra.mxu0 0.0
  %3347 = vmatprep.subr.mxu0 0.0
  %3348 = vmatpush1.msra.mxu0 0.0
  %3349 = vmatprep.subr.mxu0 0.0
  %3350 = vmatpush1.msra.mxu0 0.0
  %3351 = vmatprep.mubr.f32.mxu0 0.0
  %3352 = vmatmul.mubr.f32.gmra.mrb[0].mxu0 %v3111
  %v3353 = vpop.f32.mrb[0].mxu0
  %v3354 = vadd.f32 0.0, %v3353
  %v3355 = vpop.f32.mrb[0].mxu0
  %v3356 = vadd.f32 0.0, %v3355
  %3357 = vdwg.mxu0
  %3358 = vmatprep.subr.mxu0 %v3127
  %3359 = vmatpush1.msra.mxu0 %v3125
  %3360 = vmatprep.subr.mxu0 0.0
  %3361 = vmatpush1.msra.mxu0 0.0
  %3362 = vmatprep.subr.mxu0 0.0
  %3363 = vmatpush1.msra.mxu0 0.0
  %3364 = vmatprep.subr.mxu0 0.0
  %3365 = vmatpush1.msra.mxu0 0.0
  %3366 = vmatprep.subr.mxu0 0.0
  %3367 = vmatpush1.msra.mxu0 0.0
  %3368 = vmatprep.subr.mxu0 0.0
  %3369 = vmatpush1.msra.mxu0 0.0
  %3370 = vmatprep.subr.mxu0 0.0
  %3371 = vmatpush1.msra.mxu0 0.0
  %3372 = vmatprep.subr.mxu0 0.0
  %3373 = vmatpush1.msra.mxu0 0.0
  %3374 = vmatprep.subr.mxu0 0.0
  %3375 = vmatpush1.msra.mxu0 0.0
  %3376 = vmatprep.subr.mxu0 0.0
  %3377 = vmatpush1.msra.mxu0 0.0
  %3378 = vmatprep.subr.mxu0 0.0
  %3379 = vmatpush1.msra.mxu0 0.0
  %3380 = vmatprep.subr.mxu0 0.0
  %3381 = vmatpush1.msra.mxu0 0.0
  %3382 = vmatprep.subr.mxu0 0.0
  %3383 = vmatpush1.msra.mxu0 0.0
  %3384 = vmatprep.subr.mxu0 0.0
  %3385 = vmatpush1.msra.mxu0 0.0
  %3386 = vmatprep.subr.mxu0 0.0
  %3387 = vmatpush1.msra.mxu0 0.0
  %3388 = vmatprep.subr.mxu0 0.0
  %3389 = vmatpush1.msra.mxu0 0.0
  %3390 = vmatprep.subr.mxu0 0.0
  %3391 = vmatpush1.msra.mxu0 0.0
  %3392 = vmatprep.subr.mxu0 0.0
  %3393 = vmatpush1.msra.mxu0 0.0
  %3394 = vmatprep.subr.mxu0 0.0
  %3395 = vmatpush1.msra.mxu0 0.0
  %3396 = vmatprep.subr.mxu0 0.0
  %3397 = vmatpush1.msra.mxu0 0.0
  %3398 = vmatprep.subr.mxu0 0.0
  %3399 = vmatpush1.msra.mxu0 0.0
  %3400 = vmatprep.subr.mxu0 0.0
  %3401 = vmatpush1.msra.mxu0 0.0
  %3402 = vmatprep.subr.mxu0 0.0
  %3403 = vmatpush1.msra.mxu0 0.0
  %3404 = vmatprep.subr.mxu0 0.0
  %3405 = vmatpush1.msra.mxu0 0.0
  %3406 = vmatprep.subr.mxu0 0.0
  %3407 = vmatpush1.msra.mxu0 0.0
  %3408 = vmatprep.subr.mxu0 0.0
  %3409 = vmatpush1.msra.mxu0 0.0
  %3410 = vmatprep.subr.mxu0 0.0
  %3411 = vmatpush1.msra.mxu0 0.0
  %3412 = vmatprep.subr.mxu0 0.0
  %3413 = vmatpush1.msra.mxu0 0.0
  %3414 = vmatprep.subr.mxu0 0.0
  %3415 = vmatpush1.msra.mxu0 0.0
  %3416 = vmatprep.subr.mxu0 0.0
  %3417 = vmatpush1.msra.mxu0 0.0
  %3418 = vmatprep.subr.mxu0 0.0
  %3419 = vmatpush1.msra.mxu0 0.0
  %3420 = vmatprep.subr.mxu0 0.0
  %3421 = vmatpush1.msra.mxu0 0.0
  %3422 = vmatprep.mubr.f32.mxu0 0.0
  %3423 = vmatmul.mubr.f32.gmra.mrb[0].mxu0 %v3111
  %v3424 = vpop.f32.mrb[0].mxu0
  %v3425 = vadd.f32 0.0, %v3424
  %v3426 = vpop.f32.mrb[0].mxu0
  %v3427 = vadd.f32 0.0, %v3426
  %3428 = vdwg.mxu0
  %3429 = vmatprep.subr.mxu0 %v3131
  %3430 = vmatpush1.msra.mxu0 %v3129
  %3431 = vmatprep.subr.mxu0 0.0
  %3432 = vmatpush1.msra.mxu0 0.0
  %3433 = vmatprep.subr.mxu0 0.0
  %3434 = vmatpush1.msra.mxu0 0.0
  %3435 = vmatprep.subr.mxu0 0.0
  %3436 = vmatpush1.msra.mxu0 0.0
  %3437 = vmatprep.subr.mxu0 0.0
  %3438 = vmatpush1.msra.mxu0 0.0
  %3439 = vmatprep.subr.mxu0 0.0
  %3440 = vmatpush1.msra.mxu0 0.0
  %3441 = vmatprep.subr.mxu0 0.0
  %3442 = vmatpush1.msra.mxu0 0.0
  %3443 = vmatprep.subr.mxu0 0.0
  %3444 = vmatpush1.msra.mxu0 0.0
  %3445 = vmatprep.subr.mxu0 0.0
  %3446 = vmatpush1.msra.mxu0 0.0
  %3447 = vmatprep.subr.mxu0 0.0
  %3448 = vmatpush1.msra.mxu0 0.0
  %3449 = vmatprep.subr.mxu0 0.0
  %3450 = vmatpush1.msra.mxu0 0.0
  %3451 = vmatprep.subr.mxu0 0.0
  %3452 = vmatpush1.msra.mxu0 0.0
  %3453 = vmatprep.subr.mxu0 0.0
  %3454 = vmatpush1.msra.mxu0 0.0
  %3455 = vmatprep.subr.mxu0 0.0
  %3456 = vmatpush1.msra.mxu0 0.0
  %3457 = vmatprep.subr.mxu0 0.0
  %3458 = vmatpush1.msra.mxu0 0.0
  %3459 = vmatprep.subr.mxu0 0.0
  %3460 = vmatpush1.msra.mxu0 0.0
  %3461 = vmatprep.subr.mxu0 0.0
  %3462 = vmatpush1.msra.mxu0 0.0
  %3463 = vmatprep.subr.mxu0 0.0
  %3464 = vmatpush1.msra.mxu0 0.0
  %3465 = vmatprep.subr.mxu0 0.0
  %3466 = vmatpush1.msra.mxu0 0.0
  %3467 = vmatprep.subr.mxu0 0.0
  %3468 = vmatpush1.msra.mxu0 0.0
  %3469 = vmatprep.subr.mxu0 0.0
  %3470 = vmatpush1.msra.mxu0 0.0
  %3471 = vmatprep.subr.mxu0 0.0
  %3472 = vmatpush1.msra.mxu0 0.0
  %3473 = vmatprep.subr.mxu0 0.0
  %3474 = vmatpush1.msra.mxu0 0.0
  %3475 = vmatprep.subr.mxu0 0.0
  %3476 = vmatpush1.msra.mxu0 0.0
  %3477 = vmatprep.subr.mxu0 0.0
  %3478 = vmatpush1.msra.mxu0 0.0
  %3479 = vmatprep.subr.mxu0 0.0
  %3480 = vmatpush1.msra.mxu0 0.0
  %3481 = vmatprep.subr.mxu0 0.0
  %3482 = vmatpush1.msra.mxu0 0.0
  %3483 = vmatprep.subr.mxu0 0.0
  %3484 = vmatpush1.msra.mxu0 0.0
  %3485 = vmatprep.subr.mxu0 0.0
  %3486 = vmatpush1.msra.mxu0 0.0
  %3487 = vmatprep.subr.mxu0 0.0
  %3488 = vmatpush1.msra.mxu0 0.0
  %3489 = vmatprep.subr.mxu0 0.0
  %3490 = vmatpush1.msra.mxu0 0.0
  %3491 = vmatprep.subr.mxu0 0.0
  %3492 = vmatpush1.msra.mxu0 0.0
  %3493 = vmatprep.mubr.f32.mxu0 0.0
  %3494 = vmatmul.mubr.f32.gmra.mrb[0].mxu0 %v3111
  %v3495 = vpop.f32.mrb[0].mxu0
  %v3496 = vadd.f32 0.0, %v3495
  %v3497 = vpop.f32.mrb[0].mxu0
  %v3498 = vadd.f32 0.0, %v3497
  %3499 = vdwg.mxu0
  %3500 = vmatprep.subr.mxu0 %v3135
  %3501 = vmatpush1.msra.mxu0 %v3133
  %3502 = vmatprep.subr.mxu0 0.0
  %3503 = vmatpush1.msra.mxu0 0.0
  %3504 = vmatprep.subr.mxu0 0.0
  %3505 = vmatpush1.msra.mxu0 0.0
  %3506 = vmatprep.subr.mxu0 0.0
  %3507 = vmatpush1.msra.mxu0 0.0
  %3508 = vmatprep.subr.mxu0 0.0
  %3509 = vmatpush1.msra.mxu0 0.0
  %3510 = vmatprep.subr.mxu0 0.0
  %3511 = vmatpush1.msra.mxu0 0.0
  %3512 = vmatprep.subr.mxu0 0.0
  %3513 = vmatpush1.msra.mxu0 0.0
  %3514 = vmatprep.subr.mxu0 0.0
  %3515 = vmatpush1.msra.mxu0 0.0
  %3516 = vmatprep.subr.mxu0 0.0
  %3517 = vmatpush1.msra.mxu0 0.0
  %3518 = vmatprep.subr.mxu0 0.0
  %3519 = vmatpush1.msra.mxu0 0.0
  %3520 = vmatprep.subr.mxu0 0.0
  %3521 = vmatpush1.msra.mxu0 0.0
  %3522 = vmatprep.subr.mxu0 0.0
  %3523 = vmatpush1.msra.mxu0 0.0
  %3524 = vmatprep.subr.mxu0 0.0
  %3525 = vmatpush1.msra.mxu0 0.0
  %3526 = vmatprep.subr.mxu0 0.0
  %3527 = vmatpush1.msra.mxu0 0.0
  %3528 = vmatprep.subr.mxu0 0.0
  %3529 = vmatpush1.msra.mxu0 0.0
  %3530 = vmatprep.subr.mxu0 0.0
  %3531 = vmatpush1.msra.mxu0 0.0
  %3532 = vmatprep.subr.mxu0 0.0
  %3533 = vmatpush1.msra.mxu0 0.0
  %3534 = vmatprep.subr.mxu0 0.0
  %3535 = vmatpush1.msra.mxu0 0.0
  %3536 = vmatprep.subr.mxu0 0.0
  %3537 = vmatpush1.msra.mxu0 0.0
  %3538 = vmatprep.subr.mxu0 0.0
  %3539 = vmatpush1.msra.mxu0 0.0
  %3540 = vmatprep.subr.mxu0 0.0
  %3541 = vmatpush1.msra.mxu0 0.0
  %3542 = vmatprep.subr.mxu0 0.0
  %3543 = vmatpush1.msra.mxu0 0.0
  %3544 = vmatprep.subr.mxu0 0.0
  %3545 = vmatpush1.msra.mxu0 0.0
  %3546 = vmatprep.subr.mxu0 0.0
  %3547 = vmatpush1.msra.mxu0 0.0
  %3548 = vmatprep.subr.mxu0 0.0
  %3549 = vmatpush1.msra.mxu0 0.0
  %3550 = vmatprep.subr.mxu0 0.0
  %3551 = vmatpush1.msra.mxu0 0.0
  %3552 = vmatprep.subr.mxu0 0.0
  %3553 = vmatpush1.msra.mxu0 0.0
  %3554 = vmatprep.subr.mxu0 0.0
  %3555 = vmatpush1.msra.mxu0 0.0
  %3556 = vmatprep.subr.mxu0 0.0
  %3557 = vmatpush1.msra.mxu0 0.0
  %3558 = vmatprep.subr.mxu0 0.0
  %3559 = vmatpush1.msra.mxu0 0.0
  %3560 = vmatprep.subr.mxu0 0.0
  %3561 = vmatpush1.msra.mxu0 0.0
  %3562 = vmatprep.subr.mxu0 0.0
  %3563 = vmatpush1.msra.mxu0 0.0
  %3564 = vmatprep.mubr.f32.mxu0 0.0
  %3565 = vmatmul.mubr.f32.gmra.mrb[0].mxu0 %v3111
  %v3566 = vpop.f32.mrb[0].mxu0
  %v3567 = vadd.f32 0.0, %v3566
  %v3568 = vpop.f32.mrb[0].mxu0
  %v3569 = vadd.f32 0.0, %v3568
  %3570 = vdwg.mxu0
  %3571 = vmatprep.subr.mxu0 %v3139
  %3572 = vmatpush1.msra.mxu0 %v3137
  %3573 = vmatprep.subr.mxu0 0.0
  %3574 = vmatpush1.msra.mxu0 0.0
  %3575 = vmatprep.subr.mxu0 0.0
  %3576 = vmatpush1.msra.mxu0 0.0
  %3577 = vmatprep.subr.mxu0 0.0
  %3578 = vmatpush1.msra.mxu0 0.0
  %3579 = vmatprep.subr.mxu0 0.0
  %3580 = vmatpush1.msra.mxu0 0.0
  %3581 = vmatprep.subr.mxu0 0.0
  %3582 = vmatpush1.msra.mxu0 0.0
  %3583 = vmatprep.subr.mxu0 0.0
  %3584 = vmatpush1.msra.mxu0 0.0
  %3585 = vmatprep.subr.mxu0 0.0
  %3586 = vmatpush1.msra.mxu0 0.0
  %3587 = vmatprep.subr.mxu0 0.0
  %3588 = vmatpush1.msra.mxu0 0.0
  %3589 = vmatprep.subr.mxu0 0.0
  %3590 = vmatpush1.msra.mxu0 0.0
  %3591 = vmatprep.subr.mxu0 0.0
  %3592 = vmatpush1.msra.mxu0 0.0
  %3593 = vmatprep.subr.mxu0 0.0
  %3594 = vmatpush1.msra.mxu0 0.0
  %3595 = vmatprep.subr.mxu0 0.0
  %3596 = vmatpush1.msra.mxu0 0.0
  %3597 = vmatprep.subr.mxu0 0.0
  %3598 = vmatpush1.msra.mxu0 0.0
  %3599 = vmatprep.subr.mxu0 0.0
  %3600 = vmatpush1.msra.mxu0 0.0
  %3601 = vmatprep.subr.mxu0 0.0
  %3602 = vmatpush1.msra.mxu0 0.0
  %3603 = vmatprep.subr.mxu0 0.0
  %3604 = vmatpush1.msra.mxu0 0.0
  %3605 = vmatprep.subr.mxu0 0.0
  %3606 = vmatpush1.msra.mxu0 0.0
  %3607 = vmatprep.subr.mxu0 0.0
  %3608 = vmatpush1.msra.mxu0 0.0
  %3609 = vmatprep.subr.mxu0 0.0
  %3610 = vmatpush1.msra.mxu0 0.0
  %3611 = vmatprep.subr.mxu0 0.0
  %3612 = vmatpush1.msra.mxu0 0.0
  %3613 = vmatprep.subr.mxu0 0.0
  %3614 = vmatpush1.msra.mxu0 0.0
  %3615 = vmatprep.subr.mxu0 0.0
  %3616 = vmatpush1.msra.mxu0 0.0
  %3617 = vmatprep.subr.mxu0 0.0
  %3618 = vmatpush1.msra.mxu0 0.0
  %3619 = vmatprep.subr.mxu0 0.0
  %3620 = vmatpush1.msra.mxu0 0.0
  %3621 = vmatprep.subr.mxu0 0.0
  %3622 = vmatpush1.msra.mxu0 0.0
  %3623 = vmatprep.subr.mxu0 0.0
  %3624 = vmatpush1.msra.mxu0 0.0
  %3625 = vmatprep.subr.mxu0 0.0
  %3626 = vmatpush1.msra.mxu0 0.0
  %3627 = vmatprep.subr.mxu0 0.0
  %3628 = vmatpush1.msra.mxu0 0.0
  %3629 = vmatprep.subr.mxu0 0.0
  %3630 = vmatpush1.msra.mxu0 0.0
  %3631 = vmatprep.subr.mxu0 0.0
  %3632 = vmatpush1.msra.mxu0 0.0
  %3633 = vmatprep.subr.mxu0 0.0
  %3634 = vmatpush1.msra.mxu0 0.0
  %3635 = vmatprep.mubr.f32.mxu0 0.0
  %3636 = vmatmul.mubr.f32.gmra.mrb[0].mxu0 %v3111
  %v3637 = vpop.f32.mrb[0].mxu0
  %v3638 = vadd.f32 0.0, %v3637
  %v3639 = vpop.f32.mrb[0].mxu0
  %v3640 = vadd.f32 0.0, %v3639
  %3641 = vdwg.mxu0
  %3642 = vmatprep.subr.mxu0 %v3143
  %3643 = vmatpush1.msra.mxu0 %v3141
  %3644 = vmatprep.subr.mxu0 0.0
  %3645 = vmatpush1.msra.mxu0 0.0
  %3646 = vmatprep.subr.mxu0 0.0
  %3647 = vmatpush1.msra.mxu0 0.0
  %3648 = vmatprep.subr.mxu0 0.0
  %3649 = vmatpush1.msra.mxu0 0.0
  %3650 = vmatprep.subr.mxu0 0.0
  %3651 = vmatpush1.msra.mxu0 0.0
  %3652 = vmatprep.subr.mxu0 0.0
  %3653 = vmatpush1.msra.mxu0 0.0
  %3654 = vmatprep.subr.mxu0 0.0
  %3655 = vmatpush1.msra.mxu0 0.0
  %3656 = vmatprep.subr.mxu0 0.0
  %3657 = vmatpush1.msra.mxu0 0.0
  %3658 = vmatprep.subr.mxu0 0.0
  %3659 = vmatpush1.msra.mxu0 0.0
  %3660 = vmatprep.subr.mxu0 0.0
  %3661 = vmatpush1.msra.mxu0 0.0
  %3662 = vmatprep.subr.mxu0 0.0
  %3663 = vmatpush1.msra.mxu0 0.0
  %3664 = vmatprep.subr.mxu0 0.0
  %3665 = vmatpush1.msra.mxu0 0.0
  %3666 = vmatprep.subr.mxu0 0.0
  %3667 = vmatpush1.msra.mxu0 0.0
  %3668 = vmatprep.subr.mxu0 0.0
  %3669 = vmatpush1.msra.mxu0 0.0
  %3670 = vmatprep.subr.mxu0 0.0
  %3671 = vmatpush1.msra.mxu0 0.0
  %3672 = vmatprep.subr.mxu0 0.0
  %3673 = vmatpush1.msra.mxu0 0.0
  %3674 = vmatprep.subr.mxu0 0.0
  %3675 = vmatpush1.msra.mxu0 0.0
  %3676 = vmatprep.subr.mxu0 0.0
  %3677 = vmatpush1.msra.mxu0 0.0
  %3678 = vmatprep.subr.mxu0 0.0
  %3679 = vmatpush1.msra.mxu0 0.0
  %3680 = vmatprep.subr.mxu0 0.0
  %3681 = vmatpush1.msra.mxu0 0.0
  %3682 = vmatprep.subr.mxu0 0.0
  %3683 = vmatpush1.msra.mxu0 0.0
  %3684 = vmatprep.subr.mxu0 0.0
  %3685 = vmatpush1.msra.mxu0 0.0
  %3686 = vmatprep.subr.mxu0 0.0
  %3687 = vmatpush1.msra.mxu0 0.0
  %3688 = vmatprep.subr.mxu0 0.0
  %3689 = vmatpush1.msra.mxu0 0.0
  %3690 = vmatprep.subr.mxu0 0.0
  %3691 = vmatpush1.msra.mxu0 0.0
  %3692 = vmatprep.subr.mxu0 0.0
  %3693 = vmatpush1.msra.mxu0 0.0
  %3694 = vmatprep.subr.mxu0 0.0
  %3695 = vmatpush1.msra.mxu0 0.0
  %3696 = vmatprep.subr.mxu0 0.0
  %3697 = vmatpush1.msra.mxu0 0.0
  %3698 = vmatprep.subr.mxu0 0.0
  %3699 = vmatpush1.msra.mxu0 0.0
  %3700 = vmatprep.subr.mxu0 0.0
  %3701 = vmatpush1.msra.mxu0 0.0
  %3702 = vmatprep.subr.mxu0 0.0
  %3703 = vmatpush1.msra.mxu0 0.0
  %3704 = vmatprep.subr.mxu0 0.0
  %3705 = vmatpush1.msra.mxu0 0.0
  %3706 = vmatprep.mubr.f32.mxu0 0.0
  %3707 = vmatmul.mubr.f32.gmra.mrb[0].mxu0 %v3111
  %v3708 = vpop.f32.mrb[0].mxu0
  %v3709 = vadd.f32 0.0, %v3708
  %v3710 = vpop.f32.mrb[0].mxu0
  %v3711 = vadd.f32 0.0, %v3710
  %3712 = vdwg.mxu0
  %v3713 = vadd.f32 %v3093, %v3212
  %v3714 = vadd.f32 %v3094, %v3214
  %v3715 = vadd.f32 %v3095, %v3283
  %v3716 = vadd.f32 %v3096, %v3285
  %v3717 = vadd.f32 %v3097, %v3354
  %v3718 = vadd.f32 %v3098, %v3356
  %v3719 = vadd.f32 %v3099, %v3425
  %v3720 = vadd.f32 %v3100, %v3427
  %v3721 = vadd.f32 %v3101, %v3496
  %v3722 = vadd.f32 %v3102, %v3498
  %v3723 = vadd.f32 %v3103, %v3567
  %v3724 = vadd.f32 %v3104, %v3569
  %v3725 = vadd.f32 %v3105, %v3638
  %v3726 = vadd.f32 %v3106, %v3640
  %v3727 = vadd.f32 %v3107, %v3709
  %v3728 = vadd.f32 %v3108, %v3711
  %3729 = vrot.lane.b32.xlu0 %v14, 126
  %v3730 = vpop.permute.xlu0 %3729
  %3731 = vrot.lane.b32.xlu0 %v160, 126
  %v3732 = vpop.permute.xlu0 %3731
  %3733 = vrot.lane.b32.xlu0 %v15, 126
  %v3734 = vpop.permute.xlu0 %3733
  %3735 = vrot.lane.b32.xlu0 %v161, 126
  %v3736 = vpop.permute.xlu0 %3735
  %3737 = vrot.lane.b32.xlu0 %v16, 126
  %v3738 = vpop.permute.xlu0 %3737
  %3739 = vrot.lane.b32.xlu0 %v162, 126
  %v3740 = vpop.permute.xlu0 %3739
  %3741 = vrot.lane.b32.xlu0 %v17, 126
  %v3742 = vpop.permute.xlu0 %3741
  %3743 = vrot.lane.b32.xlu0 %v163, 126
  %v3744 = vpop.permute.xlu0 %3743
  %3745 = vrot.lane.b32.xlu0 %v18, 126
  %v3746 = vpop.permute.xlu0 %3745
  %3747 = vrot.lane.b32.xlu0 %v164, 126
  %v3748 = vpop.permute.xlu0 %3747
  %3749 = vrot.lane.b32.xlu0 %v19, 126
  %v3750 = vpop.permute.xlu0 %3749
  %3751 = vrot.lane.b32.xlu0 %v165, 126
  %v3752 = vpop.permute.xlu0 %3751
  %3753 = vrot.lane.b32.xlu0 %v20, 126
  %v3754 = vpop.permute.xlu0 %3753
  %3755 = vrot.lane.b32.xlu0 %v166, 126
  %v3756 = vpop.permute.xlu0 %3755
  %3757 = vrot.lane.b32.xlu0 %v21, 126
  %v3758 = vpop.permute.xlu0 %3757
  %3759 = vrot.lane.b32.xlu0 %v167, 126
  %v3760 = vpop.permute.xlu0 %3759
  %vm3761 = vcmp.lt.s32.totalorder %v24, 126
  %v3762 = vsel %vm3761, %v3758, %v3760
  %v3763 = vsel %vm3761, %v3756, %v3758
  %v3764 = vsel %vm3761, %v3754, %v3756
  %v3765 = vsel %vm3761, %v3752, %v3754
  %v3766 = vsel %vm3761, %v3750, %v3752
  %v3767 = vsel %vm3761, %v3748, %v3750
  %v3768 = vsel %vm3761, %v3746, %v3748
  %v3769 = vsel %vm3761, %v3744, %v3746
  %v3770 = vsel %vm3761, %v3742, %v3744
  %v3771 = vsel %vm3761, %v3740, %v3742
  %v3772 = vsel %vm3761, %v3738, %v3740
  %v3773 = vsel %vm3761, %v3736, %v3738
  %v3774 = vsel %vm3761, %v3734, %v3736
  %v3775 = vsel %vm3761, %v3732, %v3734
  %v3776 = vsel %vm3761, %v3730, %v3732
  %v3777 = vsel %vm3761, %v3760, %v3730
  %v3778 = vsel %vm104, 1, 0
  %v3779 = vsel %vm105, 1, 0
  %v3780 = vsel %vm106, 1, 0
  %v3781 = vsel %vm107, 1, 0
  %v3782 = vsel %vm108, 1, 0
  %v3783 = vsel %vm109, 1, 0
  %v3784 = vsel %vm110, 1, 0
  %v3785 = vsel %vm111, 1, 0
  %v3786 = vsel %vm112, 1, 0
  %v3787 = vsel %vm113, 1, 0
  %v3788 = vsel %vm114, 1, 0
  %v3789 = vsel %vm115, 1, 0
  %v3790 = vsel %vm116, 1, 0
  %v3791 = vsel %vm117, 1, 0
  %v3792 = vsel %vm118, 1, 0
  %v3793 = vsel %vm119, 1, 0
  %vm3794 = vcmp.eq.s32.totalorder %v3778, 1
  %vm3795 = vcmp.eq.s32.totalorder %v3779, 1
  %vm3796 = vcmp.eq.s32.totalorder %v3780, 1
  %vm3797 = vcmp.eq.s32.totalorder %v3781, 1
  %vm3798 = vcmp.eq.s32.totalorder %v3782, 1
  %vm3799 = vcmp.eq.s32.totalorder %v3783, 1
  %vm3800 = vcmp.eq.s32.totalorder %v3784, 1
  %vm3801 = vcmp.eq.s32.totalorder %v3785, 1
  %vm3802 = vcmp.eq.s32.totalorder %v3786, 1
  %vm3803 = vcmp.eq.s32.totalorder %v3787, 1
  %vm3804 = vcmp.eq.s32.totalorder %v3788, 1
  %vm3805 = vcmp.eq.s32.totalorder %v3789, 1
  %vm3806 = vcmp.eq.s32.totalorder %v3790, 1
  %vm3807 = vcmp.eq.s32.totalorder %v3791, 1
  %vm3808 = vcmp.eq.s32.totalorder %v3792, 1
  %vm3809 = vcmp.eq.s32.totalorder %v3793, 1
  %v3810 = vsel %vm3794, %v3776, 0.0
  %v3811 = vsel %vm3795, %v3775, 0.0
  %v3812 = vsel %vm3796, %v3774, 0.0
  %v3813 = vsel %vm3797, %v3773, 0.0
  %v3814 = vsel %vm3798, %v3772, 0.0
  %v3815 = vsel %vm3799, %v3771, 0.0
  %v3816 = vsel %vm3800, %v3770, 0.0
  %v3817 = vsel %vm3801, %v3769, 0.0
  %v3818 = vsel %vm3802, %v3768, 0.0
  %v3819 = vsel %vm3803, %v3767, 0.0
  %v3820 = vsel %vm3804, %v3766, 0.0
  %v3821 = vsel %vm3805, %v3765, 0.0
  %v3822 = vsel %vm3806, %v3764, 0.0
  %v3823 = vsel %vm3807, %v3763, 0.0
  %v3824 = vsel %vm3808, %v3762, 0.0
  %v3825 = vsel %vm3809, %v3777, 0.0
  %3826 = vrot.lane.b32.xlu0 %v22, 108
  %v3827 = vpop.permute.xlu0 %3826
  %v3828 = vsel %vm389, %v3827, 0
  %v3831 = vsel %vm392, %v3810, 0
  %v3834 = vsel %vm392, %v3811, 0
  %v3837 = vsel %vm392, %v3812, 0
  %v3840 = vsel %vm392, %v3813, 0
  %v3843 = vsel %vm392, %v3814, 0
  %v3846 = vsel %vm392, %v3815, 0
  %v3849 = vsel %vm392, %v3816, 0
  %v3852 = vsel %vm392, %v3817, 0
  %v3855 = vsel %vm392, %v3818, 0
  %v3858 = vsel %vm392, %v3819, 0
  %v3861 = vsel %vm392, %v3820, 0
  %v3864 = vsel %vm392, %v3821, 0
  %v3867 = vsel %vm392, %v3822, 0
  %v3870 = vsel %vm392, %v3823, 0
  %v3873 = vsel %vm392, %v3824, 0
  %v3876 = vsel %vm392, %v3825, 0
  %3878 = vmatprep.subr.mxu0 %v3834
  %3879 = vmatpush1.msra.mxu0 %v3831
  %3880 = vmatprep.subr.mxu0 0.0
  %3881 = vmatpush1.msra.mxu0 0.0
  %3882 = vmatprep.subr.mxu0 0.0
  %3883 = vmatpush1.msra.mxu0 0.0
  %3884 = vmatprep.subr.mxu0 0.0
  %3885 = vmatpush1.msra.mxu0 0.0
  %3886 = vmatprep.subr.mxu0 0.0
  %3887 = vmatpush1.msra.mxu0 0.0
  %3888 = vmatprep.subr.mxu0 0.0
  %3889 = vmatpush1.msra.mxu0 0.0
  %3890 = vmatprep.subr.mxu0 0.0
  %3891 = vmatpush1.msra.mxu0 0.0
  %3892 = vmatprep.subr.mxu0 0.0
  %3893 = vmatpush1.msra.mxu0 0.0
  %3894 = vmatprep.subr.mxu0 0.0
  %3895 = vmatpush1.msra.mxu0 0.0
  %3896 = vmatprep.subr.mxu0 0.0
  %3897 = vmatpush1.msra.mxu0 0.0
  %3898 = vmatprep.subr.mxu0 0.0
  %3899 = vmatpush1.msra.mxu0 0.0
  %3900 = vmatprep.subr.mxu0 0.0
  %3901 = vmatpush1.msra.mxu0 0.0
  %3902 = vmatprep.subr.mxu0 0.0
  %3903 = vmatpush1.msra.mxu0 0.0
  %3904 = vmatprep.subr.mxu0 0.0
  %3905 = vmatpush1.msra.mxu0 0.0
  %3906 = vmatprep.subr.mxu0 0.0
  %3907 = vmatpush1.msra.mxu0 0.0
  %3908 = vmatprep.subr.mxu0 0.0
  %3909 = vmatpush1.msra.mxu0 0.0
  %3910 = vmatprep.subr.mxu0 0.0
  %3911 = vmatpush1.msra.mxu0 0.0
  %3912 = vmatprep.subr.mxu0 0.0
  %3913 = vmatpush1.msra.mxu0 0.0
  %3914 = vmatprep.subr.mxu0 0.0
  %3915 = vmatpush1.msra.mxu0 0.0
  %3916 = vmatprep.subr.mxu0 0.0
  %3917 = vmatpush1.msra.mxu0 0.0
  %3918 = vmatprep.subr.mxu0 0.0
  %3919 = vmatpush1.msra.mxu0 0.0
  %3920 = vmatprep.subr.mxu0 0.0
  %3921 = vmatpush1.msra.mxu0 0.0
  %3922 = vmatprep.subr.mxu0 0.0
  %3923 = vmatpush1.msra.mxu0 0.0
  %3924 = vmatprep.subr.mxu0 0.0
  %3925 = vmatpush1.msra.mxu0 0.0
  %3926 = vmatprep.subr.mxu0 0.0
  %3927 = vmatpush1.msra.mxu0 0.0
  %3928 = vmatprep.subr.mxu0 0.0
  %3929 = vmatpush1.msra.mxu0 0.0
  %3930 = vmatprep.subr.mxu0 0.0
  %3931 = vmatpush1.msra.mxu0 0.0
  %3932 = vmatprep.subr.mxu0 0.0
  %3933 = vmatpush1.msra.mxu0 0.0
  %3934 = vmatprep.subr.mxu0 0.0
  %3935 = vmatpush1.msra.mxu0 0.0
  %3936 = vmatprep.subr.mxu0 0.0
  %3937 = vmatpush1.msra.mxu0 0.0
  %3938 = vmatprep.subr.mxu0 0.0
  %3939 = vmatpush1.msra.mxu0 0.0
  %3940 = vmatprep.subr.mxu0 0.0
  %3941 = vmatpush1.msra.mxu0 0.0
  %3942 = vmatprep.mubr.f32.mxu0 0.0
  %3943 = vmatmul.mubr.f32.gmra.mrb[0].mxu0 %v3828
  %v3944 = vpop.f32.mrb[0].mxu0
  %v3945 = vadd.f32 0.0, %v3944
  %v3946 = vpop.f32.mrb[0].mxu0
  %v3947 = vadd.f32 0.0, %v3946
  %3948 = vdwg.mxu0
  %3949 = vmatprep.subr.mxu0 %v3840
  %3950 = vmatpush1.msra.mxu0 %v3837
  %3951 = vmatprep.subr.mxu0 0.0
  %3952 = vmatpush1.msra.mxu0 0.0
  %3953 = vmatprep.subr.mxu0 0.0
  %3954 = vmatpush1.msra.mxu0 0.0
  %3955 = vmatprep.subr.mxu0 0.0
  %3956 = vmatpush1.msra.mxu0 0.0
  %3957 = vmatprep.subr.mxu0 0.0
  %3958 = vmatpush1.msra.mxu0 0.0
  %3959 = vmatprep.subr.mxu0 0.0
  %3960 = vmatpush1.msra.mxu0 0.0
  %3961 = vmatprep.subr.mxu0 0.0
  %3962 = vmatpush1.msra.mxu0 0.0
  %3963 = vmatprep.subr.mxu0 0.0
  %3964 = vmatpush1.msra.mxu0 0.0
  %3965 = vmatprep.subr.mxu0 0.0
  %3966 = vmatpush1.msra.mxu0 0.0
  %3967 = vmatprep.subr.mxu0 0.0
  %3968 = vmatpush1.msra.mxu0 0.0
  %3969 = vmatprep.subr.mxu0 0.0
  %3970 = vmatpush1.msra.mxu0 0.0
  %3971 = vmatprep.subr.mxu0 0.0
  %3972 = vmatpush1.msra.mxu0 0.0
  %3973 = vmatprep.subr.mxu0 0.0
  %3974 = vmatpush1.msra.mxu0 0.0
  %3975 = vmatprep.subr.mxu0 0.0
  %3976 = vmatpush1.msra.mxu0 0.0
  %3977 = vmatprep.subr.mxu0 0.0
  %3978 = vmatpush1.msra.mxu0 0.0
  %3979 = vmatprep.subr.mxu0 0.0
  %3980 = vmatpush1.msra.mxu0 0.0
  %3981 = vmatprep.subr.mxu0 0.0
  %3982 = vmatpush1.msra.mxu0 0.0
  %3983 = vmatprep.subr.mxu0 0.0
  %3984 = vmatpush1.msra.mxu0 0.0
  %3985 = vmatprep.subr.mxu0 0.0
  %3986 = vmatpush1.msra.mxu0 0.0
  %3987 = vmatprep.subr.mxu0 0.0
  %3988 = vmatpush1.msra.mxu0 0.0
  %3989 = vmatprep.subr.mxu0 0.0
  %3990 = vmatpush1.msra.mxu0 0.0
  %3991 = vmatprep.subr.mxu0 0.0
  %3992 = vmatpush1.msra.mxu0 0.0
  %3993 = vmatprep.subr.mxu0 0.0
  %3994 = vmatpush1.msra.mxu0 0.0
  %3995 = vmatprep.subr.mxu0 0.0
  %3996 = vmatpush1.msra.mxu0 0.0
  %3997 = vmatprep.subr.mxu0 0.0
  %3998 = vmatpush1.msra.mxu0 0.0
  %3999 = vmatprep.subr.mxu0 0.0
  %4000 = vmatpush1.msra.mxu0 0.0
  %4001 = vmatprep.subr.mxu0 0.0
  %4002 = vmatpush1.msra.mxu0 0.0
  %4003 = vmatprep.subr.mxu0 0.0
  %4004 = vmatpush1.msra.mxu0 0.0
  %4005 = vmatprep.subr.mxu0 0.0
  %4006 = vmatpush1.msra.mxu0 0.0
  %4007 = vmatprep.subr.mxu0 0.0
  %4008 = vmatpush1.msra.mxu0 0.0
  %4009 = vmatprep.subr.mxu0 0.0
  %4010 = vmatpush1.msra.mxu0 0.0
  %4011 = vmatprep.subr.mxu0 0.0
  %4012 = vmatpush1.msra.mxu0 0.0
  %4013 = vmatprep.mubr.f32.mxu0 0.0
  %4014 = vmatmul.mubr.f32.gmra.mrb[0].mxu0 %v3828
  %v4015 = vpop.f32.mrb[0].mxu0
  %v4016 = vadd.f32 0.0, %v4015
  %v4017 = vpop.f32.mrb[0].mxu0
  %v4018 = vadd.f32 0.0, %v4017
  %4019 = vdwg.mxu0
  %4020 = vmatprep.subr.mxu0 %v3846
  %4021 = vmatpush1.msra.mxu0 %v3843
  %4022 = vmatprep.subr.mxu0 0.0
  %4023 = vmatpush1.msra.mxu0 0.0
  %4024 = vmatprep.subr.mxu0 0.0
  %4025 = vmatpush1.msra.mxu0 0.0
  %4026 = vmatprep.subr.mxu0 0.0
  %4027 = vmatpush1.msra.mxu0 0.0
  %4028 = vmatprep.subr.mxu0 0.0
  %4029 = vmatpush1.msra.mxu0 0.0
  %4030 = vmatprep.subr.mxu0 0.0
  %4031 = vmatpush1.msra.mxu0 0.0
  %4032 = vmatprep.subr.mxu0 0.0
  %4033 = vmatpush1.msra.mxu0 0.0
  %4034 = vmatprep.subr.mxu0 0.0
  %4035 = vmatpush1.msra.mxu0 0.0
  %4036 = vmatprep.subr.mxu0 0.0
  %4037 = vmatpush1.msra.mxu0 0.0
  %4038 = vmatprep.subr.mxu0 0.0
  %4039 = vmatpush1.msra.mxu0 0.0
  %4040 = vmatprep.subr.mxu0 0.0
  %4041 = vmatpush1.msra.mxu0 0.0
  %4042 = vmatprep.subr.mxu0 0.0
  %4043 = vmatpush1.msra.mxu0 0.0
  %4044 = vmatprep.subr.mxu0 0.0
  %4045 = vmatpush1.msra.mxu0 0.0
  %4046 = vmatprep.subr.mxu0 0.0
  %4047 = vmatpush1.msra.mxu0 0.0
  %4048 = vmatprep.subr.mxu0 0.0
  %4049 = vmatpush1.msra.mxu0 0.0
  %4050 = vmatprep.subr.mxu0 0.0
  %4051 = vmatpush1.msra.mxu0 0.0
  %4052 = vmatprep.subr.mxu0 0.0
  %4053 = vmatpush1.msra.mxu0 0.0
  %4054 = vmatprep.subr.mxu0 0.0
  %4055 = vmatpush1.msra.mxu0 0.0
  %4056 = vmatprep.subr.mxu0 0.0
  %4057 = vmatpush1.msra.mxu0 0.0
  %4058 = vmatprep.subr.mxu0 0.0
  %4059 = vmatpush1.msra.mxu0 0.0
  %4060 = vmatprep.subr.mxu0 0.0
  %4061 = vmatpush1.msra.mxu0 0.0
  %4062 = vmatprep.subr.mxu0 0.0
  %4063 = vmatpush1.msra.mxu0 0.0
  %4064 = vmatprep.subr.mxu0 0.0
  %4065 = vmatpush1.msra.mxu0 0.0
  %4066 = vmatprep.subr.mxu0 0.0
  %4067 = vmatpush1.msra.mxu0 0.0
  %4068 = vmatprep.subr.mxu0 0.0
  %4069 = vmatpush1.msra.mxu0 0.0
  %4070 = vmatprep.subr.mxu0 0.0
  %4071 = vmatpush1.msra.mxu0 0.0
  %4072 = vmatprep.subr.mxu0 0.0
  %4073 = vmatpush1.msra.mxu0 0.0
  %4074 = vmatprep.subr.mxu0 0.0
  %4075 = vmatpush1.msra.mxu0 0.0
  %4076 = vmatprep.subr.mxu0 0.0
  %4077 = vmatpush1.msra.mxu0 0.0
  %4078 = vmatprep.subr.mxu0 0.0
  %4079 = vmatpush1.msra.mxu0 0.0
  %4080 = vmatprep.subr.mxu0 0.0
  %4081 = vmatpush1.msra.mxu0 0.0
  %4082 = vmatprep.subr.mxu0 0.0
  %4083 = vmatpush1.msra.mxu0 0.0
  %4084 = vmatprep.mubr.f32.mxu0 0.0
  %4085 = vmatmul.mubr.f32.gmra.mrb[0].mxu0 %v3828
  %v4086 = vpop.f32.mrb[0].mxu0
  %v4087 = vadd.f32 0.0, %v4086
  %v4088 = vpop.f32.mrb[0].mxu0
  %v4089 = vadd.f32 0.0, %v4088
  %4090 = vdwg.mxu0
  %4091 = vmatprep.subr.mxu0 %v3852
  %4092 = vmatpush1.msra.mxu0 %v3849
  %4093 = vmatprep.subr.mxu0 0.0
  %4094 = vmatpush1.msra.mxu0 0.0
  %4095 = vmatprep.subr.mxu0 0.0
  %4096 = vmatpush1.msra.mxu0 0.0
  %4097 = vmatprep.subr.mxu0 0.0
  %4098 = vmatpush1.msra.mxu0 0.0
  %4099 = vmatprep.subr.mxu0 0.0
  %4100 = vmatpush1.msra.mxu0 0.0
  %4101 = vmatprep.subr.mxu0 0.0
  %4102 = vmatpush1.msra.mxu0 0.0
  %4103 = vmatprep.subr.mxu0 0.0
  %4104 = vmatpush1.msra.mxu0 0.0
  %4105 = vmatprep.subr.mxu0 0.0
  %4106 = vmatpush1.msra.mxu0 0.0
  %4107 = vmatprep.subr.mxu0 0.0
  %4108 = vmatpush1.msra.mxu0 0.0
  %4109 = vmatprep.subr.mxu0 0.0
  %4110 = vmatpush1.msra.mxu0 0.0
  %4111 = vmatprep.subr.mxu0 0.0
  %4112 = vmatpush1.msra.mxu0 0.0
  %4113 = vmatprep.subr.mxu0 0.0
  %4114 = vmatpush1.msra.mxu0 0.0
  %4115 = vmatprep.subr.mxu0 0.0
  %4116 = vmatpush1.msra.mxu0 0.0
  %4117 = vmatprep.subr.mxu0 0.0
  %4118 = vmatpush1.msra.mxu0 0.0
  %4119 = vmatprep.subr.mxu0 0.0
  %4120 = vmatpush1.msra.mxu0 0.0
  %4121 = vmatprep.subr.mxu0 0.0
  %4122 = vmatpush1.msra.mxu0 0.0
  %4123 = vmatprep.subr.mxu0 0.0
  %4124 = vmatpush1.msra.mxu0 0.0
  %4125 = vmatprep.subr.mxu0 0.0
  %4126 = vmatpush1.msra.mxu0 0.0
  %4127 = vmatprep.subr.mxu0 0.0
  %4128 = vmatpush1.msra.mxu0 0.0
  %4129 = vmatprep.subr.mxu0 0.0
  %4130 = vmatpush1.msra.mxu0 0.0
  %4131 = vmatprep.subr.mxu0 0.0
  %4132 = vmatpush1.msra.mxu0 0.0
  %4133 = vmatprep.subr.mxu0 0.0
  %4134 = vmatpush1.msra.mxu0 0.0
  %4135 = vmatprep.subr.mxu0 0.0
  %4136 = vmatpush1.msra.mxu0 0.0
  %4137 = vmatprep.subr.mxu0 0.0
  %4138 = vmatpush1.msra.mxu0 0.0
  %4139 = vmatprep.subr.mxu0 0.0
  %4140 = vmatpush1.msra.mxu0 0.0
  %4141 = vmatprep.subr.mxu0 0.0
  %4142 = vmatpush1.msra.mxu0 0.0
  %4143 = vmatprep.subr.mxu0 0.0
  %4144 = vmatpush1.msra.mxu0 0.0
  %4145 = vmatprep.subr.mxu0 0.0
  %4146 = vmatpush1.msra.mxu0 0.0
  %4147 = vmatprep.subr.mxu0 0.0
  %4148 = vmatpush1.msra.mxu0 0.0
  %4149 = vmatprep.subr.mxu0 0.0
  %4150 = vmatpush1.msra.mxu0 0.0
  %4151 = vmatprep.subr.mxu0 0.0
  %4152 = vmatpush1.msra.mxu0 0.0
  %4153 = vmatprep.subr.mxu0 0.0
  %4154 = vmatpush1.msra.mxu0 0.0
  %4155 = vmatprep.mubr.f32.mxu0 0.0
  %4156 = vmatmul.mubr.f32.gmra.mrb[0].mxu0 %v3828
  %v4157 = vpop.f32.mrb[0].mxu0
  %v4158 = vadd.f32 0.0, %v4157
  %v4159 = vpop.f32.mrb[0].mxu0
  %v4160 = vadd.f32 0.0, %v4159
  %4161 = vdwg.mxu0
  %4162 = vmatprep.subr.mxu0 %v3858
  %4163 = vmatpush1.msra.mxu0 %v3855
  %4164 = vmatprep.subr.mxu0 0.0
  %4165 = vmatpush1.msra.mxu0 0.0
  %4166 = vmatprep.subr.mxu0 0.0
  %4167 = vmatpush1.msra.mxu0 0.0
  %4168 = vmatprep.subr.mxu0 0.0
  %4169 = vmatpush1.msra.mxu0 0.0
  %4170 = vmatprep.subr.mxu0 0.0
  %4171 = vmatpush1.msra.mxu0 0.0
  %4172 = vmatprep.subr.mxu0 0.0
  %4173 = vmatpush1.msra.mxu0 0.0
  %4174 = vmatprep.subr.mxu0 0.0
  %4175 = vmatpush1.msra.mxu0 0.0
  %4176 = vmatprep.subr.mxu0 0.0
  %4177 = vmatpush1.msra.mxu0 0.0
  %4178 = vmatprep.subr.mxu0 0.0
  %4179 = vmatpush1.msra.mxu0 0.0
  %4180 = vmatprep.subr.mxu0 0.0
  %4181 = vmatpush1.msra.mxu0 0.0
  %4182 = vmatprep.subr.mxu0 0.0
  %4183 = vmatpush1.msra.mxu0 0.0
  %4184 = vmatprep.subr.mxu0 0.0
  %4185 = vmatpush1.msra.mxu0 0.0
  %4186 = vmatprep.subr.mxu0 0.0
  %4187 = vmatpush1.msra.mxu0 0.0
  %4188 = vmatprep.subr.mxu0 0.0
  %4189 = vmatpush1.msra.mxu0 0.0
  %4190 = vmatprep.subr.mxu0 0.0
  %4191 = vmatpush1.msra.mxu0 0.0
  %4192 = vmatprep.subr.mxu0 0.0
  %4193 = vmatpush1.msra.mxu0 0.0
  %4194 = vmatprep.subr.mxu0 0.0
  %4195 = vmatpush1.msra.mxu0 0.0
  %4196 = vmatprep.subr.mxu0 0.0
  %4197 = vmatpush1.msra.mxu0 0.0
  %4198 = vmatprep.subr.mxu0 0.0
  %4199 = vmatpush1.msra.mxu0 0.0
  %4200 = vmatprep.subr.mxu0 0.0
  %4201 = vmatpush1.msra.mxu0 0.0
  %4202 = vmatprep.subr.mxu0 0.0
  %4203 = vmatpush1.msra.mxu0 0.0
  %4204 = vmatprep.subr.mxu0 0.0
  %4205 = vmatpush1.msra.mxu0 0.0
  %4206 = vmatprep.subr.mxu0 0.0
  %4207 = vmatpush1.msra.mxu0 0.0
  %4208 = vmatprep.subr.mxu0 0.0
  %4209 = vmatpush1.msra.mxu0 0.0
  %4210 = vmatprep.subr.mxu0 0.0
  %4211 = vmatpush1.msra.mxu0 0.0
  %4212 = vmatprep.subr.mxu0 0.0
  %4213 = vmatpush1.msra.mxu0 0.0
  %4214 = vmatprep.subr.mxu0 0.0
  %4215 = vmatpush1.msra.mxu0 0.0
  %4216 = vmatprep.subr.mxu0 0.0
  %4217 = vmatpush1.msra.mxu0 0.0
  %4218 = vmatprep.subr.mxu0 0.0
  %4219 = vmatpush1.msra.mxu0 0.0
  %4220 = vmatprep.subr.mxu0 0.0
  %4221 = vmatpush1.msra.mxu0 0.0
  %4222 = vmatprep.subr.mxu0 0.0
  %4223 = vmatpush1.msra.mxu0 0.0
  %4224 = vmatprep.subr.mxu0 0.0
  %4225 = vmatpush1.msra.mxu0 0.0
  %4226 = vmatprep.mubr.f32.mxu0 0.0
  %4227 = vmatmul.mubr.f32.gmra.mrb[0].mxu0 %v3828
  %v4228 = vpop.f32.mrb[0].mxu0
  %v4229 = vadd.f32 0.0, %v4228
  %v4230 = vpop.f32.mrb[0].mxu0
  %v4231 = vadd.f32 0.0, %v4230
  %4232 = vdwg.mxu0
  %4233 = vmatprep.subr.mxu0 %v3864
  %4234 = vmatpush1.msra.mxu0 %v3861
  %4235 = vmatprep.subr.mxu0 0.0
  %4236 = vmatpush1.msra.mxu0 0.0
  %4237 = vmatprep.subr.mxu0 0.0
  %4238 = vmatpush1.msra.mxu0 0.0
  %4239 = vmatprep.subr.mxu0 0.0
  %4240 = vmatpush1.msra.mxu0 0.0
  %4241 = vmatprep.subr.mxu0 0.0
  %4242 = vmatpush1.msra.mxu0 0.0
  %4243 = vmatprep.subr.mxu0 0.0
  %4244 = vmatpush1.msra.mxu0 0.0
  %4245 = vmatprep.subr.mxu0 0.0
  %4246 = vmatpush1.msra.mxu0 0.0
  %4247 = vmatprep.subr.mxu0 0.0
  %4248 = vmatpush1.msra.mxu0 0.0
  %4249 = vmatprep.subr.mxu0 0.0
  %4250 = vmatpush1.msra.mxu0 0.0
  %4251 = vmatprep.subr.mxu0 0.0
  %4252 = vmatpush1.msra.mxu0 0.0
  %4253 = vmatprep.subr.mxu0 0.0
  %4254 = vmatpush1.msra.mxu0 0.0
  %4255 = vmatprep.subr.mxu0 0.0
  %4256 = vmatpush1.msra.mxu0 0.0
  %4257 = vmatprep.subr.mxu0 0.0
  %4258 = vmatpush1.msra.mxu0 0.0
  %4259 = vmatprep.subr.mxu0 0.0
  %4260 = vmatpush1.msra.mxu0 0.0
  %4261 = vmatprep.subr.mxu0 0.0
  %4262 = vmatpush1.msra.mxu0 0.0
  %4263 = vmatprep.subr.mxu0 0.0
  %4264 = vmatpush1.msra.mxu0 0.0
  %4265 = vmatprep.subr.mxu0 0.0
  %4266 = vmatpush1.msra.mxu0 0.0
  %4267 = vmatprep.subr.mxu0 0.0
  %4268 = vmatpush1.msra.mxu0 0.0
  %4269 = vmatprep.subr.mxu0 0.0
  %4270 = vmatpush1.msra.mxu0 0.0
  %4271 = vmatprep.subr.mxu0 0.0
  %4272 = vmatpush1.msra.mxu0 0.0
  %4273 = vmatprep.subr.mxu0 0.0
  %4274 = vmatpush1.msra.mxu0 0.0
  %4275 = vmatprep.subr.mxu0 0.0
  %4276 = vmatpush1.msra.mxu0 0.0
  %4277 = vmatprep.subr.mxu0 0.0
  %4278 = vmatpush1.msra.mxu0 0.0
  %4279 = vmatprep.subr.mxu0 0.0
  %4280 = vmatpush1.msra.mxu0 0.0
  %4281 = vmatprep.subr.mxu0 0.0
  %4282 = vmatpush1.msra.mxu0 0.0
  %4283 = vmatprep.subr.mxu0 0.0
  %4284 = vmatpush1.msra.mxu0 0.0
  %4285 = vmatprep.subr.mxu0 0.0
  %4286 = vmatpush1.msra.mxu0 0.0
  %4287 = vmatprep.subr.mxu0 0.0
  %4288 = vmatpush1.msra.mxu0 0.0
  %4289 = vmatprep.subr.mxu0 0.0
  %4290 = vmatpush1.msra.mxu0 0.0
  %4291 = vmatprep.subr.mxu0 0.0
  %4292 = vmatpush1.msra.mxu0 0.0
  %4293 = vmatprep.subr.mxu0 0.0
  %4294 = vmatpush1.msra.mxu0 0.0
  %4295 = vmatprep.subr.mxu0 0.0
  %4296 = vmatpush1.msra.mxu0 0.0
  %4297 = vmatprep.mubr.f32.mxu0 0.0
  %4298 = vmatmul.mubr.f32.gmra.mrb[0].mxu0 %v3828
  %v4299 = vpop.f32.mrb[0].mxu0
  %v4300 = vadd.f32 0.0, %v4299
  %v4301 = vpop.f32.mrb[0].mxu0
  %v4302 = vadd.f32 0.0, %v4301
  %4303 = vdwg.mxu0
  %4304 = vmatprep.subr.mxu0 %v3870
  %4305 = vmatpush1.msra.mxu0 %v3867
  %4306 = vmatprep.subr.mxu0 0.0
  %4307 = vmatpush1.msra.mxu0 0.0
  %4308 = vmatprep.subr.mxu0 0.0
  %4309 = vmatpush1.msra.mxu0 0.0
  %4310 = vmatprep.subr.mxu0 0.0
  %4311 = vmatpush1.msra.mxu0 0.0
  %4312 = vmatprep.subr.mxu0 0.0
  %4313 = vmatpush1.msra.mxu0 0.0
  %4314 = vmatprep.subr.mxu0 0.0
  %4315 = vmatpush1.msra.mxu0 0.0
  %4316 = vmatprep.subr.mxu0 0.0
  %4317 = vmatpush1.msra.mxu0 0.0
  %4318 = vmatprep.subr.mxu0 0.0
  %4319 = vmatpush1.msra.mxu0 0.0
  %4320 = vmatprep.subr.mxu0 0.0
  %4321 = vmatpush1.msra.mxu0 0.0
  %4322 = vmatprep.subr.mxu0 0.0
  %4323 = vmatpush1.msra.mxu0 0.0
  %4324 = vmatprep.subr.mxu0 0.0
  %4325 = vmatpush1.msra.mxu0 0.0
  %4326 = vmatprep.subr.mxu0 0.0
  %4327 = vmatpush1.msra.mxu0 0.0
  %4328 = vmatprep.subr.mxu0 0.0
  %4329 = vmatpush1.msra.mxu0 0.0
  %4330 = vmatprep.subr.mxu0 0.0
  %4331 = vmatpush1.msra.mxu0 0.0
  %4332 = vmatprep.subr.mxu0 0.0
  %4333 = vmatpush1.msra.mxu0 0.0
  %4334 = vmatprep.subr.mxu0 0.0
  %4335 = vmatpush1.msra.mxu0 0.0
  %4336 = vmatprep.subr.mxu0 0.0
  %4337 = vmatpush1.msra.mxu0 0.0
  %4338 = vmatprep.subr.mxu0 0.0
  %4339 = vmatpush1.msra.mxu0 0.0
  %4340 = vmatprep.subr.mxu0 0.0
  %4341 = vmatpush1.msra.mxu0 0.0
  %4342 = vmatprep.subr.mxu0 0.0
  %4343 = vmatpush1.msra.mxu0 0.0
  %4344 = vmatprep.subr.mxu0 0.0
  %4345 = vmatpush1.msra.mxu0 0.0
  %4346 = vmatprep.subr.mxu0 0.0
  %4347 = vmatpush1.msra.mxu0 0.0
  %4348 = vmatprep.subr.mxu0 0.0
  %4349 = vmatpush1.msra.mxu0 0.0
  %4350 = vmatprep.subr.mxu0 0.0
  %4351 = vmatpush1.msra.mxu0 0.0
  %4352 = vmatprep.subr.mxu0 0.0
  %4353 = vmatpush1.msra.mxu0 0.0
  %4354 = vmatprep.subr.mxu0 0.0
  %4355 = vmatpush1.msra.mxu0 0.0
  %4356 = vmatprep.subr.mxu0 0.0
  %4357 = vmatpush1.msra.mxu0 0.0
  %4358 = vmatprep.subr.mxu0 0.0
  %4359 = vmatpush1.msra.mxu0 0.0
  %4360 = vmatprep.subr.mxu0 0.0
  %4361 = vmatpush1.msra.mxu0 0.0
  %4362 = vmatprep.subr.mxu0 0.0
  %4363 = vmatpush1.msra.mxu0 0.0
  %4364 = vmatprep.subr.mxu0 0.0
  %4365 = vmatpush1.msra.mxu0 0.0
  %4366 = vmatprep.subr.mxu0 0.0
  %4367 = vmatpush1.msra.mxu0 0.0
  %4368 = vmatprep.mubr.f32.mxu0 0.0
  %4369 = vmatmul.mubr.f32.gmra.mrb[0].mxu0 %v3828
  %v4370 = vpop.f32.mrb[0].mxu0
  %v4371 = vadd.f32 0.0, %v4370
  %v4372 = vpop.f32.mrb[0].mxu0
  %v4373 = vadd.f32 0.0, %v4372
  %4374 = vdwg.mxu0
  %4375 = vmatprep.subr.mxu0 %v3876
  %4376 = vmatpush1.msra.mxu0 %v3873
  %4377 = vmatprep.subr.mxu0 0.0
  %4378 = vmatpush1.msra.mxu0 0.0
  %4379 = vmatprep.subr.mxu0 0.0
  %4380 = vmatpush1.msra.mxu0 0.0
  %4381 = vmatprep.subr.mxu0 0.0
  %4382 = vmatpush1.msra.mxu0 0.0
  %4383 = vmatprep.subr.mxu0 0.0
  %4384 = vmatpush1.msra.mxu0 0.0
  %4385 = vmatprep.subr.mxu0 0.0
  %4386 = vmatpush1.msra.mxu0 0.0
  %4387 = vmatprep.subr.mxu0 0.0
  %4388 = vmatpush1.msra.mxu0 0.0
  %4389 = vmatprep.subr.mxu0 0.0
  %4390 = vmatpush1.msra.mxu0 0.0
  %4391 = vmatprep.subr.mxu0 0.0
  %4392 = vmatpush1.msra.mxu0 0.0
  %4393 = vmatprep.subr.mxu0 0.0
  %4394 = vmatpush1.msra.mxu0 0.0
  %4395 = vmatprep.subr.mxu0 0.0
  %4396 = vmatpush1.msra.mxu0 0.0
  %4397 = vmatprep.subr.mxu0 0.0
  %4398 = vmatpush1.msra.mxu0 0.0
  %4399 = vmatprep.subr.mxu0 0.0
  %4400 = vmatpush1.msra.mxu0 0.0
  %4401 = vmatprep.subr.mxu0 0.0
  %4402 = vmatpush1.msra.mxu0 0.0
  %4403 = vmatprep.subr.mxu0 0.0
  %4404 = vmatpush1.msra.mxu0 0.0
  %4405 = vmatprep.subr.mxu0 0.0
  %4406 = vmatpush1.msra.mxu0 0.0
  %4407 = vmatprep.subr.mxu0 0.0
  %4408 = vmatpush1.msra.mxu0 0.0
  %4409 = vmatprep.subr.mxu0 0.0
  %4410 = vmatpush1.msra.mxu0 0.0
  %4411 = vmatprep.subr.mxu0 0.0
  %4412 = vmatpush1.msra.mxu0 0.0
  %4413 = vmatprep.subr.mxu0 0.0
  %4414 = vmatpush1.msra.mxu0 0.0
  %4415 = vmatprep.subr.mxu0 0.0
  %4416 = vmatpush1.msra.mxu0 0.0
  %4417 = vmatprep.subr.mxu0 0.0
  %4418 = vmatpush1.msra.mxu0 0.0
  %4419 = vmatprep.subr.mxu0 0.0
  %4420 = vmatpush1.msra.mxu0 0.0
  %4421 = vmatprep.subr.mxu0 0.0
  %4422 = vmatpush1.msra.mxu0 0.0
  %4423 = vmatprep.subr.mxu0 0.0
  %4424 = vmatpush1.msra.mxu0 0.0
  %4425 = vmatprep.subr.mxu0 0.0
  %4426 = vmatpush1.msra.mxu0 0.0
  %4427 = vmatprep.subr.mxu0 0.0
  %4428 = vmatpush1.msra.mxu0 0.0
  %4429 = vmatprep.subr.mxu0 0.0
  %4430 = vmatpush1.msra.mxu0 0.0
  %4431 = vmatprep.subr.mxu0 0.0
  %4432 = vmatpush1.msra.mxu0 0.0
  %4433 = vmatprep.subr.mxu0 0.0
  %4434 = vmatpush1.msra.mxu0 0.0
  %4435 = vmatprep.subr.mxu0 0.0
  %4436 = vmatpush1.msra.mxu0 0.0
  %4437 = vmatprep.subr.mxu0 0.0
  %4438 = vmatpush1.msra.mxu0 0.0
  %4439 = vmatprep.mubr.f32.mxu0 0.0
  %4440 = vmatmul.mubr.f32.gmra.mrb[0].mxu0 %v3828
  %v4441 = vpop.f32.mrb[0].mxu0
  %v4442 = vadd.f32 0.0, %v4441
  %v4443 = vpop.f32.mrb[0].mxu0
  %v4444 = vadd.f32 0.0, %v4443
  %4445 = vdwg.mxu0
  %v4446 = vadd.f32 %v3713, %v3945
  %v4447 = vadd.f32 %v3714, %v3947
  %v4448 = vadd.f32 %v3715, %v4016
  %v4449 = vadd.f32 %v3716, %v4018
  %v4450 = vadd.f32 %v3717, %v4087
  %v4451 = vadd.f32 %v3718, %v4089
  %v4452 = vadd.f32 %v3719, %v4158
  %v4453 = vadd.f32 %v3720, %v4160
  %v4454 = vadd.f32 %v3721, %v4229
  %v4455 = vadd.f32 %v3722, %v4231
  %v4456 = vadd.f32 %v3723, %v4300
  %v4457 = vadd.f32 %v3724, %v4302
  %v4458 = vadd.f32 %v3725, %v4371
  %v4459 = vadd.f32 %v3726, %v4373
  %v4460 = vadd.f32 %v3727, %v4442
  %v4461 = vadd.f32 %v3728, %v4444
  %vm4462 = vmand %vm88, %vm136
  %vm4463 = vmand %vm89, %vm137
  %vm4464 = vmand %vm90, %vm138
  %vm4465 = vmand %vm91, %vm139
  %vm4466 = vmand %vm92, %vm140
  %vm4467 = vmand %vm93, %vm141
  %vm4468 = vmand %vm94, %vm142
  %vm4469 = vmand %vm95, %vm143
  %vm4470 = vmand %vm96, %vm144
  %vm4471 = vmand %vm97, %vm145
  %vm4472 = vmand %vm98, %vm146
  %vm4473 = vmand %vm99, %vm147
  %vm4474 = vmand %vm100, %vm148
  %vm4475 = vmand %vm101, %vm149
  %vm4476 = vmand %vm102, %vm150
  %vm4477 = vmand %vm103, %vm151
  %v4478 = vsel %vm4462, 1, 0
  %v4479 = vsel %vm4463, 1, 0
  %v4480 = vsel %vm4464, 1, 0
  %v4481 = vsel %vm4465, 1, 0
  %v4482 = vsel %vm4466, 1, 0
  %v4483 = vsel %vm4467, 1, 0
  %v4484 = vsel %vm4468, 1, 0
  %v4485 = vsel %vm4469, 1, 0
  %v4486 = vsel %vm4470, 1, 0
  %v4487 = vsel %vm4471, 1, 0
  %v4488 = vsel %vm4472, 1, 0
  %v4489 = vsel %vm4473, 1, 0
  %v4490 = vsel %vm4474, 1, 0
  %v4491 = vsel %vm4475, 1, 0
  %v4492 = vsel %vm4476, 1, 0
  %v4493 = vsel %vm4477, 1, 0
  %vm4494 = vcmp.eq.s32.totalorder %v4478, 1
  %vm4495 = vcmp.eq.s32.totalorder %v4479, 1
  %vm4496 = vcmp.eq.s32.totalorder %v4480, 1
  %vm4497 = vcmp.eq.s32.totalorder %v4481, 1
  %vm4498 = vcmp.eq.s32.totalorder %v4482, 1
  %vm4499 = vcmp.eq.s32.totalorder %v4483, 1
  %vm4500 = vcmp.eq.s32.totalorder %v4484, 1
  %vm4501 = vcmp.eq.s32.totalorder %v4485, 1
  %vm4502 = vcmp.eq.s32.totalorder %v4486, 1
  %vm4503 = vcmp.eq.s32.totalorder %v4487, 1
  %vm4504 = vcmp.eq.s32.totalorder %v4488, 1
  %vm4505 = vcmp.eq.s32.totalorder %v4489, 1
  %vm4506 = vcmp.eq.s32.totalorder %v4490, 1
  %vm4507 = vcmp.eq.s32.totalorder %v4491, 1
  %vm4508 = vcmp.eq.s32.totalorder %v4492, 1
  %vm4509 = vcmp.eq.s32.totalorder %v4493, 1
  %v4510 = vsel %vm4494, %v223, 0.0
  %v4511 = vsel %vm4495, %v222, 0.0
  %v4512 = vsel %vm4496, %v221, 0.0
  %v4513 = vsel %vm4497, %v220, 0.0
  %v4514 = vsel %vm4498, %v219, 0.0
  %v4515 = vsel %vm4499, %v218, 0.0
  %v4516 = vsel %vm4500, %v217, 0.0
  %v4517 = vsel %vm4501, %v216, 0.0
  %v4518 = vsel %vm4502, %v215, 0.0
  %v4519 = vsel %vm4503, %v214, 0.0
  %v4520 = vsel %vm4504, %v213, 0.0
  %v4521 = vsel %vm4505, %v212, 0.0
  %v4522 = vsel %vm4506, %v211, 0.0
  %v4523 = vsel %vm4507, %v210, 0.0
  %v4524 = vsel %vm4508, %v209, 0.0
  %v4525 = vsel %vm4509, %v224, 0.0
  %4526 = vrot.lane.b32.xlu0 %v22, 104
  %v4527 = vpop.permute.xlu0 %4526
  %v4528 = vsel %vm389, %v4527, 0
  %v4531 = vsel %vm392, %v4510, 0
  %v4534 = vsel %vm392, %v4511, 0
  %v4537 = vsel %vm392, %v4512, 0
  %v4540 = vsel %vm392, %v4513, 0
  %v4543 = vsel %vm392, %v4514, 0
  %v4546 = vsel %vm392, %v4515, 0
  %v4549 = vsel %vm392, %v4516, 0
  %v4552 = vsel %vm392, %v4517, 0
  %v4555 = vsel %vm392, %v4518, 0
  %v4558 = vsel %vm392, %v4519, 0
  %v4561 = vsel %vm392, %v4520, 0
  %v4564 = vsel %vm392, %v4521, 0
  %v4567 = vsel %vm392, %v4522, 0
  %v4570 = vsel %vm392, %v4523, 0
  %v4573 = vsel %vm392, %v4524, 0
  %v4576 = vsel %vm392, %v4525, 0
  %4578 = vmatprep.subr.mxu0 %v4534
  %4579 = vmatpush1.msra.mxu0 %v4531
  %4580 = vmatprep.subr.mxu0 0.0
  %4581 = vmatpush1.msra.mxu0 0.0
  %4582 = vmatprep.subr.mxu0 0.0
  %4583 = vmatpush1.msra.mxu0 0.0
  %4584 = vmatprep.subr.mxu0 0.0
  %4585 = vmatpush1.msra.mxu0 0.0
  %4586 = vmatprep.subr.mxu0 0.0
  %4587 = vmatpush1.msra.mxu0 0.0
  %4588 = vmatprep.subr.mxu0 0.0
  %4589 = vmatpush1.msra.mxu0 0.0
  %4590 = vmatprep.subr.mxu0 0.0
  %4591 = vmatpush1.msra.mxu0 0.0
  %4592 = vmatprep.subr.mxu0 0.0
  %4593 = vmatpush1.msra.mxu0 0.0
  %4594 = vmatprep.subr.mxu0 0.0
  %4595 = vmatpush1.msra.mxu0 0.0
  %4596 = vmatprep.subr.mxu0 0.0
  %4597 = vmatpush1.msra.mxu0 0.0
  %4598 = vmatprep.subr.mxu0 0.0
  %4599 = vmatpush1.msra.mxu0 0.0
  %4600 = vmatprep.subr.mxu0 0.0
  %4601 = vmatpush1.msra.mxu0 0.0
  %4602 = vmatprep.subr.mxu0 0.0
  %4603 = vmatpush1.msra.mxu0 0.0
  %4604 = vmatprep.subr.mxu0 0.0
  %4605 = vmatpush1.msra.mxu0 0.0
  %4606 = vmatprep.subr.mxu0 0.0
  %4607 = vmatpush1.msra.mxu0 0.0
  %4608 = vmatprep.subr.mxu0 0.0
  %4609 = vmatpush1.msra.mxu0 0.0
  %4610 = vmatprep.subr.mxu0 0.0
  %4611 = vmatpush1.msra.mxu0 0.0
  %4612 = vmatprep.subr.mxu0 0.0
  %4613 = vmatpush1.msra.mxu0 0.0
  %4614 = vmatprep.subr.mxu0 0.0
  %4615 = vmatpush1.msra.mxu0 0.0
  %4616 = vmatprep.subr.mxu0 0.0
  %4617 = vmatpush1.msra.mxu0 0.0
  %4618 = vmatprep.subr.mxu0 0.0
  %4619 = vmatpush1.msra.mxu0 0.0
  %4620 = vmatprep.subr.mxu0 0.0
  %4621 = vmatpush1.msra.mxu0 0.0
  %4622 = vmatprep.subr.mxu0 0.0
  %4623 = vmatpush1.msra.mxu0 0.0
  %4624 = vmatprep.subr.mxu0 0.0
  %4625 = vmatpush1.msra.mxu0 0.0
  %4626 = vmatprep.subr.mxu0 0.0
  %4627 = vmatpush1.msra.mxu0 0.0
  %4628 = vmatprep.subr.mxu0 0.0
  %4629 = vmatpush1.msra.mxu0 0.0
  %4630 = vmatprep.subr.mxu0 0.0
  %4631 = vmatpush1.msra.mxu0 0.0
  %4632 = vmatprep.subr.mxu0 0.0
  %4633 = vmatpush1.msra.mxu0 0.0
  %4634 = vmatprep.subr.mxu0 0.0
  %4635 = vmatpush1.msra.mxu0 0.0
  %4636 = vmatprep.subr.mxu0 0.0
  %4637 = vmatpush1.msra.mxu0 0.0
  %4638 = vmatprep.subr.mxu0 0.0
  %4639 = vmatpush1.msra.mxu0 0.0
  %4640 = vmatprep.subr.mxu0 0.0
  %4641 = vmatpush1.msra.mxu0 0.0
  %4642 = vmatprep.mubr.f32.mxu0 0.0
  %4643 = vmatmul.mubr.f32.gmra.mrb[0].mxu0 %v4528
  %v4644 = vpop.f32.mrb[0].mxu0
  %v4645 = vadd.f32 0.0, %v4644
  %v4646 = vpop.f32.mrb[0].mxu0
  %v4647 = vadd.f32 0.0, %v4646
  %4648 = vdwg.mxu0
  %4649 = vmatprep.subr.mxu0 %v4540
  %4650 = vmatpush1.msra.mxu0 %v4537
  %4651 = vmatprep.subr.mxu0 0.0
  %4652 = vmatpush1.msra.mxu0 0.0
  %4653 = vmatprep.subr.mxu0 0.0
  %4654 = vmatpush1.msra.mxu0 0.0
  %4655 = vmatprep.subr.mxu0 0.0
  %4656 = vmatpush1.msra.mxu0 0.0
  %4657 = vmatprep.subr.mxu0 0.0
  %4658 = vmatpush1.msra.mxu0 0.0
  %4659 = vmatprep.subr.mxu0 0.0
  %4660 = vmatpush1.msra.mxu0 0.0
  %4661 = vmatprep.subr.mxu0 0.0
  %4662 = vmatpush1.msra.mxu0 0.0
  %4663 = vmatprep.subr.mxu0 0.0
  %4664 = vmatpush1.msra.mxu0 0.0
  %4665 = vmatprep.subr.mxu0 0.0
  %4666 = vmatpush1.msra.mxu0 0.0
  %4667 = vmatprep.subr.mxu0 0.0
  %4668 = vmatpush1.msra.mxu0 0.0
  %4669 = vmatprep.subr.mxu0 0.0
  %4670 = vmatpush1.msra.mxu0 0.0
  %4671 = vmatprep.subr.mxu0 0.0
  %4672 = vmatpush1.msra.mxu0 0.0
  %4673 = vmatprep.subr.mxu0 0.0
  %4674 = vmatpush1.msra.mxu0 0.0
  %4675 = vmatprep.subr.mxu0 0.0
  %4676 = vmatpush1.msra.mxu0 0.0
  %4677 = vmatprep.subr.mxu0 0.0
  %4678 = vmatpush1.msra.mxu0 0.0
  %4679 = vmatprep.subr.mxu0 0.0
  %4680 = vmatpush1.msra.mxu0 0.0
  %4681 = vmatprep.subr.mxu0 0.0
  %4682 = vmatpush1.msra.mxu0 0.0
  %4683 = vmatprep.subr.mxu0 0.0
  %4684 = vmatpush1.msra.mxu0 0.0
  %4685 = vmatprep.subr.mxu0 0.0
  %4686 = vmatpush1.msra.mxu0 0.0
  %4687 = vmatprep.subr.mxu0 0.0
  %4688 = vmatpush1.msra.mxu0 0.0
  %4689 = vmatprep.subr.mxu0 0.0
  %4690 = vmatpush1.msra.mxu0 0.0
  %4691 = vmatprep.subr.mxu0 0.0
  %4692 = vmatpush1.msra.mxu0 0.0
  %4693 = vmatprep.subr.mxu0 0.0
  %4694 = vmatpush1.msra.mxu0 0.0
  %4695 = vmatprep.subr.mxu0 0.0
  %4696 = vmatpush1.msra.mxu0 0.0
  %4697 = vmatprep.subr.mxu0 0.0
  %4698 = vmatpush1.msra.mxu0 0.0
  %4699 = vmatprep.subr.mxu0 0.0
  %4700 = vmatpush1.msra.mxu0 0.0
  %4701 = vmatprep.subr.mxu0 0.0
  %4702 = vmatpush1.msra.mxu0 0.0
  %4703 = vmatprep.subr.mxu0 0.0
  %4704 = vmatpush1.msra.mxu0 0.0
  %4705 = vmatprep.subr.mxu0 0.0
  %4706 = vmatpush1.msra.mxu0 0.0
  %4707 = vmatprep.subr.mxu0 0.0
  %4708 = vmatpush1.msra.mxu0 0.0
  %4709 = vmatprep.subr.mxu0 0.0
  %4710 = vmatpush1.msra.mxu0 0.0
  %4711 = vmatprep.subr.mxu0 0.0
  %4712 = vmatpush1.msra.mxu0 0.0
  %4713 = vmatprep.mubr.f32.mxu0 0.0
  %4714 = vmatmul.mubr.f32.gmra.mrb[0].mxu0 %v4528
  %v4715 = vpop.f32.mrb[0].mxu0
  %v4716 = vadd.f32 0.0, %v4715
  %v4717 = vpop.f32.mrb[0].mxu0
  %v4718 = vadd.f32 0.0, %v4717
  %4719 = vdwg.mxu0
  %4720 = vmatprep.subr.mxu0 %v4546
  %4721 = vmatpush1.msra.mxu0 %v4543
  %4722 = vmatprep.subr.mxu0 0.0
  %4723 = vmatpush1.msra.mxu0 0.0
  %4724 = vmatprep.subr.mxu0 0.0
  %4725 = vmatpush1.msra.mxu0 0.0
  %4726 = vmatprep.subr.mxu0 0.0
  %4727 = vmatpush1.msra.mxu0 0.0
  %4728 = vmatprep.subr.mxu0 0.0
  %4729 = vmatpush1.msra.mxu0 0.0
  %4730 = vmatprep.subr.mxu0 0.0
  %4731 = vmatpush1.msra.mxu0 0.0
  %4732 = vmatprep.subr.mxu0 0.0
  %4733 = vmatpush1.msra.mxu0 0.0
  %4734 = vmatprep.subr.mxu0 0.0
  %4735 = vmatpush1.msra.mxu0 0.0
  %4736 = vmatprep.subr.mxu0 0.0
  %4737 = vmatpush1.msra.mxu0 0.0
  %4738 = vmatprep.subr.mxu0 0.0
  %4739 = vmatpush1.msra.mxu0 0.0
  %4740 = vmatprep.subr.mxu0 0.0
  %4741 = vmatpush1.msra.mxu0 0.0
  %4742 = vmatprep.subr.mxu0 0.0
  %4743 = vmatpush1.msra.mxu0 0.0
  %4744 = vmatprep.subr.mxu0 0.0
  %4745 = vmatpush1.msra.mxu0 0.0
  %4746 = vmatprep.subr.mxu0 0.0
  %4747 = vmatpush1.msra.mxu0 0.0
  %4748 = vmatprep.subr.mxu0 0.0
  %4749 = vmatpush1.msra.mxu0 0.0
  %4750 = vmatprep.subr.mxu0 0.0
  %4751 = vmatpush1.msra.mxu0 0.0
  %4752 = vmatprep.subr.mxu0 0.0
  %4753 = vmatpush1.msra.mxu0 0.0
  %4754 = vmatprep.subr.mxu0 0.0
  %4755 = vmatpush1.msra.mxu0 0.0
  %4756 = vmatprep.subr.mxu0 0.0
  %4757 = vmatpush1.msra.mxu0 0.0
  %4758 = vmatprep.subr.mxu0 0.0
  %4759 = vmatpush1.msra.mxu0 0.0
  %4760 = vmatprep.subr.mxu0 0.0
  %4761 = vmatpush1.msra.mxu0 0.0
  %4762 = vmatprep.subr.mxu0 0.0
  %4763 = vmatpush1.msra.mxu0 0.0
  %4764 = vmatprep.subr.mxu0 0.0
  %4765 = vmatpush1.msra.mxu0 0.0
  %4766 = vmatprep.subr.mxu0 0.0
  %4767 = vmatpush1.msra.mxu0 0.0
  %4768 = vmatprep.subr.mxu0 0.0
  %4769 = vmatpush1.msra.mxu0 0.0
  %4770 = vmatprep.subr.mxu0 0.0
  %4771 = vmatpush1.msra.mxu0 0.0
  %4772 = vmatprep.subr.mxu0 0.0
  %4773 = vmatpush1.msra.mxu0 0.0
  %4774 = vmatprep.subr.mxu0 0.0
  %4775 = vmatpush1.msra.mxu0 0.0
  %4776 = vmatprep.subr.mxu0 0.0
  %4777 = vmatpush1.msra.mxu0 0.0
  %4778 = vmatprep.subr.mxu0 0.0
  %4779 = vmatpush1.msra.mxu0 0.0
  %4780 = vmatprep.subr.mxu0 0.0
  %4781 = vmatpush1.msra.mxu0 0.0
  %4782 = vmatprep.subr.mxu0 0.0
  %4783 = vmatpush1.msra.mxu0 0.0
  %4784 = vmatprep.mubr.f32.mxu0 0.0
  %4785 = vmatmul.mubr.f32.gmra.mrb[0].mxu0 %v4528
  %v4786 = vpop.f32.mrb[0].mxu0
  %v4787 = vadd.f32 0.0, %v4786
  %v4788 = vpop.f32.mrb[0].mxu0
  %v4789 = vadd.f32 0.0, %v4788
  %4790 = vdwg.mxu0
  %4791 = vmatprep.subr.mxu0 %v4552
  %4792 = vmatpush1.msra.mxu0 %v4549
  %4793 = vmatprep.subr.mxu0 0.0
  %4794 = vmatpush1.msra.mxu0 0.0
  %4795 = vmatprep.subr.mxu0 0.0
  %4796 = vmatpush1.msra.mxu0 0.0
  %4797 = vmatprep.subr.mxu0 0.0
  %4798 = vmatpush1.msra.mxu0 0.0
  %4799 = vmatprep.subr.mxu0 0.0
  %4800 = vmatpush1.msra.mxu0 0.0
  %4801 = vmatprep.subr.mxu0 0.0
  %4802 = vmatpush1.msra.mxu0 0.0
  %4803 = vmatprep.subr.mxu0 0.0
  %4804 = vmatpush1.msra.mxu0 0.0
  %4805 = vmatprep.subr.mxu0 0.0
  %4806 = vmatpush1.msra.mxu0 0.0
  %4807 = vmatprep.subr.mxu0 0.0
  %4808 = vmatpush1.msra.mxu0 0.0
  %4809 = vmatprep.subr.mxu0 0.0
  %4810 = vmatpush1.msra.mxu0 0.0
  %4811 = vmatprep.subr.mxu0 0.0
  %4812 = vmatpush1.msra.mxu0 0.0
  %4813 = vmatprep.subr.mxu0 0.0
  %4814 = vmatpush1.msra.mxu0 0.0
  %4815 = vmatprep.subr.mxu0 0.0
  %4816 = vmatpush1.msra.mxu0 0.0
  %4817 = vmatprep.subr.mxu0 0.0
  %4818 = vmatpush1.msra.mxu0 0.0
  %4819 = vmatprep.subr.mxu0 0.0
  %4820 = vmatpush1.msra.mxu0 0.0
  %4821 = vmatprep.subr.mxu0 0.0
  %4822 = vmatpush1.msra.mxu0 0.0
  %4823 = vmatprep.subr.mxu0 0.0
  %4824 = vmatpush1.msra.mxu0 0.0
  %4825 = vmatprep.subr.mxu0 0.0
  %4826 = vmatpush1.msra.mxu0 0.0
  %4827 = vmatprep.subr.mxu0 0.0
  %4828 = vmatpush1.msra.mxu0 0.0
  %4829 = vmatprep.subr.mxu0 0.0
  %4830 = vmatpush1.msra.mxu0 0.0
  %4831 = vmatprep.subr.mxu0 0.0
  %4832 = vmatpush1.msra.mxu0 0.0
  %4833 = vmatprep.subr.mxu0 0.0
  %4834 = vmatpush1.msra.mxu0 0.0
  %4835 = vmatprep.subr.mxu0 0.0
  %4836 = vmatpush1.msra.mxu0 0.0
  %4837 = vmatprep.subr.mxu0 0.0
  %4838 = vmatpush1.msra.mxu0 0.0
  %4839 = vmatprep.subr.mxu0 0.0
  %4840 = vmatpush1.msra.mxu0 0.0
  %4841 = vmatprep.subr.mxu0 0.0
  %4842 = vmatpush1.msra.mxu0 0.0
  %4843 = vmatprep.subr.mxu0 0.0
  %4844 = vmatpush1.msra.mxu0 0.0
  %4845 = vmatprep.subr.mxu0 0.0
  %4846 = vmatpush1.msra.mxu0 0.0
  %4847 = vmatprep.subr.mxu0 0.0
  %4848 = vmatpush1.msra.mxu0 0.0
  %4849 = vmatprep.subr.mxu0 0.0
  %4850 = vmatpush1.msra.mxu0 0.0
  %4851 = vmatprep.subr.mxu0 0.0
  %4852 = vmatpush1.msra.mxu0 0.0
  %4853 = vmatprep.subr.mxu0 0.0
  %4854 = vmatpush1.msra.mxu0 0.0
  %4855 = vmatprep.mubr.f32.mxu0 0.0
  %4856 = vmatmul.mubr.f32.gmra.mrb[0].mxu0 %v4528
  %v4857 = vpop.f32.mrb[0].mxu0
  %v4858 = vadd.f32 0.0, %v4857
  %v4859 = vpop.f32.mrb[0].mxu0
  %v4860 = vadd.f32 0.0, %v4859
  %4861 = vdwg.mxu0
  %4862 = vmatprep.subr.mxu0 %v4558
  %4863 = vmatpush1.msra.mxu0 %v4555
  %4864 = vmatprep.subr.mxu0 0.0
  %4865 = vmatpush1.msra.mxu0 0.0
  %4866 = vmatprep.subr.mxu0 0.0
  %4867 = vmatpush1.msra.mxu0 0.0
  %4868 = vmatprep.subr.mxu0 0.0
  %4869 = vmatpush1.msra.mxu0 0.0
  %4870 = vmatprep.subr.mxu0 0.0
  %4871 = vmatpush1.msra.mxu0 0.0
  %4872 = vmatprep.subr.mxu0 0.0
  %4873 = vmatpush1.msra.mxu0 0.0
  %4874 = vmatprep.subr.mxu0 0.0
  %4875 = vmatpush1.msra.mxu0 0.0
  %4876 = vmatprep.subr.mxu0 0.0
  %4877 = vmatpush1.msra.mxu0 0.0
  %4878 = vmatprep.subr.mxu0 0.0
  %4879 = vmatpush1.msra.mxu0 0.0
  %4880 = vmatprep.subr.mxu0 0.0
  %4881 = vmatpush1.msra.mxu0 0.0
  %4882 = vmatprep.subr.mxu0 0.0
  %4883 = vmatpush1.msra.mxu0 0.0
  %4884 = vmatprep.subr.mxu0 0.0
  %4885 = vmatpush1.msra.mxu0 0.0
  %4886 = vmatprep.subr.mxu0 0.0
  %4887 = vmatpush1.msra.mxu0 0.0
  %4888 = vmatprep.subr.mxu0 0.0
  %4889 = vmatpush1.msra.mxu0 0.0
  %4890 = vmatprep.subr.mxu0 0.0
  %4891 = vmatpush1.msra.mxu0 0.0
  %4892 = vmatprep.subr.mxu0 0.0
  %4893 = vmatpush1.msra.mxu0 0.0
  %4894 = vmatprep.subr.mxu0 0.0
  %4895 = vmatpush1.msra.mxu0 0.0
  %4896 = vmatprep.subr.mxu0 0.0
  %4897 = vmatpush1.msra.mxu0 0.0
  %4898 = vmatprep.subr.mxu0 0.0
  %4899 = vmatpush1.msra.mxu0 0.0
  %4900 = vmatprep.subr.mxu0 0.0
  %4901 = vmatpush1.msra.mxu0 0.0
  %4902 = vmatprep.subr.mxu0 0.0
  %4903 = vmatpush1.msra.mxu0 0.0
  %4904 = vmatprep.subr.mxu0 0.0
  %4905 = vmatpush1.msra.mxu0 0.0
  %4906 = vmatprep.subr.mxu0 0.0
  %4907 = vmatpush1.msra.mxu0 0.0
  %4908 = vmatprep.subr.mxu0 0.0
  %4909 = vmatpush1.msra.mxu0 0.0
  %4910 = vmatprep.subr.mxu0 0.0
  %4911 = vmatpush1.msra.mxu0 0.0
  %4912 = vmatprep.subr.mxu0 0.0
  %4913 = vmatpush1.msra.mxu0 0.0
  %4914 = vmatprep.subr.mxu0 0.0
  %4915 = vmatpush1.msra.mxu0 0.0
  %4916 = vmatprep.subr.mxu0 0.0
  %4917 = vmatpush1.msra.mxu0 0.0
  %4918 = vmatprep.subr.mxu0 0.0
  %4919 = vmatpush1.msra.mxu0 0.0
  %4920 = vmatprep.subr.mxu0 0.0
  %4921 = vmatpush1.msra.mxu0 0.0
  %4922 = vmatprep.subr.mxu0 0.0
  %4923 = vmatpush1.msra.mxu0 0.0
  %4924 = vmatprep.subr.mxu0 0.0
  %4925 = vmatpush1.msra.mxu0 0.0
  %4926 = vmatprep.mubr.f32.mxu0 0.0
  %4927 = vmatmul.mubr.f32.gmra.mrb[0].mxu0 %v4528
  %v4928 = vpop.f32.mrb[0].mxu0
  %v4929 = vadd.f32 0.0, %v4928
  %v4930 = vpop.f32.mrb[0].mxu0
  %v4931 = vadd.f32 0.0, %v4930
  %4932 = vdwg.mxu0
  %4933 = vmatprep.subr.mxu0 %v4564
  %4934 = vmatpush1.msra.mxu0 %v4561
  %4935 = vmatprep.subr.mxu0 0.0
  %4936 = vmatpush1.msra.mxu0 0.0
  %4937 = vmatprep.subr.mxu0 0.0
  %4938 = vmatpush1.msra.mxu0 0.0
  %4939 = vmatprep.subr.mxu0 0.0
  %4940 = vmatpush1.msra.mxu0 0.0
  %4941 = vmatprep.subr.mxu0 0.0
  %4942 = vmatpush1.msra.mxu0 0.0
  %4943 = vmatprep.subr.mxu0 0.0
  %4944 = vmatpush1.msra.mxu0 0.0
  %4945 = vmatprep.subr.mxu0 0.0
  %4946 = vmatpush1.msra.mxu0 0.0
  %4947 = vmatprep.subr.mxu0 0.0
  %4948 = vmatpush1.msra.mxu0 0.0
  %4949 = vmatprep.subr.mxu0 0.0
  %4950 = vmatpush1.msra.mxu0 0.0
  %4951 = vmatprep.subr.mxu0 0.0
  %4952 = vmatpush1.msra.mxu0 0.0
  %4953 = vmatprep.subr.mxu0 0.0
  %4954 = vmatpush1.msra.mxu0 0.0
  %4955 = vmatprep.subr.mxu0 0.0
  %4956 = vmatpush1.msra.mxu0 0.0
  %4957 = vmatprep.subr.mxu0 0.0
  %4958 = vmatpush1.msra.mxu0 0.0
  %4959 = vmatprep.subr.mxu0 0.0
  %4960 = vmatpush1.msra.mxu0 0.0
  %4961 = vmatprep.subr.mxu0 0.0
  %4962 = vmatpush1.msra.mxu0 0.0
  %4963 = vmatprep.subr.mxu0 0.0
  %4964 = vmatpush1.msra.mxu0 0.0
  %4965 = vmatprep.subr.mxu0 0.0
  %4966 = vmatpush1.msra.mxu0 0.0
  %4967 = vmatprep.subr.mxu0 0.0
  %4968 = vmatpush1.msra.mxu0 0.0
  %4969 = vmatprep.subr.mxu0 0.0
  %4970 = vmatpush1.msra.mxu0 0.0
  %4971 = vmatprep.subr.mxu0 0.0
  %4972 = vmatpush1.msra.mxu0 0.0
  %4973 = vmatprep.subr.mxu0 0.0
  %4974 = vmatpush1.msra.mxu0 0.0
  %4975 = vmatprep.subr.mxu0 0.0
  %4976 = vmatpush1.msra.mxu0 0.0
  %4977 = vmatprep.subr.mxu0 0.0
  %4978 = vmatpush1.msra.mxu0 0.0
  %4979 = vmatprep.subr.mxu0 0.0
  %4980 = vmatpush1.msra.mxu0 0.0
  %4981 = vmatprep.subr.mxu0 0.0
  %4982 = vmatpush1.msra.mxu0 0.0
  %4983 = vmatprep.subr.mxu0 0.0
  %4984 = vmatpush1.msra.mxu0 0.0
  %4985 = vmatprep.subr.mxu0 0.0
  %4986 = vmatpush1.msra.mxu0 0.0
  %4987 = vmatprep.subr.mxu0 0.0
  %4988 = vmatpush1.msra.mxu0 0.0
  %4989 = vmatprep.subr.mxu0 0.0
  %4990 = vmatpush1.msra.mxu0 0.0
  %4991 = vmatprep.subr.mxu0 0.0
  %4992 = vmatpush1.msra.mxu0 0.0
  %4993 = vmatprep.subr.mxu0 0.0
  %4994 = vmatpush1.msra.mxu0 0.0
  %4995 = vmatprep.subr.mxu0 0.0
  %4996 = vmatpush1.msra.mxu0 0.0
  %4997 = vmatprep.mubr.f32.mxu0 0.0
  %4998 = vmatmul.mubr.f32.gmra.mrb[0].mxu0 %v4528
  %v4999 = vpop.f32.mrb[0].mxu0
  %v5000 = vadd.f32 0.0, %v4999
  %v5001 = vpop.f32.mrb[0].mxu0
  %v5002 = vadd.f32 0.0, %v5001
  %5003 = vdwg.mxu0
  %5004 = vmatprep.subr.mxu0 %v4570
  %5005 = vmatpush1.msra.mxu0 %v4567
  %5006 = vmatprep.subr.mxu0 0.0
  %5007 = vmatpush1.msra.mxu0 0.0
  %5008 = vmatprep.subr.mxu0 0.0
  %5009 = vmatpush1.msra.mxu0 0.0
  %5010 = vmatprep.subr.mxu0 0.0
  %5011 = vmatpush1.msra.mxu0 0.0
  %5012 = vmatprep.subr.mxu0 0.0
  %5013 = vmatpush1.msra.mxu0 0.0
  %5014 = vmatprep.subr.mxu0 0.0
  %5015 = vmatpush1.msra.mxu0 0.0
  %5016 = vmatprep.subr.mxu0 0.0
  %5017 = vmatpush1.msra.mxu0 0.0
  %5018 = vmatprep.subr.mxu0 0.0
  %5019 = vmatpush1.msra.mxu0 0.0
  %5020 = vmatprep.subr.mxu0 0.0
  %5021 = vmatpush1.msra.mxu0 0.0
  %5022 = vmatprep.subr.mxu0 0.0
  %5023 = vmatpush1.msra.mxu0 0.0
  %5024 = vmatprep.subr.mxu0 0.0
  %5025 = vmatpush1.msra.mxu0 0.0
  %5026 = vmatprep.subr.mxu0 0.0
  %5027 = vmatpush1.msra.mxu0 0.0
  %5028 = vmatprep.subr.mxu0 0.0
  %5029 = vmatpush1.msra.mxu0 0.0
  %5030 = vmatprep.subr.mxu0 0.0
  %5031 = vmatpush1.msra.mxu0 0.0
  %5032 = vmatprep.subr.mxu0 0.0
  %5033 = vmatpush1.msra.mxu0 0.0
  %5034 = vmatprep.subr.mxu0 0.0
  %5035 = vmatpush1.msra.mxu0 0.0
  %5036 = vmatprep.subr.mxu0 0.0
  %5037 = vmatpush1.msra.mxu0 0.0
  %5038 = vmatprep.subr.mxu0 0.0
  %5039 = vmatpush1.msra.mxu0 0.0
  %5040 = vmatprep.subr.mxu0 0.0
  %5041 = vmatpush1.msra.mxu0 0.0
  %5042 = vmatprep.subr.mxu0 0.0
  %5043 = vmatpush1.msra.mxu0 0.0
  %5044 = vmatprep.subr.mxu0 0.0
  %5045 = vmatpush1.msra.mxu0 0.0
  %5046 = vmatprep.subr.mxu0 0.0
  %5047 = vmatpush1.msra.mxu0 0.0
  %5048 = vmatprep.subr.mxu0 0.0
  %5049 = vmatpush1.msra.mxu0 0.0
  %5050 = vmatprep.subr.mxu0 0.0
  %5051 = vmatpush1.msra.mxu0 0.0
  %5052 = vmatprep.subr.mxu0 0.0
  %5053 = vmatpush1.msra.mxu0 0.0
  %5054 = vmatprep.subr.mxu0 0.0
  %5055 = vmatpush1.msra.mxu0 0.0
  %5056 = vmatprep.subr.mxu0 0.0
  %5057 = vmatpush1.msra.mxu0 0.0
  %5058 = vmatprep.subr.mxu0 0.0
  %5059 = vmatpush1.msra.mxu0 0.0
  %5060 = vmatprep.subr.mxu0 0.0
  %5061 = vmatpush1.msra.mxu0 0.0
  %5062 = vmatprep.subr.mxu0 0.0
  %5063 = vmatpush1.msra.mxu0 0.0
  %5064 = vmatprep.subr.mxu0 0.0
  %5065 = vmatpush1.msra.mxu0 0.0
  %5066 = vmatprep.subr.mxu0 0.0
  %5067 = vmatpush1.msra.mxu0 0.0
  %5068 = vmatprep.mubr.f32.mxu0 0.0
  %5069 = vmatmul.mubr.f32.gmra.mrb[0].mxu0 %v4528
  %v5070 = vpop.f32.mrb[0].mxu0
  %v5071 = vadd.f32 0.0, %v5070
  %v5072 = vpop.f32.mrb[0].mxu0
  %v5073 = vadd.f32 0.0, %v5072
  %5074 = vdwg.mxu0
  %5075 = vmatprep.subr.mxu0 %v4576
  %5076 = vmatpush1.msra.mxu0 %v4573
  %5077 = vmatprep.subr.mxu0 0.0
  %5078 = vmatpush1.msra.mxu0 0.0
  %5079 = vmatprep.subr.mxu0 0.0
  %5080 = vmatpush1.msra.mxu0 0.0
  %5081 = vmatprep.subr.mxu0 0.0
  %5082 = vmatpush1.msra.mxu0 0.0
  %5083 = vmatprep.subr.mxu0 0.0
  %5084 = vmatpush1.msra.mxu0 0.0
  %5085 = vmatprep.subr.mxu0 0.0
  %5086 = vmatpush1.msra.mxu0 0.0
  %5087 = vmatprep.subr.mxu0 0.0
  %5088 = vmatpush1.msra.mxu0 0.0
  %5089 = vmatprep.subr.mxu0 0.0
  %5090 = vmatpush1.msra.mxu0 0.0
  %5091 = vmatprep.subr.mxu0 0.0
  %5092 = vmatpush1.msra.mxu0 0.0
  %5093 = vmatprep.subr.mxu0 0.0
  %5094 = vmatpush1.msra.mxu0 0.0
  %5095 = vmatprep.subr.mxu0 0.0
  %5096 = vmatpush1.msra.mxu0 0.0
  %5097 = vmatprep.subr.mxu0 0.0
  %5098 = vmatpush1.msra.mxu0 0.0
  %5099 = vmatprep.subr.mxu0 0.0
  %5100 = vmatpush1.msra.mxu0 0.0
  %5101 = vmatprep.subr.mxu0 0.0
  %5102 = vmatpush1.msra.mxu0 0.0
  %5103 = vmatprep.subr.mxu0 0.0
  %5104 = vmatpush1.msra.mxu0 0.0
  %5105 = vmatprep.subr.mxu0 0.0
  %5106 = vmatpush1.msra.mxu0 0.0
  %5107 = vmatprep.subr.mxu0 0.0
  %5108 = vmatpush1.msra.mxu0 0.0
  %5109 = vmatprep.subr.mxu0 0.0
  %5110 = vmatpush1.msra.mxu0 0.0
  %5111 = vmatprep.subr.mxu0 0.0
  %5112 = vmatpush1.msra.mxu0 0.0
  %5113 = vmatprep.subr.mxu0 0.0
  %5114 = vmatpush1.msra.mxu0 0.0
  %5115 = vmatprep.subr.mxu0 0.0
  %5116 = vmatpush1.msra.mxu0 0.0
  %5117 = vmatprep.subr.mxu0 0.0
  %5118 = vmatpush1.msra.mxu0 0.0
  %5119 = vmatprep.subr.mxu0 0.0
  %5120 = vmatpush1.msra.mxu0 0.0
  %5121 = vmatprep.subr.mxu0 0.0
  %5122 = vmatpush1.msra.mxu0 0.0
  %5123 = vmatprep.subr.mxu0 0.0
  %5124 = vmatpush1.msra.mxu0 0.0
  %5125 = vmatprep.subr.mxu0 0.0
  %5126 = vmatpush1.msra.mxu0 0.0
  %5127 = vmatprep.subr.mxu0 0.0
  %5128 = vmatpush1.msra.mxu0 0.0
  %5129 = vmatprep.subr.mxu0 0.0
  %5130 = vmatpush1.msra.mxu0 0.0
  %5131 = vmatprep.subr.mxu0 0.0
  %5132 = vmatpush1.msra.mxu0 0.0
  %5133 = vmatprep.subr.mxu0 0.0
  %5134 = vmatpush1.msra.mxu0 0.0
  %5135 = vmatprep.subr.mxu0 0.0
  %5136 = vmatpush1.msra.mxu0 0.0
  %5137 = vmatprep.subr.mxu0 0.0
  %5138 = vmatpush1.msra.mxu0 0.0
  %5139 = vmatprep.mubr.f32.mxu0 0.0
  %5140 = vmatmul.mubr.f32.gmra.mrb[0].mxu0 %v4528
  %v5141 = vpop.f32.mrb[0].mxu0
  %v5142 = vadd.f32 0.0, %v5141
  %v5143 = vpop.f32.mrb[0].mxu0
  %v5144 = vadd.f32 0.0, %v5143
  %5145 = vdwg.mxu0
  %v5146 = vadd.f32 %v4446, %v4645
  %v5147 = vadd.f32 %v4447, %v4647
  %v5148 = vadd.f32 %v4448, %v4716
  %v5149 = vadd.f32 %v4449, %v4718
  %v5150 = vadd.f32 %v4450, %v4787
  %v5151 = vadd.f32 %v4451, %v4789
  %v5152 = vadd.f32 %v4452, %v4858
  %v5153 = vadd.f32 %v4453, %v4860
  %v5154 = vadd.f32 %v4454, %v4929
  %v5155 = vadd.f32 %v4455, %v4931
  %v5156 = vadd.f32 %v4456, %v5000
  %v5157 = vadd.f32 %v4457, %v5002
  %v5158 = vadd.f32 %v4458, %v5071
  %v5159 = vadd.f32 %v4459, %v5073
  %v5160 = vadd.f32 %v4460, %v5142
  %v5161 = vadd.f32 %v4461, %v5144
  %v5162 = vsel %vm136, 1, 0
  %v5163 = vsel %vm137, 1, 0
  %v5164 = vsel %vm138, 1, 0
  %v5165 = vsel %vm139, 1, 0
  %v5166 = vsel %vm140, 1, 0
  %v5167 = vsel %vm141, 1, 0
  %v5168 = vsel %vm142, 1, 0
  %v5169 = vsel %vm143, 1, 0
  %v5170 = vsel %vm144, 1, 0
  %v5171 = vsel %vm145, 1, 0
  %v5172 = vsel %vm146, 1, 0
  %v5173 = vsel %vm147, 1, 0
  %v5174 = vsel %vm148, 1, 0
  %v5175 = vsel %vm149, 1, 0
  %v5176 = vsel %vm150, 1, 0
  %v5177 = vsel %vm151, 1, 0
  %vm5178 = vcmp.eq.s32.totalorder %v5162, 1
  %vm5179 = vcmp.eq.s32.totalorder %v5163, 1
  %vm5180 = vcmp.eq.s32.totalorder %v5164, 1
  %vm5181 = vcmp.eq.s32.totalorder %v5165, 1
  %vm5182 = vcmp.eq.s32.totalorder %v5166, 1
  %vm5183 = vcmp.eq.s32.totalorder %v5167, 1
  %vm5184 = vcmp.eq.s32.totalorder %v5168, 1
  %vm5185 = vcmp.eq.s32.totalorder %v5169, 1
  %vm5186 = vcmp.eq.s32.totalorder %v5170, 1
  %vm5187 = vcmp.eq.s32.totalorder %v5171, 1
  %vm5188 = vcmp.eq.s32.totalorder %v5172, 1
  %vm5189 = vcmp.eq.s32.totalorder %v5173, 1
  %vm5190 = vcmp.eq.s32.totalorder %v5174, 1
  %vm5191 = vcmp.eq.s32.totalorder %v5175, 1
  %vm5192 = vcmp.eq.s32.totalorder %v5176, 1
  %vm5193 = vcmp.eq.s32.totalorder %v5177, 1
  %v5194 = vsel %vm5178, %v336, 0.0
  %v5195 = vsel %vm5179, %v335, 0.0
  %v5196 = vsel %vm5180, %v334, 0.0
  %v5197 = vsel %vm5181, %v333, 0.0
  %v5198 = vsel %vm5182, %v332, 0.0
  %v5199 = vsel %vm5183, %v331, 0.0
  %v5200 = vsel %vm5184, %v330, 0.0
  %v5201 = vsel %vm5185, %v329, 0.0
  %v5202 = vsel %vm5186, %v328, 0.0
  %v5203 = vsel %vm5187, %v327, 0.0
  %v5204 = vsel %vm5188, %v326, 0.0
  %v5205 = vsel %vm5189, %v325, 0.0
  %v5206 = vsel %vm5190, %v324, 0.0
  %v5207 = vsel %vm5191, %v323, 0.0
  %v5208 = vsel %vm5192, %v322, 0.0
  %v5209 = vsel %vm5193, %v337, 0.0
  %5210 = vrot.lane.b32.xlu0 %v22, 100
  %v5211 = vpop.permute.xlu0 %5210
  %v5212 = vsel %vm389, %v5211, 0
  %v5215 = vsel %vm392, %v5194, 0
  %v5218 = vsel %vm392, %v5195, 0
  %v5221 = vsel %vm392, %v5196, 0
  %v5224 = vsel %vm392, %v5197, 0
  %v5227 = vsel %vm392, %v5198, 0
  %v5230 = vsel %vm392, %v5199, 0
  %v5233 = vsel %vm392, %v5200, 0
  %v5236 = vsel %vm392, %v5201, 0
  %v5239 = vsel %vm392, %v5202, 0
  %v5242 = vsel %vm392, %v5203, 0
  %v5245 = vsel %vm392, %v5204, 0
  %v5248 = vsel %vm392, %v5205, 0
  %v5251 = vsel %vm392, %v5206, 0
  %v5254 = vsel %vm392, %v5207, 0
  %v5257 = vsel %vm392, %v5208, 0
  %v5260 = vsel %vm392, %v5209, 0
  %5262 = vmatprep.subr.mxu0 %v5218
  %5263 = vmatpush1.msra.mxu0 %v5215
  %5264 = vmatprep.subr.mxu0 0.0
  %5265 = vmatpush1.msra.mxu0 0.0
  %5266 = vmatprep.subr.mxu0 0.0
  %5267 = vmatpush1.msra.mxu0 0.0
  %5268 = vmatprep.subr.mxu0 0.0
  %5269 = vmatpush1.msra.mxu0 0.0
  %5270 = vmatprep.subr.mxu0 0.0
  %5271 = vmatpush1.msra.mxu0 0.0
  %5272 = vmatprep.subr.mxu0 0.0
  %5273 = vmatpush1.msra.mxu0 0.0
  %5274 = vmatprep.subr.mxu0 0.0
  %5275 = vmatpush1.msra.mxu0 0.0
  %5276 = vmatprep.subr.mxu0 0.0
  %5277 = vmatpush1.msra.mxu0 0.0
  %5278 = vmatprep.subr.mxu0 0.0
  %5279 = vmatpush1.msra.mxu0 0.0
  %5280 = vmatprep.subr.mxu0 0.0
  %5281 = vmatpush1.msra.mxu0 0.0
  %5282 = vmatprep.subr.mxu0 0.0
  %5283 = vmatpush1.msra.mxu0 0.0
  %5284 = vmatprep.subr.mxu0 0.0
  %5285 = vmatpush1.msra.mxu0 0.0
  %5286 = vmatprep.subr.mxu0 0.0
  %5287 = vmatpush1.msra.mxu0 0.0
  %5288 = vmatprep.subr.mxu0 0.0
  %5289 = vmatpush1.msra.mxu0 0.0
  %5290 = vmatprep.subr.mxu0 0.0
  %5291 = vmatpush1.msra.mxu0 0.0
  %5292 = vmatprep.subr.mxu0 0.0
  %5293 = vmatpush1.msra.mxu0 0.0
  %5294 = vmatprep.subr.mxu0 0.0
  %5295 = vmatpush1.msra.mxu0 0.0
  %5296 = vmatprep.subr.mxu0 0.0
  %5297 = vmatpush1.msra.mxu0 0.0
  %5298 = vmatprep.subr.mxu0 0.0
  %5299 = vmatpush1.msra.mxu0 0.0
  %5300 = vmatprep.subr.mxu0 0.0
  %5301 = vmatpush1.msra.mxu0 0.0
  %5302 = vmatprep.subr.mxu0 0.0
  %5303 = vmatpush1.msra.mxu0 0.0
  %5304 = vmatprep.subr.mxu0 0.0
  %5305 = vmatpush1.msra.mxu0 0.0
  %5306 = vmatprep.subr.mxu0 0.0
  %5307 = vmatpush1.msra.mxu0 0.0
  %5308 = vmatprep.subr.mxu0 0.0
  %5309 = vmatpush1.msra.mxu0 0.0
  %5310 = vmatprep.subr.mxu0 0.0
  %5311 = vmatpush1.msra.mxu0 0.0
  %5312 = vmatprep.subr.mxu0 0.0
  %5313 = vmatpush1.msra.mxu0 0.0
  %5314 = vmatprep.subr.mxu0 0.0
  %5315 = vmatpush1.msra.mxu0 0.0
  %5316 = vmatprep.subr.mxu0 0.0
  %5317 = vmatpush1.msra.mxu0 0.0
  %5318 = vmatprep.subr.mxu0 0.0
  %5319 = vmatpush1.msra.mxu0 0.0
  %5320 = vmatprep.subr.mxu0 0.0
  %5321 = vmatpush1.msra.mxu0 0.0
  %5322 = vmatprep.subr.mxu0 0.0
  %5323 = vmatpush1.msra.mxu0 0.0
  %5324 = vmatprep.subr.mxu0 0.0
  %5325 = vmatpush1.msra.mxu0 0.0
  %5326 = vmatprep.mubr.f32.mxu0 0.0
  %5327 = vmatmul.mubr.f32.gmra.mrb[0].mxu0 %v5212
  %v5328 = vpop.f32.mrb[0].mxu0
  %v5329 = vadd.f32 0.0, %v5328
  %v5330 = vpop.f32.mrb[0].mxu0
  %v5331 = vadd.f32 0.0, %v5330
  %5332 = vdwg.mxu0
  %5333 = vmatprep.subr.mxu0 %v5224
  %5334 = vmatpush1.msra.mxu0 %v5221
  %5335 = vmatprep.subr.mxu0 0.0
  %5336 = vmatpush1.msra.mxu0 0.0
  %5337 = vmatprep.subr.mxu0 0.0
  %5338 = vmatpush1.msra.mxu0 0.0
  %5339 = vmatprep.subr.mxu0 0.0
  %5340 = vmatpush1.msra.mxu0 0.0
  %5341 = vmatprep.subr.mxu0 0.0
  %5342 = vmatpush1.msra.mxu0 0.0
  %5343 = vmatprep.subr.mxu0 0.0
  %5344 = vmatpush1.msra.mxu0 0.0
  %5345 = vmatprep.subr.mxu0 0.0
  %5346 = vmatpush1.msra.mxu0 0.0
  %5347 = vmatprep.subr.mxu0 0.0
  %5348 = vmatpush1.msra.mxu0 0.0
  %5349 = vmatprep.subr.mxu0 0.0
  %5350 = vmatpush1.msra.mxu0 0.0
  %5351 = vmatprep.subr.mxu0 0.0
  %5352 = vmatpush1.msra.mxu0 0.0
  %5353 = vmatprep.subr.mxu0 0.0
  %5354 = vmatpush1.msra.mxu0 0.0
  %5355 = vmatprep.subr.mxu0 0.0
  %5356 = vmatpush1.msra.mxu0 0.0
  %5357 = vmatprep.subr.mxu0 0.0
  %5358 = vmatpush1.msra.mxu0 0.0
  %5359 = vmatprep.subr.mxu0 0.0
  %5360 = vmatpush1.msra.mxu0 0.0
  %5361 = vmatprep.subr.mxu0 0.0
  %5362 = vmatpush1.msra.mxu0 0.0
  %5363 = vmatprep.subr.mxu0 0.0
  %5364 = vmatpush1.msra.mxu0 0.0
  %5365 = vmatprep.subr.mxu0 0.0
  %5366 = vmatpush1.msra.mxu0 0.0
  %5367 = vmatprep.subr.mxu0 0.0
  %5368 = vmatpush1.msra.mxu0 0.0
  %5369 = vmatprep.subr.mxu0 0.0
  %5370 = vmatpush1.msra.mxu0 0.0
  %5371 = vmatprep.subr.mxu0 0.0
  %5372 = vmatpush1.msra.mxu0 0.0
  %5373 = vmatprep.subr.mxu0 0.0
  %5374 = vmatpush1.msra.mxu0 0.0
  %5375 = vmatprep.subr.mxu0 0.0
  %5376 = vmatpush1.msra.mxu0 0.0
  %5377 = vmatprep.subr.mxu0 0.0
  %5378 = vmatpush1.msra.mxu0 0.0
  %5379 = vmatprep.subr.mxu0 0.0
  %5380 = vmatpush1.msra.mxu0 0.0
  %5381 = vmatprep.subr.mxu0 0.0
  %5382 = vmatpush1.msra.mxu0 0.0
  %5383 = vmatprep.subr.mxu0 0.0
  %5384 = vmatpush1.msra.mxu0 0.0
  %5385 = vmatprep.subr.mxu0 0.0
  %5386 = vmatpush1.msra.mxu0 0.0
  %5387 = vmatprep.subr.mxu0 0.0
  %5388 = vmatpush1.msra.mxu0 0.0
  %5389 = vmatprep.subr.mxu0 0.0
  %5390 = vmatpush1.msra.mxu0 0.0
  %5391 = vmatprep.subr.mxu0 0.0
  %5392 = vmatpush1.msra.mxu0 0.0
  %5393 = vmatprep.subr.mxu0 0.0
  %5394 = vmatpush1.msra.mxu0 0.0
  %5395 = vmatprep.subr.mxu0 0.0
  %5396 = vmatpush1.msra.mxu0 0.0
  %5397 = vmatprep.mubr.f32.mxu0 0.0
  %5398 = vmatmul.mubr.f32.gmra.mrb[0].mxu0 %v5212
  %v5399 = vpop.f32.mrb[0].mxu0
  %v5400 = vadd.f32 0.0, %v5399
  %v5401 = vpop.f32.mrb[0].mxu0
  %v5402 = vadd.f32 0.0, %v5401
  %5403 = vdwg.mxu0
  %5404 = vmatprep.subr.mxu0 %v5230
  %5405 = vmatpush1.msra.mxu0 %v5227
  %5406 = vmatprep.subr.mxu0 0.0
  %5407 = vmatpush1.msra.mxu0 0.0
  %5408 = vmatprep.subr.mxu0 0.0
  %5409 = vmatpush1.msra.mxu0 0.0
  %5410 = vmatprep.subr.mxu0 0.0
  %5411 = vmatpush1.msra.mxu0 0.0
  %5412 = vmatprep.subr.mxu0 0.0
  %5413 = vmatpush1.msra.mxu0 0.0
  %5414 = vmatprep.subr.mxu0 0.0
  %5415 = vmatpush1.msra.mxu0 0.0
  %5416 = vmatprep.subr.mxu0 0.0
  %5417 = vmatpush1.msra.mxu0 0.0
  %5418 = vmatprep.subr.mxu0 0.0
  %5419 = vmatpush1.msra.mxu0 0.0
  %5420 = vmatprep.subr.mxu0 0.0
  %5421 = vmatpush1.msra.mxu0 0.0
  %5422 = vmatprep.subr.mxu0 0.0
  %5423 = vmatpush1.msra.mxu0 0.0
  %5424 = vmatprep.subr.mxu0 0.0
  %5425 = vmatpush1.msra.mxu0 0.0
  %5426 = vmatprep.subr.mxu0 0.0
  %5427 = vmatpush1.msra.mxu0 0.0
  %5428 = vmatprep.subr.mxu0 0.0
  %5429 = vmatpush1.msra.mxu0 0.0
  %5430 = vmatprep.subr.mxu0 0.0
  %5431 = vmatpush1.msra.mxu0 0.0
  %5432 = vmatprep.subr.mxu0 0.0
  %5433 = vmatpush1.msra.mxu0 0.0
  %5434 = vmatprep.subr.mxu0 0.0
  %5435 = vmatpush1.msra.mxu0 0.0
  %5436 = vmatprep.subr.mxu0 0.0
  %5437 = vmatpush1.msra.mxu0 0.0
  %5438 = vmatprep.subr.mxu0 0.0
  %5439 = vmatpush1.msra.mxu0 0.0
  %5440 = vmatprep.subr.mxu0 0.0
  %5441 = vmatpush1.msra.mxu0 0.0
  %5442 = vmatprep.subr.mxu0 0.0
  %5443 = vmatpush1.msra.mxu0 0.0
  %5444 = vmatprep.subr.mxu0 0.0
  %5445 = vmatpush1.msra.mxu0 0.0
  %5446 = vmatprep.subr.mxu0 0.0
  %5447 = vmatpush1.msra.mxu0 0.0
  %5448 = vmatprep.subr.mxu0 0.0
  %5449 = vmatpush1.msra.mxu0 0.0
  %5450 = vmatprep.subr.mxu0 0.0
  %5451 = vmatpush1.msra.mxu0 0.0
  %5452 = vmatprep.subr.mxu0 0.0
  %5453 = vmatpush1.msra.mxu0 0.0
  %5454 = vmatprep.subr.mxu0 0.0
  %5455 = vmatpush1.msra.mxu0 0.0
  %5456 = vmatprep.subr.mxu0 0.0
  %5457 = vmatpush1.msra.mxu0 0.0
  %5458 = vmatprep.subr.mxu0 0.0
  %5459 = vmatpush1.msra.mxu0 0.0
  %5460 = vmatprep.subr.mxu0 0.0
  %5461 = vmatpush1.msra.mxu0 0.0
  %5462 = vmatprep.subr.mxu0 0.0
  %5463 = vmatpush1.msra.mxu0 0.0
  %5464 = vmatprep.subr.mxu0 0.0
  %5465 = vmatpush1.msra.mxu0 0.0
  %5466 = vmatprep.subr.mxu0 0.0
  %5467 = vmatpush1.msra.mxu0 0.0
  %5468 = vmatprep.mubr.f32.mxu0 0.0
  %5469 = vmatmul.mubr.f32.gmra.mrb[0].mxu0 %v5212
  %v5470 = vpop.f32.mrb[0].mxu0
  %v5471 = vadd.f32 0.0, %v5470
  %v5472 = vpop.f32.mrb[0].mxu0
  %v5473 = vadd.f32 0.0, %v5472
  %5474 = vdwg.mxu0
  %5475 = vmatprep.subr.mxu0 %v5236
  %5476 = vmatpush1.msra.mxu0 %v5233
  %5477 = vmatprep.subr.mxu0 0.0
  %5478 = vmatpush1.msra.mxu0 0.0
  %5479 = vmatprep.subr.mxu0 0.0
  %5480 = vmatpush1.msra.mxu0 0.0
  %5481 = vmatprep.subr.mxu0 0.0
  %5482 = vmatpush1.msra.mxu0 0.0
  %5483 = vmatprep.subr.mxu0 0.0
  %5484 = vmatpush1.msra.mxu0 0.0
  %5485 = vmatprep.subr.mxu0 0.0
  %5486 = vmatpush1.msra.mxu0 0.0
  %5487 = vmatprep.subr.mxu0 0.0
  %5488 = vmatpush1.msra.mxu0 0.0
  %5489 = vmatprep.subr.mxu0 0.0
  %5490 = vmatpush1.msra.mxu0 0.0
  %5491 = vmatprep.subr.mxu0 0.0
  %5492 = vmatpush1.msra.mxu0 0.0
  %5493 = vmatprep.subr.mxu0 0.0
  %5494 = vmatpush1.msra.mxu0 0.0
  %5495 = vmatprep.subr.mxu0 0.0
  %5496 = vmatpush1.msra.mxu0 0.0
  %5497 = vmatprep.subr.mxu0 0.0
  %5498 = vmatpush1.msra.mxu0 0.0
  %5499 = vmatprep.subr.mxu0 0.0
  %5500 = vmatpush1.msra.mxu0 0.0
  %5501 = vmatprep.subr.mxu0 0.0
  %5502 = vmatpush1.msra.mxu0 0.0
  %5503 = vmatprep.subr.mxu0 0.0
  %5504 = vmatpush1.msra.mxu0 0.0
  %5505 = vmatprep.subr.mxu0 0.0
  %5506 = vmatpush1.msra.mxu0 0.0
  %5507 = vmatprep.subr.mxu0 0.0
  %5508 = vmatpush1.msra.mxu0 0.0
  %5509 = vmatprep.subr.mxu0 0.0
  %5510 = vmatpush1.msra.mxu0 0.0
  %5511 = vmatprep.subr.mxu0 0.0
  %5512 = vmatpush1.msra.mxu0 0.0
  %5513 = vmatprep.subr.mxu0 0.0
  %5514 = vmatpush1.msra.mxu0 0.0
  %5515 = vmatprep.subr.mxu0 0.0
  %5516 = vmatpush1.msra.mxu0 0.0
  %5517 = vmatprep.subr.mxu0 0.0
  %5518 = vmatpush1.msra.mxu0 0.0
  %5519 = vmatprep.subr.mxu0 0.0
  %5520 = vmatpush1.msra.mxu0 0.0
  %5521 = vmatprep.subr.mxu0 0.0
  %5522 = vmatpush1.msra.mxu0 0.0
  %5523 = vmatprep.subr.mxu0 0.0
  %5524 = vmatpush1.msra.mxu0 0.0
  %5525 = vmatprep.subr.mxu0 0.0
  %5526 = vmatpush1.msra.mxu0 0.0
  %5527 = vmatprep.subr.mxu0 0.0
  %5528 = vmatpush1.msra.mxu0 0.0
  %5529 = vmatprep.subr.mxu0 0.0
  %5530 = vmatpush1.msra.mxu0 0.0
  %5531 = vmatprep.subr.mxu0 0.0
  %5532 = vmatpush1.msra.mxu0 0.0
  %5533 = vmatprep.subr.mxu0 0.0
  %5534 = vmatpush1.msra.mxu0 0.0
  %5535 = vmatprep.subr.mxu0 0.0
  %5536 = vmatpush1.msra.mxu0 0.0
  %5537 = vmatprep.subr.mxu0 0.0
  %5538 = vmatpush1.msra.mxu0 0.0
  %5539 = vmatprep.mubr.f32.mxu0 0.0
  %5540 = vmatmul.mubr.f32.gmra.mrb[0].mxu0 %v5212
  %v5541 = vpop.f32.mrb[0].mxu0
  %v5542 = vadd.f32 0.0, %v5541
  %v5543 = vpop.f32.mrb[0].mxu0
  %v5544 = vadd.f32 0.0, %v5543
  %5545 = vdwg.mxu0
  %5546 = vmatprep.subr.mxu0 %v5242
  %5547 = vmatpush1.msra.mxu0 %v5239
  %5548 = vmatprep.subr.mxu0 0.0
  %5549 = vmatpush1.msra.mxu0 0.0
  %5550 = vmatprep.subr.mxu0 0.0
  %5551 = vmatpush1.msra.mxu0 0.0
  %5552 = vmatprep.subr.mxu0 0.0
  %5553 = vmatpush1.msra.mxu0 0.0
  %5554 = vmatprep.subr.mxu0 0.0
  %5555 = vmatpush1.msra.mxu0 0.0
  %5556 = vmatprep.subr.mxu0 0.0
  %5557 = vmatpush1.msra.mxu0 0.0
  %5558 = vmatprep.subr.mxu0 0.0
  %5559 = vmatpush1.msra.mxu0 0.0
  %5560 = vmatprep.subr.mxu0 0.0
  %5561 = vmatpush1.msra.mxu0 0.0
  %5562 = vmatprep.subr.mxu0 0.0
  %5563 = vmatpush1.msra.mxu0 0.0
  %5564 = vmatprep.subr.mxu0 0.0
  %5565 = vmatpush1.msra.mxu0 0.0
  %5566 = vmatprep.subr.mxu0 0.0
  %5567 = vmatpush1.msra.mxu0 0.0
  %5568 = vmatprep.subr.mxu0 0.0
  %5569 = vmatpush1.msra.mxu0 0.0
  %5570 = vmatprep.subr.mxu0 0.0
  %5571 = vmatpush1.msra.mxu0 0.0
  %5572 = vmatprep.subr.mxu0 0.0
  %5573 = vmatpush1.msra.mxu0 0.0
  %5574 = vmatprep.subr.mxu0 0.0
  %5575 = vmatpush1.msra.mxu0 0.0
  %5576 = vmatprep.subr.mxu0 0.0
  %5577 = vmatpush1.msra.mxu0 0.0
  %5578 = vmatprep.subr.mxu0 0.0
  %5579 = vmatpush1.msra.mxu0 0.0
  %5580 = vmatprep.subr.mxu0 0.0
  %5581 = vmatpush1.msra.mxu0 0.0
  %5582 = vmatprep.subr.mxu0 0.0
  %5583 = vmatpush1.msra.mxu0 0.0
  %5584 = vmatprep.subr.mxu0 0.0
  %5585 = vmatpush1.msra.mxu0 0.0
  %5586 = vmatprep.subr.mxu0 0.0
  %5587 = vmatpush1.msra.mxu0 0.0
  %5588 = vmatprep.subr.mxu0 0.0
  %5589 = vmatpush1.msra.mxu0 0.0
  %5590 = vmatprep.subr.mxu0 0.0
  %5591 = vmatpush1.msra.mxu0 0.0
  %5592 = vmatprep.subr.mxu0 0.0
  %5593 = vmatpush1.msra.mxu0 0.0
  %5594 = vmatprep.subr.mxu0 0.0
  %5595 = vmatpush1.msra.mxu0 0.0
  %5596 = vmatprep.subr.mxu0 0.0
  %5597 = vmatpush1.msra.mxu0 0.0
  %5598 = vmatprep.subr.mxu0 0.0
  %5599 = vmatpush1.msra.mxu0 0.0
  %5600 = vmatprep.subr.mxu0 0.0
  %5601 = vmatpush1.msra.mxu0 0.0
  %5602 = vmatprep.subr.mxu0 0.0
  %5603 = vmatpush1.msra.mxu0 0.0
  %5604 = vmatprep.subr.mxu0 0.0
  %5605 = vmatpush1.msra.mxu0 0.0
  %5606 = vmatprep.subr.mxu0 0.0
  %5607 = vmatpush1.msra.mxu0 0.0
  %5608 = vmatprep.subr.mxu0 0.0
  %5609 = vmatpush1.msra.mxu0 0.0
  %5610 = vmatprep.mubr.f32.mxu0 0.0
  %5611 = vmatmul.mubr.f32.gmra.mrb[0].mxu0 %v5212
  %v5612 = vpop.f32.mrb[0].mxu0
  %v5613 = vadd.f32 0.0, %v5612
  %v5614 = vpop.f32.mrb[0].mxu0
  %v5615 = vadd.f32 0.0, %v5614
  %5616 = vdwg.mxu0
  %5617 = vmatprep.subr.mxu0 %v5248
  %5618 = vmatpush1.msra.mxu0 %v5245
  %5619 = vmatprep.subr.mxu0 0.0
  %5620 = vmatpush1.msra.mxu0 0.0
  %5621 = vmatprep.subr.mxu0 0.0
  %5622 = vmatpush1.msra.mxu0 0.0
  %5623 = vmatprep.subr.mxu0 0.0
  %5624 = vmatpush1.msra.mxu0 0.0
  %5625 = vmatprep.subr.mxu0 0.0
  %5626 = vmatpush1.msra.mxu0 0.0
  %5627 = vmatprep.subr.mxu0 0.0
  %5628 = vmatpush1.msra.mxu0 0.0
  %5629 = vmatprep.subr.mxu0 0.0
  %5630 = vmatpush1.msra.mxu0 0.0
  %5631 = vmatprep.subr.mxu0 0.0
  %5632 = vmatpush1.msra.mxu0 0.0
  %5633 = vmatprep.subr.mxu0 0.0
  %5634 = vmatpush1.msra.mxu0 0.0
  %5635 = vmatprep.subr.mxu0 0.0
  %5636 = vmatpush1.msra.mxu0 0.0
  %5637 = vmatprep.subr.mxu0 0.0
  %5638 = vmatpush1.msra.mxu0 0.0
  %5639 = vmatprep.subr.mxu0 0.0
  %5640 = vmatpush1.msra.mxu0 0.0
  %5641 = vmatprep.subr.mxu0 0.0
  %5642 = vmatpush1.msra.mxu0 0.0
  %5643 = vmatprep.subr.mxu0 0.0
  %5644 = vmatpush1.msra.mxu0 0.0
  %5645 = vmatprep.subr.mxu0 0.0
  %5646 = vmatpush1.msra.mxu0 0.0
  %5647 = vmatprep.subr.mxu0 0.0
  %5648 = vmatpush1.msra.mxu0 0.0
  %5649 = vmatprep.subr.mxu0 0.0
  %5650 = vmatpush1.msra.mxu0 0.0
  %5651 = vmatprep.subr.mxu0 0.0
  %5652 = vmatpush1.msra.mxu0 0.0
  %5653 = vmatprep.subr.mxu0 0.0
  %5654 = vmatpush1.msra.mxu0 0.0
  %5655 = vmatprep.subr.mxu0 0.0
  %5656 = vmatpush1.msra.mxu0 0.0
  %5657 = vmatprep.subr.mxu0 0.0
  %5658 = vmatpush1.msra.mxu0 0.0
  %5659 = vmatprep.subr.mxu0 0.0
  %5660 = vmatpush1.msra.mxu0 0.0
  %5661 = vmatprep.subr.mxu0 0.0
  %5662 = vmatpush1.msra.mxu0 0.0
  %5663 = vmatprep.subr.mxu0 0.0
  %5664 = vmatpush1.msra.mxu0 0.0
  %5665 = vmatprep.subr.mxu0 0.0
  %5666 = vmatpush1.msra.mxu0 0.0
  %5667 = vmatprep.subr.mxu0 0.0
  %5668 = vmatpush1.msra.mxu0 0.0
  %5669 = vmatprep.subr.mxu0 0.0
  %5670 = vmatpush1.msra.mxu0 0.0
  %5671 = vmatprep.subr.mxu0 0.0
  %5672 = vmatpush1.msra.mxu0 0.0
  %5673 = vmatprep.subr.mxu0 0.0
  %5674 = vmatpush1.msra.mxu0 0.0
  %5675 = vmatprep.subr.mxu0 0.0
  %5676 = vmatpush1.msra.mxu0 0.0
  %5677 = vmatprep.subr.mxu0 0.0
  %5678 = vmatpush1.msra.mxu0 0.0
  %5679 = vmatprep.subr.mxu0 0.0
  %5680 = vmatpush1.msra.mxu0 0.0
  %5681 = vmatprep.mubr.f32.mxu0 0.0
  %5682 = vmatmul.mubr.f32.gmra.mrb[0].mxu0 %v5212
  %v5683 = vpop.f32.mrb[0].mxu0
  %v5684 = vadd.f32 0.0, %v5683
  %v5685 = vpop.f32.mrb[0].mxu0
  %v5686 = vadd.f32 0.0, %v5685
  %5687 = vdwg.mxu0
  %5688 = vmatprep.subr.mxu0 %v5254
  %5689 = vmatpush1.msra.mxu0 %v5251
  %5690 = vmatprep.subr.mxu0 0.0
  %5691 = vmatpush1.msra.mxu0 0.0
  %5692 = vmatprep.subr.mxu0 0.0
  %5693 = vmatpush1.msra.mxu0 0.0
  %5694 = vmatprep.subr.mxu0 0.0
  %5695 = vmatpush1.msra.mxu0 0.0
  %5696 = vmatprep.subr.mxu0 0.0
  %5697 = vmatpush1.msra.mxu0 0.0
  %5698 = vmatprep.subr.mxu0 0.0
  %5699 = vmatpush1.msra.mxu0 0.0
  %5700 = vmatprep.subr.mxu0 0.0
  %5701 = vmatpush1.msra.mxu0 0.0
  %5702 = vmatprep.subr.mxu0 0.0
  %5703 = vmatpush1.msra.mxu0 0.0
  %5704 = vmatprep.subr.mxu0 0.0
  %5705 = vmatpush1.msra.mxu0 0.0
  %5706 = vmatprep.subr.mxu0 0.0
  %5707 = vmatpush1.msra.mxu0 0.0
  %5708 = vmatprep.subr.mxu0 0.0
  %5709 = vmatpush1.msra.mxu0 0.0
  %5710 = vmatprep.subr.mxu0 0.0
  %5711 = vmatpush1.msra.mxu0 0.0
  %5712 = vmatprep.subr.mxu0 0.0
  %5713 = vmatpush1.msra.mxu0 0.0
  %5714 = vmatprep.subr.mxu0 0.0
  %5715 = vmatpush1.msra.mxu0 0.0
  %5716 = vmatprep.subr.mxu0 0.0
  %5717 = vmatpush1.msra.mxu0 0.0
  %5718 = vmatprep.subr.mxu0 0.0
  %5719 = vmatpush1.msra.mxu0 0.0
  %5720 = vmatprep.subr.mxu0 0.0
  %5721 = vmatpush1.msra.mxu0 0.0
  %5722 = vmatprep.subr.mxu0 0.0
  %5723 = vmatpush1.msra.mxu0 0.0
  %5724 = vmatprep.subr.mxu0 0.0
  %5725 = vmatpush1.msra.mxu0 0.0
  %5726 = vmatprep.subr.mxu0 0.0
  %5727 = vmatpush1.msra.mxu0 0.0
  %5728 = vmatprep.subr.mxu0 0.0
  %5729 = vmatpush1.msra.mxu0 0.0
  %5730 = vmatprep.subr.mxu0 0.0
  %5731 = vmatpush1.msra.mxu0 0.0
  %5732 = vmatprep.subr.mxu0 0.0
  %5733 = vmatpush1.msra.mxu0 0.0
  %5734 = vmatprep.subr.mxu0 0.0
  %5735 = vmatpush1.msra.mxu0 0.0
  %5736 = vmatprep.subr.mxu0 0.0
  %5737 = vmatpush1.msra.mxu0 0.0
  %5738 = vmatprep.subr.mxu0 0.0
  %5739 = vmatpush1.msra.mxu0 0.0
  %5740 = vmatprep.subr.mxu0 0.0
  %5741 = vmatpush1.msra.mxu0 0.0
  %5742 = vmatprep.subr.mxu0 0.0
  %5743 = vmatpush1.msra.mxu0 0.0
  %5744 = vmatprep.subr.mxu0 0.0
  %5745 = vmatpush1.msra.mxu0 0.0
  %5746 = vmatprep.subr.mxu0 0.0
  %5747 = vmatpush1.msra.mxu0 0.0
  %5748 = vmatprep.subr.mxu0 0.0
  %5749 = vmatpush1.msra.mxu0 0.0
  %5750 = vmatprep.subr.mxu0 0.0
  %5751 = vmatpush1.msra.mxu0 0.0
  %5752 = vmatprep.mubr.f32.mxu0 0.0
  %5753 = vmatmul.mubr.f32.gmra.mrb[0].mxu0 %v5212
  %v5754 = vpop.f32.mrb[0].mxu0
  %v5755 = vadd.f32 0.0, %v5754
  %v5756 = vpop.f32.mrb[0].mxu0
  %v5757 = vadd.f32 0.0, %v5756
  %5758 = vdwg.mxu0
  %5759 = vmatprep.subr.mxu0 %v5260
  %5760 = vmatpush1.msra.mxu0 %v5257
  %5761 = vmatprep.subr.mxu0 0.0
  %5762 = vmatpush1.msra.mxu0 0.0
  %5763 = vmatprep.subr.mxu0 0.0
  %5764 = vmatpush1.msra.mxu0 0.0
  %5765 = vmatprep.subr.mxu0 0.0
  %5766 = vmatpush1.msra.mxu0 0.0
  %5767 = vmatprep.subr.mxu0 0.0
  %5768 = vmatpush1.msra.mxu0 0.0
  %5769 = vmatprep.subr.mxu0 0.0
  %5770 = vmatpush1.msra.mxu0 0.0
  %5771 = vmatprep.subr.mxu0 0.0
  %5772 = vmatpush1.msra.mxu0 0.0
  %5773 = vmatprep.subr.mxu0 0.0
  %5774 = vmatpush1.msra.mxu0 0.0
  %5775 = vmatprep.subr.mxu0 0.0
  %5776 = vmatpush1.msra.mxu0 0.0
  %5777 = vmatprep.subr.mxu0 0.0
  %5778 = vmatpush1.msra.mxu0 0.0
  %5779 = vmatprep.subr.mxu0 0.0
  %5780 = vmatpush1.msra.mxu0 0.0
  %5781 = vmatprep.subr.mxu0 0.0
  %5782 = vmatpush1.msra.mxu0 0.0
  %5783 = vmatprep.subr.mxu0 0.0
  %5784 = vmatpush1.msra.mxu0 0.0
  %5785 = vmatprep.subr.mxu0 0.0
  %5786 = vmatpush1.msra.mxu0 0.0
  %5787 = vmatprep.subr.mxu0 0.0
  %5788 = vmatpush1.msra.mxu0 0.0
  %5789 = vmatprep.subr.mxu0 0.0
  %5790 = vmatpush1.msra.mxu0 0.0
  %5791 = vmatprep.subr.mxu0 0.0
  %5792 = vmatpush1.msra.mxu0 0.0
  %5793 = vmatprep.subr.mxu0 0.0
  %5794 = vmatpush1.msra.mxu0 0.0
  %5795 = vmatprep.subr.mxu0 0.0
  %5796 = vmatpush1.msra.mxu0 0.0
  %5797 = vmatprep.subr.mxu0 0.0
  %5798 = vmatpush1.msra.mxu0 0.0
  %5799 = vmatprep.subr.mxu0 0.0
  %5800 = vmatpush1.msra.mxu0 0.0
  %5801 = vmatprep.subr.mxu0 0.0
  %5802 = vmatpush1.msra.mxu0 0.0
  %5803 = vmatprep.subr.mxu0 0.0
  %5804 = vmatpush1.msra.mxu0 0.0
  %5805 = vmatprep.subr.mxu0 0.0
  %5806 = vmatpush1.msra.mxu0 0.0
  %5807 = vmatprep.subr.mxu0 0.0
  %5808 = vmatpush1.msra.mxu0 0.0
  %5809 = vmatprep.subr.mxu0 0.0
  %5810 = vmatpush1.msra.mxu0 0.0
  %5811 = vmatprep.subr.mxu0 0.0
  %5812 = vmatpush1.msra.mxu0 0.0
  %5813 = vmatprep.subr.mxu0 0.0
  %5814 = vmatpush1.msra.mxu0 0.0
  %5815 = vmatprep.subr.mxu0 0.0
  %5816 = vmatpush1.msra.mxu0 0.0
  %5817 = vmatprep.subr.mxu0 0.0
  %5818 = vmatpush1.msra.mxu0 0.0
  %5819 = vmatprep.subr.mxu0 0.0
  %5820 = vmatpush1.msra.mxu0 0.0
  %5821 = vmatprep.subr.mxu0 0.0
  %5822 = vmatpush1.msra.mxu0 0.0
  %5823 = vmatprep.mubr.f32.mxu0 0.0
  %5824 = vmatmul.mubr.f32.gmra.mrb[0].mxu0 %v5212
  %v5825 = vpop.f32.mrb[0].mxu0
  %v5826 = vadd.f32 0.0, %v5825
  %v5827 = vpop.f32.mrb[0].mxu0
  %v5828 = vadd.f32 0.0, %v5827
  %5829 = vdwg.mxu0
  %v5830 = vadd.f32 %v5146, %v5329
  %v5831 = vadd.f32 %v5147, %v5331
  %v5832 = vadd.f32 %v5148, %v5400
  %v5833 = vadd.f32 %v5149, %v5402
  %v5834 = vadd.f32 %v5150, %v5471
  %v5835 = vadd.f32 %v5151, %v5473
  %v5836 = vadd.f32 %v5152, %v5542
  %v5837 = vadd.f32 %v5153, %v5544
  %v5838 = vadd.f32 %v5154, %v5613
  %v5839 = vadd.f32 %v5155, %v5615
  %v5840 = vadd.f32 %v5156, %v5684
  %v5841 = vadd.f32 %v5157, %v5686
  %v5842 = vadd.f32 %v5158, %v5755
  %v5843 = vadd.f32 %v5159, %v5757
  %v5844 = vadd.f32 %v5160, %v5826
  %v5845 = vadd.f32 %v5161, %v5828
  %vm5846 = vmand %vm104, %vm136
  %vm5847 = vmand %vm105, %vm137
  %vm5848 = vmand %vm106, %vm138
  %vm5849 = vmand %vm107, %vm139
  %vm5850 = vmand %vm108, %vm140
  %vm5851 = vmand %vm109, %vm141
  %vm5852 = vmand %vm110, %vm142
  %vm5853 = vmand %vm111, %vm143
  %vm5854 = vmand %vm112, %vm144
  %vm5855 = vmand %vm113, %vm145
  %vm5856 = vmand %vm114, %vm146
  %vm5857 = vmand %vm115, %vm147
  %vm5858 = vmand %vm116, %vm148
  %vm5859 = vmand %vm117, %vm149
  %vm5860 = vmand %vm118, %vm150
  %vm5861 = vmand %vm119, %vm151
  %v5862 = vsel %vm5846, 1, 0
  %v5863 = vsel %vm5847, 1, 0
  %v5864 = vsel %vm5848, 1, 0
  %v5865 = vsel %vm5849, 1, 0
  %v5866 = vsel %vm5850, 1, 0
  %v5867 = vsel %vm5851, 1, 0
  %v5868 = vsel %vm5852, 1, 0
  %v5869 = vsel %vm5853, 1, 0
  %v5870 = vsel %vm5854, 1, 0
  %v5871 = vsel %vm5855, 1, 0
  %v5872 = vsel %vm5856, 1, 0
  %v5873 = vsel %vm5857, 1, 0
  %v5874 = vsel %vm5858, 1, 0
  %v5875 = vsel %vm5859, 1, 0
  %v5876 = vsel %vm5860, 1, 0
  %v5877 = vsel %vm5861, 1, 0
  %vm5878 = vcmp.eq.s32.totalorder %v5862, 1
  %vm5879 = vcmp.eq.s32.totalorder %v5863, 1
  %vm5880 = vcmp.eq.s32.totalorder %v5864, 1
  %vm5881 = vcmp.eq.s32.totalorder %v5865, 1
  %vm5882 = vcmp.eq.s32.totalorder %v5866, 1
  %vm5883 = vcmp.eq.s32.totalorder %v5867, 1
  %vm5884 = vcmp.eq.s32.totalorder %v5868, 1
  %vm5885 = vcmp.eq.s32.totalorder %v5869, 1
  %vm5886 = vcmp.eq.s32.totalorder %v5870, 1
  %vm5887 = vcmp.eq.s32.totalorder %v5871, 1
  %vm5888 = vcmp.eq.s32.totalorder %v5872, 1
  %vm5889 = vcmp.eq.s32.totalorder %v5873, 1
  %vm5890 = vcmp.eq.s32.totalorder %v5874, 1
  %vm5891 = vcmp.eq.s32.totalorder %v5875, 1
  %vm5892 = vcmp.eq.s32.totalorder %v5876, 1
  %vm5893 = vcmp.eq.s32.totalorder %v5877, 1
  %v5894 = vsel %vm5878, %v1674, 0.0
  %v5895 = vsel %vm5879, %v1673, 0.0
  %v5896 = vsel %vm5880, %v1672, 0.0
  %v5897 = vsel %vm5881, %v1671, 0.0
  %v5898 = vsel %vm5882, %v1670, 0.0
  %v5899 = vsel %vm5883, %v1669, 0.0
  %v5900 = vsel %vm5884, %v1668, 0.0
  %v5901 = vsel %vm5885, %v1667, 0.0
  %v5902 = vsel %vm5886, %v1666, 0.0
  %v5903 = vsel %vm5887, %v1665, 0.0
  %v5904 = vsel %vm5888, %v1664, 0.0
  %v5905 = vsel %vm5889, %v1663, 0.0
  %v5906 = vsel %vm5890, %v1662, 0.0
  %v5907 = vsel %vm5891, %v1661, 0.0
  %v5908 = vsel %vm5892, %v1660, 0.0
  %v5909 = vsel %vm5893, %v1675, 0.0
  %5910 = vrot.lane.b32.xlu0 %v22, 96
  %v5911 = vpop.permute.xlu0 %5910
  %v5912 = vsel %vm389, %v5911, 0
  %v5915 = vsel %vm392, %v5894, 0
  %v5918 = vsel %vm392, %v5895, 0
  %v5921 = vsel %vm392, %v5896, 0
  %v5924 = vsel %vm392, %v5897, 0
  %v5927 = vsel %vm392, %v5898, 0
  %v5930 = vsel %vm392, %v5899, 0
  %v5933 = vsel %vm392, %v5900, 0
  %v5936 = vsel %vm392, %v5901, 0
  %v5939 = vsel %vm392, %v5902, 0
  %v5942 = vsel %vm392, %v5903, 0
  %v5945 = vsel %vm392, %v5904, 0
  %v5948 = vsel %vm392, %v5905, 0
  %v5951 = vsel %vm392, %v5906, 0
  %v5954 = vsel %vm392, %v5907, 0
  %v5957 = vsel %vm392, %v5908, 0
  %v5960 = vsel %vm392, %v5909, 0
  %5962 = vmatprep.subr.mxu0 %v5918
  %5963 = vmatpush1.msra.mxu0 %v5915
  %5964 = vmatprep.subr.mxu0 0.0
  %5965 = vmatpush1.msra.mxu0 0.0
  %5966 = vmatprep.subr.mxu0 0.0
  %5967 = vmatpush1.msra.mxu0 0.0
  %5968 = vmatprep.subr.mxu0 0.0
  %5969 = vmatpush1.msra.mxu0 0.0
  %5970 = vmatprep.subr.mxu0 0.0
  %5971 = vmatpush1.msra.mxu0 0.0
  %5972 = vmatprep.subr.mxu0 0.0
  %5973 = vmatpush1.msra.mxu0 0.0
  %5974 = vmatprep.subr.mxu0 0.0
  %5975 = vmatpush1.msra.mxu0 0.0
  %5976 = vmatprep.subr.mxu0 0.0
  %5977 = vmatpush1.msra.mxu0 0.0
  %5978 = vmatprep.subr.mxu0 0.0
  %5979 = vmatpush1.msra.mxu0 0.0
  %5980 = vmatprep.subr.mxu0 0.0
  %5981 = vmatpush1.msra.mxu0 0.0
  %5982 = vmatprep.subr.mxu0 0.0
  %5983 = vmatpush1.msra.mxu0 0.0
  %5984 = vmatprep.subr.mxu0 0.0
  %5985 = vmatpush1.msra.mxu0 0.0
  %5986 = vmatprep.subr.mxu0 0.0
  %5987 = vmatpush1.msra.mxu0 0.0
  %5988 = vmatprep.subr.mxu0 0.0
  %5989 = vmatpush1.msra.mxu0 0.0
  %5990 = vmatprep.subr.mxu0 0.0
  %5991 = vmatpush1.msra.mxu0 0.0
  %5992 = vmatprep.subr.mxu0 0.0
  %5993 = vmatpush1.msra.mxu0 0.0
  %5994 = vmatprep.subr.mxu0 0.0
  %5995 = vmatpush1.msra.mxu0 0.0
  %5996 = vmatprep.subr.mxu0 0.0
  %5997 = vmatpush1.msra.mxu0 0.0
  %5998 = vmatprep.subr.mxu0 0.0
  %5999 = vmatpush1.msra.mxu0 0.0
  %6000 = vmatprep.subr.mxu0 0.0
  %6001 = vmatpush1.msra.mxu0 0.0
  %6002 = vmatprep.subr.mxu0 0.0
  %6003 = vmatpush1.msra.mxu0 0.0
  %6004 = vmatprep.subr.mxu0 0.0
  %6005 = vmatpush1.msra.mxu0 0.0
  %6006 = vmatprep.subr.mxu0 0.0
  %6007 = vmatpush1.msra.mxu0 0.0
  %6008 = vmatprep.subr.mxu0 0.0
  %6009 = vmatpush1.msra.mxu0 0.0
  %6010 = vmatprep.subr.mxu0 0.0
  %6011 = vmatpush1.msra.mxu0 0.0
  %6012 = vmatprep.subr.mxu0 0.0
  %6013 = vmatpush1.msra.mxu0 0.0
  %6014 = vmatprep.subr.mxu0 0.0
  %6015 = vmatpush1.msra.mxu0 0.0
  %6016 = vmatprep.subr.mxu0 0.0
  %6017 = vmatpush1.msra.mxu0 0.0
  %6018 = vmatprep.subr.mxu0 0.0
  %6019 = vmatpush1.msra.mxu0 0.0
  %6020 = vmatprep.subr.mxu0 0.0
  %6021 = vmatpush1.msra.mxu0 0.0
  %6022 = vmatprep.subr.mxu0 0.0
  %6023 = vmatpush1.msra.mxu0 0.0
  %6024 = vmatprep.subr.mxu0 0.0
  %6025 = vmatpush1.msra.mxu0 0.0
  %6026 = vmatprep.mubr.f32.mxu0 0.0
  %6027 = vmatmul.mubr.f32.gmra.mrb[0].mxu0 %v5912
  %v6028 = vpop.f32.mrb[0].mxu0
  %v6029 = vadd.f32 0.0, %v6028
  %v6030 = vpop.f32.mrb[0].mxu0
  %v6031 = vadd.f32 0.0, %v6030
  %6032 = vdwg.mxu0
  %6033 = vmatprep.subr.mxu0 %v5924
  %6034 = vmatpush1.msra.mxu0 %v5921
  %6035 = vmatprep.subr.mxu0 0.0
  %6036 = vmatpush1.msra.mxu0 0.0
  %6037 = vmatprep.subr.mxu0 0.0
  %6038 = vmatpush1.msra.mxu0 0.0
  %6039 = vmatprep.subr.mxu0 0.0
  %6040 = vmatpush1.msra.mxu0 0.0
  %6041 = vmatprep.subr.mxu0 0.0
  %6042 = vmatpush1.msra.mxu0 0.0
  %6043 = vmatprep.subr.mxu0 0.0
  %6044 = vmatpush1.msra.mxu0 0.0
  %6045 = vmatprep.subr.mxu0 0.0
  %6046 = vmatpush1.msra.mxu0 0.0
  %6047 = vmatprep.subr.mxu0 0.0
  %6048 = vmatpush1.msra.mxu0 0.0
  %6049 = vmatprep.subr.mxu0 0.0
  %6050 = vmatpush1.msra.mxu0 0.0
  %6051 = vmatprep.subr.mxu0 0.0
  %6052 = vmatpush1.msra.mxu0 0.0
  %6053 = vmatprep.subr.mxu0 0.0
  %6054 = vmatpush1.msra.mxu0 0.0
  %6055 = vmatprep.subr.mxu0 0.0
  %6056 = vmatpush1.msra.mxu0 0.0
  %6057 = vmatprep.subr.mxu0 0.0
  %6058 = vmatpush1.msra.mxu0 0.0
  %6059 = vmatprep.subr.mxu0 0.0
  %6060 = vmatpush1.msra.mxu0 0.0
  %6061 = vmatprep.subr.mxu0 0.0
  %6062 = vmatpush1.msra.mxu0 0.0
  %6063 = vmatprep.subr.mxu0 0.0
  %6064 = vmatpush1.msra.mxu0 0.0
  %6065 = vmatprep.subr.mxu0 0.0
  %6066 = vmatpush1.msra.mxu0 0.0
  %6067 = vmatprep.subr.mxu0 0.0
  %6068 = vmatpush1.msra.mxu0 0.0
  %6069 = vmatprep.subr.mxu0 0.0
  %6070 = vmatpush1.msra.mxu0 0.0
  %6071 = vmatprep.subr.mxu0 0.0
  %6072 = vmatpush1.msra.mxu0 0.0
  %6073 = vmatprep.subr.mxu0 0.0
  %6074 = vmatpush1.msra.mxu0 0.0
  %6075 = vmatprep.subr.mxu0 0.0
  %6076 = vmatpush1.msra.mxu0 0.0
  %6077 = vmatprep.subr.mxu0 0.0
  %6078 = vmatpush1.msra.mxu0 0.0
  %6079 = vmatprep.subr.mxu0 0.0
  %6080 = vmatpush1.msra.mxu0 0.0
  %6081 = vmatprep.subr.mxu0 0.0
  %6082 = vmatpush1.msra.mxu0 0.0
  %6083 = vmatprep.subr.mxu0 0.0
  %6084 = vmatpush1.msra.mxu0 0.0
  %6085 = vmatprep.subr.mxu0 0.0
  %6086 = vmatpush1.msra.mxu0 0.0
  %6087 = vmatprep.subr.mxu0 0.0
  %6088 = vmatpush1.msra.mxu0 0.0
  %6089 = vmatprep.subr.mxu0 0.0
  %6090 = vmatpush1.msra.mxu0 0.0
  %6091 = vmatprep.subr.mxu0 0.0
  %6092 = vmatpush1.msra.mxu0 0.0
  %6093 = vmatprep.subr.mxu0 0.0
  %6094 = vmatpush1.msra.mxu0 0.0
  %6095 = vmatprep.subr.mxu0 0.0
  %6096 = vmatpush1.msra.mxu0 0.0
  %6097 = vmatprep.mubr.f32.mxu0 0.0
  %6098 = vmatmul.mubr.f32.gmra.mrb[0].mxu0 %v5912
  %v6099 = vpop.f32.mrb[0].mxu0
  %v6100 = vadd.f32 0.0, %v6099
  %v6101 = vpop.f32.mrb[0].mxu0
  %v6102 = vadd.f32 0.0, %v6101
  %6103 = vdwg.mxu0
  %6104 = vmatprep.subr.mxu0 %v5930
  %6105 = vmatpush1.msra.mxu0 %v5927
  %6106 = vmatprep.subr.mxu0 0.0
  %6107 = vmatpush1.msra.mxu0 0.0
  %6108 = vmatprep.subr.mxu0 0.0
  %6109 = vmatpush1.msra.mxu0 0.0
  %6110 = vmatprep.subr.mxu0 0.0
  %6111 = vmatpush1.msra.mxu0 0.0
  %6112 = vmatprep.subr.mxu0 0.0
  %6113 = vmatpush1.msra.mxu0 0.0
  %6114 = vmatprep.subr.mxu0 0.0
  %6115 = vmatpush1.msra.mxu0 0.0
  %6116 = vmatprep.subr.mxu0 0.0
  %6117 = vmatpush1.msra.mxu0 0.0
  %6118 = vmatprep.subr.mxu0 0.0
  %6119 = vmatpush1.msra.mxu0 0.0
  %6120 = vmatprep.subr.mxu0 0.0
  %6121 = vmatpush1.msra.mxu0 0.0
  %6122 = vmatprep.subr.mxu0 0.0
  %6123 = vmatpush1.msra.mxu0 0.0
  %6124 = vmatprep.subr.mxu0 0.0
  %6125 = vmatpush1.msra.mxu0 0.0
  %6126 = vmatprep.subr.mxu0 0.0
  %6127 = vmatpush1.msra.mxu0 0.0
  %6128 = vmatprep.subr.mxu0 0.0
  %6129 = vmatpush1.msra.mxu0 0.0
  %6130 = vmatprep.subr.mxu0 0.0
  %6131 = vmatpush1.msra.mxu0 0.0
  %6132 = vmatprep.subr.mxu0 0.0
  %6133 = vmatpush1.msra.mxu0 0.0
  %6134 = vmatprep.subr.mxu0 0.0
  %6135 = vmatpush1.msra.mxu0 0.0
  %6136 = vmatprep.subr.mxu0 0.0
  %6137 = vmatpush1.msra.mxu0 0.0
  %6138 = vmatprep.subr.mxu0 0.0
  %6139 = vmatpush1.msra.mxu0 0.0
  %6140 = vmatprep.subr.mxu0 0.0
  %6141 = vmatpush1.msra.mxu0 0.0
  %6142 = vmatprep.subr.mxu0 0.0
  %6143 = vmatpush1.msra.mxu0 0.0
  %6144 = vmatprep.subr.mxu0 0.0
  %6145 = vmatpush1.msra.mxu0 0.0
  %6146 = vmatprep.subr.mxu0 0.0
  %6147 = vmatpush1.msra.mxu0 0.0
  %6148 = vmatprep.subr.mxu0 0.0
  %6149 = vmatpush1.msra.mxu0 0.0
  %6150 = vmatprep.subr.mxu0 0.0
  %6151 = vmatpush1.msra.mxu0 0.0
  %6152 = vmatprep.subr.mxu0 0.0
  %6153 = vmatpush1.msra.mxu0 0.0
  %6154 = vmatprep.subr.mxu0 0.0
  %6155 = vmatpush1.msra.mxu0 0.0
  %6156 = vmatprep.subr.mxu0 0.0
  %6157 = vmatpush1.msra.mxu0 0.0
  %6158 = vmatprep.subr.mxu0 0.0
  %6159 = vmatpush1.msra.mxu0 0.0
  %6160 = vmatprep.subr.mxu0 0.0
  %6161 = vmatpush1.msra.mxu0 0.0
  %6162 = vmatprep.subr.mxu0 0.0
  %6163 = vmatpush1.msra.mxu0 0.0
  %6164 = vmatprep.subr.mxu0 0.0
  %6165 = vmatpush1.msra.mxu0 0.0
  %6166 = vmatprep.subr.mxu0 0.0
  %6167 = vmatpush1.msra.mxu0 0.0
  %6168 = vmatprep.mubr.f32.mxu0 0.0
  %6169 = vmatmul.mubr.f32.gmra.mrb[0].mxu0 %v5912
  %v6170 = vpop.f32.mrb[0].mxu0
  %v6171 = vadd.f32 0.0, %v6170
  %v6172 = vpop.f32.mrb[0].mxu0
  %v6173 = vadd.f32 0.0, %v6172
  %6174 = vdwg.mxu0
  %6175 = vmatprep.subr.mxu0 %v5936
  %6176 = vmatpush1.msra.mxu0 %v5933
  %6177 = vmatprep.subr.mxu0 0.0
  %6178 = vmatpush1.msra.mxu0 0.0
  %6179 = vmatprep.subr.mxu0 0.0
  %6180 = vmatpush1.msra.mxu0 0.0
  %6181 = vmatprep.subr.mxu0 0.0
  %6182 = vmatpush1.msra.mxu0 0.0
  %6183 = vmatprep.subr.mxu0 0.0
  %6184 = vmatpush1.msra.mxu0 0.0
  %6185 = vmatprep.subr.mxu0 0.0
  %6186 = vmatpush1.msra.mxu0 0.0
  %6187 = vmatprep.subr.mxu0 0.0
  %6188 = vmatpush1.msra.mxu0 0.0
  %6189 = vmatprep.subr.mxu0 0.0
  %6190 = vmatpush1.msra.mxu0 0.0
  %6191 = vmatprep.subr.mxu0 0.0
  %6192 = vmatpush1.msra.mxu0 0.0
  %6193 = vmatprep.subr.mxu0 0.0
  %6194 = vmatpush1.msra.mxu0 0.0
  %6195 = vmatprep.subr.mxu0 0.0
  %6196 = vmatpush1.msra.mxu0 0.0
  %6197 = vmatprep.subr.mxu0 0.0
  %6198 = vmatpush1.msra.mxu0 0.0
  %6199 = vmatprep.subr.mxu0 0.0
  %6200 = vmatpush1.msra.mxu0 0.0
  %6201 = vmatprep.subr.mxu0 0.0
  %6202 = vmatpush1.msra.mxu0 0.0
  %6203 = vmatprep.subr.mxu0 0.0
  %6204 = vmatpush1.msra.mxu0 0.0
  %6205 = vmatprep.subr.mxu0 0.0
  %6206 = vmatpush1.msra.mxu0 0.0
  %6207 = vmatprep.subr.mxu0 0.0
  %6208 = vmatpush1.msra.mxu0 0.0
  %6209 = vmatprep.subr.mxu0 0.0
  %6210 = vmatpush1.msra.mxu0 0.0
  %6211 = vmatprep.subr.mxu0 0.0
  %6212 = vmatpush1.msra.mxu0 0.0
  %6213 = vmatprep.subr.mxu0 0.0
  %6214 = vmatpush1.msra.mxu0 0.0
  %6215 = vmatprep.subr.mxu0 0.0
  %6216 = vmatpush1.msra.mxu0 0.0
  %6217 = vmatprep.subr.mxu0 0.0
  %6218 = vmatpush1.msra.mxu0 0.0
  %6219 = vmatprep.subr.mxu0 0.0
  %6220 = vmatpush1.msra.mxu0 0.0
  %6221 = vmatprep.subr.mxu0 0.0
  %6222 = vmatpush1.msra.mxu0 0.0
  %6223 = vmatprep.subr.mxu0 0.0
  %6224 = vmatpush1.msra.mxu0 0.0
  %6225 = vmatprep.subr.mxu0 0.0
  %6226 = vmatpush1.msra.mxu0 0.0
  %6227 = vmatprep.subr.mxu0 0.0
  %6228 = vmatpush1.msra.mxu0 0.0
  %6229 = vmatprep.subr.mxu0 0.0
  %6230 = vmatpush1.msra.mxu0 0.0
  %6231 = vmatprep.subr.mxu0 0.0
  %6232 = vmatpush1.msra.mxu0 0.0
  %6233 = vmatprep.subr.mxu0 0.0
  %6234 = vmatpush1.msra.mxu0 0.0
  %6235 = vmatprep.subr.mxu0 0.0
  %6236 = vmatpush1.msra.mxu0 0.0
  %6237 = vmatprep.subr.mxu0 0.0
  %6238 = vmatpush1.msra.mxu0 0.0
  %6239 = vmatprep.mubr.f32.mxu0 0.0
  %6240 = vmatmul.mubr.f32.gmra.mrb[0].mxu0 %v5912
  %v6241 = vpop.f32.mrb[0].mxu0
  %v6242 = vadd.f32 0.0, %v6241
  %v6243 = vpop.f32.mrb[0].mxu0
  %v6244 = vadd.f32 0.0, %v6243
  %6245 = vdwg.mxu0
  %6246 = vmatprep.subr.mxu0 %v5942
  %6247 = vmatpush1.msra.mxu0 %v5939
  %6248 = vmatprep.subr.mxu0 0.0
  %6249 = vmatpush1.msra.mxu0 0.0
  %6250 = vmatprep.subr.mxu0 0.0
  %6251 = vmatpush1.msra.mxu0 0.0
  %6252 = vmatprep.subr.mxu0 0.0
  %6253 = vmatpush1.msra.mxu0 0.0
  %6254 = vmatprep.subr.mxu0 0.0
  %6255 = vmatpush1.msra.mxu0 0.0
  %6256 = vmatprep.subr.mxu0 0.0
  %6257 = vmatpush1.msra.mxu0 0.0
  %6258 = vmatprep.subr.mxu0 0.0
  %6259 = vmatpush1.msra.mxu0 0.0
  %6260 = vmatprep.subr.mxu0 0.0
  %6261 = vmatpush1.msra.mxu0 0.0
  %6262 = vmatprep.subr.mxu0 0.0
  %6263 = vmatpush1.msra.mxu0 0.0
  %6264 = vmatprep.subr.mxu0 0.0
  %6265 = vmatpush1.msra.mxu0 0.0
  %6266 = vmatprep.subr.mxu0 0.0
  %6267 = vmatpush1.msra.mxu0 0.0
  %6268 = vmatprep.subr.mxu0 0.0
  %6269 = vmatpush1.msra.mxu0 0.0
  %6270 = vmatprep.subr.mxu0 0.0
  %6271 = vmatpush1.msra.mxu0 0.0
  %6272 = vmatprep.subr.mxu0 0.0
  %6273 = vmatpush1.msra.mxu0 0.0
  %6274 = vmatprep.subr.mxu0 0.0
  %6275 = vmatpush1.msra.mxu0 0.0
  %6276 = vmatprep.subr.mxu0 0.0
  %6277 = vmatpush1.msra.mxu0 0.0
  %6278 = vmatprep.subr.mxu0 0.0
  %6279 = vmatpush1.msra.mxu0 0.0
  %6280 = vmatprep.subr.mxu0 0.0
  %6281 = vmatpush1.msra.mxu0 0.0
  %6282 = vmatprep.subr.mxu0 0.0
  %6283 = vmatpush1.msra.mxu0 0.0
  %6284 = vmatprep.subr.mxu0 0.0
  %6285 = vmatpush1.msra.mxu0 0.0
  %6286 = vmatprep.subr.mxu0 0.0
  %6287 = vmatpush1.msra.mxu0 0.0
  %6288 = vmatprep.subr.mxu0 0.0
  %6289 = vmatpush1.msra.mxu0 0.0
  %6290 = vmatprep.subr.mxu0 0.0
  %6291 = vmatpush1.msra.mxu0 0.0
  %6292 = vmatprep.subr.mxu0 0.0
  %6293 = vmatpush1.msra.mxu0 0.0
  %6294 = vmatprep.subr.mxu0 0.0
  %6295 = vmatpush1.msra.mxu0 0.0
  %6296 = vmatprep.subr.mxu0 0.0
  %6297 = vmatpush1.msra.mxu0 0.0
  %6298 = vmatprep.subr.mxu0 0.0
  %6299 = vmatpush1.msra.mxu0 0.0
  %6300 = vmatprep.subr.mxu0 0.0
  %6301 = vmatpush1.msra.mxu0 0.0
  %6302 = vmatprep.subr.mxu0 0.0
  %6303 = vmatpush1.msra.mxu0 0.0
  %6304 = vmatprep.subr.mxu0 0.0
  %6305 = vmatpush1.msra.mxu0 0.0
  %6306 = vmatprep.subr.mxu0 0.0
  %6307 = vmatpush1.msra.mxu0 0.0
  %6308 = vmatprep.subr.mxu0 0.0
  %6309 = vmatpush1.msra.mxu0 0.0
  %6310 = vmatprep.mubr.f32.mxu0 0.0
  %6311 = vmatmul.mubr.f32.gmra.mrb[0].mxu0 %v5912
  %v6312 = vpop.f32.mrb[0].mxu0
  %v6313 = vadd.f32 0.0, %v6312
  %v6314 = vpop.f32.mrb[0].mxu0
  %v6315 = vadd.f32 0.0, %v6314
  %6316 = vdwg.mxu0
  %6317 = vmatprep.subr.mxu0 %v5948
  %6318 = vmatpush1.msra.mxu0 %v5945
  %6319 = vmatprep.subr.mxu0 0.0
  %6320 = vmatpush1.msra.mxu0 0.0
  %6321 = vmatprep.subr.mxu0 0.0
  %6322 = vmatpush1.msra.mxu0 0.0
  %6323 = vmatprep.subr.mxu0 0.0
  %6324 = vmatpush1.msra.mxu0 0.0
  %6325 = vmatprep.subr.mxu0 0.0
  %6326 = vmatpush1.msra.mxu0 0.0
  %6327 = vmatprep.subr.mxu0 0.0
  %6328 = vmatpush1.msra.mxu0 0.0
  %6329 = vmatprep.subr.mxu0 0.0
  %6330 = vmatpush1.msra.mxu0 0.0
  %6331 = vmatprep.subr.mxu0 0.0
  %6332 = vmatpush1.msra.mxu0 0.0
  %6333 = vmatprep.subr.mxu0 0.0
  %6334 = vmatpush1.msra.mxu0 0.0
  %6335 = vmatprep.subr.mxu0 0.0
  %6336 = vmatpush1.msra.mxu0 0.0
  %6337 = vmatprep.subr.mxu0 0.0
  %6338 = vmatpush1.msra.mxu0 0.0
  %6339 = vmatprep.subr.mxu0 0.0
  %6340 = vmatpush1.msra.mxu0 0.0
  %6341 = vmatprep.subr.mxu0 0.0
  %6342 = vmatpush1.msra.mxu0 0.0
  %6343 = vmatprep.subr.mxu0 0.0
  %6344 = vmatpush1.msra.mxu0 0.0
  %6345 = vmatprep.subr.mxu0 0.0
  %6346 = vmatpush1.msra.mxu0 0.0
  %6347 = vmatprep.subr.mxu0 0.0
  %6348 = vmatpush1.msra.mxu0 0.0
  %6349 = vmatprep.subr.mxu0 0.0
  %6350 = vmatpush1.msra.mxu0 0.0
  %6351 = vmatprep.subr.mxu0 0.0
  %6352 = vmatpush1.msra.mxu0 0.0
  %6353 = vmatprep.subr.mxu0 0.0
  %6354 = vmatpush1.msra.mxu0 0.0
  %6355 = vmatprep.subr.mxu0 0.0
  %6356 = vmatpush1.msra.mxu0 0.0
  %6357 = vmatprep.subr.mxu0 0.0
  %6358 = vmatpush1.msra.mxu0 0.0
  %6359 = vmatprep.subr.mxu0 0.0
  %6360 = vmatpush1.msra.mxu0 0.0
  %6361 = vmatprep.subr.mxu0 0.0
  %6362 = vmatpush1.msra.mxu0 0.0
  %6363 = vmatprep.subr.mxu0 0.0
  %6364 = vmatpush1.msra.mxu0 0.0
  %6365 = vmatprep.subr.mxu0 0.0
  %6366 = vmatpush1.msra.mxu0 0.0
  %6367 = vmatprep.subr.mxu0 0.0
  %6368 = vmatpush1.msra.mxu0 0.0
  %6369 = vmatprep.subr.mxu0 0.0
  %6370 = vmatpush1.msra.mxu0 0.0
  %6371 = vmatprep.subr.mxu0 0.0
  %6372 = vmatpush1.msra.mxu0 0.0
  %6373 = vmatprep.subr.mxu0 0.0
  %6374 = vmatpush1.msra.mxu0 0.0
  %6375 = vmatprep.subr.mxu0 0.0
  %6376 = vmatpush1.msra.mxu0 0.0
  %6377 = vmatprep.subr.mxu0 0.0
  %6378 = vmatpush1.msra.mxu0 0.0
  %6379 = vmatprep.subr.mxu0 0.0
  %6380 = vmatpush1.msra.mxu0 0.0
  %6381 = vmatprep.mubr.f32.mxu0 0.0
  %6382 = vmatmul.mubr.f32.gmra.mrb[0].mxu0 %v5912
  %v6383 = vpop.f32.mrb[0].mxu0
  %v6384 = vadd.f32 0.0, %v6383
  %v6385 = vpop.f32.mrb[0].mxu0
  %v6386 = vadd.f32 0.0, %v6385
  %6387 = vdwg.mxu0
  %6388 = vmatprep.subr.mxu0 %v5954
  %6389 = vmatpush1.msra.mxu0 %v5951
  %6390 = vmatprep.subr.mxu0 0.0
  %6391 = vmatpush1.msra.mxu0 0.0
  %6392 = vmatprep.subr.mxu0 0.0
  %6393 = vmatpush1.msra.mxu0 0.0
  %6394 = vmatprep.subr.mxu0 0.0
  %6395 = vmatpush1.msra.mxu0 0.0
  %6396 = vmatprep.subr.mxu0 0.0
  %6397 = vmatpush1.msra.mxu0 0.0
  %6398 = vmatprep.subr.mxu0 0.0
  %6399 = vmatpush1.msra.mxu0 0.0
  %6400 = vmatprep.subr.mxu0 0.0
  %6401 = vmatpush1.msra.mxu0 0.0
  %6402 = vmatprep.subr.mxu0 0.0
  %6403 = vmatpush1.msra.mxu0 0.0
  %6404 = vmatprep.subr.mxu0 0.0
  %6405 = vmatpush1.msra.mxu0 0.0
  %6406 = vmatprep.subr.mxu0 0.0
  %6407 = vmatpush1.msra.mxu0 0.0
  %6408 = vmatprep.subr.mxu0 0.0
  %6409 = vmatpush1.msra.mxu0 0.0
  %6410 = vmatprep.subr.mxu0 0.0
  %6411 = vmatpush1.msra.mxu0 0.0
  %6412 = vmatprep.subr.mxu0 0.0
  %6413 = vmatpush1.msra.mxu0 0.0
  %6414 = vmatprep.subr.mxu0 0.0
  %6415 = vmatpush1.msra.mxu0 0.0
  %6416 = vmatprep.subr.mxu0 0.0
  %6417 = vmatpush1.msra.mxu0 0.0
  %6418 = vmatprep.subr.mxu0 0.0
  %6419 = vmatpush1.msra.mxu0 0.0
  %6420 = vmatprep.subr.mxu0 0.0
  %6421 = vmatpush1.msra.mxu0 0.0
  %6422 = vmatprep.subr.mxu0 0.0
  %6423 = vmatpush1.msra.mxu0 0.0
  %6424 = vmatprep.subr.mxu0 0.0
  %6425 = vmatpush1.msra.mxu0 0.0
  %6426 = vmatprep.subr.mxu0 0.0
  %6427 = vmatpush1.msra.mxu0 0.0
  %6428 = vmatprep.subr.mxu0 0.0
  %6429 = vmatpush1.msra.mxu0 0.0
  %6430 = vmatprep.subr.mxu0 0.0
  %6431 = vmatpush1.msra.mxu0 0.0
  %6432 = vmatprep.subr.mxu0 0.0
  %6433 = vmatpush1.msra.mxu0 0.0
  %6434 = vmatprep.subr.mxu0 0.0
  %6435 = vmatpush1.msra.mxu0 0.0
  %6436 = vmatprep.subr.mxu0 0.0
  %6437 = vmatpush1.msra.mxu0 0.0
  %6438 = vmatprep.subr.mxu0 0.0
  %6439 = vmatpush1.msra.mxu0 0.0
  %6440 = vmatprep.subr.mxu0 0.0
  %6441 = vmatpush1.msra.mxu0 0.0
  %6442 = vmatprep.subr.mxu0 0.0
  %6443 = vmatpush1.msra.mxu0 0.0
  %6444 = vmatprep.subr.mxu0 0.0
  %6445 = vmatpush1.msra.mxu0 0.0
  %6446 = vmatprep.subr.mxu0 0.0
  %6447 = vmatpush1.msra.mxu0 0.0
  %6448 = vmatprep.subr.mxu0 0.0
  %6449 = vmatpush1.msra.mxu0 0.0
  %6450 = vmatprep.subr.mxu0 0.0
  %6451 = vmatpush1.msra.mxu0 0.0
  %6452 = vmatprep.mubr.f32.mxu0 0.0
  %6453 = vmatmul.mubr.f32.gmra.mrb[0].mxu0 %v5912
  %v6454 = vpop.f32.mrb[0].mxu0
  %v6455 = vadd.f32 0.0, %v6454
  %v6456 = vpop.f32.mrb[0].mxu0
  %v6457 = vadd.f32 0.0, %v6456
  %6458 = vdwg.mxu0
  %6459 = vmatprep.subr.mxu0 %v5960
  %6460 = vmatpush1.msra.mxu0 %v5957
  %6461 = vmatprep.subr.mxu0 0.0
  %6462 = vmatpush1.msra.mxu0 0.0
  %6463 = vmatprep.subr.mxu0 0.0
  %6464 = vmatpush1.msra.mxu0 0.0
  %6465 = vmatprep.subr.mxu0 0.0
  %6466 = vmatpush1.msra.mxu0 0.0
  %6467 = vmatprep.subr.mxu0 0.0
  %6468 = vmatpush1.msra.mxu0 0.0
  %6469 = vmatprep.subr.mxu0 0.0
  %6470 = vmatpush1.msra.mxu0 0.0
  %6471 = vmatprep.subr.mxu0 0.0
  %6472 = vmatpush1.msra.mxu0 0.0
  %6473 = vmatprep.subr.mxu0 0.0
  %6474 = vmatpush1.msra.mxu0 0.0
  %6475 = vmatprep.subr.mxu0 0.0
  %6476 = vmatpush1.msra.mxu0 0.0
  %6477 = vmatprep.subr.mxu0 0.0
  %6478 = vmatpush1.msra.mxu0 0.0
  %6479 = vmatprep.subr.mxu0 0.0
  %6480 = vmatpush1.msra.mxu0 0.0
  %6481 = vmatprep.subr.mxu0 0.0
  %6482 = vmatpush1.msra.mxu0 0.0
  %6483 = vmatprep.subr.mxu0 0.0
  %6484 = vmatpush1.msra.mxu0 0.0
  %6485 = vmatprep.subr.mxu0 0.0
  %6486 = vmatpush1.msra.mxu0 0.0
  %6487 = vmatprep.subr.mxu0 0.0
  %6488 = vmatpush1.msra.mxu0 0.0
  %6489 = vmatprep.subr.mxu0 0.0
  %6490 = vmatpush1.msra.mxu0 0.0
  %6491 = vmatprep.subr.mxu0 0.0
  %6492 = vmatpush1.msra.mxu0 0.0
  %6493 = vmatprep.subr.mxu0 0.0
  %6494 = vmatpush1.msra.mxu0 0.0
  %6495 = vmatprep.subr.mxu0 0.0
  %6496 = vmatpush1.msra.mxu0 0.0
  %6497 = vmatprep.subr.mxu0 0.0
  %6498 = vmatpush1.msra.mxu0 0.0
  %6499 = vmatprep.subr.mxu0 0.0
  %6500 = vmatpush1.msra.mxu0 0.0
  %6501 = vmatprep.subr.mxu0 0.0
  %6502 = vmatpush1.msra.mxu0 0.0
  %6503 = vmatprep.subr.mxu0 0.0
  %6504 = vmatpush1.msra.mxu0 0.0
  %6505 = vmatprep.subr.mxu0 0.0
  %6506 = vmatpush1.msra.mxu0 0.0
  %6507 = vmatprep.subr.mxu0 0.0
  %6508 = vmatpush1.msra.mxu0 0.0
  %6509 = vmatprep.subr.mxu0 0.0
  %6510 = vmatpush1.msra.mxu0 0.0
  %6511 = vmatprep.subr.mxu0 0.0
  %6512 = vmatpush1.msra.mxu0 0.0
  %6513 = vmatprep.subr.mxu0 0.0
  %6514 = vmatpush1.msra.mxu0 0.0
  %6515 = vmatprep.subr.mxu0 0.0
  %6516 = vmatpush1.msra.mxu0 0.0
  %6517 = vmatprep.subr.mxu0 0.0
  %6518 = vmatpush1.msra.mxu0 0.0
  %6519 = vmatprep.subr.mxu0 0.0
  %6520 = vmatpush1.msra.mxu0 0.0
  %6521 = vmatprep.subr.mxu0 0.0
  %6522 = vmatpush1.msra.mxu0 0.0
  %6523 = vmatprep.mubr.f32.mxu0 0.0
  %6524 = vmatmul.mubr.f32.gmra.mrb[0].mxu0 %v5912
  %v6525 = vpop.f32.mrb[0].mxu0
  %v6526 = vadd.f32 0.0, %v6525
  %v6527 = vpop.f32.mrb[0].mxu0
  %v6528 = vadd.f32 0.0, %v6527
  %6529 = vdwg.mxu0
  %v6530 = vadd.f32 %v5830, %v6029
  %v6531 = vadd.f32 %v5831, %v6031
  %v6532 = vadd.f32 %v5832, %v6100
  %v6533 = vadd.f32 %v5833, %v6102
  %v6534 = vadd.f32 %v5834, %v6171
  %v6535 = vadd.f32 %v5835, %v6173
  %v6536 = vadd.f32 %v5836, %v6242
  %v6537 = vadd.f32 %v5837, %v6244
  %v6538 = vadd.f32 %v5838, %v6313
  %v6539 = vadd.f32 %v5839, %v6315
  %v6540 = vadd.f32 %v5840, %v6384
  %v6541 = vadd.f32 %v5841, %v6386
  %v6542 = vadd.f32 %v5842, %v6455
  %v6543 = vadd.f32 %v5843, %v6457
  %v6544 = vadd.f32 %v5844, %v6526
  %v6545 = vadd.f32 %v5845, %v6528
  %v6546 = vadd.f32 %v6530, %v14
  %v6547 = vadd.f32 %v6531, %v160
  %v6548 = vadd.f32 %v6532, %v15
  %v6549 = vadd.f32 %v6533, %v161
  %v6550 = vadd.f32 %v6534, %v16
  %v6551 = vadd.f32 %v6535, %v162
  %v6552 = vadd.f32 %v6536, %v17
  %v6553 = vadd.f32 %v6537, %v163
  %v6554 = vadd.f32 %v6538, %v18
  %v6555 = vadd.f32 %v6539, %v164
  %v6556 = vadd.f32 %v6540, %v19
  %v6557 = vadd.f32 %v6541, %v165
  %v6558 = vadd.f32 %v6542, %v20
  %v6559 = vadd.f32 %v6543, %v166
  %v6560 = vadd.f32 %v6544, %v21
  %v6561 = vadd.f32 %v6545, %v167
  %v6562 = vmax.f32 %v6546, 0.0
  %v6563 = vmax.f32 %v6547, 0.0
  %v6564 = vmax.f32 %v6548, 0.0
  %v6565 = vmax.f32 %v6549, 0.0
  %v6566 = vmax.f32 %v6550, 0.0
  %v6567 = vmax.f32 %v6551, 0.0
  %v6568 = vmax.f32 %v6552, 0.0
  %v6569 = vmax.f32 %v6553, 0.0
  %v6570 = vmax.f32 %v6554, 0.0
  %v6571 = vmax.f32 %v6555, 0.0
  %v6572 = vmax.f32 %v6556, 0.0
  %v6573 = vmax.f32 %v6557, 0.0
  %v6574 = vmax.f32 %v6558, 0.0
  %v6575 = vmax.f32 %v6559, 0.0
  %v6576 = vmax.f32 %v6560, 0.0
  %v6577 = vmax.f32 %v6561, 0.0
  %v6578 = vsel %vm392, %v6562, 0.0
  %v6579 = vsel %vm392, %v6563, 0.0
  %v6580 = vadd.f32 %v6578, %v6579
  %v6581 = vsel %vm392, %v6564, 0.0
  %v6582 = vadd.f32 %v6580, %v6581
  %v6583 = vsel %vm392, %v6565, 0.0
  %v6584 = vadd.f32 %v6582, %v6583
  %v6585 = vsel %vm392, %v6566, 0.0
  %v6586 = vadd.f32 %v6584, %v6585
  %v6587 = vsel %vm392, %v6567, 0.0
  %v6588 = vadd.f32 %v6586, %v6587
  %v6589 = vsel %vm392, %v6568, 0.0
  %v6590 = vadd.f32 %v6588, %v6589
  %v6591 = vsel %vm392, %v6569, 0.0
  %v6592 = vadd.f32 %v6590, %v6591
  %v6593 = vsel %vm392, %v6570, 0.0
  %v6594 = vadd.f32 %v6592, %v6593
  %v6595 = vsel %vm392, %v6571, 0.0
  %v6596 = vadd.f32 %v6594, %v6595
  %v6597 = vsel %vm392, %v6572, 0.0
  %v6598 = vadd.f32 %v6596, %v6597
  %v6599 = vsel %vm392, %v6573, 0.0
  %v6600 = vadd.f32 %v6598, %v6599
  %v6601 = vsel %vm392, %v6574, 0.0
  %v6602 = vadd.f32 %v6600, %v6601
  %v6603 = vsel %vm392, %v6575, 0.0
  %v6604 = vadd.f32 %v6602, %v6603
  %v6605 = vsel %vm392, %v6576, 0.0
  %v6606 = vadd.f32 %v6604, %v6605
  %v6607 = vsel %vm392, %v6577, 0.0
  %v6608 = vadd.f32 %v6606, %v6607
  %6609 = vadd.xlane.f32.xlu0 %v6608
  %v6610 = vpop.xlane.xlu0 %6609
  %v6611 = vmul.f32 %v6562, %v6562
  %v6612 = vmul.f32 %v6563, %v6563
  %v6613 = vmul.f32 %v6564, %v6564
  %v6614 = vmul.f32 %v6565, %v6565
  %v6615 = vmul.f32 %v6566, %v6566
  %v6616 = vmul.f32 %v6567, %v6567
  %v6617 = vmul.f32 %v6568, %v6568
  %v6618 = vmul.f32 %v6569, %v6569
  %v6619 = vmul.f32 %v6570, %v6570
  %v6620 = vmul.f32 %v6571, %v6571
  %v6621 = vmul.f32 %v6572, %v6572
  %v6622 = vmul.f32 %v6573, %v6573
  %v6623 = vmul.f32 %v6574, %v6574
  %v6624 = vmul.f32 %v6575, %v6575
  %v6625 = vmul.f32 %v6576, %v6576
  %v6626 = vmul.f32 %v6577, %v6577
  %v6627 = vsel %vm392, %v6611, 0.0
  %v6628 = vsel %vm392, %v6612, 0.0
  %v6629 = vadd.f32 %v6627, %v6628
  %v6630 = vsel %vm392, %v6613, 0.0
  %v6631 = vadd.f32 %v6629, %v6630
  %v6632 = vsel %vm392, %v6614, 0.0
  %v6633 = vadd.f32 %v6631, %v6632
  %v6634 = vsel %vm392, %v6615, 0.0
  %v6635 = vadd.f32 %v6633, %v6634
  %v6636 = vsel %vm392, %v6616, 0.0
  %v6637 = vadd.f32 %v6635, %v6636
  %v6638 = vsel %vm392, %v6617, 0.0
  %v6639 = vadd.f32 %v6637, %v6638
  %v6640 = vsel %vm392, %v6618, 0.0
  %v6641 = vadd.f32 %v6639, %v6640
  %v6642 = vsel %vm392, %v6619, 0.0
  %v6643 = vadd.f32 %v6641, %v6642
  %v6644 = vsel %vm392, %v6620, 0.0
  %v6645 = vadd.f32 %v6643, %v6644
  %v6646 = vsel %vm392, %v6621, 0.0
  %v6647 = vadd.f32 %v6645, %v6646
  %v6648 = vsel %vm392, %v6622, 0.0
  %v6649 = vadd.f32 %v6647, %v6648
  %v6650 = vsel %vm392, %v6623, 0.0
  %v6651 = vadd.f32 %v6649, %v6650
  %v6652 = vsel %vm392, %v6624, 0.0
  %v6653 = vadd.f32 %v6651, %v6652
  %v6654 = vsel %vm392, %v6625, 0.0
  %v6655 = vadd.f32 %v6653, %v6654
  %v6656 = vsel %vm392, %v6626, 0.0
  %v6657 = vadd.f32 %v6655, %v6656
  %6658 = vadd.xlane.f32.xlu0 %v6657
  %v6659 = vpop.xlane.xlu0 %6658
  %v6660 = vmul.f32 %v6610, 0.00048828125
  %v6661 = vmul.f32 %v6659, 0.00048828125
  %v6662 = vmul.f32 %v6660, %v6660
  %v6663 = vsub.f32 %v6661, %v6662
  %v6664 = vadd.f32 %v6663, 1e-05
  %v6665 = vrsqrt.pop %v6664
  %v6666 = vmul.f32 %v22, %v6665
  %v6667 = vmul.f32 %v6660, %v6666
  %6669 = vrot.lane.b32.xlu0 %v6667, 1
  %v6670 = vpop.permute.xlu0 %6669
  %v6672 = vsub.f32 %v22, %v6670
  %6674 = vset.pattern.permute.xlu0 36
  %6675 = vperm.xlu0 %6674, %v6666
  %v6676 = vpop.permute.xlu0 %6675
  %v6678 = vmul.f32 %v6562, %v6676
  %v6679 = vmul.f32 %v6563, %v6676
  %v6680 = vmul.f32 %v6564, %v6676
  %v6681 = vmul.f32 %v6565, %v6676
  %v6682 = vmul.f32 %v6566, %v6676
  %v6683 = vmul.f32 %v6567, %v6676
  %v6684 = vmul.f32 %v6568, %v6676
  %v6685 = vmul.f32 %v6569, %v6676
  %v6686 = vmul.f32 %v6570, %v6676
  %v6687 = vmul.f32 %v6571, %v6676
  %v6688 = vmul.f32 %v6572, %v6676
  %v6689 = vmul.f32 %v6573, %v6676
  %v6690 = vmul.f32 %v6574, %v6676
  %v6691 = vmul.f32 %v6575, %v6676
  %v6692 = vmul.f32 %v6576, %v6676
  %v6693 = vmul.f32 %v6577, %v6676
  %6695 = vset.pattern.permute.xlu0 37
  %6696 = vperm.xlu0 %6695, %v6672
  %v6697 = vpop.permute.xlu0 %6696
  %v6699 = vadd.f32 %v6678, %v6697
  %v6700 = vadd.f32 %v6679, %v6697
  %v6701 = vadd.f32 %v6680, %v6697
  %v6702 = vadd.f32 %v6681, %v6697
  %v6703 = vadd.f32 %v6682, %v6697
  %v6704 = vadd.f32 %v6683, %v6697
  %v6705 = vadd.f32 %v6684, %v6697
  %v6706 = vadd.f32 %v6685, %v6697
  %v6707 = vadd.f32 %v6686, %v6697
  %v6708 = vadd.f32 %v6687, %v6697
  %v6709 = vadd.f32 %v6688, %v6697
  %v6710 = vadd.f32 %v6689, %v6697
  %v6711 = vadd.f32 %v6690, %v6697
  %v6712 = vadd.f32 %v6691, %v6697
  %v6713 = vadd.f32 %v6692, %v6697
  %v6714 = vadd.f32 %v6693, %v6697
  %v6715 = vld [vmem:[%s2] sm:$0xff]
  %v6716 = vld [vmem:[%s2 + $0x8] sm:$0xff]
  %v6717 = vld [vmem:[%s2 + $0x10] sm:$0xff]
  %v6718 = vld [vmem:[%s2 + $0x18] sm:$0xff]
  %v6723 = vcombine.low %v6715, %v6715
  %v6724 = vcombine.low %v6716, %v6716
  %v6725 = vcombine.low %v6717, %v6717
  %v6726 = vcombine.low %v6718, %v6718
  %v6731 = vsel %vm392, %v6699, %v6723
  %v6732 = vsel %vm392, %v6700, %v6715
  %v6733 = vsel %vm392, %v6701, %v6724
  %v6734 = vsel %vm392, %v6702, %v6716
  %v6735 = vsel %vm392, %v6703, %v6725
  %v6736 = vsel %vm392, %v6704, %v6717
  %v6737 = vsel %vm392, %v6705, %v6726
  %v6738 = vsel %vm392, %v6706, %v6718
  %6739 = vst [vmem:[%s3] sm:$0xff] %v6731
  %6740 = vst [vmem:[%s3 + $0x8] sm:$0xff] %v6732
  %6741 = vst [vmem:[%s3 + $0x10] sm:$0xff] %v6733
  %6742 = vst [vmem:[%s3 + $0x18] sm:$0xff] %v6734
  %6743 = vst [vmem:[%s3 + $0x20] sm:$0xff] %v6735
  %6744 = vst [vmem:[%s3 + $0x28] sm:$0xff] %v6736
  %6745 = vst [vmem:[%s3 + $0x30] sm:$0xff] %v6737
  %6746 = vst [vmem:[%s3 + $0x38] sm:$0xff] %v6738
  %s6747 = scalar_lea.vmem %s2, 32
  %v6748 = vld [vmem:[%s6747] sm:$0xff]
  %v6749 = vld [vmem:[%s6747 + $0x8] sm:$0xff]
  %v6750 = vld [vmem:[%s6747 + $0x10] sm:$0xff]
  %v6751 = vld [vmem:[%s6747 + $0x18] sm:$0xff]
  %v6756 = vcombine.low %v6748, %v6748
  %v6757 = vcombine.low %v6749, %v6749
  %v6758 = vcombine.low %v6750, %v6750
  %v6759 = vcombine.low %v6751, %v6751
  %v6764 = vsel %vm392, %v6707, %v6756
  %v6765 = vsel %vm392, %v6708, %v6748
  %v6766 = vsel %vm392, %v6709, %v6757
  %v6767 = vsel %vm392, %v6710, %v6749
  %v6768 = vsel %vm392, %v6711, %v6758
  %v6769 = vsel %vm392, %v6712, %v6750
  %v6770 = vsel %vm392, %v6713, %v6759
  %v6771 = vsel %vm392, %v6714, %v6751
  %s6772 = scalar_lea.vmem %s3, 64
  %6773 = vst [vmem:[%s6772] sm:$0xff] %v6764
  %6774 = vst [vmem:[%s6772 + $0x8] sm:$0xff] %v6765
  %6775 = vst [vmem:[%s6772 + $0x10] sm:$0xff] %v6766
  %6776 = vst [vmem:[%s6772 + $0x18] sm:$0xff] %v6767
  %6777 = vst [vmem:[%s6772 + $0x20] sm:$0xff] %v6768
  %6778 = vst [vmem:[%s6772 + $0x28] sm:$0xff] %v6769
  %6779 = vst [vmem:[%s6772 + $0x30] sm:$0xff] %v6770
  %6780 = vst [vmem:[%s6772 + $0x38] sm:$0xff] %v6771
  // Predicated region
  $region14: #{convcat_forward.1} parent=0 // pred_check
    _
  $region15: #{convcat_forward.1} parent=0 // pred_check_branch
    %6782 = sbr.rel (0) target = $region17
  $region16: #{convcat_forward.1} parent=0 // pred_region
    _
  $region17: #{convcat_forward.1} parent=0 // pred_fallthru
    _
  // Predicated region
  $region18: #{convcat_forward.1} parent=0 // pred_check
    _
  $region19: #{convcat_forward.1} parent=0 // pred_check_branch
    %6784 = sbr.rel (0) target = $region21
  $region20: #{convcat_forward.1} parent=0 // pred_region
    _
  $region21: #{convcat_forward.1} parent=0 // pred_fallthru
    _

</llo_original>
